<compile_context>
chip_gen: v5e
topology: v5e:2x2
jax: 0.10.0
libtpu: 0.0.40
codegen_flags: <defaults>
</compile_context>

<pallas_src>
import functools
import math

import jax
import jax.numpy as jnp
from jax.experimental import pallas as pl
from jax.experimental.pallas import tpu as pltpu  # noqa: F401  (TPU backend)

# ----------------------------- configuration --------------------------------
B = 2
N_POINTS = 64          # num_points; must equal CLUSTER_SIZE for the literal expand(-1,-1,64)
FEAT_DIM = 16          # channel count of `features` == NetVLAD feature_size
SA1_NPOINT = 16
SA1_NSAMPLE = [4, 8, 8]
SA1_MLPS = [[8, 8, 16], [16, 16, 32], [16, 24, 32]]   # -> 16+32+32 = 80 channels
SA2_MLP = [32, 64, 128]
FP2_MLP = [64, 64]
FP1_MLP = [64, 32]
CLUSTER_SIZE = 64
OUTPUT_DIM = 32
BN_EPS = 1e-5


# ----------------------------- Pallas helpers --------------------------------


def _full_spec(shape):
    """Single-block BlockSpec covering the entire array (grid=(1,))."""
    nd = len(shape)
    if nd == 2:
        return pl.BlockSpec(shape, lambda i: (0, 0))
    if nd == 3:
        return pl.BlockSpec(shape, lambda i: (0, 0, 0))
    raise ValueError(f"unsupported rank {nd}")


def _bn_train(z, gamma, beta, n_valid):
    """Training-mode BatchNorm over rows (biased variance, torch semantics)."""
    if n_valid == z.shape[0]:
        mu = jnp.mean(z, axis=0, keepdims=True)
        var = jnp.mean(jnp.square(z - mu), axis=0, keepdims=True)
    else:
        # rows >= n_valid are zero padding added only to reach the sublane tile.
        rid = jax.lax.broadcasted_iota(jnp.int32, z.shape, 0)
        msk = (rid < n_valid).astype(jnp.float32)
        inv = jnp.float32(1.0 / n_valid)
        mu = jnp.sum(z * msk, axis=0, keepdims=True) * inv
        var = jnp.sum(jnp.square(z - mu) * msk, axis=0, keepdims=True) * inv
    scale = gamma / jnp.sqrt(var + BN_EPS)
    return (z - mu) * scale + beta


def _apply_act(z, act):
    if act == "relu":
        return jnp.maximum(z, 0.0)
    if act == "sigmoid":
        return jax.nn.sigmoid(z)
    return z


# ----------------------------- fused MLP kernel -------------------------------


def _fused_mlp_kernel(*refs, specs, n_valid):
    """x -> [matmul (+bias) -> optional BN(train) -> activation] * L, in VMEM."""
    x_ref = refs[0]
    o_ref = refs[-1]
    y = x_ref[...]
    idx = 1
    for has_bn, act in specs:
        w = refs[idx][...]
        b = refs[idx + 1][...]
        idx += 2
        z = jnp.dot(y, w, preferred_element_type=jnp.float32) + b
        if has_bn:
            g = refs[idx][...]
            bt = refs[idx + 1][...]
            idx += 2
            z = _bn_train(z, g, bt, n_valid)
        y = _apply_act(z, act)
    o_ref[...] = y


def fused_mlp(x, layers, acts):
    """One pallas_call for a whole Conv(1x1)+BN+act stack on [M, Cin] rows.

    layers: list of (w [Cin,Cout], b [Cout], gamma|None, beta|None)
    acts:   tuple of "relu" | "sigmoid" | "none", one per layer
    """
    x = x.astype(jnp.float32)
    m = x.shape[0]
    args = [x]
    in_specs = [_full_spec(x.shape)]
    specs = []
    for (w, b, g, bt), act in zip(layers, acts):
        w = w.astype(jnp.float32)
        b2 = b.astype(jnp.float32).reshape(1, -1)
        args += [w, b2]
        in_specs += [_full_spec(w.shape), _full_spec(b2.shape)]
        has_bn = g is not None
        if has_bn:
            g2 = g.astype(jnp.float32).reshape(1, -1)
            bt2 = bt.astype(jnp.float32).reshape(1, -1)
            args += [g2, bt2]
            in_specs += [_full_spec(g2.shape), _full_spec(bt2.shape)]
        specs.append((has_bn, act))
    cout = layers[-1][0].shape[1]
    out_shape = (m, cout)
    return pl.pallas_call(
        functools.partial(_fused_mlp_kernel, specs=tuple(specs), n_valid=m),
        out_shape=jax.ShapeDtypeStruct(out_shape, jnp.float32),
        grid=(1,),
        in_specs=in_specs,
        out_specs=_full_spec(out_shape),
    )(*args)


# ----------------------------- NetVLAD kernels --------------------------------


def _netvlad_front_kernel(x_ref, xt_ref, att_ref, cw_ref, g_ref, b_ref, cw2_ref,
                          o_ref, *, batch, n_points):
    # x_ref : [B*N, D]   (channels-last rows, for the cluster matmul + bn1)
    # xt_ref: [B, D, N]  (pre-transposed features so the VLAD matmul is standard)
    # att_ref: [B, K]    (per-point sigmoid scores; indexed by the cluster axis,
    #                     faithful to the reference broadcast)
    x = x_ref[...]
    act = jnp.dot(x, cw_ref[...], preferred_element_type=jnp.float32)     # [B*N, K]
    act = _bn_train(act, g_ref[...], b_ref[...], batch * n_points)        # bn1 (train)
    act = act - jnp.max(act, axis=-1, keepdims=True)                      # softmax
    act = jnp.exp(act)
    act = act / jnp.sum(act, axis=-1, keepdims=True)
    att = att_ref[...]                                                    # [B, K]
    cw2 = cw2_ref[...]                                                    # [D, K]
    for b in range(batch):
        act_b = act[b * n_points:(b + 1) * n_points, :] * att[b:b + 1, :]  # [N, K]
        a_sum = jnp.sum(act_b, axis=0, keepdims=True)                      # [1, K]
        xt_b = xt_ref[b]                                                   # [D, N]
        vlad = jnp.dot(xt_b, act_b, preferred_element_type=jnp.float32)    # [D, K]
        vlad = vlad - a_sum * cw2
        nrm = jnp.sqrt(jnp.sum(vlad * vlad, axis=0, keepdims=True))        # intra-D norm
        vlad = vlad / jnp.maximum(nrm, 1e-12)
        o_ref[b, :, :] = vlad


def netvlad_front(x2d, xt, att, p):
    bsz, d, _n = xt.shape
    k = p["cluster_weights"].shape[1]
    g2 = p["bn1_gamma"].reshape(1, k).astype(jnp.float32)
    b2 = p["bn1_beta"].reshape(1, k).astype(jnp.float32)
    cw = p["cluster_weights"].astype(jnp.float32)
    cw2 = p["cluster_weights2"].astype(jnp.float32)
    out_shape = (bsz, d, k)
    return pl.pallas_call(
        functools.partial(_netvlad_front_kernel, batch=bsz, n_points=_n),
        out_shape=jax.ShapeDtypeStruct(out_shape, jnp.float32),
        grid=(1,),
        in_specs=[
            _full_spec(x2d.shape), _full_spec(xt.shape), _full_spec(att.shape),
            _full_spec(cw.shape), _full_spec(g2.shape), _full_spec(b2.shape),
            _full_spec(cw2.shape),
        ],
        out_specs=_full_spec(out_shape),
    )(x2d.astype(jnp.float32), xt.astype(jnp.float32), att.astype(jnp.float32),
      cw, g2, b2, cw2)


def _netvlad_tail_kernel(v_ref, h1_ref, g2_ref, b2_ref, gw_ref, gg_ref, gb_ref,
                         o_ref, *, n_valid):
    v = v_ref[...]                                                       # [Mp, D*K]
    nrm = jnp.sqrt(jnp.sum(v * v, axis=-1, keepdims=True))               # row L2 norm
    v = v / jnp.maximum(nrm, 1e-12)
    h = jnp.dot(v, h1_ref[...], preferred_element_type=jnp.float32)      # hidden1
    h = _bn_train(h, g2_ref[...], b2_ref[...], n_valid)                  # bn2 (train)
    gates = jnp.dot(h, gw_ref[...], preferred_element_type=jnp.float32)  # context gating
    gates = _bn_train(gates, gg_ref[...], gb_ref[...], n_valid)
    gates = jax.nn.sigmoid(gates)
    o_ref[...] = h * gates


def netvlad_tail(vlad_flat, p):
    bsz, dk = vlad_flat.shape
    o = p["hidden1_weights"].shape[1]
    rows = ((bsz + 7) // 8) * 8          # pad only to the f32 sublane tile (8), not 128
    vp = jnp.pad(vlad_flat.astype(jnp.float32), ((0, rows - bsz), (0, 0)))
    h1 = p["hidden1_weights"].astype(jnp.float32)
    g2 = p["bn2_gamma"].reshape(1, o).astype(jnp.float32)
    b2 = p["bn2_beta"].reshape(1, o).astype(jnp.float32)
    gw = p["gating_weights"].astype(jnp.float32)
    gg = p["gate_bn_gamma"].reshape(1, o).astype(jnp.float32)
    gb = p["gate_bn_beta"].reshape(1, o).astype(jnp.float32)
    out = pl.pallas_call(
        functools.partial(_netvlad_tail_kernel, n_valid=bsz),
        out_shape=jax.ShapeDtypeStruct((rows, o), jnp.float32),
        grid=(1,),
        in_specs=[
            _full_spec((rows, dk)), _full_spec(h1.shape),
            _full_spec(g2.shape), _full_spec(b2.shape),
            _full_spec(gw.shape), _full_spec(gg.shape), _full_spec(gb.shape),
        ],
        out_specs=_full_spec((rows, o)),
    )(vp, h1, g2, b2, gw, gg, gb)
    return out[:bsz]


# ----------------------------- JAX glue helpers ------------------------------


def _cdist(a, b):
    # torch.cdist p=2;  a: [B,M,3], b: [B,S,3] -> [B,M,S]
    d2 = jnp.sum(jnp.square(a[:, :, None, :] - b[:, None, :, :]), axis=-1)
    return jnp.sqrt(jnp.maximum(d2, 0.0))


def _take_grouped(x, idx):
    # x: [B,N,C], idx: [B,S,K] -> [B,S,K,C]
    return jnp.take_along_axis(x[:, None, :, :], idx[..., None], axis=2)


# ----------------------------- model forward --------------------------------


def pcan_forward(params, xyz, features):
    # xyz: [B,3,N], features: [B,D,N]  (channel-first, like the torch module)
    bsz, _, n = xyz.shape
    d = features.shape[1]
    xyz_cl = jnp.transpose(xyz, (0, 2, 1)).astype(jnp.float32)        # [B,N,3]
    feat_cl = jnp.transpose(features, (0, 2, 1)).astype(jnp.float32)  # [B,N,D]

    # --- sa1: multi-scale grouping set abstraction --------------------------
    # TODO(synk): grouping gathers stay in XLA; feeding indices via scalar
    # prefetch into a fused gather+MLP kernel is a further possible step.
    s1 = SA1_NPOINT
    new_xyz = xyz_cl[:, :s1, :]                      # fps_idx = arange(S1)
    dist = _cdist(new_xyz, xyz_cl)                   # shared across branches
    order = jnp.argsort(dist, axis=-1)               # [B,S1,N]

    def grouped_rows(k):
        idx = order[..., :k]
        gx = _take_grouped(xyz_cl, idx) - new_xyz[:, :, None, :]
        gp = _take_grouped(feat_cl, idx)
        g = jnp.concatenate([gp, gx], axis=-1)       # [B,S1,K,D+3]
        return g.reshape(bsz * s1 * k, d + 3)

    # branch 0 (K=4): one fused MLP kernel
    k0 = SA1_NSAMPLE[0]
    r0 = fused_mlp(grouped_rows(k0), params["sa1_b0"], ("relu",) * 3)
    b0 = jnp.max(r0.reshape(bsz, s1, k0, -1), axis=2)                 # [B,S1,16]

    # branches 1 & 2 share K=8 and identical grouped inputs -> merged into one
    # fused MLP with block-diagonal weights (preserves branch independence).
    k12 = SA1_NSAMPLE[1]
    r12 = fused_mlp(grouped_rows(k12), params["sa1_b12"], ("relu",) * 3)
    b12 = jnp.max(r12.reshape(bsz, s1, k12, -1), axis=2)              # [B,S1,64]

    l1_points = jnp.concatenate([b0, b12], axis=-1)                   # [B,S1,80]
    l1_xyz = new_xyz

    # --- sa2: global set abstraction ----------------------------------------
    # TODO(synk): the reference sa2 Msg module is not executable as written
    # (iterates over ints, arange(None)); implemented as PCAN's group-all SA.
    rows = jnp.concatenate([l1_points, l1_xyz], axis=-1).reshape(bsz * s1, -1)
    r = fused_mlp(rows, params["sa2"], ("relu",) * 3)
    l2_points = jnp.max(r.reshape(bsz, s1, -1), axis=1, keepdims=True)  # [B,1,128]

    # --- fp2 (S == 1 broadcast path) -----------------------------------------
    interp = jnp.broadcast_to(l2_points, (bsz, s1, l2_points.shape[-1]))
    rows = jnp.concatenate([l1_points, interp], axis=-1).reshape(bsz * s1, -1)
    r = fused_mlp(rows, params["fp2"], ("relu",) * 2)
    l1_points2 = r.reshape(bsz, s1, -1)                                # [B,S1,64]

    # --- fp1 (3-NN inverse-distance interpolation) + attention head ----------
    # TODO(synk): reference interpolation matmul is ill-formed broadcasting;
    # standard 3-NN weighted interpolation implemented instead.
    dists = _cdist(xyz_cl, l1_xyz)                                     # [B,N,S1]
    idx = jnp.argsort(dists, axis=-1)[..., :3]
    d3 = jnp.take_along_axis(dists, idx, axis=-1)
    w3 = 1.0 / (d3 + 1e-10)
    w3 = w3 / jnp.sum(w3, axis=-1, keepdims=True)
    gathered = _take_grouped(l1_points2, idx)                          # [B,N,3,C]
    interp0 = jnp.einsum("bnj,bnjc->bnc", w3, gathered)                # [B,N,64]

    # one fused kernel: fp1 MLP -> conv1+bn+relu -> conv2(+bias) -> sigmoid
    scores = fused_mlp(interp0.reshape(bsz * n, -1), params["head"],
                       ("relu", "relu", "relu", "sigmoid"))            # [B*N,1]
    att = scores.reshape(bsz, n)                                       # [B,N]
    # literal `.expand(-1, -1, 64)` (valid because N == CLUSTER_SIZE == 64)
    attention_weights = att.reshape(bsz, 1, n)                         # [B,1,64]

    # --- NetVLAD + context gating (two fused kernels) -------------------------
    nv = params["netvlad"]
    x2d = feat_cl.reshape(bsz * n, d)                                  # [B*N,D]
    xt = features.astype(jnp.float32)                                  # [B,D,N] (already transposed)
    vlad = netvlad_front(x2d, xt, att, nv)                             # [B,D,K]
    vlad_flat = vlad.reshape(bsz, -1)                                  # d-major flatten (torch order)
    global_desc = netvlad_tail(vlad_flat, nv)                          # [B,OUT]
    return global_desc, attention_weights


# ----------------------------- parameter init --------------------------------


def init_params(key):
    keys = iter(jax.random.split(key, 64))

    def nrm(shape, scale):
        return jax.random.normal(next(keys), shape, jnp.float32) * scale

    def conv_bn(cin, cout):
        return (nrm((cin, cout), 1.0 / math.sqrt(cin)),
                jnp.zeros((cout,), jnp.float32),
                jnp.ones((cout,), jnp.float32),
                jnp.zeros((cout,), jnp.float32))

    def mlp(cin, widths):
        layers, c = [], cin
        for cout in widths:
            layers.append(conv_bn(c, cout))
            c = cout
        return layers

    def col_concat(la, lb):
        wa, ba, ga, bta = la
        wb, bb, gb, btb = lb
        return (jnp.concatenate([wa, wb], axis=1),
                jnp.concatenate([ba, bb]),
                jnp.concatenate([ga, gb]),
                jnp.concatenate([bta, btb]))

    def block_diag(la, lb):
        wa, ba, ga, bta = la
        wb, bb, gb, btb = lb
        w = jnp.concatenate(
            [jnp.concatenate([wa, jnp.zeros((wa.shape[0], wb.shape[1]), jnp.float32)], axis=1),
             jnp.concatenate([jnp.zeros((wb.shape[0], wa.shape[1]), jnp.float32), wb], axis=1)],
            axis=0)
        return (w, jnp.concatenate([ba, bb]), jnp.concatenate([ga, gb]),
                jnp.concatenate([bta, btb]))

    cin_sa1 = FEAT_DIM + 3
    br0 = mlp(cin_sa1, SA1_MLPS[0])
    br1 = mlp(cin_sa1, SA1_MLPS[1])
    br2 = mlp(cin_sa1, SA1_MLPS[2])
    # merge independently-initialised branches 1 & 2 into block-diagonal weights
    # (same grouped inputs, per-channel BN => numerically identical semantics).
    br12 = [col_concat(br1[0], br2[0]),
            block_diag(br1[1], br2[1]),
            block_diag(br1[2], br2[2])]

    c_sa1 = sum(m[-1] for m in SA1_MLPS)
    fp1 = mlp(FP2_MLP[-1], FP1_MLP)
    conv1 = conv_bn(FP1_MLP[-1], FP1_MLP[-1])
    conv2 = (nrm((FP1_MLP[-1], 1), 1.0 / math.sqrt(FP1_MLP[-1])),
             jnp.zeros((1,), jnp.float32), None, None)

    d, k, o = FEAT_DIM, CLUSTER_SIZE, OUTPUT_DIM
    params = {
        "sa1_b0": br0,
        "sa1_b12": br12,
        "sa2": mlp(c_sa1 + 3, SA2_MLP),
        "fp2": mlp(SA2_MLP[-1] + c_sa1, FP2_MLP),
        "head": fp1 + [conv1, conv2],
        "netvlad": {
            "cluster_weights": nrm((d, k), 1.0 / math.sqrt(d)),
            "cluster_weights2": nrm((d, k), 1.0 / math.sqrt(d)),   # stored as [D,K]
            "hidden1_weights": nrm((k * d, o), 1.0 / math.sqrt(d)),
            "bn1_gamma": jnp.ones((k,), jnp.float32),
            "bn1_beta": jnp.zeros((k,), jnp.float32),
            "bn2_gamma": jnp.ones((o,), jnp.float32),
            "bn2_beta": jnp.zeros((o,), jnp.float32),
            "gating_weights": nrm((o, o), 1.0 / math.sqrt(o)),
            "gate_bn_gamma": jnp.ones((o,), jnp.float32),
            "gate_bn_beta": jnp.zeros((o,), jnp.float32),
        },
    }
    return params


# ----------------------------------- main ------------------------------------

if __name__ == "__main__":
    key = jax.random.PRNGKey(0)
    kx, kf, kp = jax.random.split(key, 3)
    xyz = jax.random.normal(kx, (B, 3, N_POINTS), jnp.float32)
    features = jax.random.normal(kf, (B, FEAT_DIM, N_POINTS), jnp.float32)
    params = init_params(kp)

    forward = jax.jit(pcan_forward)
    global_desc, attention_weights = forward(params, xyz, features)
    jax.block_until_ready(global_desc)
    jax.block_until_ready(attention_weights)

    assert global_desc.shape == (B, OUTPUT_DIM)
    assert attention_weights.shape == (B, 1, CLUSTER_SIZE)
    assert bool(jnp.all(jnp.isfinite(global_desc)))
    assert bool(jnp.all(jnp.isfinite(attention_weights)))
    print("KERNEL_OK")
</pallas_src>

<mosaic_0001>
module attributes {stable_mosaic.version = 11 : i64} {
  func.func @_fused_mlp_kernel(%arg0: i32, %arg1: memref<128x19xf32, #tpu.memory_space<vmem>>, %arg2: memref<19x8xf32, #tpu.memory_space<vmem>>, %arg3: memref<1x8xf32, #tpu.memory_space<vmem>>, %arg4: memref<1x8xf32, #tpu.memory_space<vmem>>, %arg5: memref<1x8xf32, #tpu.memory_space<vmem>>, %arg6: memref<8x8xf32, #tpu.memory_space<vmem>>, %arg7: memref<1x8xf32, #tpu.memory_space<vmem>>, %arg8: memref<1x8xf32, #tpu.memory_space<vmem>>, %arg9: memref<1x8xf32, #tpu.memory_space<vmem>>, %arg10: memref<8x16xf32, #tpu.memory_space<vmem>>, %arg11: memref<1x16xf32, #tpu.memory_space<vmem>>, %arg12: memref<1x16xf32, #tpu.memory_space<vmem>>, %arg13: memref<1x16xf32, #tpu.memory_space<vmem>>, %arg14: memref<128x16xf32, #tpu.memory_space<vmem>>) attributes {dimension_semantics = [#tpu.dimension_semantics<arbitrary>], iteration_bounds = array<i64: 1>, scalar_prefetch = 0 : i64, scratch_operands = 0 : i64, tpu.core_type = #tpu.core_type<tc>, window_params = [{pipeline_mode = #tpu.pipeline_mode<synchronous>, transform_indices = @transform_0, window_bounds = array<i64: 128, 19>}, {pipeline_mode = #tpu.pipeline_mode<synchronous>, transform_indices = @transform_1, window_bounds = array<i64: 19, 8>}, {pipeline_mode = #tpu.pipeline_mode<synchronous>, transform_indices = @transform_2, window_bounds = array<i64: 1, 8>}, {pipeline_mode = #tpu.pipeline_mode<synchronous>, transform_indices = @transform_3, window_bounds = array<i64: 1, 8>}, {pipeline_mode = #tpu.pipeline_mode<synchronous>, transform_indices = @transform_4, window_bounds = array<i64: 1, 8>}, {pipeline_mode = #tpu.pipeline_mode<synchronous>, transform_indices = @transform_5, window_bounds = array<i64: 8, 8>}, {pipeline_mode = #tpu.pipeline_mode<synchronous>, transform_indices = @transform_6, window_bounds = array<i64: 1, 8>}, {pipeline_mode = #tpu.pipeline_mode<synchronous>, transform_indices = @transform_7, window_bounds = array<i64: 1, 8>}, {pipeline_mode = #tpu.pipeline_mode<synchronous>, transform_indices = @transform_8, window_bounds = array<i64: 1, 8>}, {pipeline_mode = #tpu.pipeline_mode<synchronous>, transform_indices = @transform_9, window_bounds = array<i64: 8, 16>}, {pipeline_mode = #tpu.pipeline_mode<synchronous>, transform_indices = @transform_10, window_bounds = array<i64: 1, 16>}, {pipeline_mode = #tpu.pipeline_mode<synchronous>, transform_indices = @transform_11, window_bounds = array<i64: 1, 16>}, {pipeline_mode = #tpu.pipeline_mode<synchronous>, transform_indices = @transform_12, window_bounds = array<i64: 1, 16>}, {pipeline_mode = #tpu.pipeline_mode<synchronous>, transform_indices = @transform_13, window_bounds = array<i64: 128, 16>}]} {
    %c0 = arith.constant 0 : index
    %c0_0 = arith.constant 0 : index
    %0 = vector.load %arg1[%c0, %c0_0] : memref<128x19xf32, #tpu.memory_space<vmem>>, vector<128x19xf32>
    %c0_1 = arith.constant 0 : index
    %c0_2 = arith.constant 0 : index
    %1 = vector.load %arg2[%c0_1, %c0_2] : memref<19x8xf32, #tpu.memory_space<vmem>>, vector<19x8xf32>
    %c0_3 = arith.constant 0 : index
    %c0_4 = arith.constant 0 : index
    %2 = vector.load %arg3[%c0_3, %c0_4] : memref<1x8xf32, #tpu.memory_space<vmem>>, vector<1x8xf32>
    %cst = arith.constant dense<0.000000e+00> : vector<128x8xf32>
    %3 = tpu.matmul %0, %1, %cst {dimension_numbers = #tpu.dot_dimension_numbers<[1], [0], [0], [1], [0, 0, 1, 1], [], []>} : vector<128x19xf32>, vector<19x8xf32>, vector<128x8xf32> -> vector<128x8xf32>
    %4 = vector.broadcast %2 : vector<1x8xf32> to vector<128x8xf32>
    %5 = arith.addf %3, %4 : vector<128x8xf32>
    %c0_5 = arith.constant 0 : index
    %c0_6 = arith.constant 0 : index
    %6 = vector.load %arg4[%c0_5, %c0_6] : memref<1x8xf32, #tpu.memory_space<vmem>>, vector<1x8xf32>
    %c0_7 = arith.constant 0 : index
    %c0_8 = arith.constant 0 : index
    %7 = vector.load %arg5[%c0_7, %c0_8] : memref<1x8xf32, #tpu.memory_space<vmem>>, vector<1x8xf32>
    %cst_9 = arith.constant dense<0.000000e+00> : vector<8xf32>
    %8 = vector.multi_reduction <add>, %5, %cst_9 [0] : vector<128x8xf32> to vector<8xf32>
    %9 = vector.shape_cast %8 : vector<8xf32> to vector<1x8xf32>
    %cst_10 = arith.constant 1.280000e+02 : f32
    %10 = vector.broadcast %cst_10 : f32 to vector<1x8xf32>
    %11 = arith.divf %9, %10 : vector<1x8xf32>
    %12 = vector.broadcast %11 : vector<1x8xf32> to vector<128x8xf32>
    %13 = arith.subf %5, %12 : vector<128x8xf32>
    %14 = arith.mulf %13, %13 : vector<128x8xf32>
    %cst_11 = arith.constant dense<0.000000e+00> : vector<8xf32>
    %15 = vector.multi_reduction <add>, %14, %cst_11 [0] : vector<128x8xf32> to vector<8xf32>
    %16 = vector.shape_cast %15 : vector<8xf32> to vector<1x8xf32>
    %cst_12 = arith.constant 1.280000e+02 : f32
    %17 = vector.broadcast %cst_12 : f32 to vector<1x8xf32>
    %18 = arith.divf %16, %17 : vector<1x8xf32>
    %cst_13 = arith.constant 9.99999974E-6 : f32
    %19 = vector.broadcast %cst_13 : f32 to vector<1x8xf32>
    %20 = arith.addf %18, %19 : vector<1x8xf32>
    %21 = math.sqrt %20 : vector<1x8xf32>
    %22 = arith.divf %6, %21 : vector<1x8xf32>
    %23 = vector.broadcast %11 : vector<1x8xf32> to vector<128x8xf32>
    %24 = arith.subf %5, %23 : vector<128x8xf32>
    %25 = vector.broadcast %22 : vector<1x8xf32> to vector<128x8xf32>
    %26 = arith.mulf %24, %25 : vector<128x8xf32>
    %27 = vector.broadcast %7 : vector<1x8xf32> to vector<128x8xf32>
    %28 = arith.addf %26, %27 : vector<128x8xf32>
    %cst_14 = arith.constant 0.000000e+00 : f32
    %29 = vector.broadcast %cst_14 : f32 to vector<128x8xf32>
    %30 = arith.maximumf %28, %29 : vector<128x8xf32>
    %c0_15 = arith.constant 0 : index
    %c0_16 = arith.constant 0 : index
    %31 = vector.load %arg6[%c0_15, %c0_16] : memref<8x8xf32, #tpu.memory_space<vmem>>, vector<8x8xf32>
    %c0_17 = arith.constant 0 : index
    %c0_18 = arith.constant 0 : index
    %32 = vector.load %arg7[%c0_17, %c0_18] : memref<1x8xf32, #tpu.memory_space<vmem>>, vector<1x8xf32>
    %cst_19 = arith.constant dense<0.000000e+00> : vector<128x8xf32>
    %33 = tpu.matmul %30, %31, %cst_19 {dimension_numbers = #tpu.dot_dimension_numbers<[1], [0], [0], [1], [0, 0, 1, 1], [], []>} : vector<128x8xf32>, vector<8x8xf32>, vector<128x8xf32> -> vector<128x8xf32>
    %34 = vector.broadcast %32 : vector<1x8xf32> to vector<128x8xf32>
    %35 = arith.addf %33, %34 : vector<128x8xf32>
    %c0_20 = arith.constant 0 : index
    %c0_21 = arith.constant 0 : index
    %36 = vector.load %arg8[%c0_20, %c0_21] : memref<1x8xf32, #tpu.memory_space<vmem>>, vector<1x8xf32>
    %c0_22 = arith.constant 0 : index
    %c0_23 = arith.constant 0 : index
    %37 = vector.load %arg9[%c0_22, %c0_23] : memref<1x8xf32, #tpu.memory_space<vmem>>, vector<1x8xf32>
    %cst_24 = arith.constant dense<0.000000e+00> : vector<8xf32>
    %38 = vector.multi_reduction <add>, %35, %cst_24 [0] : vector<128x8xf32> to vector<8xf32>
    %39 = vector.shape_cast %38 : vector<8xf32> to vector<1x8xf32>
    %cst_25 = arith.constant 1.280000e+02 : f32
    %40 = vector.broadcast %cst_25 : f32 to vector<1x8xf32>
    %41 = arith.divf %39, %40 : vector<1x8xf32>
    %42 = vector.broadcast %41 : vector<1x8xf32> to vector<128x8xf32>
    %43 = arith.subf %35, %42 : vector<128x8xf32>
    %44 = arith.mulf %43, %43 : vector<128x8xf32>
    %cst_26 = arith.constant dense<0.000000e+00> : vector<8xf32>
    %45 = vector.multi_reduction <add>, %44, %cst_26 [0] : vector<128x8xf32> to vector<8xf32>
    %46 = vector.shape_cast %45 : vector<8xf32> to vector<1x8xf32>
    %cst_27 = arith.constant 1.280000e+02 : f32
    %47 = vector.broadcast %cst_27 : f32 to vector<1x8xf32>
    %48 = arith.divf %46, %47 : vector<1x8xf32>
    %cst_28 = arith.constant 9.99999974E-6 : f32
    %49 = vector.broadcast %cst_28 : f32 to vector<1x8xf32>
    %50 = arith.addf %48, %49 : vector<1x8xf32>
    %51 = math.sqrt %50 : vector<1x8xf32>
    %52 = arith.divf %36, %51 : vector<1x8xf32>
    %53 = vector.broadcast %41 : vector<1x8xf32> to vector<128x8xf32>
    %54 = arith.subf %35, %53 : vector<128x8xf32>
    %55 = vector.broadcast %52 : vector<1x8xf32> to vector<128x8xf32>
    %56 = arith.mulf %54, %55 : vector<128x8xf32>
    %57 = vector.broadcast %37 : vector<1x8xf32> to vector<128x8xf32>
    %58 = arith.addf %56, %57 : vector<128x8xf32>
    %cst_29 = arith.constant 0.000000e+00 : f32
    %59 = vector.broadcast %cst_29 : f32 to vector<128x8xf32>
    %60 = arith.maximumf %58, %59 : vector<128x8xf32>
    %c0_30 = arith.constant 0 : index
    %c0_31 = arith.constant 0 : index
    %61 = vector.load %arg10[%c0_30, %c0_31] : memref<8x16xf32, #tpu.memory_space<vmem>>, vector<8x16xf32>
    %c0_32 = arith.constant 0 : index
    %c0_33 = arith.constant 0 : index
    %62 = vector.load %arg11[%c0_32, %c0_33] : memref<1x16xf32, #tpu.memory_space<vmem>>, vector<1x16xf32>
    %cst_34 = arith.constant dense<0.000000e+00> : vector<128x16xf32>
    %63 = tpu.matmul %60, %61, %cst_34 {dimension_numbers = #tpu.dot_dimension_numbers<[1], [0], [0], [1], [0, 0, 1, 1], [], []>} : vector<128x8xf32>, vector<8x16xf32>, vector<128x16xf32> -> vector<128x16xf32>
    %64 = vector.broadcast %62 : vector<1x16xf32> to vector<128x16xf32>
    %65 = arith.addf %63, %64 : vector<128x16xf32>
    %c0_35 = arith.constant 0 : index
    %c0_36 = arith.constant 0 : index
    %66 = vector.load %arg12[%c0_35, %c0_36] : memref<1x16xf32, #tpu.memory_space<vmem>>, vector<1x16xf32>
    %c0_37 = arith.constant 0 : index
    %c0_38 = arith.constant 0 : index
    %67 = vector.load %arg13[%c0_37, %c0_38] : memref<1x16xf32, #tpu.memory_space<vmem>>, vector<1x16xf32>
    %cst_39 = arith.constant dense<0.000000e+00> : vector<16xf32>
    %68 = vector.multi_reduction <add>, %65, %cst_39 [0] : vector<128x16xf32> to vector<16xf32>
    %69 = vector.shape_cast %68 : vector<16xf32> to vector<1x16xf32>
    %cst_40 = arith.constant 1.280000e+02 : f32
    %70 = vector.broadcast %cst_40 : f32 to vector<1x16xf32>
    %71 = arith.divf %69, %70 : vector<1x16xf32>
    %72 = vector.broadcast %71 : vector<1x16xf32> to vector<128x16xf32>
    %73 = arith.subf %65, %72 : vector<128x16xf32>
    %74 = arith.mulf %73, %73 : vector<128x16xf32>
    %cst_41 = arith.constant dense<0.000000e+00> : vector<16xf32>
    %75 = vector.multi_reduction <add>, %74, %cst_41 [0] : vector<128x16xf32> to vector<16xf32>
    %76 = vector.shape_cast %75 : vector<16xf32> to vector<1x16xf32>
    %cst_42 = arith.constant 1.280000e+02 : f32
    %77 = vector.broadcast %cst_42 : f32 to vector<1x16xf32>
    %78 = arith.divf %76, %77 : vector<1x16xf32>
    %cst_43 = arith.constant 9.99999974E-6 : f32
    %79 = vector.broadcast %cst_43 : f32 to vector<1x16xf32>
    %80 = arith.addf %78, %79 : vector<1x16xf32>
    %81 = math.sqrt %80 : vector<1x16xf32>
    %82 = arith.divf %66, %81 : vector<1x16xf32>
    %83 = vector.broadcast %71 : vector<1x16xf32> to vector<128x16xf32>
    %84 = arith.subf %65, %83 : vector<128x16xf32>
    %85 = vector.broadcast %82 : vector<1x16xf32> to vector<128x16xf32>
    %86 = arith.mulf %84, %85 : vector<128x16xf32>
    %87 = vector.broadcast %67 : vector<1x16xf32> to vector<128x16xf32>
    %88 = arith.addf %86, %87 : vector<128x16xf32>
    %cst_44 = arith.constant 0.000000e+00 : f32
    %89 = vector.broadcast %cst_44 : f32 to vector<128x16xf32>
    %90 = arith.maximumf %88, %89 : vector<128x16xf32>
    %c0_45 = arith.constant 0 : index
    %c0_46 = arith.constant 0 : index
    %91 = vector.load %arg14[%c0_45, %c0_46] : memref<128x16xf32, #tpu.memory_space<vmem>>, vector<128x16xf32>
    tpu.vector_store %arg14[%c0_45, %c0_46], %90 {strides = array<i32>} : memref<128x16xf32, #tpu.memory_space<vmem>>, vector<128x16xf32>,
    return
  }
  func.func @transform_0(%arg0: i32) -> (i32, i32) {
    %c0_i32 = arith.constant 0 : i32
    %c0_i32_0 = arith.constant 0 : i32
    %c0_i32_1 = arith.constant 0 : i32
    return %c0_i32, %c0_i32_0 : i32, i32
  }
  func.func @transform_1(%arg0: i32) -> (i32, i32) {
    %c0_i32 = arith.constant 0 : i32
    %c0_i32_0 = arith.constant 0 : i32
    %c0_i32_1 = arith.constant 0 : i32
    return %c0_i32, %c0_i32_0 : i32, i32
  }
  func.func @transform_2(%arg0: i32) -> (i32, i32) {
    %c0_i32 = arith.constant 0 : i32
    %c0_i32_0 = arith.constant 0 : i32
    %c0_i32_1 = arith.constant 0 : i32
    return %c0_i32, %c0_i32_0 : i32, i32
  }
  func.func @transform_3(%arg0: i32) -> (i32, i32) {
    %c0_i32 = arith.constant 0 : i32
    %c0_i32_0 = arith.constant 0 : i32
    %c0_i32_1 = arith.constant 0 : i32
    return %c0_i32, %c0_i32_0 : i32, i32
  }
  func.func @transform_4(%arg0: i32) -> (i32, i32) {
    %c0_i32 = arith.constant 0 : i32
    %c0_i32_0 = arith.constant 0 : i32
    %c0_i32_1 = arith.constant 0 : i32
    return %c0_i32, %c0_i32_0 : i32, i32
  }
  func.func @transform_5(%arg0: i32) -> (i32, i32) {
    %c0_i32 = arith.constant 0 : i32
    %c0_i32_0 = arith.constant 0 : i32
    %c0_i32_1 = arith.constant 0 : i32
    return %c0_i32, %c0_i32_0 : i32, i32
  }
  func.func @transform_6(%arg0: i32) -> (i32, i32) {
    %c0_i32 = arith.constant 0 : i32
    %c0_i32_0 = arith.constant 0 : i32
    %c0_i32_1 = arith.constant 0 : i32
    return %c0_i32, %c0_i32_0 : i32, i32
  }
  func.func @transform_7(%arg0: i32) -> (i32, i32) {
    %c0_i32 = arith.constant 0 : i32
    %c0_i32_0 = arith.constant 0 : i32
    %c0_i32_1 = arith.constant 0 : i32
    return %c0_i32, %c0_i32_0 : i32, i32
  }
  func.func @transform_8(%arg0: i32) -> (i32, i32) {
    %c0_i32 = arith.constant 0 : i32
    %c0_i32_0 = arith.constant 0 : i32
    %c0_i32_1 = arith.constant 0 : i32
    return %c0_i32, %c0_i32_0 : i32, i32
  }
  func.func @transform_9(%arg0: i32) -> (i32, i32) {
    %c0_i32 = arith.constant 0 : i32
    %c0_i32_0 = arith.constant 0 : i32
    %c0_i32_1 = arith.constant 0 : i32
    return %c0_i32, %c0_i32_0 : i32, i32
  }
  func.func @transform_10(%arg0: i32) -> (i32, i32) {
    %c0_i32 = arith.constant 0 : i32
    %c0_i32_0 = arith.constant 0 : i32
    %c0_i32_1 = arith.constant 0 : i32
    return %c0_i32, %c0_i32_0 : i32, i32
  }
  func.func @transform_11(%arg0: i32) -> (i32, i32) {
    %c0_i32 = arith.constant 0 : i32
    %c0_i32_0 = arith.constant 0 : i32
    %c0_i32_1 = arith.constant 0 : i32
    return %c0_i32, %c0_i32_0 : i32, i32
  }
  func.func @transform_12(%arg0: i32) -> (i32, i32) {
    %c0_i32 = arith.constant 0 : i32
    %c0_i32_0 = arith.constant 0 : i32
    %c0_i32_1 = arith.constant 0 : i32
    return %c0_i32, %c0_i32_0 : i32, i32
  }
  func.func @transform_13(%arg0: i32) -> (i32, i32) {
    %c0_i32 = arith.constant 0 : i32
    %c0_i32_0 = arith.constant 0 : i32
    %c0_i32_1 = arith.constant 0 : i32
    return %c0_i32, %c0_i32_0 : i32, i32
  }
}

module attributes {stable_mosaic.version = 11 : i64} {
  func.func @_fused_mlp_kernel(%arg0: i32, %arg1: memref<256x19xf32, #tpu.memory_space<vmem>>, %arg2: memref<19x32xf32, #tpu.memory_space<vmem>>, %arg3: memref<1x32xf32, #tpu.memory_space<vmem>>, %arg4: memref<1x32xf32, #tpu.memory_space<vmem>>, %arg5: memref<1x32xf32, #tpu.memory_space<vmem>>, %arg6: memref<32x40xf32, #tpu.memory_space<vmem>>, %arg7: memref<1x40xf32, #tpu.memory_space<vmem>>, %arg8: memref<1x40xf32, #tpu.memory_space<vmem>>, %arg9: memref<1x40xf32, #tpu.memory_space<vmem>>, %arg10: memref<40x64xf32, #tpu.memory_space<vmem>>, %arg11: memref<1x64xf32, #tpu.memory_space<vmem>>, %arg12: memref<1x64xf32, #tpu.memory_space<vmem>>, %arg13: memref<1x64xf32, #tpu.memory_space<vmem>>, %arg14: memref<256x64xf32, #tpu.memory_space<vmem>>) attributes {dimension_semantics = [#tpu.dimension_semantics<arbitrary>], iteration_bounds = array<i64: 1>, scalar_prefetch = 0 : i64, scratch_operands = 0 : i64, tpu.core_type = #tpu.core_type<tc>, window_params = [{pipeline_mode = #tpu.pipeline_mode<synchronous>, transform_indices = @transform_0, window_bounds = array<i64: 256, 19>}, {pipeline_mode = #tpu.pipeline_mode<synchronous>, transform_indices = @transform_1, window_bounds = array<i64: 19, 32>}, {pipeline_mode = #tpu.pipeline_mode<synchronous>, transform_indices = @transform_2, window_bounds = array<i64: 1, 32>}, {pipeline_mode = #tpu.pipeline_mode<synchronous>, transform_indices = @transform_3, window_bounds = array<i64: 1, 32>}, {pipeline_mode = #tpu.pipeline_mode<synchronous>, transform_indices = @transform_4, window_bounds = array<i64: 1, 32>}, {pipeline_mode = #tpu.pipeline_mode<synchronous>, transform_indices = @transform_5, window_bounds = array<i64: 32, 40>}, {pipeline_mode = #tpu.pipeline_mode<synchronous>, transform_indices = @transform_6, window_bounds = array<i64: 1, 40>}, {pipeline_mode = #tpu.pipeline_mode<synchronous>, transform_indices = @transform_7, window_bounds = array<i64: 1, 40>}, {pipeline_mode = #tpu.pipeline_mode<synchronous>, transform_indices = @transform_8, window_bounds = array<i64: 1, 40>}, {pipeline_mode = #tpu.pipeline_mode<synchronous>, transform_indices = @transform_9, window_bounds = array<i64: 40, 64>}, {pipeline_mode = #tpu.pipeline_mode<synchronous>, transform_indices = @transform_10, window_bounds = array<i64: 1, 64>}, {pipeline_mode = #tpu.pipeline_mode<synchronous>, transform_indices = @transform_11, window_bounds = array<i64: 1, 64>}, {pipeline_mode = #tpu.pipeline_mode<synchronous>, transform_indices = @transform_12, window_bounds = array<i64: 1, 64>}, {pipeline_mode = #tpu.pipeline_mode<synchronous>, transform_indices = @transform_13, window_bounds = array<i64: 256, 64>}]} {
    %c0 = arith.constant 0 : index
    %c0_0 = arith.constant 0 : index
    %0 = vector.load %arg1[%c0, %c0_0] : memref<256x19xf32, #tpu.memory_space<vmem>>, vector<256x19xf32>
    %c0_1 = arith.constant 0 : index
    %c0_2 = arith.constant 0 : index
    %1 = vector.load %arg2[%c0_1, %c0_2] : memref<19x32xf32, #tpu.memory_space<vmem>>, vector<19x32xf32>
    %c0_3 = arith.constant 0 : index
    %c0_4 = arith.constant 0 : index
    %2 = vector.load %arg3[%c0_3, %c0_4] : memref<1x32xf32, #tpu.memory_space<vmem>>, vector<1x32xf32>
    %cst = arith.constant dense<0.000000e+00> : vector<256x32xf32>
    %3 = tpu.matmul %0, %1, %cst {dimension_numbers = #tpu.dot_dimension_numbers<[1], [0], [0], [1], [0, 0, 1, 1], [], []>} : vector<256x19xf32>, vector<19x32xf32>, vector<256x32xf32> -> vector<256x32xf32>
    %4 = vector.broadcast %2 : vector<1x32xf32> to vector<256x32xf32>
    %5 = arith.addf %3, %4 : vector<256x32xf32>
    %c0_5 = arith.constant 0 : index
    %c0_6 = arith.constant 0 : index
    %6 = vector.load %arg4[%c0_5, %c0_6] : memref<1x32xf32, #tpu.memory_space<vmem>>, vector<1x32xf32>
    %c0_7 = arith.constant 0 : index
    %c0_8 = arith.constant 0 : index
    %7 = vector.load %arg5[%c0_7, %c0_8] : memref<1x32xf32, #tpu.memory_space<vmem>>, vector<1x32xf32>
    %cst_9 = arith.constant dense<0.000000e+00> : vector<32xf32>
    %8 = vector.multi_reduction <add>, %5, %cst_9 [0] : vector<256x32xf32> to vector<32xf32>
    %9 = vector.shape_cast %8 : vector<32xf32> to vector<1x32xf32>
    %cst_10 = arith.constant 2.560000e+02 : f32
    %10 = vector.broadcast %cst_10 : f32 to vector<1x32xf32>
    %11 = arith.divf %9, %10 : vector<1x32xf32>
    %12 = vector.broadcast %11 : vector<1x32xf32> to vector<256x32xf32>
    %13 = arith.subf %5, %12 : vector<256x32xf32>
    %14 = arith.mulf %13, %13 : vector<256x32xf32>
    %cst_11 = arith.constant dense<0.000000e+00> : vector<32xf32>
    %15 = vector.multi_reduction <add>, %14, %cst_11 [0] : vector<256x32xf32> to vector<32xf32>
    %16 = vector.shape_cast %15 : vector<32xf32> to vector<1x32xf32>
    %cst_12 = arith.constant 2.560000e+02 : f32
    %17 = vector.broadcast %cst_12 : f32 to vector<1x32xf32>
    %18 = arith.divf %16, %17 : vector<1x32xf32>
    %cst_13 = arith.constant 9.99999974E-6 : f32
    %19 = vector.broadcast %cst_13 : f32 to vector<1x32xf32>
    %20 = arith.addf %18, %19 : vector<1x32xf32>
    %21 = math.sqrt %20 : vector<1x32xf32>
    %22 = arith.divf %6, %21 : vector<1x32xf32>
    %23 = vector.broadcast %11 : vector<1x32xf32> to vector<256x32xf32>
    %24 = arith.subf %5, %23 : vector<256x32xf32>
    %25 = vector.broadcast %22 : vector<1x32xf32> to vector<256x32xf32>
    %26 = arith.mulf %24, %25 : vector<256x32xf32>
    %27 = vector.broadcast %7 : vector<1x32xf32> to vector<256x32xf32>
    %28 = arith.addf %26, %27 : vector<256x32xf32>
    %cst_14 = arith.constant 0.000000e+00 : f32
    %29 = vector.broadcast %cst_14 : f32 to vector<256x32xf32>
    %30 = arith.maximumf %28, %29 : vector<256x32xf32>
    %c0_15 = arith.constant 0 : index
    %c0_16 = arith.constant 0 : index
    %31 = vector.load %arg6[%c0_15, %c0_16] : memref<32x40xf32, #tpu.memory_space<vmem>>, vector<32x40xf32>
    %c0_17 = arith.constant 0 : index
    %c0_18 = arith.constant 0 : index
    %32 = vector.load %arg7[%c0_17, %c0_18] : memref<1x40xf32, #tpu.memory_space<vmem>>, vector<1x40xf32>
    %cst_19 = arith.constant dense<0.000000e+00> : vector<256x40xf32>
    %33 = tpu.matmul %30, %31, %cst_19 {dimension_numbers = #tpu.dot_dimension_numbers<[1], [0], [0], [1], [0, 0, 1, 1], [], []>} : vector<256x32xf32>, vector<32x40xf32>, vector<256x40xf32> -> vector<256x40xf32>
    %34 = vector.broadcast %32 : vector<1x40xf32> to vector<256x40xf32>
    %35 = arith.addf %33, %34 : vector<256x40xf32>
    %c0_20 = arith.constant 0 : index
    %c0_21 = arith.constant 0 : index
    %36 = vector.load %arg8[%c0_20, %c0_21] : memref<1x40xf32, #tpu.memory_space<vmem>>, vector<1x40xf32>
    %c0_22 = arith.constant 0 : index
    %c0_23 = arith.constant 0 : index
    %37 = vector.load %arg9[%c0_22, %c0_23] : memref<1x40xf32, #tpu.memory_space<vmem>>, vector<1x40xf32>
    %cst_24 = arith.constant dense<0.000000e+00> : vector<40xf32>
    %38 = vector.multi_reduction <add>, %35, %cst_24 [0] : vector<256x40xf32> to vector<40xf32>
    %39 = vector.shape_cast %38 : vector<40xf32> to vector<1x40xf32>
    %cst_25 = arith.constant 2.560000e+02 : f32
    %40 = vector.broadcast %cst_25 : f32 to vector<1x40xf32>
    %41 = arith.divf %39, %40 : vector<1x40xf32>
    %42 = vector.broadcast %41 : vector<1x40xf32> to vector<256x40xf32>
    %43 = arith.subf %35, %42 : vector<256x40xf32>
    %44 = arith.mulf %43, %43 : vector<256x40xf32>
    %cst_26 = arith.constant dense<0.000000e+00> : vector<40xf32>
    %45 = vector.multi_reduction <add>, %44, %cst_26 [0] : vector<256x40xf32> to vector<40xf32>
    %46 = vector.shape_cast %45 : vector<40xf32> to vector<1x40xf32>
    %cst_27 = arith.constant 2.560000e+02 : f32
    %47 = vector.broadcast %cst_27 : f32 to vector<1x40xf32>
    %48 = arith.divf %46, %47 : vector<1x40xf32>
    %cst_28 = arith.constant 9.99999974E-6 : f32
    %49 = vector.broadcast %cst_28 : f32 to vector<1x40xf32>
    %50 = arith.addf %48, %49 : vector<1x40xf32>
    %51 = math.sqrt %50 : vector<1x40xf32>
    %52 = arith.divf %36, %51 : vector<1x40xf32>
    %53 = vector.broadcast %41 : vector<1x40xf32> to vector<256x40xf32>
    %54 = arith.subf %35, %53 : vector<256x40xf32>
    %55 = vector.broadcast %52 : vector<1x40xf32> to vector<256x40xf32>
    %56 = arith.mulf %54, %55 : vector<256x40xf32>
    %57 = vector.broadcast %37 : vector<1x40xf32> to vector<256x40xf32>
    %58 = arith.addf %56, %57 : vector<256x40xf32>
    %cst_29 = arith.constant 0.000000e+00 : f32
    %59 = vector.broadcast %cst_29 : f32 to vector<256x40xf32>
    %60 = arith.maximumf %58, %59 : vector<256x40xf32>
    %c0_30 = arith.constant 0 : index
    %c0_31 = arith.constant 0 : index
    %61 = vector.load %arg10[%c0_30, %c0_31] : memref<40x64xf32, #tpu.memory_space<vmem>>, vector<40x64xf32>
    %c0_32 = arith.constant 0 : index
    %c0_33 = arith.constant 0 : index
    %62 = vector.load %arg11[%c0_32, %c0_33] : memref<1x64xf32, #tpu.memory_space<vmem>>, vector<1x64xf32>
    %cst_34 = arith.constant dense<0.000000e+00> : vector<256x64xf32>
    %63 = tpu.matmul %60, %61, %cst_34 {dimension_numbers = #tpu.dot_dimension_numbers<[1], [0], [0], [1], [0, 0, 1, 1], [], []>} : vector<256x40xf32>, vector<40x64xf32>, vector<256x64xf32> -> vector<256x64xf32>
    %64 = vector.broadcast %62 : vector<1x64xf32> to vector<256x64xf32>
    %65 = arith.addf %63, %64 : vector<256x64xf32>
    %c0_35 = arith.constant 0 : index
    %c0_36 = arith.constant 0 : index
    %66 = vector.load %arg12[%c0_35, %c0_36] : memref<1x64xf32, #tpu.memory_space<vmem>>, vector<1x64xf32>
    %c0_37 = arith.constant 0 : index
    %c0_38 = arith.constant 0 : index
    %67 = vector.load %arg13[%c0_37, %c0_38] : memref<1x64xf32, #tpu.memory_space<vmem>>, vector<1x64xf32>
    %cst_39 = arith.constant dense<0.000000e+00> : vector<64xf32>
    %68 = vector.multi_reduction <add>, %65, %cst_39 [0] : vector<256x64xf32> to vector<64xf32>
    %69 = vector.shape_cast %68 : vector<64xf32> to vector<1x64xf32>
    %cst_40 = arith.constant 2.560000e+02 : f32
    %70 = vector.broadcast %cst_40 : f32 to vector<1x64xf32>
    %71 = arith.divf %69, %70 : vector<1x64xf32>
    %72 = vector.broadcast %71 : vector<1x64xf32> to vector<256x64xf32>
    %73 = arith.subf %65, %72 : vector<256x64xf32>
    %74 = arith.mulf %73, %73 : vector<256x64xf32>
    %cst_41 = arith.constant dense<0.000000e+00> : vector<64xf32>
    %75 = vector.multi_reduction <add>, %74, %cst_41 [0] : vector<256x64xf32> to vector<64xf32>
    %76 = vector.shape_cast %75 : vector<64xf32> to vector<1x64xf32>
    %cst_42 = arith.constant 2.560000e+02 : f32
    %77 = vector.broadcast %cst_42 : f32 to vector<1x64xf32>
    %78 = arith.divf %76, %77 : vector<1x64xf32>
    %cst_43 = arith.constant 9.99999974E-6 : f32
    %79 = vector.broadcast %cst_43 : f32 to vector<1x64xf32>
    %80 = arith.addf %78, %79 : vector<1x64xf32>
    %81 = math.sqrt %80 : vector<1x64xf32>
    %82 = arith.divf %66, %81 : vector<1x64xf32>
    %83 = vector.broadcast %71 : vector<1x64xf32> to vector<256x64xf32>
    %84 = arith.subf %65, %83 : vector<256x64xf32>
    %85 = vector.broadcast %82 : vector<1x64xf32> to vector<256x64xf32>
    %86 = arith.mulf %84, %85 : vector<256x64xf32>
    %87 = vector.broadcast %67 : vector<1x64xf32> to vector<256x64xf32>
    %88 = arith.addf %86, %87 : vector<256x64xf32>
    %cst_44 = arith.constant 0.000000e+00 : f32
    %89 = vector.broadcast %cst_44 : f32 to vector<256x64xf32>
    %90 = arith.maximumf %88, %89 : vector<256x64xf32>
    %c0_45 = arith.constant 0 : index
    %c0_46 = arith.constant 0 : index
    %91 = vector.load %arg14[%c0_45, %c0_46] : memref<256x64xf32, #tpu.memory_space<vmem>>, vector<256x64xf32>
    tpu.vector_store %arg14[%c0_45, %c0_46], %90 {strides = array<i32>} : memref<256x64xf32, #tpu.memory_space<vmem>>, vector<256x64xf32>,
    return
  }
  func.func @transform_0(%arg0: i32) -> (i32, i32) {
    %c0_i32 = arith.constant 0 : i32
    %c0_i32_0 = arith.constant 0 : i32
    %c0_i32_1 = arith.constant 0 : i32
    return %c0_i32, %c0_i32_0 : i32, i32
  }
  func.func @transform_1(%arg0: i32) -> (i32, i32) {
    %c0_i32 = arith.constant 0 : i32
    %c0_i32_0 = arith.constant 0 : i32
    %c0_i32_1 = arith.constant 0 : i32
    return %c0_i32, %c0_i32_0 : i32, i32
  }
  func.func @transform_2(%arg0: i32) -> (i32, i32) {
    %c0_i32 = arith.constant 0 : i32
    %c0_i32_0 = arith.constant 0 : i32
    %c0_i32_1 = arith.constant 0 : i32
    return %c0_i32, %c0_i32_0 : i32, i32
  }
  func.func @transform_3(%arg0: i32) -> (i32, i32) {
    %c0_i32 = arith.constant 0 : i32
    %c0_i32_0 = arith.constant 0 : i32
    %c0_i32_1 = arith.constant 0 : i32
    return %c0_i32, %c0_i32_0 : i32, i32
  }
  func.func @transform_4(%arg0: i32) -> (i32, i32) {
    %c0_i32 = arith.constant 0 : i32
    %c0_i32_0 = arith.constant 0 : i32
    %c0_i32_1 = arith.constant 0 : i32
    return %c0_i32, %c0_i32_0 : i32, i32
  }
  func.func @transform_5(%arg0: i32) -> (i32, i32) {
    %c0_i32 = arith.constant 0 : i32
    %c0_i32_0 = arith.constant 0 : i32
    %c0_i32_1 = arith.constant 0 : i32
    return %c0_i32, %c0_i32_0 : i32, i32
  }
  func.func @transform_6(%arg0: i32) -> (i32, i32) {
    %c0_i32 = arith.constant 0 : i32
    %c0_i32_0 = arith.constant 0 : i32
    %c0_i32_1 = arith.constant 0 : i32
    return %c0_i32, %c0_i32_0 : i32, i32
  }
  func.func @transform_7(%arg0: i32) -> (i32, i32) {
    %c0_i32 = arith.constant 0 : i32
    %c0_i32_0 = arith.constant 0 : i32
    %c0_i32_1 = arith.constant 0 : i32
    return %c0_i32, %c0_i32_0 : i32, i32
  }
  func.func @transform_8(%arg0: i32) -> (i32, i32) {
    %c0_i32 = arith.constant 0 : i32
    %c0_i32_0 = arith.constant 0 : i32
    %c0_i32_1 = arith.constant 0 : i32
    return %c0_i32, %c0_i32_0 : i32, i32
  }
  func.func @transform_9(%arg0: i32) -> (i32, i32) {
    %c0_i32 = arith.constant 0 : i32
    %c0_i32_0 = arith.constant 0 : i32
    %c0_i32_1 = arith.constant 0 : i32
    return %c0_i32, %c0_i32_0 : i32, i32
  }
  func.func @transform_10(%arg0: i32) -> (i32, i32) {
    %c0_i32 = arith.constant 0 : i32
    %c0_i32_0 = arith.constant 0 : i32
    %c0_i32_1 = arith.constant 0 : i32
    return %c0_i32, %c0_i32_0 : i32, i32
  }
  func.func @transform_11(%arg0: i32) -> (i32, i32) {
    %c0_i32 = arith.constant 0 : i32
    %c0_i32_0 = arith.constant 0 : i32
    %c0_i32_1 = arith.constant 0 : i32
    return %c0_i32, %c0_i32_0 : i32, i32
  }
  func.func @transform_12(%arg0: i32) -> (i32, i32) {
    %c0_i32 = arith.constant 0 : i32
    %c0_i32_0 = arith.constant 0 : i32
    %c0_i32_1 = arith.constant 0 : i32
    return %c0_i32, %c0_i32_0 : i32, i32
  }
  func.func @transform_13(%arg0: i32) -> (i32, i32) {
    %c0_i32 = arith.constant 0 : i32
    %c0_i32_0 = arith.constant 0 : i32
    %c0_i32_1 = arith.constant 0 : i32
    return %c0_i32, %c0_i32_0 : i32, i32
  }
}

module attributes {stable_mosaic.version = 11 : i64} {
  func.func @_fused_mlp_kernel(%arg0: i32, %arg1: memref<32x83xf32, #tpu.memory_space<vmem>>, %arg2: memref<83x32xf32, #tpu.memory_space<vmem>>, %arg3: memref<1x32xf32, #tpu.memory_space<vmem>>, %arg4: memref<1x32xf32, #tpu.memory_space<vmem>>, %arg5: memref<1x32xf32, #tpu.memory_space<vmem>>, %arg6: memref<32x64xf32, #tpu.memory_space<vmem>>, %arg7: memref<1x64xf32, #tpu.memory_space<vmem>>, %arg8: memref<1x64xf32, #tpu.memory_space<vmem>>, %arg9: memref<1x64xf32, #tpu.memory_space<vmem>>, %arg10: memref<64x128xf32, #tpu.memory_space<vmem>>, %arg11: memref<1x128xf32, #tpu.memory_space<vmem>>, %arg12: memref<1x128xf32, #tpu.memory_space<vmem>>, %arg13: memref<1x128xf32, #tpu.memory_space<vmem>>, %arg14: memref<32x128xf32, #tpu.memory_space<vmem>>) attributes {dimension_semantics = [#tpu.dimension_semantics<arbitrary>], iteration_bounds = array<i64: 1>, scalar_prefetch = 0 : i64, scratch_operands = 0 : i64, tpu.core_type = #tpu.core_type<tc>, window_params = [{pipeline_mode = #tpu.pipeline_mode<synchronous>, transform_indices = @transform_0, window_bounds = array<i64: 32, 83>}, {pipeline_mode = #tpu.pipeline_mode<synchronous>, transform_indices = @transform_1, window_bounds = array<i64: 83, 32>}, {pipeline_mode = #tpu.pipeline_mode<synchronous>, transform_indices = @transform_2, window_bounds = array<i64: 1, 32>}, {pipeline_mode = #tpu.pipeline_mode<synchronous>, transform_indices = @transform_3, window_bounds = array<i64: 1, 32>}, {pipeline_mode = #tpu.pipeline_mode<synchronous>, transform_indices = @transform_4, window_bounds = array<i64: 1, 32>}, {pipeline_mode = #tpu.pipeline_mode<synchronous>, transform_indices = @transform_5, window_bounds = array<i64: 32, 64>}, {pipeline_mode = #tpu.pipeline_mode<synchronous>, transform_indices = @transform_6, window_bounds = array<i64: 1, 64>}, {pipeline_mode = #tpu.pipeline_mode<synchronous>, transform_indices = @transform_7, window_bounds = array<i64: 1, 64>}, {pipeline_mode = #tpu.pipeline_mode<synchronous>, transform_indices = @transform_8, window_bounds = array<i64: 1, 64>}, {pipeline_mode = #tpu.pipeline_mode<synchronous>, transform_indices = @transform_9, window_bounds = array<i64: 64, 128>}, {pipeline_mode = #tpu.pipeline_mode<synchronous>, transform_indices = @transform_10, window_bounds = array<i64: 1, 128>}, {pipeline_mode = #tpu.pipeline_mode<synchronous>, transform_indices = @transform_11, window_bounds = array<i64: 1, 128>}, {pipeline_mode = #tpu.pipeline_mode<synchronous>, transform_indices = @transform_12, window_bounds = array<i64: 1, 128>}, {pipeline_mode = #tpu.pipeline_mode<synchronous>, transform_indices = @transform_13, window_bounds = array<i64: 32, 128>}]} {
    %c0 = arith.constant 0 : index
    %c0_0 = arith.constant 0 : index
    %0 = vector.load %arg1[%c0, %c0_0] : memref<32x83xf32, #tpu.memory_space<vmem>>, vector<32x83xf32>
    %c0_1 = arith.constant 0 : index
    %c0_2 = arith.constant 0 : index
    %1 = vector.load %arg2[%c0_1, %c0_2] : memref<83x32xf32, #tpu.memory_space<vmem>>, vector<83x32xf32>
    %c0_3 = arith.constant 0 : index
    %c0_4 = arith.constant 0 : index
    %2 = vector.load %arg3[%c0_3, %c0_4] : memref<1x32xf32, #tpu.memory_space<vmem>>, vector<1x32xf32>
    %cst = arith.constant dense<0.000000e+00> : vector<32x32xf32>
    %3 = tpu.matmul %0, %1, %cst {dimension_numbers = #tpu.dot_dimension_numbers<[1], [0], [0], [1], [0, 0, 1, 1], [], []>} : vector<32x83xf32>, vector<83x32xf32>, vector<32x32xf32> -> vector<32x32xf32>
    %4 = vector.broadcast %2 : vector<1x32xf32> to vector<32x32xf32>
    %5 = arith.addf %3, %4 : vector<32x32xf32>
    %c0_5 = arith.constant 0 : index
    %c0_6 = arith.constant 0 : index
    %6 = vector.load %arg4[%c0_5, %c0_6] : memref<1x32xf32, #tpu.memory_space<vmem>>, vector<1x32xf32>
    %c0_7 = arith.constant 0 : index
    %c0_8 = arith.constant 0 : index
    %7 = vector.load %arg5[%c0_7, %c0_8] : memref<1x32xf32, #tpu.memory_space<vmem>>, vector<1x32xf32>
    %cst_9 = arith.constant dense<0.000000e+00> : vector<32xf32>
    %8 = vector.multi_reduction <add>, %5, %cst_9 [0] : vector<32x32xf32> to vector<32xf32>
    %9 = vector.shape_cast %8 : vector<32xf32> to vector<1x32xf32>
    %cst_10 = arith.constant 3.200000e+01 : f32
    %10 = vector.broadcast %cst_10 : f32 to vector<1x32xf32>
    %11 = arith.divf %9, %10 : vector<1x32xf32>
    %12 = vector.broadcast %11 : vector<1x32xf32> to vector<32x32xf32>
    %13 = arith.subf %5, %12 : vector<32x32xf32>
    %14 = arith.mulf %13, %13 : vector<32x32xf32>
    %cst_11 = arith.constant dense<0.000000e+00> : vector<32xf32>
    %15 = vector.multi_reduction <add>, %14, %cst_11 [0] : vector<32x32xf32> to vector<32xf32>
    %16 = vector.shape_cast %15 : vector<32xf32> to vector<1x32xf32>
    %cst_12 = arith.constant 3.200000e+01 : f32
    %17 = vector.broadcast %cst_12 : f32 to vector<1x32xf32>
    %18 = arith.divf %16, %17 : vector<1x32xf32>
    %cst_13 = arith.constant 9.99999974E-6 : f32
    %19 = vector.broadcast %cst_13 : f32 to vector<1x32xf32>
    %20 = arith.addf %18, %19 : vector<1x32xf32>
    %21 = math.sqrt %20 : vector<1x32xf32>
    %22 = arith.divf %6, %21 : vector<1x32xf32>
    %23 = vector.broadcast %11 : vector<1x32xf32> to vector<32x32xf32>
    %24 = arith.subf %5, %23 : vector<32x32xf32>
    %25 = vector.broadcast %22 : vector<1x32xf32> to vector<32x32xf32>
    %26 = arith.mulf %24, %25 : vector<32x32xf32>
    %27 = vector.broadcast %7 : vector<1x32xf32> to vector<32x32xf32>
    %28 = arith.addf %26, %27 : vector<32x32xf32>
    %cst_14 = arith.constant 0.000000e+00 : f32
    %29 = vector.broadcast %cst_14 : f32 to vector<32x32xf32>
    %30 = arith.maximumf %28, %29 : vector<32x32xf32>
    %c0_15 = arith.constant 0 : index
    %c0_16 = arith.constant 0 : index
    %31 = vector.load %arg6[%c0_15, %c0_16] : memref<32x64xf32, #tpu.memory_space<vmem>>, vector<32x64xf32>
    %c0_17 = arith.constant 0 : index
    %c0_18 = arith.constant 0 : index
    %32 = vector.load %arg7[%c0_17, %c0_18] : memref<1x64xf32, #tpu.memory_space<vmem>>, vector<1x64xf32>
    %cst_19 = arith.constant dense<0.000000e+00> : vector<32x64xf32>
    %33 = tpu.matmul %30, %31, %cst_19 {dimension_numbers = #tpu.dot_dimension_numbers<[1], [0], [0], [1], [0, 0, 1, 1], [], []>} : vector<32x32xf32>, vector<32x64xf32>, vector<32x64xf32> -> vector<32x64xf32>
    %34 = vector.broadcast %32 : vector<1x64xf32> to vector<32x64xf32>
    %35 = arith.addf %33, %34 : vector<32x64xf32>
    %c0_20 = arith.constant 0 : index
    %c0_21 = arith.constant 0 : index
    %36 = vector.load %arg8[%c0_20, %c0_21] : memref<1x64xf32, #tpu.memory_space<vmem>>, vector<1x64xf32>
    %c0_22 = arith.constant 0 : index
    %c0_23 = arith.constant 0 : index
    %37 = vector.load %arg9[%c0_22, %c0_23] : memref<1x64xf32, #tpu.memory_space<vmem>>, vector<1x64xf32>
    %cst_24 = arith.constant dense<0.000000e+00> : vector<64xf32>
    %38 = vector.multi_reduction <add>, %35, %cst_24 [0] : vector<32x64xf32> to vector<64xf32>
    %39 = vector.shape_cast %38 : vector<64xf32> to vector<1x64xf32>
    %cst_25 = arith.constant 3.200000e+01 : f32
    %40 = vector.broadcast %cst_25 : f32 to vector<1x64xf32>
    %41 = arith.divf %39, %40 : vector<1x64xf32>
    %42 = vector.broadcast %41 : vector<1x64xf32> to vector<32x64xf32>
    %43 = arith.subf %35, %42 : vector<32x64xf32>
    %44 = arith.mulf %43, %43 : vector<32x64xf32>
    %cst_26 = arith.constant dense<0.000000e+00> : vector<64xf32>
    %45 = vector.multi_reduction <add>, %44, %cst_26 [0] : vector<32x64xf32> to vector<64xf32>
    %46 = vector.shape_cast %45 : vector<64xf32> to vector<1x64xf32>
    %cst_27 = arith.constant 3.200000e+01 : f32
    %47 = vector.broadcast %cst_27 : f32 to vector<1x64xf32>
    %48 = arith.divf %46, %47 : vector<1x64xf32>
    %cst_28 = arith.constant 9.99999974E-6 : f32
    %49 = vector.broadcast %cst_28 : f32 to vector<1x64xf32>
    %50 = arith.addf %48, %49 : vector<1x64xf32>
    %51 = math.sqrt %50 : vector<1x64xf32>
    %52 = arith.divf %36, %51 : vector<1x64xf32>
    %53 = vector.broadcast %41 : vector<1x64xf32> to vector<32x64xf32>
    %54 = arith.subf %35, %53 : vector<32x64xf32>
    %55 = vector.broadcast %52 : vector<1x64xf32> to vector<32x64xf32>
    %56 = arith.mulf %54, %55 : vector<32x64xf32>
    %57 = vector.broadcast %37 : vector<1x64xf32> to vector<32x64xf32>
    %58 = arith.addf %56, %57 : vector<32x64xf32>
    %cst_29 = arith.constant 0.000000e+00 : f32
    %59 = vector.broadcast %cst_29 : f32 to vector<32x64xf32>
    %60 = arith.maximumf %58, %59 : vector<32x64xf32>
    %c0_30 = arith.constant 0 : index
    %c0_31 = arith.constant 0 : index
    %61 = vector.load %arg10[%c0_30, %c0_31] : memref<64x128xf32, #tpu.memory_space<vmem>>, vector<64x128xf32>
    %c0_32 = arith.constant 0 : index
    %c0_33 = arith.constant 0 : index
    %62 = vector.load %arg11[%c0_32, %c0_33] : memref<1x128xf32, #tpu.memory_space<vmem>>, vector<1x128xf32>
    %cst_34 = arith.constant dense<0.000000e+00> : vector<32x128xf32>
    %63 = tpu.matmul %60, %61, %cst_34 {dimension_numbers = #tpu.dot_dimension_numbers<[1], [0], [0], [1], [0, 0, 1, 1], [], []>} : vector<32x64xf32>, vector<64x128xf32>, vector<32x128xf32> -> vector<32x128xf32>
    %64 = vector.broadcast %62 : vector<1x128xf32> to vector<32x128xf32>
    %65 = arith.addf %63, %64 : vector<32x128xf32>
    %c0_35 = arith.constant 0 : index
    %c0_36 = arith.constant 0 : index
    %66 = vector.load %arg12[%c0_35, %c0_36] : memref<1x128xf32, #tpu.memory_space<vmem>>, vector<1x128xf32>
    %c0_37 = arith.constant 0 : index
    %c0_38 = arith.constant 0 : index
    %67 = vector.load %arg13[%c0_37, %c0_38] : memref<1x128xf32, #tpu.memory_space<vmem>>, vector<1x128xf32>
    %cst_39 = arith.constant dense<0.000000e+00> : vector<128xf32>
    %68 = vector.multi_reduction <add>, %65, %cst_39 [0] : vector<32x128xf32> to vector<128xf32>
    %69 = vector.shape_cast %68 : vector<128xf32> to vector<1x128xf32>
    %cst_40 = arith.constant 3.200000e+01 : f32
    %70 = vector.broadcast %cst_40 : f32 to vector<1x128xf32>
    %71 = arith.divf %69, %70 : vector<1x128xf32>
    %72 = vector.broadcast %71 : vector<1x128xf32> to vector<32x128xf32>
    %73 = arith.subf %65, %72 : vector<32x128xf32>
    %74 = arith.mulf %73, %73 : vector<32x128xf32>
    %cst_41 = arith.constant dense<0.000000e+00> : vector<128xf32>
    %75 = vector.multi_reduction <add>, %74, %cst_41 [0] : vector<32x128xf32> to vector<128xf32>
    %76 = vector.shape_cast %75 : vector<128xf32> to vector<1x128xf32>
    %cst_42 = arith.constant 3.200000e+01 : f32
    %77 = vector.broadcast %cst_42 : f32 to vector<1x128xf32>
    %78 = arith.divf %76, %77 : vector<1x128xf32>
    %cst_43 = arith.constant 9.99999974E-6 : f32
    %79 = vector.broadcast %cst_43 : f32 to vector<1x128xf32>
    %80 = arith.addf %78, %79 : vector<1x128xf32>
    %81 = math.sqrt %80 : vector<1x128xf32>
    %82 = arith.divf %66, %81 : vector<1x128xf32>
    %83 = vector.broadcast %71 : vector<1x128xf32> to vector<32x128xf32>
    %84 = arith.subf %65, %83 : vector<32x128xf32>
    %85 = vector.broadcast %82 : vector<1x128xf32> to vector<32x128xf32>
    %86 = arith.mulf %84, %85 : vector<32x128xf32>
    %87 = vector.broadcast %67 : vector<1x128xf32> to vector<32x128xf32>
    %88 = arith.addf %86, %87 : vector<32x128xf32>
    %cst_44 = arith.constant 0.000000e+00 : f32
    %89 = vector.broadcast %cst_44 : f32 to vector<32x128xf32>
    %90 = arith.maximumf %88, %89 : vector<32x128xf32>
    %c0_45 = arith.constant 0 : index
    %c0_46 = arith.constant 0 : index
    %91 = vector.load %arg14[%c0_45, %c0_46] : memref<32x128xf32, #tpu.memory_space<vmem>>, vector<32x128xf32>
    tpu.vector_store %arg14[%c0_45, %c0_46], %90 {strides = array<i32>} : memref<32x128xf32, #tpu.memory_space<vmem>>, vector<32x128xf32>,
    return
  }
  func.func @transform_0(%arg0: i32) -> (i32, i32) {
    %c0_i32 = arith.constant 0 : i32
    %c0_i32_0 = arith.constant 0 : i32
    %c0_i32_1 = arith.constant 0 : i32
    return %c0_i32, %c0_i32_0 : i32, i32
  }
  func.func @transform_1(%arg0: i32) -> (i32, i32) {
    %c0_i32 = arith.constant 0 : i32
    %c0_i32_0 = arith.constant 0 : i32
    %c0_i32_1 = arith.constant 0 : i32
    return %c0_i32, %c0_i32_0 : i32, i32
  }
  func.func @transform_2(%arg0: i32) -> (i32, i32) {
    %c0_i32 = arith.constant 0 : i32
    %c0_i32_0 = arith.constant 0 : i32
    %c0_i32_1 = arith.constant 0 : i32
    return %c0_i32, %c0_i32_0 : i32, i32
  }
  func.func @transform_3(%arg0: i32) -> (i32, i32) {
    %c0_i32 = arith.constant 0 : i32
    %c0_i32_0 = arith.constant 0 : i32
    %c0_i32_1 = arith.constant 0 : i32
    return %c0_i32, %c0_i32_0 : i32, i32
  }
  func.func @transform_4(%arg0: i32) -> (i32, i32) {
    %c0_i32 = arith.constant 0 : i32
    %c0_i32_0 = arith.constant 0 : i32
    %c0_i32_1 = arith.constant 0 : i32
    return %c0_i32, %c0_i32_0 : i32, i32
  }
  func.func @transform_5(%arg0: i32) -> (i32, i32) {
    %c0_i32 = arith.constant 0 : i32
    %c0_i32_0 = arith.constant 0 : i32
    %c0_i32_1 = arith.constant 0 : i32
    return %c0_i32, %c0_i32_0 : i32, i32
  }
  func.func @transform_6(%arg0: i32) -> (i32, i32) {
    %c0_i32 = arith.constant 0 : i32
    %c0_i32_0 = arith.constant 0 : i32
    %c0_i32_1 = arith.constant 0 : i32
    return %c0_i32, %c0_i32_0 : i32, i32
  }
  func.func @transform_7(%arg0: i32) -> (i32, i32) {
    %c0_i32 = arith.constant 0 : i32
    %c0_i32_0 = arith.constant 0 : i32
    %c0_i32_1 = arith.constant 0 : i32
    return %c0_i32, %c0_i32_0 : i32, i32
  }
  func.func @transform_8(%arg0: i32) -> (i32, i32) {
    %c0_i32 = arith.constant 0 : i32
    %c0_i32_0 = arith.constant 0 : i32
    %c0_i32_1 = arith.constant 0 : i32
    return %c0_i32, %c0_i32_0 : i32, i32
  }
  func.func @transform_9(%arg0: i32) -> (i32, i32) {
    %c0_i32 = arith.constant 0 : i32
    %c0_i32_0 = arith.constant 0 : i32
    %c0_i32_1 = arith.constant 0 : i32
    return %c0_i32, %c0_i32_0 : i32, i32
  }
  func.func @transform_10(%arg0: i32) -> (i32, i32) {
    %c0_i32 = arith.constant 0 : i32
    %c0_i32_0 = arith.constant 0 : i32
    %c0_i32_1 = arith.constant 0 : i32
    return %c0_i32, %c0_i32_0 : i32, i32
  }
  func.func @transform_11(%arg0: i32) -> (i32, i32) {
    %c0_i32 = arith.constant 0 : i32
    %c0_i32_0 = arith.constant 0 : i32
    %c0_i32_1 = arith.constant 0 : i32
    return %c0_i32, %c0_i32_0 : i32, i32
  }
  func.func @transform_12(%arg0: i32) -> (i32, i32) {
    %c0_i32 = arith.constant 0 : i32
    %c0_i32_0 = arith.constant 0 : i32
    %c0_i32_1 = arith.constant 0 : i32
    return %c0_i32, %c0_i32_0 : i32, i32
  }
  func.func @transform_13(%arg0: i32) -> (i32, i32) {
    %c0_i32 = arith.constant 0 : i32
    %c0_i32_0 = arith.constant 0 : i32
    %c0_i32_1 = arith.constant 0 : i32
    return %c0_i32, %c0_i32_0 : i32, i32
  }
}

module attributes {stable_mosaic.version = 11 : i64} {
  func.func @_fused_mlp_kernel(%arg0: i32, %arg1: memref<32x208xf32, #tpu.memory_space<vmem>>, %arg2: memref<208x64xf32, #tpu.memory_space<vmem>>, %arg3: memref<1x64xf32, #tpu.memory_space<vmem>>, %arg4: memref<1x64xf32, #tpu.memory_space<vmem>>, %arg5: memref<1x64xf32, #tpu.memory_space<vmem>>, %arg6: memref<64x64xf32, #tpu.memory_space<vmem>>, %arg7: memref<1x64xf32, #tpu.memory_space<vmem>>, %arg8: memref<1x64xf32, #tpu.memory_space<vmem>>, %arg9: memref<1x64xf32, #tpu.memory_space<vmem>>, %arg10: memref<32x64xf32, #tpu.memory_space<vmem>>) attributes {dimension_semantics = [#tpu.dimension_semantics<arbitrary>], iteration_bounds = array<i64: 1>, scalar_prefetch = 0 : i64, scratch_operands = 0 : i64, tpu.core_type = #tpu.core_type<tc>, window_params = [{pipeline_mode = #tpu.pipeline_mode<synchronous>, transform_indices = @transform_0, window_bounds = array<i64: 32, 208>}, {pipeline_mode = #tpu.pipeline_mode<synchronous>, transform_indices = @transform_1, window_bounds = array<i64: 208, 64>}, {pipeline_mode = #tpu.pipeline_mode<synchronous>, transform_indices = @transform_2, window_bounds = array<i64: 1, 64>}, {pipeline_mode = #tpu.pipeline_mode<synchronous>, transform_indices = @transform_3, window_bounds = array<i64: 1, 64>}, {pipeline_mode = #tpu.pipeline_mode<synchronous>, transform_indices = @transform_4, window_bounds = array<i64: 1, 64>}, {pipeline_mode = #tpu.pipeline_mode<synchronous>, transform_indices = @transform_5, window_bounds = array<i64: 64, 64>}, {pipeline_mode = #tpu.pipeline_mode<synchronous>, transform_indices = @transform_6, window_bounds = array<i64: 1, 64>}, {pipeline_mode = #tpu.pipeline_mode<synchronous>, transform_indices = @transform_7, window_bounds = array<i64: 1, 64>}, {pipeline_mode = #tpu.pipeline_mode<synchronous>, transform_indices = @transform_8, window_bounds = array<i64: 1, 64>}, {pipeline_mode = #tpu.pipeline_mode<synchronous>, transform_indices = @transform_9, window_bounds = array<i64: 32, 64>}]} {
    %c0 = arith.constant 0 : index
    %c0_0 = arith.constant 0 : index
    %0 = vector.load %arg1[%c0, %c0_0] : memref<32x208xf32, #tpu.memory_space<vmem>>, vector<32x208xf32>
    %c0_1 = arith.constant 0 : index
    %c0_2 = arith.constant 0 : index
    %1 = vector.load %arg2[%c0_1, %c0_2] : memref<208x64xf32, #tpu.memory_space<vmem>>, vector<208x64xf32>
    %c0_3 = arith.constant 0 : index
    %c0_4 = arith.constant 0 : index
    %2 = vector.load %arg3[%c0_3, %c0_4] : memref<1x64xf32, #tpu.memory_space<vmem>>, vector<1x64xf32>
    %cst = arith.constant dense<0.000000e+00> : vector<32x64xf32>
    %3 = tpu.matmul %0, %1, %cst {dimension_numbers = #tpu.dot_dimension_numbers<[1], [0], [0], [1], [0, 0, 1, 1], [], []>} : vector<32x208xf32>, vector<208x64xf32>, vector<32x64xf32> -> vector<32x64xf32>
    %4 = vector.broadcast %2 : vector<1x64xf32> to vector<32x64xf32>
    %5 = arith.addf %3, %4 : vector<32x64xf32>
    %c0_5 = arith.constant 0 : index
    %c0_6 = arith.constant 0 : index
    %6 = vector.load %arg4[%c0_5, %c0_6] : memref<1x64xf32, #tpu.memory_space<vmem>>, vector<1x64xf32>
    %c0_7 = arith.constant 0 : index
    %c0_8 = arith.constant 0 : index
    %7 = vector.load %arg5[%c0_7, %c0_8] : memref<1x64xf32, #tpu.memory_space<vmem>>, vector<1x64xf32>
    %cst_9 = arith.constant dense<0.000000e+00> : vector<64xf32>
    %8 = vector.multi_reduction <add>, %5, %cst_9 [0] : vector<32x64xf32> to vector<64xf32>
    %9 = vector.shape_cast %8 : vector<64xf32> to vector<1x64xf32>
    %cst_10 = arith.constant 3.200000e+01 : f32
    %10 = vector.broadcast %cst_10 : f32 to vector<1x64xf32>
    %11 = arith.divf %9, %10 : vector<1x64xf32>
    %12 = vector.broadcast %11 : vector<1x64xf32> to vector<32x64xf32>
    %13 = arith.subf %5, %12 : vector<32x64xf32>
    %14 = arith.mulf %13, %13 : vector<32x64xf32>
    %cst_11 = arith.constant dense<0.000000e+00> : vector<64xf32>
    %15 = vector.multi_reduction <add>, %14, %cst_11 [0] : vector<32x64xf32> to vector<64xf32>
    %16 = vector.shape_cast %15 : vector<64xf32> to vector<1x64xf32>
    %cst_12 = arith.constant 3.200000e+01 : f32
    %17 = vector.broadcast %cst_12 : f32 to vector<1x64xf32>
    %18 = arith.divf %16, %17 : vector<1x64xf32>
    %cst_13 = arith.constant 9.99999974E-6 : f32
    %19 = vector.broadcast %cst_13 : f32 to vector<1x64xf32>
    %20 = arith.addf %18, %19 : vector<1x64xf32>
    %21 = math.sqrt %20 : vector<1x64xf32>
    %22 = arith.divf %6, %21 : vector<1x64xf32>
    %23 = vector.broadcast %11 : vector<1x64xf32> to vector<32x64xf32>
    %24 = arith.subf %5, %23 : vector<32x64xf32>
    %25 = vector.broadcast %22 : vector<1x64xf32> to vector<32x64xf32>
    %26 = arith.mulf %24, %25 : vector<32x64xf32>
    %27 = vector.broadcast %7 : vector<1x64xf32> to vector<32x64xf32>
    %28 = arith.addf %26, %27 : vector<32x64xf32>
    %cst_14 = arith.constant 0.000000e+00 : f32
    %29 = vector.broadcast %cst_14 : f32 to vector<32x64xf32>
    %30 = arith.maximumf %28, %29 : vector<32x64xf32>
    %c0_15 = arith.constant 0 : index
    %c0_16 = arith.constant 0 : index
    %31 = vector.load %arg6[%c0_15, %c0_16] : memref<64x64xf32, #tpu.memory_space<vmem>>, vector<64x64xf32>
    %c0_17 = arith.constant 0 : index
    %c0_18 = arith.constant 0 : index
    %32 = vector.load %arg7[%c0_17, %c0_18] : memref<1x64xf32, #tpu.memory_space<vmem>>, vector<1x64xf32>
    %cst_19 = arith.constant dense<0.000000e+00> : vector<32x64xf32>
    %33 = tpu.matmul %30, %31, %cst_19 {dimension_numbers = #tpu.dot_dimension_numbers<[1], [0], [0], [1], [0, 0, 1, 1], [], []>} : vector<32x64xf32>, vector<64x64xf32>, vector<32x64xf32> -> vector<32x64xf32>
    %34 = vector.broadcast %32 : vector<1x64xf32> to vector<32x64xf32>
    %35 = arith.addf %33, %34 : vector<32x64xf32>
    %c0_20 = arith.constant 0 : index
    %c0_21 = arith.constant 0 : index
    %36 = vector.load %arg8[%c0_20, %c0_21] : memref<1x64xf32, #tpu.memory_space<vmem>>, vector<1x64xf32>
    %c0_22 = arith.constant 0 : index
    %c0_23 = arith.constant 0 : index
    %37 = vector.load %arg9[%c0_22, %c0_23] : memref<1x64xf32, #tpu.memory_space<vmem>>, vector<1x64xf32>
    %cst_24 = arith.constant dense<0.000000e+00> : vector<64xf32>
    %38 = vector.multi_reduction <add>, %35, %cst_24 [0] : vector<32x64xf32> to vector<64xf32>
    %39 = vector.shape_cast %38 : vector<64xf32> to vector<1x64xf32>
    %cst_25 = arith.constant 3.200000e+01 : f32
    %40 = vector.broadcast %cst_25 : f32 to vector<1x64xf32>
    %41 = arith.divf %39, %40 : vector<1x64xf32>
    %42 = vector.broadcast %41 : vector<1x64xf32> to vector<32x64xf32>
    %43 = arith.subf %35, %42 : vector<32x64xf32>
    %44 = arith.mulf %43, %43 : vector<32x64xf32>
    %cst_26 = arith.constant dense<0.000000e+00> : vector<64xf32>
    %45 = vector.multi_reduction <add>, %44, %cst_26 [0] : vector<32x64xf32> to vector<64xf32>
    %46 = vector.shape_cast %45 : vector<64xf32> to vector<1x64xf32>
    %cst_27 = arith.constant 3.200000e+01 : f32
    %47 = vector.broadcast %cst_27 : f32 to vector<1x64xf32>
    %48 = arith.divf %46, %47 : vector<1x64xf32>
    %cst_28 = arith.constant 9.99999974E-6 : f32
    %49 = vector.broadcast %cst_28 : f32 to vector<1x64xf32>
    %50 = arith.addf %48, %49 : vector<1x64xf32>
    %51 = math.sqrt %50 : vector<1x64xf32>
    %52 = arith.divf %36, %51 : vector<1x64xf32>
    %53 = vector.broadcast %41 : vector<1x64xf32> to vector<32x64xf32>
    %54 = arith.subf %35, %53 : vector<32x64xf32>
    %55 = vector.broadcast %52 : vector<1x64xf32> to vector<32x64xf32>
    %56 = arith.mulf %54, %55 : vector<32x64xf32>
    %57 = vector.broadcast %37 : vector<1x64xf32> to vector<32x64xf32>
    %58 = arith.addf %56, %57 : vector<32x64xf32>
    %cst_29 = arith.constant 0.000000e+00 : f32
    %59 = vector.broadcast %cst_29 : f32 to vector<32x64xf32>
    %60 = arith.maximumf %58, %59 : vector<32x64xf32>
    %c0_30 = arith.constant 0 : index
    %c0_31 = arith.constant 0 : index
    %61 = vector.load %arg10[%c0_30, %c0_31] : memref<32x64xf32, #tpu.memory_space<vmem>>, vector<32x64xf32>
    tpu.vector_store %arg10[%c0_30, %c0_31], %60 {strides = array<i32>} : memref<32x64xf32, #tpu.memory_space<vmem>>, vector<32x64xf32>,
    return
  }
  func.func @transform_0(%arg0: i32) -> (i32, i32) {
    %c0_i32 = arith.constant 0 : i32
    %c0_i32_0 = arith.constant 0 : i32
    %c0_i32_1 = arith.constant 0 : i32
    return %c0_i32, %c0_i32_0 : i32, i32
  }
  func.func @transform_1(%arg0: i32) -> (i32, i32) {
    %c0_i32 = arith.constant 0 : i32
    %c0_i32_0 = arith.constant 0 : i32
    %c0_i32_1 = arith.constant 0 : i32
    return %c0_i32, %c0_i32_0 : i32, i32
  }
  func.func @transform_2(%arg0: i32) -> (i32, i32) {
    %c0_i32 = arith.constant 0 : i32
    %c0_i32_0 = arith.constant 0 : i32
    %c0_i32_1 = arith.constant 0 : i32
    return %c0_i32, %c0_i32_0 : i32, i32
  }
  func.func @transform_3(%arg0: i32) -> (i32, i32) {
    %c0_i32 = arith.constant 0 : i32
    %c0_i32_0 = arith.constant 0 : i32
    %c0_i32_1 = arith.constant 0 : i32
    return %c0_i32, %c0_i32_0 : i32, i32
  }
  func.func @transform_4(%arg0: i32) -> (i32, i32) {
    %c0_i32 = arith.constant 0 : i32
    %c0_i32_0 = arith.constant 0 : i32
    %c0_i32_1 = arith.constant 0 : i32
    return %c0_i32, %c0_i32_0 : i32, i32
  }
  func.func @transform_5(%arg0: i32) -> (i32, i32) {
    %c0_i32 = arith.constant 0 : i32
    %c0_i32_0 = arith.constant 0 : i32
    %c0_i32_1 = arith.constant 0 : i32
    return %c0_i32, %c0_i32_0 : i32, i32
  }
  func.func @transform_6(%arg0: i32) -> (i32, i32) {
    %c0_i32 = arith.constant 0 : i32
    %c0_i32_0 = arith.constant 0 : i32
    %c0_i32_1 = arith.constant 0 : i32
    return %c0_i32, %c0_i32_0 : i32, i32
  }
  func.func @transform_7(%arg0: i32) -> (i32, i32) {
    %c0_i32 = arith.constant 0 : i32
    %c0_i32_0 = arith.constant 0 : i32
    %c0_i32_1 = arith.constant 0 : i32
    return %c0_i32, %c0_i32_0 : i32, i32
  }
  func.func @transform_8(%arg0: i32) -> (i32, i32) {
    %c0_i32 = arith.constant 0 : i32
    %c0_i32_0 = arith.constant 0 : i32
    %c0_i32_1 = arith.constant 0 : i32
    return %c0_i32, %c0_i32_0 : i32, i32
  }
  func.func @transform_9(%arg0: i32) -> (i32, i32) {
    %c0_i32 = arith.constant 0 : i32
    %c0_i32_0 = arith.constant 0 : i32
    %c0_i32_1 = arith.constant 0 : i32
    return %c0_i32, %c0_i32_0 : i32, i32
  }
}

module attributes {stable_mosaic.version = 11 : i64} {
  func.func @_fused_mlp_kernel(%arg0: i32, %arg1: memref<128x64xf32, #tpu.memory_space<vmem>>, %arg2: memref<64x64xf32, #tpu.memory_space<vmem>>, %arg3: memref<1x64xf32, #tpu.memory_space<vmem>>, %arg4: memref<1x64xf32, #tpu.memory_space<vmem>>, %arg5: memref<1x64xf32, #tpu.memory_space<vmem>>, %arg6: memref<64x32xf32, #tpu.memory_space<vmem>>, %arg7: memref<1x32xf32, #tpu.memory_space<vmem>>, %arg8: memref<1x32xf32, #tpu.memory_space<vmem>>, %arg9: memref<1x32xf32, #tpu.memory_space<vmem>>, %arg10: memref<32x32xf32, #tpu.memory_space<vmem>>, %arg11: memref<1x32xf32, #tpu.memory_space<vmem>>, %arg12: memref<1x32xf32, #tpu.memory_space<vmem>>, %arg13: memref<1x32xf32, #tpu.memory_space<vmem>>, %arg14: memref<32x1xf32, #tpu.memory_space<vmem>>, %arg15: memref<1x1xf32, #tpu.memory_space<vmem>>, %arg16: memref<128x1xf32, #tpu.memory_space<vmem>>) attributes {dimension_semantics = [#tpu.dimension_semantics<arbitrary>], iteration_bounds = array<i64: 1>, scalar_prefetch = 0 : i64, scratch_operands = 0 : i64, tpu.core_type = #tpu.core_type<tc>, window_params = [{pipeline_mode = #tpu.pipeline_mode<synchronous>, transform_indices = @transform_0, window_bounds = array<i64: 128, 64>}, {pipeline_mode = #tpu.pipeline_mode<synchronous>, transform_indices = @transform_1, window_bounds = array<i64: 64, 64>}, {pipeline_mode = #tpu.pipeline_mode<synchronous>, transform_indices = @transform_2, window_bounds = array<i64: 1, 64>}, {pipeline_mode = #tpu.pipeline_mode<synchronous>, transform_indices = @transform_3, window_bounds = array<i64: 1, 64>}, {pipeline_mode = #tpu.pipeline_mode<synchronous>, transform_indices = @transform_4, window_bounds = array<i64: 1, 64>}, {pipeline_mode = #tpu.pipeline_mode<synchronous>, transform_indices = @transform_5, window_bounds = array<i64: 64, 32>}, {pipeline_mode = #tpu.pipeline_mode<synchronous>, transform_indices = @transform_6, window_bounds = array<i64: 1, 32>}, {pipeline_mode = #tpu.pipeline_mode<synchronous>, transform_indices = @transform_7, window_bounds = array<i64: 1, 32>}, {pipeline_mode = #tpu.pipeline_mode<synchronous>, transform_indices = @transform_8, window_bounds = array<i64: 1, 32>}, {pipeline_mode = #tpu.pipeline_mode<synchronous>, transform_indices = @transform_9, window_bounds = array<i64: 32, 32>}, {pipeline_mode = #tpu.pipeline_mode<synchronous>, transform_indices = @transform_10, window_bounds = array<i64: 1, 32>}, {pipeline_mode = #tpu.pipeline_mode<synchronous>, transform_indices = @transform_11, window_bounds = array<i64: 1, 32>}, {pipeline_mode = #tpu.pipeline_mode<synchronous>, transform_indices = @transform_12, window_bounds = array<i64: 1, 32>}, {pipeline_mode = #tpu.pipeline_mode<synchronous>, transform_indices = @transform_13, window_bounds = array<i64: 32, 1>}, {pipeline_mode = #tpu.pipeline_mode<synchronous>, transform_indices = @transform_14, window_bounds = array<i64: 1, 1>}, {pipeline_mode = #tpu.pipeline_mode<synchronous>, transform_indices = @transform_15, window_bounds = array<i64: 128, 1>}]} {
    %c0 = arith.constant 0 : index
    %c0_0 = arith.constant 0 : index
    %0 = vector.load %arg1[%c0, %c0_0] : memref<128x64xf32, #tpu.memory_space<vmem>>, vector<128x64xf32>
    %c0_1 = arith.constant 0 : index
    %c0_2 = arith.constant 0 : index
    %1 = vector.load %arg2[%c0_1, %c0_2] : memref<64x64xf32, #tpu.memory_space<vmem>>, vector<64x64xf32>
    %c0_3 = arith.constant 0 : index
    %c0_4 = arith.constant 0 : index
    %2 = vector.load %arg3[%c0_3, %c0_4] : memref<1x64xf32, #tpu.memory_space<vmem>>, vector<1x64xf32>
    %cst = arith.constant dense<0.000000e+00> : vector<128x64xf32>
    %3 = tpu.matmul %0, %1, %cst {dimension_numbers = #tpu.dot_dimension_numbers<[1], [0], [0], [1], [0, 0, 1, 1], [], []>} : vector<128x64xf32>, vector<64x64xf32>, vector<128x64xf32> -> vector<128x64xf32>
    %4 = vector.broadcast %2 : vector<1x64xf32> to vector<128x64xf32>
    %5 = arith.addf %3, %4 : vector<128x64xf32>
    %c0_5 = arith.constant 0 : index
    %c0_6 = arith.constant 0 : index
    %6 = vector.load %arg4[%c0_5, %c0_6] : memref<1x64xf32, #tpu.memory_space<vmem>>, vector<1x64xf32>
    %c0_7 = arith.constant 0 : index
    %c0_8 = arith.constant 0 : index
    %7 = vector.load %arg5[%c0_7, %c0_8] : memref<1x64xf32, #tpu.memory_space<vmem>>, vector<1x64xf32>
    %cst_9 = arith.constant dense<0.000000e+00> : vector<64xf32>
    %8 = vector.multi_reduction <add>, %5, %cst_9 [0] : vector<128x64xf32> to vector<64xf32>
    %9 = vector.shape_cast %8 : vector<64xf32> to vector<1x64xf32>
    %cst_10 = arith.constant 1.280000e+02 : f32
    %10 = vector.broadcast %cst_10 : f32 to vector<1x64xf32>
    %11 = arith.divf %9, %10 : vector<1x64xf32>
    %12 = vector.broadcast %11 : vector<1x64xf32> to vector<128x64xf32>
    %13 = arith.subf %5, %12 : vector<128x64xf32>
    %14 = arith.mulf %13, %13 : vector<128x64xf32>
    %cst_11 = arith.constant dense<0.000000e+00> : vector<64xf32>
    %15 = vector.multi_reduction <add>, %14, %cst_11 [0] : vector<128x64xf32> to vector<64xf32>
    %16 = vector.shape_cast %15 : vector<64xf32> to vector<1x64xf32>
    %cst_12 = arith.constant 1.280000e+02 : f32
    %17 = vector.broadcast %cst_12 : f32 to vector<1x64xf32>
    %18 = arith.divf %16, %17 : vector<1x64xf32>
    %cst_13 = arith.constant 9.99999974E-6 : f32
    %19 = vector.broadcast %cst_13 : f32 to vector<1x64xf32>
    %20 = arith.addf %18, %19 : vector<1x64xf32>
    %21 = math.sqrt %20 : vector<1x64xf32>
    %22 = arith.divf %6, %21 : vector<1x64xf32>
    %23 = vector.broadcast %11 : vector<1x64xf32> to vector<128x64xf32>
    %24 = arith.subf %5, %23 : vector<128x64xf32>
    %25 = vector.broadcast %22 : vector<1x64xf32> to vector<128x64xf32>
    %26 = arith.mulf %24, %25 : vector<128x64xf32>
    %27 = vector.broadcast %7 : vector<1x64xf32> to vector<128x64xf32>
    %28 = arith.addf %26, %27 : vector<128x64xf32>
    %cst_14 = arith.constant 0.000000e+00 : f32
    %29 = vector.broadcast %cst_14 : f32 to vector<128x64xf32>
    %30 = arith.maximumf %28, %29 : vector<128x64xf32>
    %c0_15 = arith.constant 0 : index
    %c0_16 = arith.constant 0 : index
    %31 = vector.load %arg6[%c0_15, %c0_16] : memref<64x32xf32, #tpu.memory_space<vmem>>, vector<64x32xf32>
    %c0_17 = arith.constant 0 : index
    %c0_18 = arith.constant 0 : index
    %32 = vector.load %arg7[%c0_17, %c0_18] : memref<1x32xf32, #tpu.memory_space<vmem>>, vector<1x32xf32>
    %cst_19 = arith.constant dense<0.000000e+00> : vector<128x32xf32>
    %33 = tpu.matmul %30, %31, %cst_19 {dimension_numbers = #tpu.dot_dimension_numbers<[1], [0], [0], [1], [0, 0, 1, 1], [], []>} : vector<128x64xf32>, vector<64x32xf32>, vector<128x32xf32> -> vector<128x32xf32>
    %34 = vector.broadcast %32 : vector<1x32xf32> to vector<128x32xf32>
    %35 = arith.addf %33, %34 : vector<128x32xf32>
    %c0_20 = arith.constant 0 : index
    %c0_21 = arith.constant 0 : index
    %36 = vector.load %arg8[%c0_20, %c0_21] : memref<1x32xf32, #tpu.memory_space<vmem>>, vector<1x32xf32>
    %c0_22 = arith.constant 0 : index
    %c0_23 = arith.constant 0 : index
    %37 = vector.load %arg9[%c0_22, %c0_23] : memref<1x32xf32, #tpu.memory_space<vmem>>, vector<1x32xf32>
    %cst_24 = arith.constant dense<0.000000e+00> : vector<32xf32>
    %38 = vector.multi_reduction <add>, %35, %cst_24 [0] : vector<128x32xf32> to vector<32xf32>
    %39 = vector.shape_cast %38 : vector<32xf32> to vector<1x32xf32>
    %cst_25 = arith.constant 1.280000e+02 : f32
    %40 = vector.broadcast %cst_25 : f32 to vector<1x32xf32>
    %41 = arith.divf %39, %40 : vector<1x32xf32>
    %42 = vector.broadcast %41 : vector<1x32xf32> to vector<128x32xf32>
    %43 = arith.subf %35, %42 : vector<128x32xf32>
    %44 = arith.mulf %43, %43 : vector<128x32xf32>
    %cst_26 = arith.constant dense<0.000000e+00> : vector<32xf32>
    %45 = vector.multi_reduction <add>, %44, %cst_26 [0] : vector<128x32xf32> to vector<32xf32>
    %46 = vector.shape_cast %45 : vector<32xf32> to vector<1x32xf32>
    %cst_27 = arith.constant 1.280000e+02 : f32
    %47 = vector.broadcast %cst_27 : f32 to vector<1x32xf32>
    %48 = arith.divf %46, %47 : vector<1x32xf32>
    %cst_28 = arith.constant 9.99999974E-6 : f32
    %49 = vector.broadcast %cst_28 : f32 to vector<1x32xf32>
    %50 = arith.addf %48, %49 : vector<1x32xf32>
    %51 = math.sqrt %50 : vector<1x32xf32>
    %52 = arith.divf %36, %51 : vector<1x32xf32>
    %53 = vector.broadcast %41 : vector<1x32xf32> to vector<128x32xf32>
    %54 = arith.subf %35, %53 : vector<128x32xf32>
    %55 = vector.broadcast %52 : vector<1x32xf32> to vector<128x32xf32>
    %56 = arith.mulf %54, %55 : vector<128x32xf32>
    %57 = vector.broadcast %37 : vector<1x32xf32> to vector<128x32xf32>
    %58 = arith.addf %56, %57 : vector<128x32xf32>
    %cst_29 = arith.constant 0.000000e+00 : f32
    %59 = vector.broadcast %cst_29 : f32 to vector<128x32xf32>
    %60 = arith.maximumf %58, %59 : vector<128x32xf32>
    %c0_30 = arith.constant 0 : index
    %c0_31 = arith.constant 0 : index
    %61 = vector.load %arg10[%c0_30, %c0_31] : memref<32x32xf32, #tpu.memory_space<vmem>>, vector<32x32xf32>
    %c0_32 = arith.constant 0 : index
    %c0_33 = arith.constant 0 : index
    %62 = vector.load %arg11[%c0_32, %c0_33] : memref<1x32xf32, #tpu.memory_space<vmem>>, vector<1x32xf32>
    %cst_34 = arith.constant dense<0.000000e+00> : vector<128x32xf32>
    %63 = tpu.matmul %60, %61, %cst_34 {dimension_numbers = #tpu.dot_dimension_numbers<[1], [0], [0], [1], [0, 0, 1, 1], [], []>} : vector<128x32xf32>, vector<32x32xf32>, vector<128x32xf32> -> vector<128x32xf32>
    %64 = vector.broadcast %62 : vector<1x32xf32> to vector<128x32xf32>
    %65 = arith.addf %63, %64 : vector<128x32xf32>
    %c0_35 = arith.constant 0 : index
    %c0_36 = arith.constant 0 : index
    %66 = vector.load %arg12[%c0_35, %c0_36] : memref<1x32xf32, #tpu.memory_space<vmem>>, vector<1x32xf32>
    %c0_37 = arith.constant 0 : index
    %c0_38 = arith.constant 0 : index
    %67 = vector.load %arg13[%c0_37, %c0_38] : memref<1x32xf32, #tpu.memory_space<vmem>>, vector<1x32xf32>
    %cst_39 = arith.constant dense<0.000000e+00> : vector<32xf32>
    %68 = vector.multi_reduction <add>, %65, %cst_39 [0] : vector<128x32xf32> to vector<32xf32>
    %69 = vector.shape_cast %68 : vector<32xf32> to vector<1x32xf32>
    %cst_40 = arith.constant 1.280000e+02 : f32
    %70 = vector.broadcast %cst_40 : f32 to vector<1x32xf32>
    %71 = arith.divf %69, %70 : vector<1x32xf32>
    %72 = vector.broadcast %71 : vector<1x32xf32> to vector<128x32xf32>
    %73 = arith.subf %65, %72 : vector<128x32xf32>
    %74 = arith.mulf %73, %73 : vector<128x32xf32>
    %cst_41 = arith.constant dense<0.000000e+00> : vector<32xf32>
    %75 = vector.multi_reduction <add>, %74, %cst_41 [0] : vector<128x32xf32> to vector<32xf32>
    %76 = vector.shape_cast %75 : vector<32xf32> to vector<1x32xf32>
    %cst_42 = arith.constant 1.280000e+02 : f32
    %77 = vector.broadcast %cst_42 : f32 to vector<1x32xf32>
    %78 = arith.divf %76, %77 : vector<1x32xf32>
    %cst_43 = arith.constant 9.99999974E-6 : f32
    %79 = vector.broadcast %cst_43 : f32 to vector<1x32xf32>
    %80 = arith.addf %78, %79 : vector<1x32xf32>
    %81 = math.sqrt %80 : vector<1x32xf32>
    %82 = arith.divf %66, %81 : vector<1x32xf32>
    %83 = vector.broadcast %71 : vector<1x32xf32> to vector<128x32xf32>
    %84 = arith.subf %65, %83 : vector<128x32xf32>
    %85 = vector.broadcast %82 : vector<1x32xf32> to vector<128x32xf32>
    %86 = arith.mulf %84, %85 : vector<128x32xf32>
    %87 = vector.broadcast %67 : vector<1x32xf32> to vector<128x32xf32>
    %88 = arith.addf %86, %87 : vector<128x32xf32>
    %cst_44 = arith.constant 0.000000e+00 : f32
    %89 = vector.broadcast %cst_44 : f32 to vector<128x32xf32>
    %90 = arith.maximumf %88, %89 : vector<128x32xf32>
    %c0_45 = arith.constant 0 : index
    %c0_46 = arith.constant 0 : index
    %91 = vector.load %arg14[%c0_45, %c0_46] : memref<32x1xf32, #tpu.memory_space<vmem>>, vector<32x1xf32>
    %c0_47 = arith.constant 0 : index
    %c0_48 = arith.constant 0 : index
    %92 = vector.load %arg15[%c0_47, %c0_48] : memref<1x1xf32, #tpu.memory_space<vmem>>, vector<1x1xf32>
    %cst_49 = arith.constant dense<0.000000e+00> : vector<128x1xf32>
    %93 = tpu.matmul %90, %91, %cst_49 {dimension_numbers = #tpu.dot_dimension_numbers<[1], [0], [0], [1], [0, 0, 1, 1], [], []>} : vector<128x32xf32>, vector<32x1xf32>, vector<128x1xf32> -> vector<128x1xf32>
    %94 = vector.broadcast %92 : vector<1x1xf32> to vector<128x1xf32>
    %95 = arith.addf %93, %94 : vector<128x1xf32>
    %96 = arith.negf %95 : vector<128x1xf32>
    %97 = math.exp %96 : vector<128x1xf32>
    %cst_50 = arith.constant 1.000000e+00 : f32
    %98 = vector.broadcast %cst_50 : f32 to vector<128x1xf32>
    %99 = arith.addf %98, %97 : vector<128x1xf32>
    %100 = arith.divf %98, %99 : vector<128x1xf32>
    %c0_51 = arith.constant 0 : index
    %c0_52 = arith.constant 0 : index
    %101 = vector.load %arg16[%c0_51, %c0_52] : memref<128x1xf32, #tpu.memory_space<vmem>>, vector<128x1xf32>
    tpu.vector_store %arg16[%c0_51, %c0_52], %100 {strides = array<i32>} : memref<128x1xf32, #tpu.memory_space<vmem>>, vector<128x1xf32>,
    return
  }
  func.func @transform_0(%arg0: i32) -> (i32, i32) {
    %c0_i32 = arith.constant 0 : i32
    %c0_i32_0 = arith.constant 0 : i32
    %c0_i32_1 = arith.constant 0 : i32
    return %c0_i32, %c0_i32_0 : i32, i32
  }
  func.func @transform_1(%arg0: i32) -> (i32, i32) {
    %c0_i32 = arith.constant 0 : i32
    %c0_i32_0 = arith.constant 0 : i32
    %c0_i32_1 = arith.constant 0 : i32
    return %c0_i32, %c0_i32_0 : i32, i32
  }
  func.func @transform_2(%arg0: i32) -> (i32, i32) {
    %c0_i32 = arith.constant 0 : i32
    %c0_i32_0 = arith.constant 0 : i32
    %c0_i32_1 = arith.constant 0 : i32
    return %c0_i32, %c0_i32_0 : i32, i32
  }
  func.func @transform_3(%arg0: i32) -> (i32, i32) {
    %c0_i32 = arith.constant 0 : i32
    %c0_i32_0 = arith.constant 0 : i32
    %c0_i32_1 = arith.constant 0 : i32
    return %c0_i32, %c0_i32_0 : i32, i32
  }
  func.func @transform_4(%arg0: i32) -> (i32, i32) {
    %c0_i32 = arith.constant 0 : i32
    %c0_i32_0 = arith.constant 0 : i32
    %c0_i32_1 = arith.constant 0 : i32
    return %c0_i32, %c0_i32_0 : i32, i32
  }
  func.func @transform_5(%arg0: i32) -> (i32, i32) {
    %c0_i32 = arith.constant 0 : i32
    %c0_i32_0 = arith.constant 0 : i32
    %c0_i32_1 = arith.constant 0 : i32
    return %c0_i32, %c0_i32_0 : i32, i32
  }
  func.func @transform_6(%arg0: i32) -> (i32, i32) {
    %c0_i32 = arith.constant 0 : i32
    %c0_i32_0 = arith.constant 0 : i32
    %c0_i32_1 = arith.constant 0 : i32
    return %c0_i32, %c0_i32_0 : i32, i32
  }
  func.func @transform_7(%arg0: i32) -> (i32, i32) {
    %c0_i32 = arith.constant 0 : i32
    %c0_i32_0 = arith.constant 0 : i32
    %c0_i32_1 = arith.constant 0 : i32
    return %c0_i32, %c0_i32_0 : i32, i32
  }
  func.func @transform_8(%arg0: i32) -> (i32, i32) {
    %c0_i32 = arith.constant 0 : i32
    %c0_i32_0 = arith.constant 0 : i32
    %c0_i32_1 = arith.constant 0 : i32
    return %c0_i32, %c0_i32_0 : i32, i32
  }
  func.func @transform_9(%arg0: i32) -> (i32, i32) {
    %c0_i32 = arith.constant 0 : i32
    %c0_i32_0 = arith.constant 0 : i32
    %c0_i32_1 = arith.constant 0 : i32
    return %c0_i32, %c0_i32_0 : i32, i32
  }
  func.func @transform_10(%arg0: i32) -> (i32, i32) {
    %c0_i32 = arith.constant 0 : i32
    %c0_i32_0 = arith.constant 0 : i32
    %c0_i32_1 = arith.constant 0 : i32
    return %c0_i32, %c0_i32_0 : i32, i32
  }
  func.func @transform_11(%arg0: i32) -> (i32, i32) {
    %c0_i32 = arith.constant 0 : i32
    %c0_i32_0 = arith.constant 0 : i32
    %c0_i32_1 = arith.constant 0 : i32
    return %c0_i32, %c0_i32_0 : i32, i32
  }
  func.func @transform_12(%arg0: i32) -> (i32, i32) {
    %c0_i32 = arith.constant 0 : i32
    %c0_i32_0 = arith.constant 0 : i32
    %c0_i32_1 = arith.constant 0 : i32
    return %c0_i32, %c0_i32_0 : i32, i32
  }
  func.func @transform_13(%arg0: i32) -> (i32, i32) {
    %c0_i32 = arith.constant 0 : i32
    %c0_i32_0 = arith.constant 0 : i32
    %c0_i32_1 = arith.constant 0 : i32
    return %c0_i32, %c0_i32_0 : i32, i32
  }
  func.func @transform_14(%arg0: i32) -> (i32, i32) {
    %c0_i32 = arith.constant 0 : i32
    %c0_i32_0 = arith.constant 0 : i32
    %c0_i32_1 = arith.constant 0 : i32
    return %c0_i32, %c0_i32_0 : i32, i32
  }
  func.func @transform_15(%arg0: i32) -> (i32, i32) {
    %c0_i32 = arith.constant 0 : i32
    %c0_i32_0 = arith.constant 0 : i32
    %c0_i32_1 = arith.constant 0 : i32
    return %c0_i32, %c0_i32_0 : i32, i32
  }
}

module attributes {stable_mosaic.version = 11 : i64} {
  func.func @_netvlad_front_kernel(%arg0: i32, %arg1: memref<128x16xf32, #tpu.memory_space<vmem>>, %arg2: memref<2x16x64xf32, #tpu.memory_space<vmem>>, %arg3: memref<2x64xf32, #tpu.memory_space<vmem>>, %arg4: memref<16x64xf32, #tpu.memory_space<vmem>>, %arg5: memref<1x64xf32, #tpu.memory_space<vmem>>, %arg6: memref<1x64xf32, #tpu.memory_space<vmem>>, %arg7: memref<16x64xf32, #tpu.memory_space<vmem>>, %arg8: memref<2x16x64xf32, #tpu.memory_space<vmem>>) attributes {dimension_semantics = [#tpu.dimension_semantics<arbitrary>], iteration_bounds = array<i64: 1>, scalar_prefetch = 0 : i64, scratch_operands = 0 : i64, tpu.core_type = #tpu.core_type<tc>, window_params = [{pipeline_mode = #tpu.pipeline_mode<synchronous>, transform_indices = @transform_0, window_bounds = array<i64: 128, 16>}, {pipeline_mode = #tpu.pipeline_mode<synchronous>, transform_indices = @transform_1, window_bounds = array<i64: 2, 16, 64>}, {pipeline_mode = #tpu.pipeline_mode<synchronous>, transform_indices = @transform_2, window_bounds = array<i64: 2, 64>}, {pipeline_mode = #tpu.pipeline_mode<synchronous>, transform_indices = @transform_3, window_bounds = array<i64: 16, 64>}, {pipeline_mode = #tpu.pipeline_mode<synchronous>, transform_indices = @transform_4, window_bounds = array<i64: 1, 64>}, {pipeline_mode = #tpu.pipeline_mode<synchronous>, transform_indices = @transform_5, window_bounds = array<i64: 1, 64>}, {pipeline_mode = #tpu.pipeline_mode<synchronous>, transform_indices = @transform_6, window_bounds = array<i64: 16, 64>}, {pipeline_mode = #tpu.pipeline_mode<synchronous>, transform_indices = @transform_7, window_bounds = array<i64: 2, 16, 64>}]} {
    %c0 = arith.constant 0 : index
    %c0_0 = arith.constant 0 : index
    %0 = vector.load %arg1[%c0, %c0_0] : memref<128x16xf32, #tpu.memory_space<vmem>>, vector<128x16xf32>
    %c0_1 = arith.constant 0 : index
    %c0_2 = arith.constant 0 : index
    %1 = vector.load %arg4[%c0_1, %c0_2] : memref<16x64xf32, #tpu.memory_space<vmem>>, vector<16x64xf32>
    %cst = arith.constant dense<0.000000e+00> : vector<128x64xf32>
    %2 = tpu.matmul %0, %1, %cst {dimension_numbers = #tpu.dot_dimension_numbers<[1], [0], [0], [1], [0, 0, 1, 1], [], []>} : vector<128x16xf32>, vector<16x64xf32>, vector<128x64xf32> -> vector<128x64xf32>
    %c0_3 = arith.constant 0 : index
    %c0_4 = arith.constant 0 : index
    %3 = vector.load %arg5[%c0_3, %c0_4] : memref<1x64xf32, #tpu.memory_space<vmem>>, vector<1x64xf32>
    %c0_5 = arith.constant 0 : index
    %c0_6 = arith.constant 0 : index
    %4 = vector.load %arg6[%c0_5, %c0_6] : memref<1x64xf32, #tpu.memory_space<vmem>>, vector<1x64xf32>
    %cst_7 = arith.constant dense<0.000000e+00> : vector<64xf32>
    %5 = vector.multi_reduction <add>, %2, %cst_7 [0] : vector<128x64xf32> to vector<64xf32>
    %6 = vector.shape_cast %5 : vector<64xf32> to vector<1x64xf32>
    %cst_8 = arith.constant 1.280000e+02 : f32
    %7 = vector.broadcast %cst_8 : f32 to vector<1x64xf32>
    %8 = arith.divf %6, %7 : vector<1x64xf32>
    %9 = vector.broadcast %8 : vector<1x64xf32> to vector<128x64xf32>
    %10 = arith.subf %2, %9 : vector<128x64xf32>
    %11 = arith.mulf %10, %10 : vector<128x64xf32>
    %cst_9 = arith.constant dense<0.000000e+00> : vector<64xf32>
    %12 = vector.multi_reduction <add>, %11, %cst_9 [0] : vector<128x64xf32> to vector<64xf32>
    %13 = vector.shape_cast %12 : vector<64xf32> to vector<1x64xf32>
    %cst_10 = arith.constant 1.280000e+02 : f32
    %14 = vector.broadcast %cst_10 : f32 to vector<1x64xf32>
    %15 = arith.divf %13, %14 : vector<1x64xf32>
    %cst_11 = arith.constant 9.99999974E-6 : f32
    %16 = vector.broadcast %cst_11 : f32 to vector<1x64xf32>
    %17 = arith.addf %15, %16 : vector<1x64xf32>
    %18 = math.sqrt %17 : vector<1x64xf32>
    %19 = arith.divf %3, %18 : vector<1x64xf32>
    %20 = vector.broadcast %8 : vector<1x64xf32> to vector<128x64xf32>
    %21 = arith.subf %2, %20 : vector<128x64xf32>
    %22 = vector.broadcast %19 : vector<1x64xf32> to vector<128x64xf32>
    %23 = arith.mulf %21, %22 : vector<128x64xf32>
    %24 = vector.broadcast %4 : vector<1x64xf32> to vector<128x64xf32>
    %25 = arith.addf %23, %24 : vector<128x64xf32>
    %cst_12 = arith.constant dense<0xFF800000> : vector<128xf32>
    %26 = vector.multi_reduction <maximumf>, %25, %cst_12 [1] : vector<128x64xf32> to vector<128xf32>
    %27 = vector.shape_cast %26 : vector<128xf32> to vector<128x1xf32>
    %28 = vector.broadcast %27 : vector<128x1xf32> to vector<128x64xf32>
    %29 = arith.subf %25, %28 : vector<128x64xf32>
    %30 = math.exp %29 : vector<128x64xf32>
    %cst_13 = arith.constant dense<0.000000e+00> : vector<128xf32>
    %31 = vector.multi_reduction <add>, %30, %cst_13 [1] : vector<128x64xf32> to vector<128xf32>
    %32 = vector.shape_cast %31 : vector<128xf32> to vector<128x1xf32>
    %33 = vector.broadcast %32 : vector<128x1xf32> to vector<128x64xf32>
    %34 = arith.divf %30, %33 : vector<128x64xf32>
    %c0_14 = arith.constant 0 : index
    %c0_15 = arith.constant 0 : index
    %35 = vector.load %arg3[%c0_14, %c0_15] : memref<2x64xf32, #tpu.memory_space<vmem>>, vector<2x64xf32>
    %c0_16 = arith.constant 0 : index
    %c0_17 = arith.constant 0 : index
    %36 = vector.load %arg7[%c0_16, %c0_17] : memref<16x64xf32, #tpu.memory_space<vmem>>, vector<16x64xf32>
    %37 = vector.extract_strided_slice %34 {offsets = [0, 0], sizes = [64, 64], strides = [1, 1]} : vector<128x64xf32> to vector<64x64xf32>
    %38 = vector.extract_strided_slice %35 {offsets = [0, 0], sizes = [1, 64], strides = [1, 1]} : vector<2x64xf32> to vector<1x64xf32>
    %39 = vector.broadcast %38 : vector<1x64xf32> to vector<64x64xf32>
    %40 = arith.mulf %37, %39 : vector<64x64xf32>
    %cst_18 = arith.constant dense<0.000000e+00> : vector<64xf32>
    %41 = vector.multi_reduction <add>, %40, %cst_18 [0] : vector<64x64xf32> to vector<64xf32>
    %42 = vector.shape_cast %41 : vector<64xf32> to vector<1x64xf32>
    %c0_19 = arith.constant 0 : index
    %c0_20 = arith.constant 0 : index
    %c0_21 = arith.constant 0 : index
    %43 = vector.load %arg2[%c0_19, %c0_20, %c0_21] : memref<2x16x64xf32, #tpu.memory_space<vmem>>, vector<1x16x64xf32>
    %44 = vector.shape_cast %43 : vector<1x16x64xf32> to vector<16x64xf32>
    %cst_22 = arith.constant dense<0.000000e+00> : vector<16x64xf32>
    %45 = tpu.matmul %44, %40, %cst_22 {dimension_numbers = #tpu.dot_dimension_numbers<[1], [0], [0], [1], [0, 0, 1, 1], [], []>} : vector<16x64xf32>, vector<64x64xf32>, vector<16x64xf32> -> vector<16x64xf32>
    %46 = vector.broadcast %42 : vector<1x64xf32> to vector<16x64xf32>
    %47 = arith.mulf %46, %36 : vector<16x64xf32>
    %48 = arith.subf %45, %47 : vector<16x64xf32>
    %49 = arith.mulf %48, %48 : vector<16x64xf32>
    %cst_23 = arith.constant dense<0.000000e+00> : vector<64xf32>
    %50 = vector.multi_reduction <add>, %49, %cst_23 [0] : vector<16x64xf32> to vector<64xf32>
    %51 = vector.shape_cast %50 : vector<64xf32> to vector<1x64xf32>
    %52 = math.sqrt %51 : vector<1x64xf32>
    %cst_24 = arith.constant 9.99999996E-13 : f32
    %53 = vector.broadcast %cst_24 : f32 to vector<1x64xf32>
    %54 = arith.maximumf %52, %53 : vector<1x64xf32>
    %55 = vector.broadcast %54 : vector<1x64xf32> to vector<16x64xf32>
    %56 = arith.divf %48, %55 : vector<16x64xf32>
    %c0_25 = arith.constant 0 : index
    %c0_26 = arith.constant 0 : index
    %c0_27 = arith.constant 0 : index
    %57 = vector.load %arg8[%c0_25, %c0_26, %c0_27] : memref<2x16x64xf32, #tpu.memory_space<vmem>>, vector<1x16x64xf32>
    %58 = vector.shape_cast %57 : vector<1x16x64xf32> to vector<16x64xf32>
    %59 = vector.shape_cast %56 : vector<16x64xf32> to vector<1x16x64xf32>
    tpu.vector_store %arg8[%c0_25, %c0_26, %c0_27], %59 {strides = array<i32>} : memref<2x16x64xf32, #tpu.memory_space<vmem>>, vector<1x16x64xf32>,
    %60 = vector.extract_strided_slice %34 {offsets = [64, 0], sizes = [64, 64], strides = [1, 1]} : vector<128x64xf32> to vector<64x64xf32>
    %61 = vector.extract_strided_slice %35 {offsets = [1, 0], sizes = [1, 64], strides = [1, 1]} : vector<2x64xf32> to vector<1x64xf32>
    %62 = vector.broadcast %61 : vector<1x64xf32> to vector<64x64xf32>
    %63 = arith.mulf %60, %62 : vector<64x64xf32>
    %cst_28 = arith.constant dense<0.000000e+00> : vector<64xf32>
    %64 = vector.multi_reduction <add>, %63, %cst_28 [0] : vector<64x64xf32> to vector<64xf32>
    %65 = vector.shape_cast %64 : vector<64xf32> to vector<1x64xf32>
    %c1 = arith.constant 1 : index
    %c0_29 = arith.constant 0 : index
    %c0_30 = arith.constant 0 : index
    %66 = vector.load %arg2[%c1, %c0_29, %c0_30] : memref<2x16x64xf32, #tpu.memory_space<vmem>>, vector<1x16x64xf32>
    %67 = vector.shape_cast %66 : vector<1x16x64xf32> to vector<16x64xf32>
    %cst_31 = arith.constant dense<0.000000e+00> : vector<16x64xf32>
    %68 = tpu.matmul %67, %63, %cst_31 {dimension_numbers = #tpu.dot_dimension_numbers<[1], [0], [0], [1], [0, 0, 1, 1], [], []>} : vector<16x64xf32>, vector<64x64xf32>, vector<16x64xf32> -> vector<16x64xf32>
    %69 = vector.broadcast %65 : vector<1x64xf32> to vector<16x64xf32>
    %70 = arith.mulf %69, %36 : vector<16x64xf32>
    %71 = arith.subf %68, %70 : vector<16x64xf32>
    %72 = arith.mulf %71, %71 : vector<16x64xf32>
    %cst_32 = arith.constant dense<0.000000e+00> : vector<64xf32>
    %73 = vector.multi_reduction <add>, %72, %cst_32 [0] : vector<16x64xf32> to vector<64xf32>
    %74 = vector.shape_cast %73 : vector<64xf32> to vector<1x64xf32>
    %75 = math.sqrt %74 : vector<1x64xf32>
    %cst_33 = arith.constant 9.99999996E-13 : f32
    %76 = vector.broadcast %cst_33 : f32 to vector<1x64xf32>
    %77 = arith.maximumf %75, %76 : vector<1x64xf32>
    %78 = vector.broadcast %77 : vector<1x64xf32> to vector<16x64xf32>
    %79 = arith.divf %71, %78 : vector<16x64xf32>
    %c1_34 = arith.constant 1 : index
    %c0_35 = arith.constant 0 : index
    %c0_36 = arith.constant 0 : index
    %80 = vector.load %arg8[%c1_34, %c0_35, %c0_36] : memref<2x16x64xf32, #tpu.memory_space<vmem>>, vector<1x16x64xf32>
    %81 = vector.shape_cast %80 : vector<1x16x64xf32> to vector<16x64xf32>
    %82 = vector.shape_cast %79 : vector<16x64xf32> to vector<1x16x64xf32>
    tpu.vector_store %arg8[%c1_34, %c0_35, %c0_36], %82 {strides = array<i32>} : memref<2x16x64xf32, #tpu.memory_space<vmem>>, vector<1x16x64xf32>,
    return
  }
  func.func @transform_0(%arg0: i32) -> (i32, i32) {
    %c0_i32 = arith.constant 0 : i32
    %c0_i32_0 = arith.constant 0 : i32
    %c0_i32_1 = arith.constant 0 : i32
    return %c0_i32, %c0_i32_0 : i32, i32
  }
  func.func @transform_1(%arg0: i32) -> (i32, i32, i32) {
    %c0_i32 = arith.constant 0 : i32
    %c0_i32_0 = arith.constant 0 : i32
    %c0_i32_1 = arith.constant 0 : i32
    %c0_i32_2 = arith.constant 0 : i32
    return %c0_i32, %c0_i32_0, %c0_i32_1 : i32, i32, i32
  }
  func.func @transform_2(%arg0: i32) -> (i32, i32) {
    %c0_i32 = arith.constant 0 : i32
    %c0_i32_0 = arith.constant 0 : i32
    %c0_i32_1 = arith.constant 0 : i32
    return %c0_i32, %c0_i32_0 : i32, i32
  }
  func.func @transform_3(%arg0: i32) -> (i32, i32) {
    %c0_i32 = arith.constant 0 : i32
    %c0_i32_0 = arith.constant 0 : i32
    %c0_i32_1 = arith.constant 0 : i32
    return %c0_i32, %c0_i32_0 : i32, i32
  }
  func.func @transform_4(%arg0: i32) -> (i32, i32) {
    %c0_i32 = arith.constant 0 : i32
    %c0_i32_0 = arith.constant 0 : i32
    %c0_i32_1 = arith.constant 0 : i32
    return %c0_i32, %c0_i32_0 : i32, i32
  }
  func.func @transform_5(%arg0: i32) -> (i32, i32) {
    %c0_i32 = arith.constant 0 : i32
    %c0_i32_0 = arith.constant 0 : i32
    %c0_i32_1 = arith.constant 0 : i32
    return %c0_i32, %c0_i32_0 : i32, i32
  }
  func.func @transform_6(%arg0: i32) -> (i32, i32) {
    %c0_i32 = arith.constant 0 : i32
    %c0_i32_0 = arith.constant 0 : i32
    %c0_i32_1 = arith.constant 0 : i32
    return %c0_i32, %c0_i32_0 : i32, i32
  }
  func.func @transform_7(%arg0: i32) -> (i32, i32, i32) {
    %c0_i32 = arith.constant 0 : i32
    %c0_i32_0 = arith.constant 0 : i32
    %c0_i32_1 = arith.constant 0 : i32
    %c0_i32_2 = arith.constant 0 : i32
    return %c0_i32, %c0_i32_0, %c0_i32_1 : i32, i32, i32
  }
}

module attributes {stable_mosaic.version = 11 : i64} {
  func.func @_netvlad_tail_kernel(%arg0: i32, %arg1: memref<8x1024xf32, #tpu.memory_space<vmem>>, %arg2: memref<1024x32xf32, #tpu.memory_space<vmem>>, %arg3: memref<1x32xf32, #tpu.memory_space<vmem>>, %arg4: memref<1x32xf32, #tpu.memory_space<vmem>>, %arg5: memref<32x32xf32, #tpu.memory_space<vmem>>, %arg6: memref<1x32xf32, #tpu.memory_space<vmem>>, %arg7: memref<1x32xf32, #tpu.memory_space<vmem>>, %arg8: memref<8x32xf32, #tpu.memory_space<vmem>>) attributes {dimension_semantics = [#tpu.dimension_semantics<arbitrary>], iteration_bounds = array<i64: 1>, scalar_prefetch = 0 : i64, scratch_operands = 0 : i64, tpu.core_type = #tpu.core_type<tc>, window_params = [{pipeline_mode = #tpu.pipeline_mode<synchronous>, transform_indices = @transform_0, window_bounds = array<i64: 8, 1024>}, {pipeline_mode = #tpu.pipeline_mode<synchronous>, transform_indices = @transform_1, window_bounds = array<i64: 1024, 32>}, {pipeline_mode = #tpu.pipeline_mode<synchronous>, transform_indices = @transform_2, window_bounds = array<i64: 1, 32>}, {pipeline_mode = #tpu.pipeline_mode<synchronous>, transform_indices = @transform_3, window_bounds = array<i64: 1, 32>}, {pipeline_mode = #tpu.pipeline_mode<synchronous>, transform_indices = @transform_4, window_bounds = array<i64: 32, 32>}, {pipeline_mode = #tpu.pipeline_mode<synchronous>, transform_indices = @transform_5, window_bounds = array<i64: 1, 32>}, {pipeline_mode = #tpu.pipeline_mode<synchronous>, transform_indices = @transform_6, window_bounds = array<i64: 1, 32>}, {pipeline_mode = #tpu.pipeline_mode<synchronous>, transform_indices = @transform_7, window_bounds = array<i64: 8, 32>}]} {
    %c0 = arith.constant 0 : index
    %c0_0 = arith.constant 0 : index
    %0 = vector.load %arg1[%c0, %c0_0] : memref<8x1024xf32, #tpu.memory_space<vmem>>, vector<8x1024xf32>
    %1 = arith.mulf %0, %0 : vector<8x1024xf32>
    %cst = arith.constant dense<0.000000e+00> : vector<8xf32>
    %2 = vector.multi_reduction <add>, %1, %cst [1] : vector<8x1024xf32> to vector<8xf32>
    %3 = vector.shape_cast %2 : vector<8xf32> to vector<8x1xf32>
    %4 = math.sqrt %3 : vector<8x1xf32>
    %cst_1 = arith.constant 9.99999996E-13 : f32
    %5 = vector.broadcast %cst_1 : f32 to vector<8x1xf32>
    %6 = arith.maximumf %4, %5 : vector<8x1xf32>
    %7 = vector.broadcast %6 : vector<8x1xf32> to vector<8x1024xf32>
    %8 = arith.divf %0, %7 : vector<8x1024xf32>
    %c0_2 = arith.constant 0 : index
    %c0_3 = arith.constant 0 : index
    %9 = vector.load %arg2[%c0_2, %c0_3] : memref<1024x32xf32, #tpu.memory_space<vmem>>, vector<1024x32xf32>
    %cst_4 = arith.constant dense<0.000000e+00> : vector<8x32xf32>
    %10 = tpu.matmul %8, %9, %cst_4 {dimension_numbers = #tpu.dot_dimension_numbers<[1], [0], [0], [1], [0, 0, 1, 1], [], []>} : vector<8x1024xf32>, vector<1024x32xf32>, vector<8x32xf32> -> vector<8x32xf32>
    %c0_5 = arith.constant 0 : index
    %c0_6 = arith.constant 0 : index
    %11 = vector.load %arg3[%c0_5, %c0_6] : memref<1x32xf32, #tpu.memory_space<vmem>>, vector<1x32xf32>
    %c0_7 = arith.constant 0 : index
    %c0_8 = arith.constant 0 : index
    %12 = vector.load %arg4[%c0_7, %c0_8] : memref<1x32xf32, #tpu.memory_space<vmem>>, vector<1x32xf32>
    %13 = tpu.iota {dimensions = array<i32: 0>} : vector<8x32xi32>
    %c2_i32 = arith.constant 2 : i32
    %14 = vector.broadcast %c2_i32 : i32 to vector<8x32xi32>
    %15 = arith.cmpi slt, %13, %14 : vector<8x32xi32>
    %16 = arith.extui %15 : vector<8x32xi1> to vector<8x32xi32>
    %17 = arith.sitofp %16 : vector<8x32xi32> to vector<8x32xf32>
    %18 = arith.mulf %10, %17 : vector<8x32xf32>
    %cst_9 = arith.constant dense<0.000000e+00> : vector<32xf32>
    %19 = vector.multi_reduction <add>, %18, %cst_9 [0] : vector<8x32xf32> to vector<32xf32>
    %20 = vector.shape_cast %19 : vector<32xf32> to vector<1x32xf32>
    %cst_10 = arith.constant 5.000000e-01 : f32
    %21 = vector.broadcast %cst_10 : f32 to vector<1x32xf32>
    %22 = arith.mulf %20, %21 : vector<1x32xf32>
    %23 = vector.broadcast %22 : vector<1x32xf32> to vector<8x32xf32>
    %24 = arith.subf %10, %23 : vector<8x32xf32>
    %25 = arith.mulf %24, %24 : vector<8x32xf32>
    %26 = arith.mulf %25, %17 : vector<8x32xf32>
    %cst_11 = arith.constant dense<0.000000e+00> : vector<32xf32>
    %27 = vector.multi_reduction <add>, %26, %cst_11 [0] : vector<8x32xf32> to vector<32xf32>
    %28 = vector.shape_cast %27 : vector<32xf32> to vector<1x32xf32>
    %cst_12 = arith.constant 5.000000e-01 : f32
    %29 = vector.broadcast %cst_12 : f32 to vector<1x32xf32>
    %30 = arith.mulf %28, %29 : vector<1x32xf32>
    %cst_13 = arith.constant 9.99999974E-6 : f32
    %31 = vector.broadcast %cst_13 : f32 to vector<1x32xf32>
    %32 = arith.addf %30, %31 : vector<1x32xf32>
    %33 = math.sqrt %32 : vector<1x32xf32>
    %34 = arith.divf %11, %33 : vector<1x32xf32>
    %35 = vector.broadcast %22 : vector<1x32xf32> to vector<8x32xf32>
    %36 = arith.subf %10, %35 : vector<8x32xf32>
    %37 = vector.broadcast %34 : vector<1x32xf32> to vector<8x32xf32>
    %38 = arith.mulf %36, %37 : vector<8x32xf32>
    %39 = vector.broadcast %12 : vector<1x32xf32> to vector<8x32xf32>
    %40 = arith.addf %38, %39 : vector<8x32xf32>
    %c0_14 = arith.constant 0 : index
    %c0_15 = arith.constant 0 : index
    %41 = vector.load %arg5[%c0_14, %c0_15] : memref<32x32xf32, #tpu.memory_space<vmem>>, vector<32x32xf32>
    %cst_16 = arith.constant dense<0.000000e+00> : vector<8x32xf32>
    %42 = tpu.matmul %40, %41, %cst_16 {dimension_numbers = #tpu.dot_dimension_numbers<[1], [0], [0], [1], [0, 0, 1, 1], [], []>} : vector<8x32xf32>, vector<32x32xf32>, vector<8x32xf32> -> vector<8x32xf32>
    %c0_17 = arith.constant 0 : index
    %c0_18 = arith.constant 0 : index
    %43 = vector.load %arg6[%c0_17, %c0_18] : memref<1x32xf32, #tpu.memory_space<vmem>>, vector<1x32xf32>
    %c0_19 = arith.constant 0 : index
    %c0_20 = arith.constant 0 : index
    %44 = vector.load %arg7[%c0_19, %c0_20] : memref<1x32xf32, #tpu.memory_space<vmem>>, vector<1x32xf32>
    %45 = tpu.iota {dimensions = array<i32: 0>} : vector<8x32xi32>
    %c2_i32_21 = arith.constant 2 : i32
    %46 = vector.broadcast %c2_i32_21 : i32 to vector<8x32xi32>
    %47 = arith.cmpi slt, %45, %46 : vector<8x32xi32>
    %48 = arith.extui %47 : vector<8x32xi1> to vector<8x32xi32>
    %49 = arith.sitofp %48 : vector<8x32xi32> to vector<8x32xf32>
    %50 = arith.mulf %42, %49 : vector<8x32xf32>
    %cst_22 = arith.constant dense<0.000000e+00> : vector<32xf32>
    %51 = vector.multi_reduction <add>, %50, %cst_22 [0] : vector<8x32xf32> to vector<32xf32>
    %52 = vector.shape_cast %51 : vector<32xf32> to vector<1x32xf32>
    %cst_23 = arith.constant 5.000000e-01 : f32
    %53 = vector.broadcast %cst_23 : f32 to vector<1x32xf32>
    %54 = arith.mulf %52, %53 : vector<1x32xf32>
    %55 = vector.broadcast %54 : vector<1x32xf32> to vector<8x32xf32>
    %56 = arith.subf %42, %55 : vector<8x32xf32>
    %57 = arith.mulf %56, %56 : vector<8x32xf32>
    %58 = arith.mulf %57, %49 : vector<8x32xf32>
    %cst_24 = arith.constant dense<0.000000e+00> : vector<32xf32>
    %59 = vector.multi_reduction <add>, %58, %cst_24 [0] : vector<8x32xf32> to vector<32xf32>
    %60 = vector.shape_cast %59 : vector<32xf32> to vector<1x32xf32>
    %cst_25 = arith.constant 5.000000e-01 : f32
    %61 = vector.broadcast %cst_25 : f32 to vector<1x32xf32>
    %62 = arith.mulf %60, %61 : vector<1x32xf32>
    %cst_26 = arith.constant 9.99999974E-6 : f32
    %63 = vector.broadcast %cst_26 : f32 to vector<1x32xf32>
    %64 = arith.addf %62, %63 : vector<1x32xf32>
    %65 = math.sqrt %64 : vector<1x32xf32>
    %66 = arith.divf %43, %65 : vector<1x32xf32>
    %67 = vector.broadcast %54 : vector<1x32xf32> to vector<8x32xf32>
    %68 = arith.subf %42, %67 : vector<8x32xf32>
    %69 = vector.broadcast %66 : vector<1x32xf32> to vector<8x32xf32>
    %70 = arith.mulf %68, %69 : vector<8x32xf32>
    %71 = vector.broadcast %44 : vector<1x32xf32> to vector<8x32xf32>
    %72 = arith.addf %70, %71 : vector<8x32xf32>
    %73 = arith.negf %72 : vector<8x32xf32>
    %74 = math.exp %73 : vector<8x32xf32>
    %cst_27 = arith.constant 1.000000e+00 : f32
    %75 = vector.broadcast %cst_27 : f32 to vector<8x32xf32>
    %76 = arith.addf %75, %74 : vector<8x32xf32>
    %77 = arith.divf %75, %76 : vector<8x32xf32>
    %78 = arith.mulf %40, %77 : vector<8x32xf32>
    %c0_28 = arith.constant 0 : index
    %c0_29 = arith.constant 0 : index
    %79 = vector.load %arg8[%c0_28, %c0_29] : memref<8x32xf32, #tpu.memory_space<vmem>>, vector<8x32xf32>
    tpu.vector_store %arg8[%c0_28, %c0_29], %78 {strides = array<i32>} : memref<8x32xf32, #tpu.memory_space<vmem>>, vector<8x32xf32>,
    return
  }
  func.func @transform_0(%arg0: i32) -> (i32, i32) {
    %c0_i32 = arith.constant 0 : i32
    %c0_i32_0 = arith.constant 0 : i32
    %c0_i32_1 = arith.constant 0 : i32
    return %c0_i32, %c0_i32_0 : i32, i32
  }
  func.func @transform_1(%arg0: i32) -> (i32, i32) {
    %c0_i32 = arith.constant 0 : i32
    %c0_i32_0 = arith.constant 0 : i32
    %c0_i32_1 = arith.constant 0 : i32
    return %c0_i32, %c0_i32_0 : i32, i32
  }
  func.func @transform_2(%arg0: i32) -> (i32, i32) {
    %c0_i32 = arith.constant 0 : i32
    %c0_i32_0 = arith.constant 0 : i32
    %c0_i32_1 = arith.constant 0 : i32
    return %c0_i32, %c0_i32_0 : i32, i32
  }
  func.func @transform_3(%arg0: i32) -> (i32, i32) {
    %c0_i32 = arith.constant 0 : i32
    %c0_i32_0 = arith.constant 0 : i32
    %c0_i32_1 = arith.constant 0 : i32
    return %c0_i32, %c0_i32_0 : i32, i32
  }
  func.func @transform_4(%arg0: i32) -> (i32, i32) {
    %c0_i32 = arith.constant 0 : i32
    %c0_i32_0 = arith.constant 0 : i32
    %c0_i32_1 = arith.constant 0 : i32
    return %c0_i32, %c0_i32_0 : i32, i32
  }
  func.func @transform_5(%arg0: i32) -> (i32, i32) {
    %c0_i32 = arith.constant 0 : i32
    %c0_i32_0 = arith.constant 0 : i32
    %c0_i32_1 = arith.constant 0 : i32
    return %c0_i32, %c0_i32_0 : i32, i32
  }
  func.func @transform_6(%arg0: i32) -> (i32, i32) {
    %c0_i32 = arith.constant 0 : i32
    %c0_i32_0 = arith.constant 0 : i32
    %c0_i32_1 = arith.constant 0 : i32
    return %c0_i32, %c0_i32_0 : i32, i32
  }
  func.func @transform_7(%arg0: i32) -> (i32, i32) {
    %c0_i32 = arith.constant 0 : i32
    %c0_i32_0 = arith.constant 0 : i32
    %c0_i32_1 = arith.constant 0 : i32
    return %c0_i32, %c0_i32_0 : i32, i32
  }
}

</mosaic_0001>

<llo_original>
// kernel: pcan_forward.7
$region0: #{pcan_forward.7}
  #allocation0 [shape = 'u32[]', space=smem, size = 0x4, offset = 0x4, fixed_abs, tag = 'smem constant byte address 0x4 - core index']
  #allocation1 [shape = 'u32[72,128]{1,0:T(1,128)}', space=vmem, size = 0x9000, scoped, tag = 'internal scratch']
  %s0 = inlined_call_operand.vmem [shape: f32[128,19], index: 0, kind: input, shape index: {}]
  %s1 = inlined_call_operand.vmem [shape: f32[19,8], index: 1, kind: input, shape index: {}]
  %s2 = inlined_call_operand.vmem [shape: f32[1,8], index: 2, kind: input, shape index: {}]
  %s3 = inlined_call_operand.vmem [shape: f32[1,8], index: 3, kind: input, shape index: {}]
  %s4 = inlined_call_operand.vmem [shape: f32[1,8], index: 4, kind: input, shape index: {}]
  %s5 = inlined_call_operand.vmem [shape: f32[8,8], index: 5, kind: input, shape index: {}]
  %s6 = inlined_call_operand.vmem [shape: f32[1,8], index: 6, kind: input, shape index: {}]
  %s7 = inlined_call_operand.vmem [shape: f32[1,8], index: 7, kind: input, shape index: {}]
  %s8 = inlined_call_operand.vmem [shape: f32[1,8], index: 8, kind: input, shape index: {}]
  %s9 = inlined_call_operand.vmem [shape: f32[8,16], index: 9, kind: input, shape index: {}]
  %s10 = inlined_call_operand.vmem [shape: f32[1,16], index: 10, kind: input, shape index: {}]
  %s11 = inlined_call_operand.vmem [shape: f32[1,16], index: 11, kind: input, shape index: {}]
  %s12 = inlined_call_operand.vmem [shape: f32[1,16], index: 12, kind: input, shape index: {}]
  %s13 = inlined_call_operand.vmem [shape: f32[128,16], index: 13, kind: output, shape index: {}]
  %s14 = sld [smem:[#allocation0]]
  $region62: #{pcan_forward.7} parent=0
    _
  %s16 = ssub.s32 1, %s14
  %s17 = scalar_select 0, %s16, %s14
  // Predicated region
  $region2: #{pcan_forward.7} parent=0 // pred_check
    _
  $region3: #{pcan_forward.7} parent=0 // pred_check_branch
    %19 = sbr.rel (0) target = $region5
  $region4: #{pcan_forward.7} parent=0 // pred_region
    _
  $region5: #{pcan_forward.7} parent=0 // pred_fallthru
    _
  // Predicated region
  $region6: #{pcan_forward.7} parent=0 // pred_check
    _
  $region7: #{pcan_forward.7} parent=0 // pred_check_branch
    %21 = sbr.rel (0) target = $region9
  $region8: #{pcan_forward.7} parent=0 // pred_region
    _
  $region9: #{pcan_forward.7} parent=0 // pred_fallthru
    _
  // Predicated region
  $region10: #{pcan_forward.7} parent=0 // pred_check
    _
  $region11: #{pcan_forward.7} parent=0 // pred_check_branch
    %23 = sbr.rel (0) target = $region13
  $region12: #{pcan_forward.7} parent=0 // pred_region
    _
  $region13: #{pcan_forward.7} parent=0 // pred_fallthru
    _
  // Predicated region
  $region14: #{pcan_forward.7} parent=0 // pred_check
    _
  $region15: #{pcan_forward.7} parent=0 // pred_check_branch
    %25 = sbr.rel (0) target = $region17
  $region16: #{pcan_forward.7} parent=0 // pred_region
    _
  $region17: #{pcan_forward.7} parent=0 // pred_fallthru
    _
  // Predicated region
  $region18: #{pcan_forward.7} parent=0 // pred_check
    _
  $region19: #{pcan_forward.7} parent=0 // pred_check_branch
    %27 = sbr.rel (0) target = $region21
  $region20: #{pcan_forward.7} parent=0 // pred_region
    _
  $region21: #{pcan_forward.7} parent=0 // pred_fallthru
    _
  // Predicated region
  $region22: #{pcan_forward.7} parent=0 // pred_check
    _
  $region23: #{pcan_forward.7} parent=0 // pred_check_branch
    %29 = sbr.rel (0) target = $region25
  $region24: #{pcan_forward.7} parent=0 // pred_region
    _
  $region25: #{pcan_forward.7} parent=0 // pred_fallthru
    _
  // Predicated region
  $region26: #{pcan_forward.7} parent=0 // pred_check
    _
  $region27: #{pcan_forward.7} parent=0 // pred_check_branch
    %31 = sbr.rel (0) target = $region29
  $region28: #{pcan_forward.7} parent=0 // pred_region
    _
  $region29: #{pcan_forward.7} parent=0 // pred_fallthru
    _
  // Predicated region
  $region30: #{pcan_forward.7} parent=0 // pred_check
    _
  $region31: #{pcan_forward.7} parent=0 // pred_check_branch
    %33 = sbr.rel (0) target = $region33
  $region32: #{pcan_forward.7} parent=0 // pred_region
    _
  $region33: #{pcan_forward.7} parent=0 // pred_fallthru
    _
  // Predicated region
  $region34: #{pcan_forward.7} parent=0 // pred_check
    _
  $region35: #{pcan_forward.7} parent=0 // pred_check_branch
    %35 = sbr.rel (0) target = $region37
  $region36: #{pcan_forward.7} parent=0 // pred_region
    _
  $region37: #{pcan_forward.7} parent=0 // pred_fallthru
    _
  // Predicated region
  $region38: #{pcan_forward.7} parent=0 // pred_check
    _
  $region39: #{pcan_forward.7} parent=0 // pred_check_branch
    %37 = sbr.rel (0) target = $region41
  $region40: #{pcan_forward.7} parent=0 // pred_region
    _
  $region41: #{pcan_forward.7} parent=0 // pred_fallthru
    _
  // Predicated region
  $region42: #{pcan_forward.7} parent=0 // pred_check
    _
  $region43: #{pcan_forward.7} parent=0 // pred_check_branch
    %39 = sbr.rel (0) target = $region45
  $region44: #{pcan_forward.7} parent=0 // pred_region
    _
  $region45: #{pcan_forward.7} parent=0 // pred_fallthru
    _
  // Predicated region
  $region46: #{pcan_forward.7} parent=0 // pred_check
    _
  $region47: #{pcan_forward.7} parent=0 // pred_check_branch
    %41 = sbr.rel (0) target = $region49
  $region48: #{pcan_forward.7} parent=0 // pred_region
    _
  $region49: #{pcan_forward.7} parent=0 // pred_fallthru
    _
  // Predicated region
  $region50: #{pcan_forward.7} parent=0 // pred_check
    _
  $region51: #{pcan_forward.7} parent=0 // pred_check_branch
    %43 = sbr.rel (0) target = $region53
  $region52: #{pcan_forward.7} parent=0 // pred_region
    _
  $region53: #{pcan_forward.7} parent=0 // pred_fallthru
    _
  %v44 = vld [vmem:[%s0] sm:$0xff]
  %v45 = vld [vmem:[%s0 + $0x8] sm:$0xff]
  %v46 = vld [vmem:[%s0 + $0x10] sm:$0xff]
  %v47 = vld [vmem:[%s0 + $0x18] sm:$0xff]
  %v48 = vld [vmem:[%s0 + $0x20] sm:$0xff]
  %v49 = vld [vmem:[%s0 + $0x28] sm:$0xff]
  %v50 = vld [vmem:[%s0 + $0x30] sm:$0xff]
  %v51 = vld [vmem:[%s0 + $0x38] sm:$0xff]
  %v52 = vld [vmem:[%s0 + $0x40] sm:$0xff]
  %v53 = vld [vmem:[%s0 + $0x48] sm:$0xff]
  %v54 = vld [vmem:[%s0 + $0x50] sm:$0xff]
  %v55 = vld [vmem:[%s0 + $0x58] sm:$0xff]
  %v56 = vld [vmem:[%s0 + $0x60] sm:$0xff]
  %v57 = vld [vmem:[%s0 + $0x68] sm:$0xff]
  %v58 = vld [vmem:[%s0 + $0x70] sm:$0xff]
  %v59 = vld [vmem:[%s0 + $0x78] sm:$0xff]
  %v60 = vld [vmem:[%s1] sm:$0xff]
  %v61 = vld [vmem:[%s1 + $0x8] sm:$0xff]
  %v62 = vld [vmem:[%s1 + $0x10] sm:$0x7]
  %v63 = vld [vmem:[%s2] sm:$0x1]
  %v65 = vperm.slane %v63, 0
  %vm67 = vcmask 154624
  %v69 = vsel %vm67, %v44, 0
  %v72 = vsel %vm67, %v45, 0
  %v75 = vsel %vm67, %v46, 0
  %v78 = vsel %vm67, %v47, 0
  %v81 = vsel %vm67, %v48, 0
  %v84 = vsel %vm67, %v49, 0
  %v87 = vsel %vm67, %v50, 0
  %v90 = vsel %vm67, %v51, 0
  %v93 = vsel %vm67, %v52, 0
  %v96 = vsel %vm67, %v53, 0
  %v99 = vsel %vm67, %v54, 0
  %v102 = vsel %vm67, %v55, 0
  %v105 = vsel %vm67, %v56, 0
  %v108 = vsel %vm67, %v57, 0
  %v111 = vsel %vm67, %v58, 0
  %v114 = vsel %vm67, %v59, 0
  %vm116 = vcmask 1042432
  %v118 = vsel %vm116, %v62, 0
  %120 = vmatpush.msra.mxu0 0.0
  %121 = vmatpush.msra.mxu0 0.0
  %122 = vmatpush.msra.mxu0 0.0
  %123 = vmatpush.msra.mxu0 0.0
  %124 = vmatpush.msra.mxu0 0.0
  %125 = vmatpush.msra.mxu0 0.0
  %126 = vmatpush.msra.mxu0 0.0
  %127 = vmatpush.msra.mxu0 0.0
  %128 = vmatpush.msra.mxu0 0.0
  %129 = vmatpush.msra.mxu0 0.0
  %130 = vmatpush.msra.mxu0 0.0
  %131 = vmatpush.msra.mxu0 0.0
  %132 = vmatpush.msra.mxu0 0.0
  %133 = vmatpush.msra.mxu0 %v118
  %134 = vmatpush.msra.mxu0 %v61
  %135 = vmatpush.msra.mxu0 %v60
  %136 = vmatmul.f32.gmra.mxu0 %v69
  %v137 = vpop.f32.mrf.mxu0
  %v138 = vadd.f32 %v65, %v137
  %139 = vmatmul.f32.gmra.mxu0 %v72
  %v140 = vpop.f32.mrf.mxu0
  %v141 = vadd.f32 %v65, %v140
  %142 = vmatmul.f32.gmra.mxu0 %v75
  %v143 = vpop.f32.mrf.mxu0
  %v144 = vadd.f32 %v65, %v143
  %145 = vmatmul.f32.gmra.mxu0 %v78
  %v146 = vpop.f32.mrf.mxu0
  %v147 = vadd.f32 %v65, %v146
  %148 = vmatmul.f32.gmra.mxu0 %v81
  %v149 = vpop.f32.mrf.mxu0
  %v150 = vadd.f32 %v65, %v149
  %151 = vmatmul.f32.gmra.mxu0 %v84
  %v152 = vpop.f32.mrf.mxu0
  %v153 = vadd.f32 %v65, %v152
  %154 = vmatmul.f32.gmra.mxu0 %v87
  %v155 = vpop.f32.mrf.mxu0
  %v156 = vadd.f32 %v65, %v155
  %157 = vmatmul.f32.gmra.mxu0 %v90
  %v158 = vpop.f32.mrf.mxu0
  %v159 = vadd.f32 %v65, %v158
  %160 = vmatmul.f32.gmra.mxu0 %v93
  %v161 = vpop.f32.mrf.mxu0
  %v162 = vadd.f32 %v65, %v161
  %163 = vmatmul.f32.gmra.mxu0 %v96
  %v164 = vpop.f32.mrf.mxu0
  %v165 = vadd.f32 %v65, %v164
  %166 = vmatmul.f32.gmra.mxu0 %v99
  %v167 = vpop.f32.mrf.mxu0
  %v168 = vadd.f32 %v65, %v167
  %169 = vmatmul.f32.gmra.mxu0 %v102
  %v170 = vpop.f32.mrf.mxu0
  %v171 = vadd.f32 %v65, %v170
  %172 = vmatmul.f32.gmra.mxu0 %v105
  %v173 = vpop.f32.mrf.mxu0
  %v174 = vadd.f32 %v65, %v173
  %175 = vmatmul.f32.gmra.mxu0 %v108
  %v176 = vpop.f32.mrf.mxu0
  %v177 = vadd.f32 %v65, %v176
  %178 = vmatmul.f32.gmra.mxu0 %v111
  %v179 = vpop.f32.mrf.mxu0
  %v180 = vadd.f32 %v65, %v179
  %181 = vmatmul.f32.gmra.mxu0 %v114
  %v182 = vpop.f32.mrf.mxu0
  %v183 = vadd.f32 %v65, %v182
  %184 = vdwg.mxu0
  %v185 = vld [vmem:[%s3] sm:$0x1]
  %v186 = vld [vmem:[%s4] sm:$0x1]
  %vm187 = vcmask 64512
  %v188 = vsel %vm187, %v138, 0.0
  %v189 = vsel %vm187, %v141, 0.0
  %v190 = vadd.f32 %v188, %v189
  %v191 = vsel %vm187, %v144, 0.0
  %v192 = vadd.f32 %v190, %v191
  %v193 = vsel %vm187, %v147, 0.0
  %v194 = vadd.f32 %v192, %v193
  %v195 = vsel %vm187, %v150, 0.0
  %v196 = vadd.f32 %v194, %v195
  %v197 = vsel %vm187, %v153, 0.0
  %v198 = vadd.f32 %v196, %v197
  %v199 = vsel %vm187, %v156, 0.0
  %v200 = vadd.f32 %v198, %v199
  %v201 = vsel %vm187, %v159, 0.0
  %v202 = vadd.f32 %v200, %v201
  %v203 = vsel %vm187, %v162, 0.0
  %v204 = vadd.f32 %v202, %v203
  %v205 = vsel %vm187, %v165, 0.0
  %v206 = vadd.f32 %v204, %v205
  %v207 = vsel %vm187, %v168, 0.0
  %v208 = vadd.f32 %v206, %v207
  %v209 = vsel %vm187, %v171, 0.0
  %v210 = vadd.f32 %v208, %v209
  %v211 = vsel %vm187, %v174, 0.0
  %v212 = vadd.f32 %v210, %v211
  %v213 = vsel %vm187, %v177, 0.0
  %v214 = vadd.f32 %v212, %v213
  %v215 = vsel %vm187, %v180, 0.0
  %v216 = vadd.f32 %v214, %v215
  %v217 = vsel %vm187, %v183, 0.0
  %v218 = vadd.f32 %v216, %v217
  %v219 = vrot.slane %v218, 4
  %v220 = vadd.f32 %v218, %v219
  %v221 = vrot.slane %v220, 2
  %v222 = vadd.f32 %v220, %v221
  %v223 = vrot.slane %v222, 1
  %v224 = vadd.f32 %v222, %v223
  %v225 = vrcp.pop 128.0
  %v226 = vmul.f32 128.0, %v225
  %v227 = vsub.f32 1.0, %v226
  %v228 = vmul.f32 %v225, %v227
  %v229 = vadd.f32 %v225, %v228
  %vm230 = vweird.f32 %v225
  %v231 = vsel %vm230, %v225, %v229
  %v232 = vmul.f32 %v224, %v231
  %v233 = vsub.f32 %v138, %v232
  %v234 = vsub.f32 %v141, %v232
  %v235 = vsub.f32 %v144, %v232
  %v236 = vsub.f32 %v147, %v232
  %v237 = vsub.f32 %v150, %v232
  %v238 = vsub.f32 %v153, %v232
  %v239 = vsub.f32 %v156, %v232
  %v240 = vsub.f32 %v159, %v232
  %v241 = vsub.f32 %v162, %v232
  %v242 = vsub.f32 %v165, %v232
  %v243 = vsub.f32 %v168, %v232
  %v244 = vsub.f32 %v171, %v232
  %v245 = vsub.f32 %v174, %v232
  %v246 = vsub.f32 %v177, %v232
  %v247 = vsub.f32 %v180, %v232
  %v248 = vsub.f32 %v183, %v232
  %v249 = vmul.f32 %v233, %v233
  %v250 = vmul.f32 %v234, %v234
  %v251 = vmul.f32 %v235, %v235
  %v252 = vmul.f32 %v236, %v236
  %v253 = vmul.f32 %v237, %v237
  %v254 = vmul.f32 %v238, %v238
  %v255 = vmul.f32 %v239, %v239
  %v256 = vmul.f32 %v240, %v240
  %v257 = vmul.f32 %v241, %v241
  %v258 = vmul.f32 %v242, %v242
  %v259 = vmul.f32 %v243, %v243
  %v260 = vmul.f32 %v244, %v244
  %v261 = vmul.f32 %v245, %v245
  %v262 = vmul.f32 %v246, %v246
  %v263 = vmul.f32 %v247, %v247
  %v264 = vmul.f32 %v248, %v248
  %v265 = vsel %vm187, %v249, 0.0
  %v266 = vsel %vm187, %v250, 0.0
  %v267 = vadd.f32 %v265, %v266
  %v268 = vsel %vm187, %v251, 0.0
  %v269 = vadd.f32 %v267, %v268
  %v270 = vsel %vm187, %v252, 0.0
  %v271 = vadd.f32 %v269, %v270
  %v272 = vsel %vm187, %v253, 0.0
  %v273 = vadd.f32 %v271, %v272
  %v274 = vsel %vm187, %v254, 0.0
  %v275 = vadd.f32 %v273, %v274
  %v276 = vsel %vm187, %v255, 0.0
  %v277 = vadd.f32 %v275, %v276
  %v278 = vsel %vm187, %v256, 0.0
  %v279 = vadd.f32 %v277, %v278
  %v280 = vsel %vm187, %v257, 0.0
  %v281 = vadd.f32 %v279, %v280
  %v282 = vsel %vm187, %v258, 0.0
  %v283 = vadd.f32 %v281, %v282
  %v284 = vsel %vm187, %v259, 0.0
  %v285 = vadd.f32 %v283, %v284
  %v286 = vsel %vm187, %v260, 0.0
  %v287 = vadd.f32 %v285, %v286
  %v288 = vsel %vm187, %v261, 0.0
  %v289 = vadd.f32 %v287, %v288
  %v290 = vsel %vm187, %v262, 0.0
  %v291 = vadd.f32 %v289, %v290
  %v292 = vsel %vm187, %v263, 0.0
  %v293 = vadd.f32 %v291, %v292
  %v294 = vsel %vm187, %v264, 0.0
  %v295 = vadd.f32 %v293, %v294
  %v296 = vrot.slane %v295, 4
  %v297 = vadd.f32 %v295, %v296
  %v298 = vrot.slane %v297, 2
  %v299 = vadd.f32 %v297, %v298
  %v300 = vrot.slane %v299, 1
  %v301 = vadd.f32 %v299, %v300
  %v302 = vmul.f32 %v301, %v231
  %v303 = vadd.f32 %v302, 1e-05
  %v304 = vrsqrt.pop %v303
  %v305 = vmul.f32 %v304, %v303
  %v306 = vmul.f32 %v305, %v304
  %v307 = vmul.f32 0.5, %v306
  %v308 = vsub.f32 1.5, %v307
  %v309 = vmul.f32 %v304, %v308
  %v310 = vmul.f32 %v303, %v309
  %vm311 = vcmp.eq.f32.partialorder %v303, inf
  %v312 = vsel %vm311, %v303, %v310
  %vm313 = vcmp.eq.f32.partialorder %v303, 0.0
  %v314 = vand.u32 %v303, 2147483648
  %v315 = vsel %vm313, %v314, %v312
  %v316 = vrcp.pop %v315
  %v317 = vmul.f32 %v315, %v316
  %v318 = vsub.f32 1.0, %v317
  %v319 = vmul.f32 %v316, %v318
  %v320 = vadd.f32 %v316, %v319
  %vm321 = vweird.f32 %v315
  %vm322 = vweird.f32 %v316
  %vm323 = vmor %vm321, %vm322
  %v324 = vsel %vm323, %v316, %v320
  %v325 = vand.u32 2147483647, %v315
  %vm326 = vcmp.eq.f32.partialorder %v325, 8.507059e+37
  %v327 = vand.u32 %v315, 2147483648
  %v328 = vor.u32 1.1754944e-38, %v327
  %v329 = vsel %vm326, %v328, %v324
  %v330 = vmul.f32 %v185, %v329
  %v332 = vperm.slane %v330, 0
  %v334 = vmul.f32 %v233, %v332
  %v335 = vmul.f32 %v234, %v332
  %v336 = vmul.f32 %v235, %v332
  %v337 = vmul.f32 %v236, %v332
  %v338 = vmul.f32 %v237, %v332
  %v339 = vmul.f32 %v238, %v332
  %v340 = vmul.f32 %v239, %v332
  %v341 = vmul.f32 %v240, %v332
  %v342 = vmul.f32 %v241, %v332
  %v343 = vmul.f32 %v242, %v332
  %v344 = vmul.f32 %v243, %v332
  %v345 = vmul.f32 %v244, %v332
  %v346 = vmul.f32 %v245, %v332
  %v347 = vmul.f32 %v246, %v332
  %v348 = vmul.f32 %v247, %v332
  %v349 = vmul.f32 %v248, %v332
  %v351 = vperm.slane %v186, 0
  %v353 = vadd.f32 %v334, %v351
  %v354 = vadd.f32 %v335, %v351
  %v355 = vadd.f32 %v336, %v351
  %v356 = vadd.f32 %v337, %v351
  %v357 = vadd.f32 %v338, %v351
  %v358 = vadd.f32 %v339, %v351
  %v359 = vadd.f32 %v340, %v351
  %v360 = vadd.f32 %v341, %v351
  %v361 = vadd.f32 %v342, %v351
  %v362 = vadd.f32 %v343, %v351
  %v363 = vadd.f32 %v344, %v351
  %v364 = vadd.f32 %v345, %v351
  %v365 = vadd.f32 %v346, %v351
  %v366 = vadd.f32 %v347, %v351
  %v367 = vadd.f32 %v348, %v351
  %v368 = vadd.f32 %v349, %v351
  %v369 = vmax.f32 %v353, 0.0
  %v370 = vmax.f32 %v354, 0.0
  %v371 = vmax.f32 %v355, 0.0
  %v372 = vmax.f32 %v356, 0.0
  %v373 = vmax.f32 %v357, 0.0
  %v374 = vmax.f32 %v358, 0.0
  %v375 = vmax.f32 %v359, 0.0
  %v376 = vmax.f32 %v360, 0.0
  %v377 = vmax.f32 %v361, 0.0
  %v378 = vmax.f32 %v362, 0.0
  %v379 = vmax.f32 %v363, 0.0
  %v380 = vmax.f32 %v364, 0.0
  %v381 = vmax.f32 %v365, 0.0
  %v382 = vmax.f32 %v366, 0.0
  %v383 = vmax.f32 %v367, 0.0
  %v384 = vmax.f32 %v368, 0.0
  %v385 = vld [vmem:[%s5] sm:$0xff]
  %v386 = vld [vmem:[%s6] sm:$0x1]
  %v388 = vperm.slane %v386, 0
  %v391 = vsel %vm187, %v369, 0
  %v394 = vsel %vm187, %v370, 0
  %v397 = vsel %vm187, %v371, 0
  %v400 = vsel %vm187, %v372, 0
  %v403 = vsel %vm187, %v373, 0
  %v406 = vsel %vm187, %v374, 0
  %v409 = vsel %vm187, %v375, 0
  %v412 = vsel %vm187, %v376, 0
  %v415 = vsel %vm187, %v377, 0
  %v418 = vsel %vm187, %v378, 0
  %v421 = vsel %vm187, %v379, 0
  %v424 = vsel %vm187, %v380, 0
  %v427 = vsel %vm187, %v381, 0
  %v430 = vsel %vm187, %v382, 0
  %v433 = vsel %vm187, %v383, 0
  %v436 = vsel %vm187, %v384, 0
  %438 = vmatpush.msra.mxu0 0.0
  %439 = vmatpush.msra.mxu0 0.0
  %440 = vmatpush.msra.mxu0 0.0
  %441 = vmatpush.msra.mxu0 0.0
  %442 = vmatpush.msra.mxu0 0.0
  %443 = vmatpush.msra.mxu0 0.0
  %444 = vmatpush.msra.mxu0 0.0
  %445 = vmatpush.msra.mxu0 0.0
  %446 = vmatpush.msra.mxu0 0.0
  %447 = vmatpush.msra.mxu0 0.0
  %448 = vmatpush.msra.mxu0 0.0
  %449 = vmatpush.msra.mxu0 0.0
  %450 = vmatpush.msra.mxu0 0.0
  %451 = vmatpush.msra.mxu0 0.0
  %452 = vmatpush.msra.mxu0 0.0
  %453 = vmatpush.msra.mxu0 %v385
  %454 = vmatmul.f32.gmra.mxu0 %v391
  %v455 = vpop.f32.mrf.mxu0
  %v456 = vadd.f32 %v388, %v455
  %457 = vmatmul.f32.gmra.mxu0 %v394
  %v458 = vpop.f32.mrf.mxu0
  %v459 = vadd.f32 %v388, %v458
  %460 = vmatmul.f32.gmra.mxu0 %v397
  %v461 = vpop.f32.mrf.mxu0
  %v462 = vadd.f32 %v388, %v461
  %463 = vmatmul.f32.gmra.mxu0 %v400
  %v464 = vpop.f32.mrf.mxu0
  %v465 = vadd.f32 %v388, %v464
  %466 = vmatmul.f32.gmra.mxu0 %v403
  %v467 = vpop.f32.mrf.mxu0
  %v468 = vadd.f32 %v388, %v467
  %469 = vmatmul.f32.gmra.mxu0 %v406
  %v470 = vpop.f32.mrf.mxu0
  %v471 = vadd.f32 %v388, %v470
  %472 = vmatmul.f32.gmra.mxu0 %v409
  %v473 = vpop.f32.mrf.mxu0
  %v474 = vadd.f32 %v388, %v473
  %475 = vmatmul.f32.gmra.mxu0 %v412
  %v476 = vpop.f32.mrf.mxu0
  %v477 = vadd.f32 %v388, %v476
  %478 = vmatmul.f32.gmra.mxu0 %v415
  %v479 = vpop.f32.mrf.mxu0
  %v480 = vadd.f32 %v388, %v479
  %481 = vmatmul.f32.gmra.mxu0 %v418
  %v482 = vpop.f32.mrf.mxu0
  %v483 = vadd.f32 %v388, %v482
  %484 = vmatmul.f32.gmra.mxu0 %v421
  %v485 = vpop.f32.mrf.mxu0
  %v486 = vadd.f32 %v388, %v485
  %487 = vmatmul.f32.gmra.mxu0 %v424
  %v488 = vpop.f32.mrf.mxu0
  %v489 = vadd.f32 %v388, %v488
  %490 = vmatmul.f32.gmra.mxu0 %v427
  %v491 = vpop.f32.mrf.mxu0
  %v492 = vadd.f32 %v388, %v491
  %493 = vmatmul.f32.gmra.mxu0 %v430
  %v494 = vpop.f32.mrf.mxu0
  %v495 = vadd.f32 %v388, %v494
  %496 = vmatmul.f32.gmra.mxu0 %v433
  %v497 = vpop.f32.mrf.mxu0
  %v498 = vadd.f32 %v388, %v497
  %499 = vmatmul.f32.gmra.mxu0 %v436
  %v500 = vpop.f32.mrf.mxu0
  %v501 = vadd.f32 %v388, %v500
  %502 = vdwg.mxu0
  %v503 = vld [vmem:[%s7] sm:$0x1]
  %v504 = vld [vmem:[%s8] sm:$0x1]
  %v505 = vsel %vm187, %v456, 0.0
  %v506 = vsel %vm187, %v459, 0.0
  %v507 = vadd.f32 %v505, %v506
  %v508 = vsel %vm187, %v462, 0.0
  %v509 = vadd.f32 %v507, %v508
  %v510 = vsel %vm187, %v465, 0.0
  %v511 = vadd.f32 %v509, %v510
  %v512 = vsel %vm187, %v468, 0.0
  %v513 = vadd.f32 %v511, %v512
  %v514 = vsel %vm187, %v471, 0.0
  %v515 = vadd.f32 %v513, %v514
  %v516 = vsel %vm187, %v474, 0.0
  %v517 = vadd.f32 %v515, %v516
  %v518 = vsel %vm187, %v477, 0.0
  %v519 = vadd.f32 %v517, %v518
  %v520 = vsel %vm187, %v480, 0.0
  %v521 = vadd.f32 %v519, %v520
  %v522 = vsel %vm187, %v483, 0.0
  %v523 = vadd.f32 %v521, %v522
  %v524 = vsel %vm187, %v486, 0.0
  %v525 = vadd.f32 %v523, %v524
  %v526 = vsel %vm187, %v489, 0.0
  %v527 = vadd.f32 %v525, %v526
  %v528 = vsel %vm187, %v492, 0.0
  %v529 = vadd.f32 %v527, %v528
  %v530 = vsel %vm187, %v495, 0.0
  %v531 = vadd.f32 %v529, %v530
  %v532 = vsel %vm187, %v498, 0.0
  %v533 = vadd.f32 %v531, %v532
  %v534 = vsel %vm187, %v501, 0.0
  %v535 = vadd.f32 %v533, %v534
  %v536 = vrot.slane %v535, 4
  %v537 = vadd.f32 %v535, %v536
  %v538 = vrot.slane %v537, 2
  %v539 = vadd.f32 %v537, %v538
  %v540 = vrot.slane %v539, 1
  %v541 = vadd.f32 %v539, %v540
  %v542 = vmul.f32 %v541, %v231
  %v543 = vsub.f32 %v456, %v542
  %v544 = vsub.f32 %v459, %v542
  %v545 = vsub.f32 %v462, %v542
  %v546 = vsub.f32 %v465, %v542
  %v547 = vsub.f32 %v468, %v542
  %v548 = vsub.f32 %v471, %v542
  %v549 = vsub.f32 %v474, %v542
  %v550 = vsub.f32 %v477, %v542
  %v551 = vsub.f32 %v480, %v542
  %v552 = vsub.f32 %v483, %v542
  %v553 = vsub.f32 %v486, %v542
  %v554 = vsub.f32 %v489, %v542
  %v555 = vsub.f32 %v492, %v542
  %v556 = vsub.f32 %v495, %v542
  %v557 = vsub.f32 %v498, %v542
  %v558 = vsub.f32 %v501, %v542
  %v559 = vmul.f32 %v543, %v543
  %v560 = vmul.f32 %v544, %v544
  %v561 = vmul.f32 %v545, %v545
  %v562 = vmul.f32 %v546, %v546
  %v563 = vmul.f32 %v547, %v547
  %v564 = vmul.f32 %v548, %v548
  %v565 = vmul.f32 %v549, %v549
  %v566 = vmul.f32 %v550, %v550
  %v567 = vmul.f32 %v551, %v551
  %v568 = vmul.f32 %v552, %v552
  %v569 = vmul.f32 %v553, %v553
  %v570 = vmul.f32 %v554, %v554
  %v571 = vmul.f32 %v555, %v555
  %v572 = vmul.f32 %v556, %v556
  %v573 = vmul.f32 %v557, %v557
  %v574 = vmul.f32 %v558, %v558
  %v575 = vsel %vm187, %v559, 0.0
  %v576 = vsel %vm187, %v560, 0.0
  %v577 = vadd.f32 %v575, %v576
  %v578 = vsel %vm187, %v561, 0.0
  %v579 = vadd.f32 %v577, %v578
  %v580 = vsel %vm187, %v562, 0.0
  %v581 = vadd.f32 %v579, %v580
  %v582 = vsel %vm187, %v563, 0.0
  %v583 = vadd.f32 %v581, %v582
  %v584 = vsel %vm187, %v564, 0.0
  %v585 = vadd.f32 %v583, %v584
  %v586 = vsel %vm187, %v565, 0.0
  %v587 = vadd.f32 %v585, %v586
  %v588 = vsel %vm187, %v566, 0.0
  %v589 = vadd.f32 %v587, %v588
  %v590 = vsel %vm187, %v567, 0.0
  %v591 = vadd.f32 %v589, %v590
  %v592 = vsel %vm187, %v568, 0.0
  %v593 = vadd.f32 %v591, %v592
  %v594 = vsel %vm187, %v569, 0.0
  %v595 = vadd.f32 %v593, %v594
  %v596 = vsel %vm187, %v570, 0.0
  %v597 = vadd.f32 %v595, %v596
  %v598 = vsel %vm187, %v571, 0.0
  %v599 = vadd.f32 %v597, %v598
  %v600 = vsel %vm187, %v572, 0.0
  %v601 = vadd.f32 %v599, %v600
  %v602 = vsel %vm187, %v573, 0.0
  %v603 = vadd.f32 %v601, %v602
  %v604 = vsel %vm187, %v574, 0.0
  %v605 = vadd.f32 %v603, %v604
  %v606 = vrot.slane %v605, 4
  %v607 = vadd.f32 %v605, %v606
  %v608 = vrot.slane %v607, 2
  %v609 = vadd.f32 %v607, %v608
  %v610 = vrot.slane %v609, 1
  %v611 = vadd.f32 %v609, %v610
  %v612 = vmul.f32 %v611, %v231
  %v613 = vadd.f32 %v612, 1e-05
  %v614 = vrsqrt.pop %v613
  %v615 = vmul.f32 %v614, %v613
  %v616 = vmul.f32 %v615, %v614
  %v617 = vmul.f32 0.5, %v616
  %v618 = vsub.f32 1.5, %v617
  %v619 = vmul.f32 %v614, %v618
  %v620 = vmul.f32 %v613, %v619
  %vm621 = vcmp.eq.f32.partialorder %v613, inf
  %v622 = vsel %vm621, %v613, %v620
  %vm623 = vcmp.eq.f32.partialorder %v613, 0.0
  %v624 = vand.u32 %v613, 2147483648
  %v625 = vsel %vm623, %v624, %v622
  %v626 = vrcp.pop %v625
  %v627 = vmul.f32 %v625, %v626
  %v628 = vsub.f32 1.0, %v627
  %v629 = vmul.f32 %v626, %v628
  %v630 = vadd.f32 %v626, %v629
  %vm631 = vweird.f32 %v625
  %vm632 = vweird.f32 %v626
  %vm633 = vmor %vm631, %vm632
  %v634 = vsel %vm633, %v626, %v630
  %v635 = vand.u32 2147483647, %v625
  %vm636 = vcmp.eq.f32.partialorder %v635, 8.507059e+37
  %v637 = vand.u32 %v625, 2147483648
  %v638 = vor.u32 1.1754944e-38, %v637
  %v639 = vsel %vm636, %v638, %v634
  %v640 = vmul.f32 %v503, %v639
  %v642 = vperm.slane %v640, 0
  %v644 = vmul.f32 %v543, %v642
  %v645 = vmul.f32 %v544, %v642
  %v646 = vmul.f32 %v545, %v642
  %v647 = vmul.f32 %v546, %v642
  %v648 = vmul.f32 %v547, %v642
  %v649 = vmul.f32 %v548, %v642
  %v650 = vmul.f32 %v549, %v642
  %v651 = vmul.f32 %v550, %v642
  %v652 = vmul.f32 %v551, %v642
  %v653 = vmul.f32 %v552, %v642
  %v654 = vmul.f32 %v553, %v642
  %v655 = vmul.f32 %v554, %v642
  %v656 = vmul.f32 %v555, %v642
  %v657 = vmul.f32 %v556, %v642
  %v658 = vmul.f32 %v557, %v642
  %v659 = vmul.f32 %v558, %v642
  %v661 = vperm.slane %v504, 0
  %v663 = vadd.f32 %v644, %v661
  %v664 = vadd.f32 %v645, %v661
  %v665 = vadd.f32 %v646, %v661
  %v666 = vadd.f32 %v647, %v661
  %v667 = vadd.f32 %v648, %v661
  %v668 = vadd.f32 %v649, %v661
  %v669 = vadd.f32 %v650, %v661
  %v670 = vadd.f32 %v651, %v661
  %v671 = vadd.f32 %v652, %v661
  %v672 = vadd.f32 %v653, %v661
  %v673 = vadd.f32 %v654, %v661
  %v674 = vadd.f32 %v655, %v661
  %v675 = vadd.f32 %v656, %v661
  %v676 = vadd.f32 %v657, %v661
  %v677 = vadd.f32 %v658, %v661
  %v678 = vadd.f32 %v659, %v661
  %v679 = vmax.f32 %v663, 0.0
  %v680 = vmax.f32 %v664, 0.0
  %v681 = vmax.f32 %v665, 0.0
  %v682 = vmax.f32 %v666, 0.0
  %v683 = vmax.f32 %v667, 0.0
  %v684 = vmax.f32 %v668, 0.0
  %v685 = vmax.f32 %v669, 0.0
  %v686 = vmax.f32 %v670, 0.0
  %v687 = vmax.f32 %v671, 0.0
  %v688 = vmax.f32 %v672, 0.0
  %v689 = vmax.f32 %v673, 0.0
  %v690 = vmax.f32 %v674, 0.0
  %v691 = vmax.f32 %v675, 0.0
  %v692 = vmax.f32 %v676, 0.0
  %v693 = vmax.f32 %v677, 0.0
  %v694 = vmax.f32 %v678, 0.0
  %v695 = vld [vmem:[%s9] sm:$0xff]
  %v696 = vld [vmem:[%s10] sm:$0x1]
  %v698 = vperm.slane %v696, 0
  %v701 = vsel %vm187, %v679, 0
  %v704 = vsel %vm187, %v680, 0
  %v707 = vsel %vm187, %v681, 0
  %v710 = vsel %vm187, %v682, 0
  %v713 = vsel %vm187, %v683, 0
  %v716 = vsel %vm187, %v684, 0
  %v719 = vsel %vm187, %v685, 0
  %v722 = vsel %vm187, %v686, 0
  %v725 = vsel %vm187, %v687, 0
  %v728 = vsel %vm187, %v688, 0
  %v731 = vsel %vm187, %v689, 0
  %v734 = vsel %vm187, %v690, 0
  %v737 = vsel %vm187, %v691, 0
  %v740 = vsel %vm187, %v692, 0
  %v743 = vsel %vm187, %v693, 0
  %v746 = vsel %vm187, %v694, 0
  %748 = vmatpush.msra.mxu0 0.0
  %749 = vmatpush.msra.mxu0 0.0
  %750 = vmatpush.msra.mxu0 0.0
  %751 = vmatpush.msra.mxu0 0.0
  %752 = vmatpush.msra.mxu0 0.0
  %753 = vmatpush.msra.mxu0 0.0
  %754 = vmatpush.msra.mxu0 0.0
  %755 = vmatpush.msra.mxu0 0.0
  %756 = vmatpush.msra.mxu0 0.0
  %757 = vmatpush.msra.mxu0 0.0
  %758 = vmatpush.msra.mxu0 0.0
  %759 = vmatpush.msra.mxu0 0.0
  %760 = vmatpush.msra.mxu0 0.0
  %761 = vmatpush.msra.mxu0 0.0
  %762 = vmatpush.msra.mxu0 0.0
  %763 = vmatpush.msra.mxu0 %v695
  %764 = vmatmul.f32.gmra.mxu0 %v701
  %v765 = vpop.f32.mrf.mxu0
  %v766 = vadd.f32 %v698, %v765
  %767 = vmatmul.f32.gmra.mxu0 %v704
  %v768 = vpop.f32.mrf.mxu0
  %v769 = vadd.f32 %v698, %v768
  %770 = vmatmul.f32.gmra.mxu0 %v707
  %v771 = vpop.f32.mrf.mxu0
  %v772 = vadd.f32 %v698, %v771
  %773 = vmatmul.f32.gmra.mxu0 %v710
  %v774 = vpop.f32.mrf.mxu0
  %v775 = vadd.f32 %v698, %v774
  %776 = vmatmul.f32.gmra.mxu0 %v713
  %v777 = vpop.f32.mrf.mxu0
  %v778 = vadd.f32 %v698, %v777
  %779 = vmatmul.f32.gmra.mxu0 %v716
  %v780 = vpop.f32.mrf.mxu0
  %v781 = vadd.f32 %v698, %v780
  %782 = vmatmul.f32.gmra.mxu0 %v719
  %v783 = vpop.f32.mrf.mxu0
  %v784 = vadd.f32 %v698, %v783
  %785 = vmatmul.f32.gmra.mxu0 %v722
  %v786 = vpop.f32.mrf.mxu0
  %v787 = vadd.f32 %v698, %v786
  %788 = vmatmul.f32.gmra.mxu0 %v725
  %v789 = vpop.f32.mrf.mxu0
  %v790 = vadd.f32 %v698, %v789
  %791 = vmatmul.f32.gmra.mxu0 %v728
  %v792 = vpop.f32.mrf.mxu0
  %v793 = vadd.f32 %v698, %v792
  %794 = vmatmul.f32.gmra.mxu0 %v731
  %v795 = vpop.f32.mrf.mxu0
  %v796 = vadd.f32 %v698, %v795
  %797 = vmatmul.f32.gmra.mxu0 %v734
  %v798 = vpop.f32.mrf.mxu0
  %v799 = vadd.f32 %v698, %v798
  %800 = vmatmul.f32.gmra.mxu0 %v737
  %v801 = vpop.f32.mrf.mxu0
  %v802 = vadd.f32 %v698, %v801
  %803 = vmatmul.f32.gmra.mxu0 %v740
  %v804 = vpop.f32.mrf.mxu0
  %v805 = vadd.f32 %v698, %v804
  %806 = vmatmul.f32.gmra.mxu0 %v743
  %v807 = vpop.f32.mrf.mxu0
  %v808 = vadd.f32 %v698, %v807
  %809 = vmatmul.f32.gmra.mxu0 %v746
  %v810 = vpop.f32.mrf.mxu0
  %v811 = vadd.f32 %v698, %v810
  %812 = vdwg.mxu0
  %v813 = vld [vmem:[%s11] sm:$0x1]
  %v814 = vld [vmem:[%s12] sm:$0x1]
  %vm815 = vcmask 130048
  %v816 = vsel %vm815, %v766, 0.0
  %v817 = vsel %vm815, %v769, 0.0
  %v818 = vadd.f32 %v816, %v817
  %v819 = vsel %vm815, %v772, 0.0
  %v820 = vadd.f32 %v818, %v819
  %v821 = vsel %vm815, %v775, 0.0
  %v822 = vadd.f32 %v820, %v821
  %v823 = vsel %vm815, %v778, 0.0
  %v824 = vadd.f32 %v822, %v823
  %v825 = vsel %vm815, %v781, 0.0
  %v826 = vadd.f32 %v824, %v825
  %v827 = vsel %vm815, %v784, 0.0
  %v828 = vadd.f32 %v826, %v827
  %v829 = vsel %vm815, %v787, 0.0
  %v830 = vadd.f32 %v828, %v829
  %v831 = vsel %vm815, %v790, 0.0
  %v832 = vadd.f32 %v830, %v831
  %v833 = vsel %vm815, %v793, 0.0
  %v834 = vadd.f32 %v832, %v833
  %v835 = vsel %vm815, %v796, 0.0
  %v836 = vadd.f32 %v834, %v835
  %v837 = vsel %vm815, %v799, 0.0
  %v838 = vadd.f32 %v836, %v837
  %v839 = vsel %vm815, %v802, 0.0
  %v840 = vadd.f32 %v838, %v839
  %v841 = vsel %vm815, %v805, 0.0
  %v842 = vadd.f32 %v840, %v841
  %v843 = vsel %vm815, %v808, 0.0
  %v844 = vadd.f32 %v842, %v843
  %v845 = vsel %vm815, %v811, 0.0
  %v846 = vadd.f32 %v844, %v845
  %v847 = vrot.slane %v846, 4
  %v848 = vadd.f32 %v846, %v847
  %v849 = vrot.slane %v848, 2
  %v850 = vadd.f32 %v848, %v849
  %v851 = vrot.slane %v850, 1
  %v852 = vadd.f32 %v850, %v851
  %v853 = vmul.f32 %v852, %v231
  %v854 = vsub.f32 %v766, %v853
  %v855 = vsub.f32 %v769, %v853
  %v856 = vsub.f32 %v772, %v853
  %v857 = vsub.f32 %v775, %v853
  %v858 = vsub.f32 %v778, %v853
  %v859 = vsub.f32 %v781, %v853
  %v860 = vsub.f32 %v784, %v853
  %v861 = vsub.f32 %v787, %v853
  %v862 = vsub.f32 %v790, %v853
  %v863 = vsub.f32 %v793, %v853
  %v864 = vsub.f32 %v796, %v853
  %v865 = vsub.f32 %v799, %v853
  %v866 = vsub.f32 %v802, %v853
  %v867 = vsub.f32 %v805, %v853
  %v868 = vsub.f32 %v808, %v853
  %v869 = vsub.f32 %v811, %v853
  %v870 = vmul.f32 %v854, %v854
  %v871 = vmul.f32 %v855, %v855
  %v872 = vmul.f32 %v856, %v856
  %v873 = vmul.f32 %v857, %v857
  %v874 = vmul.f32 %v858, %v858
  %v875 = vmul.f32 %v859, %v859
  %v876 = vmul.f32 %v860, %v860
  %v877 = vmul.f32 %v861, %v861
  %v878 = vmul.f32 %v862, %v862
  %v879 = vmul.f32 %v863, %v863
  %v880 = vmul.f32 %v864, %v864
  %v881 = vmul.f32 %v865, %v865
  %v882 = vmul.f32 %v866, %v866
  %v883 = vmul.f32 %v867, %v867
  %v884 = vmul.f32 %v868, %v868
  %v885 = vmul.f32 %v869, %v869
  %v886 = vsel %vm815, %v870, 0.0
  %v887 = vsel %vm815, %v871, 0.0
  %v888 = vadd.f32 %v886, %v887
  %v889 = vsel %vm815, %v872, 0.0
  %v890 = vadd.f32 %v888, %v889
  %v891 = vsel %vm815, %v873, 0.0
  %v892 = vadd.f32 %v890, %v891
  %v893 = vsel %vm815, %v874, 0.0
  %v894 = vadd.f32 %v892, %v893
  %v895 = vsel %vm815, %v875, 0.0
  %v896 = vadd.f32 %v894, %v895
  %v897 = vsel %vm815, %v876, 0.0
  %v898 = vadd.f32 %v896, %v897
  %v899 = vsel %vm815, %v877, 0.0
  %v900 = vadd.f32 %v898, %v899
  %v901 = vsel %vm815, %v878, 0.0
  %v902 = vadd.f32 %v900, %v901
  %v903 = vsel %vm815, %v879, 0.0
  %v904 = vadd.f32 %v902, %v903
  %v905 = vsel %vm815, %v880, 0.0
  %v906 = vadd.f32 %v904, %v905
  %v907 = vsel %vm815, %v881, 0.0
  %v908 = vadd.f32 %v906, %v907
  %v909 = vsel %vm815, %v882, 0.0
  %v910 = vadd.f32 %v908, %v909
  %v911 = vsel %vm815, %v883, 0.0
  %v912 = vadd.f32 %v910, %v911
  %v913 = vsel %vm815, %v884, 0.0
  %v914 = vadd.f32 %v912, %v913
  %v915 = vsel %vm815, %v885, 0.0
  %v916 = vadd.f32 %v914, %v915
  %v917 = vrot.slane %v916, 4
  %v918 = vadd.f32 %v916, %v917
  %v919 = vrot.slane %v918, 2
  %v920 = vadd.f32 %v918, %v919
  %v921 = vrot.slane %v920, 1
  %v922 = vadd.f32 %v920, %v921
  %v923 = vmul.f32 %v922, %v231
  %v924 = vadd.f32 %v923, 1e-05
  %v925 = vrsqrt.pop %v924
  %v926 = vmul.f32 %v925, %v924
  %v927 = vmul.f32 %v926, %v925
  %v928 = vmul.f32 0.5, %v927
  %v929 = vsub.f32 1.5, %v928
  %v930 = vmul.f32 %v925, %v929
  %v931 = vmul.f32 %v924, %v930
  %vm932 = vcmp.eq.f32.partialorder %v924, inf
  %v933 = vsel %vm932, %v924, %v931
  %vm934 = vcmp.eq.f32.partialorder %v924, 0.0
  %v935 = vand.u32 %v924, 2147483648
  %v936 = vsel %vm934, %v935, %v933
  %v937 = vrcp.pop %v936
  %v938 = vmul.f32 %v936, %v937
  %v939 = vsub.f32 1.0, %v938
  %v940 = vmul.f32 %v937, %v939
  %v941 = vadd.f32 %v937, %v940
  %vm942 = vweird.f32 %v936
  %vm943 = vweird.f32 %v937
  %vm944 = vmor %vm942, %vm943
  %v945 = vsel %vm944, %v937, %v941
  %v946 = vand.u32 2147483647, %v936
  %vm947 = vcmp.eq.f32.partialorder %v946, 8.507059e+37
  %v948 = vand.u32 %v936, 2147483648
  %v949 = vor.u32 1.1754944e-38, %v948
  %v950 = vsel %vm947, %v949, %v945
  %v951 = vmul.f32 %v813, %v950
  %v953 = vperm.slane %v951, 0
  %v955 = vmul.f32 %v854, %v953
  %v956 = vmul.f32 %v855, %v953
  %v957 = vmul.f32 %v856, %v953
  %v958 = vmul.f32 %v857, %v953
  %v959 = vmul.f32 %v858, %v953
  %v960 = vmul.f32 %v859, %v953
  %v961 = vmul.f32 %v860, %v953
  %v962 = vmul.f32 %v861, %v953
  %v963 = vmul.f32 %v862, %v953
  %v964 = vmul.f32 %v863, %v953
  %v965 = vmul.f32 %v864, %v953
  %v966 = vmul.f32 %v865, %v953
  %v967 = vmul.f32 %v866, %v953
  %v968 = vmul.f32 %v867, %v953
  %v969 = vmul.f32 %v868, %v953
  %v970 = vmul.f32 %v869, %v953
  %v972 = vperm.slane %v814, 0
  %v974 = vadd.f32 %v955, %v972
  %v975 = vadd.f32 %v956, %v972
  %v976 = vadd.f32 %v957, %v972
  %v977 = vadd.f32 %v958, %v972
  %v978 = vadd.f32 %v959, %v972
  %v979 = vadd.f32 %v960, %v972
  %v980 = vadd.f32 %v961, %v972
  %v981 = vadd.f32 %v962, %v972
  %v982 = vadd.f32 %v963, %v972
  %v983 = vadd.f32 %v964, %v972
  %v984 = vadd.f32 %v965, %v972
  %v985 = vadd.f32 %v966, %v972
  %v986 = vadd.f32 %v967, %v972
  %v987 = vadd.f32 %v968, %v972
  %v988 = vadd.f32 %v969, %v972
  %v989 = vadd.f32 %v970, %v972
  %v990 = vmax.f32 %v974, 0.0
  %v991 = vmax.f32 %v975, 0.0
  %v992 = vmax.f32 %v976, 0.0
  %v993 = vmax.f32 %v977, 0.0
  %v994 = vmax.f32 %v978, 0.0
  %v995 = vmax.f32 %v979, 0.0
  %v996 = vmax.f32 %v980, 0.0
  %v997 = vmax.f32 %v981, 0.0
  %v998 = vmax.f32 %v982, 0.0
  %v999 = vmax.f32 %v983, 0.0
  %v1000 = vmax.f32 %v984, 0.0
  %v1001 = vmax.f32 %v985, 0.0
  %v1002 = vmax.f32 %v986, 0.0
  %v1003 = vmax.f32 %v987, 0.0
  %v1004 = vmax.f32 %v988, 0.0
  %v1005 = vmax.f32 %v989, 0.0
  %1006 = vst.msk [vmem:[%s13] sm:$0xff] %vm815, %v990
  %1007 = vst.msk [vmem:[%s13 + $0x8] sm:$0xff] %vm815, %v991
  %1008 = vst.msk [vmem:[%s13 + $0x10] sm:$0xff] %vm815, %v992
  %1009 = vst.msk [vmem:[%s13 + $0x18] sm:$0xff] %vm815, %v993
  %1010 = vst.msk [vmem:[%s13 + $0x20] sm:$0xff] %vm815, %v994
  %1011 = vst.msk [vmem:[%s13 + $0x28] sm:$0xff] %vm815, %v995
  %1012 = vst.msk [vmem:[%s13 + $0x30] sm:$0xff] %vm815, %v996
  %1013 = vst.msk [vmem:[%s13 + $0x38] sm:$0xff] %vm815, %v997
  %1014 = vst.msk [vmem:[%s13 + $0x40] sm:$0xff] %vm815, %v998
  %1015 = vst.msk [vmem:[%s13 + $0x48] sm:$0xff] %vm815, %v999
  %1016 = vst.msk [vmem:[%s13 + $0x50] sm:$0xff] %vm815, %v1000
  %1017 = vst.msk [vmem:[%s13 + $0x58] sm:$0xff] %vm815, %v1001
  %1018 = vst.msk [vmem:[%s13 + $0x60] sm:$0xff] %vm815, %v1002
  %1019 = vst.msk [vmem:[%s13 + $0x68] sm:$0xff] %vm815, %v1003
  %1020 = vst.msk [vmem:[%s13 + $0x70] sm:$0xff] %vm815, %v1004
  %1021 = vst.msk [vmem:[%s13 + $0x78] sm:$0xff] %vm815, %v1005
  // Predicated region
  $region54: #{pcan_forward.7} parent=0 // pred_check
    _
  $region55: #{pcan_forward.7} parent=0 // pred_check_branch
    %1023 = sbr.rel (0) target = $region57
  $region56: #{pcan_forward.7} parent=0 // pred_region
    _
  $region57: #{pcan_forward.7} parent=0 // pred_fallthru
    _
  // Predicated region
  $region58: #{pcan_forward.7} parent=0 // pred_check
    _
  $region59: #{pcan_forward.7} parent=0 // pred_check_branch
    %1025 = sbr.rel (0) target = $region61
  $region60: #{pcan_forward.7} parent=0 // pred_region
    _
  $region61: #{pcan_forward.7} parent=0 // pred_fallthru
    _

// kernel: pcan_forward.8
$region0: #{pcan_forward.8}
  #allocation0 [shape = 'u32[]', space=smem, size = 0x4, offset = 0x4, fixed_abs, tag = 'smem constant byte address 0x4 - core index']
  #allocation1 [shape = 'u32[72,128]{1,0:T(1,128)}', space=vmem, size = 0x9000, scoped, tag = 'internal scratch']
  %s0 = inlined_call_operand.vmem [shape: f32[256,19], index: 0, kind: input, shape index: {}]
  %s1 = inlined_call_operand.vmem [shape: f32[19,32], index: 1, kind: input, shape index: {}]
  %s2 = inlined_call_operand.vmem [shape: f32[1,32], index: 2, kind: input, shape index: {}]
  %s3 = inlined_call_operand.vmem [shape: f32[1,32], index: 3, kind: input, shape index: {}]
  %s4 = inlined_call_operand.vmem [shape: f32[1,32], index: 4, kind: input, shape index: {}]
  %s5 = inlined_call_operand.vmem [shape: f32[32,40], index: 5, kind: input, shape index: {}]
  %s6 = inlined_call_operand.vmem [shape: f32[1,40], index: 6, kind: input, shape index: {}]
  %s7 = inlined_call_operand.vmem [shape: f32[1,40], index: 7, kind: input, shape index: {}]
  %s8 = inlined_call_operand.vmem [shape: f32[1,40], index: 8, kind: input, shape index: {}]
  %s9 = inlined_call_operand.vmem [shape: f32[40,64], index: 9, kind: input, shape index: {}]
  %s10 = inlined_call_operand.vmem [shape: f32[1,64], index: 10, kind: input, shape index: {}]
  %s11 = inlined_call_operand.vmem [shape: f32[1,64], index: 11, kind: input, shape index: {}]
  %s12 = inlined_call_operand.vmem [shape: f32[1,64], index: 12, kind: input, shape index: {}]
  %s13 = inlined_call_operand.vmem [shape: f32[256,64], index: 13, kind: output, shape index: {}]
  %s14 = sld [smem:[#allocation0]]
  $region62: #{pcan_forward.8} parent=0
    _
  %s16 = ssub.s32 1, %s14
  %s17 = scalar_select 0, %s16, %s14
  // Predicated region
  $region2: #{pcan_forward.8} parent=0 // pred_check
    _
  $region3: #{pcan_forward.8} parent=0 // pred_check_branch
    %19 = sbr.rel (0) target = $region5
  $region4: #{pcan_forward.8} parent=0 // pred_region
    _
  $region5: #{pcan_forward.8} parent=0 // pred_fallthru
    _
  // Predicated region
  $region6: #{pcan_forward.8} parent=0 // pred_check
    _
  $region7: #{pcan_forward.8} parent=0 // pred_check_branch
    %21 = sbr.rel (0) target = $region9
  $region8: #{pcan_forward.8} parent=0 // pred_region
    _
  $region9: #{pcan_forward.8} parent=0 // pred_fallthru
    _
  // Predicated region
  $region10: #{pcan_forward.8} parent=0 // pred_check
    _
  $region11: #{pcan_forward.8} parent=0 // pred_check_branch
    %23 = sbr.rel (0) target = $region13
  $region12: #{pcan_forward.8} parent=0 // pred_region
    _
  $region13: #{pcan_forward.8} parent=0 // pred_fallthru
    _
  // Predicated region
  $region14: #{pcan_forward.8} parent=0 // pred_check
    _
  $region15: #{pcan_forward.8} parent=0 // pred_check_branch
    %25 = sbr.rel (0) target = $region17
  $region16: #{pcan_forward.8} parent=0 // pred_region
    _
  $region17: #{pcan_forward.8} parent=0 // pred_fallthru
    _
  // Predicated region
  $region18: #{pcan_forward.8} parent=0 // pred_check
    _
  $region19: #{pcan_forward.8} parent=0 // pred_check_branch
    %27 = sbr.rel (0) target = $region21
  $region20: #{pcan_forward.8} parent=0 // pred_region
    _
  $region21: #{pcan_forward.8} parent=0 // pred_fallthru
    _
  // Predicated region
  $region22: #{pcan_forward.8} parent=0 // pred_check
    _
  $region23: #{pcan_forward.8} parent=0 // pred_check_branch
    %29 = sbr.rel (0) target = $region25
  $region24: #{pcan_forward.8} parent=0 // pred_region
    _
  $region25: #{pcan_forward.8} parent=0 // pred_fallthru
    _
  // Predicated region
  $region26: #{pcan_forward.8} parent=0 // pred_check
    _
  $region27: #{pcan_forward.8} parent=0 // pred_check_branch
    %31 = sbr.rel (0) target = $region29
  $region28: #{pcan_forward.8} parent=0 // pred_region
    _
  $region29: #{pcan_forward.8} parent=0 // pred_fallthru
    _
  // Predicated region
  $region30: #{pcan_forward.8} parent=0 // pred_check
    _
  $region31: #{pcan_forward.8} parent=0 // pred_check_branch
    %33 = sbr.rel (0) target = $region33
  $region32: #{pcan_forward.8} parent=0 // pred_region
    _
  $region33: #{pcan_forward.8} parent=0 // pred_fallthru
    _
  // Predicated region
  $region34: #{pcan_forward.8} parent=0 // pred_check
    _
  $region35: #{pcan_forward.8} parent=0 // pred_check_branch
    %35 = sbr.rel (0) target = $region37
  $region36: #{pcan_forward.8} parent=0 // pred_region
    _
  $region37: #{pcan_forward.8} parent=0 // pred_fallthru
    _
  // Predicated region
  $region38: #{pcan_forward.8} parent=0 // pred_check
    _
  $region39: #{pcan_forward.8} parent=0 // pred_check_branch
    %37 = sbr.rel (0) target = $region41
  $region40: #{pcan_forward.8} parent=0 // pred_region
    _
  $region41: #{pcan_forward.8} parent=0 // pred_fallthru
    _
  // Predicated region
  $region42: #{pcan_forward.8} parent=0 // pred_check
    _
  $region43: #{pcan_forward.8} parent=0 // pred_check_branch
    %39 = sbr.rel (0) target = $region45
  $region44: #{pcan_forward.8} parent=0 // pred_region
    _
  $region45: #{pcan_forward.8} parent=0 // pred_fallthru
    _
  // Predicated region
  $region46: #{pcan_forward.8} parent=0 // pred_check
    _
  $region47: #{pcan_forward.8} parent=0 // pred_check_branch
    %41 = sbr.rel (0) target = $region49
  $region48: #{pcan_forward.8} parent=0 // pred_region
    _
  $region49: #{pcan_forward.8} parent=0 // pred_fallthru
    _
  // Predicated region
  $region50: #{pcan_forward.8} parent=0 // pred_check
    _
  $region51: #{pcan_forward.8} parent=0 // pred_check_branch
    %43 = sbr.rel (0) target = $region53
  $region52: #{pcan_forward.8} parent=0 // pred_region
    _
  $region53: #{pcan_forward.8} parent=0 // pred_fallthru
    _
  %v44 = vld [vmem:[%s0] sm:$0xff]
  %v45 = vld [vmem:[%s0 + $0x8] sm:$0xff]
  %v46 = vld [vmem:[%s0 + $0x10] sm:$0xff]
  %v47 = vld [vmem:[%s0 + $0x18] sm:$0xff]
  %v48 = vld [vmem:[%s0 + $0x20] sm:$0xff]
  %v49 = vld [vmem:[%s0 + $0x28] sm:$0xff]
  %v50 = vld [vmem:[%s0 + $0x30] sm:$0xff]
  %v51 = vld [vmem:[%s0 + $0x38] sm:$0xff]
  %v52 = vld [vmem:[%s0 + $0x40] sm:$0xff]
  %v53 = vld [vmem:[%s0 + $0x48] sm:$0xff]
  %v54 = vld [vmem:[%s0 + $0x50] sm:$0xff]
  %v55 = vld [vmem:[%s0 + $0x58] sm:$0xff]
  %v56 = vld [vmem:[%s0 + $0x60] sm:$0xff]
  %v57 = vld [vmem:[%s0 + $0x68] sm:$0xff]
  %v58 = vld [vmem:[%s0 + $0x70] sm:$0xff]
  %v59 = vld [vmem:[%s0 + $0x78] sm:$0xff]
  %v60 = vld [vmem:[%s0 + $0x80] sm:$0xff]
  %v61 = vld [vmem:[%s0 + $0x88] sm:$0xff]
  %v62 = vld [vmem:[%s0 + $0x90] sm:$0xff]
  %v63 = vld [vmem:[%s0 + $0x98] sm:$0xff]
  %v64 = vld [vmem:[%s0 + $0xa0] sm:$0xff]
  %v65 = vld [vmem:[%s0 + $0xa8] sm:$0xff]
  %v66 = vld [vmem:[%s0 + $0xb0] sm:$0xff]
  %v67 = vld [vmem:[%s0 + $0xb8] sm:$0xff]
  %v68 = vld [vmem:[%s0 + $0xc0] sm:$0xff]
  %v69 = vld [vmem:[%s0 + $0xc8] sm:$0xff]
  %v70 = vld [vmem:[%s0 + $0xd0] sm:$0xff]
  %v71 = vld [vmem:[%s0 + $0xd8] sm:$0xff]
  %v72 = vld [vmem:[%s0 + $0xe0] sm:$0xff]
  %v73 = vld [vmem:[%s0 + $0xe8] sm:$0xff]
  %v74 = vld [vmem:[%s0 + $0xf0] sm:$0xff]
  %v75 = vld [vmem:[%s0 + $0xf8] sm:$0xff]
  %v76 = vld [vmem:[%s1] sm:$0xff]
  %v77 = vld [vmem:[%s1 + $0x8] sm:$0xff]
  %v78 = vld [vmem:[%s1 + $0x10] sm:$0x7]
  %v79 = vld [vmem:[%s2] sm:$0x1]
  %v81 = vperm.slane %v79, 0
  %vm83 = vcmask 154624
  %v85 = vsel %vm83, %v44, 0
  %v88 = vsel %vm83, %v45, 0
  %v91 = vsel %vm83, %v46, 0
  %v94 = vsel %vm83, %v47, 0
  %v97 = vsel %vm83, %v48, 0
  %v100 = vsel %vm83, %v49, 0
  %v103 = vsel %vm83, %v50, 0
  %v106 = vsel %vm83, %v51, 0
  %v109 = vsel %vm83, %v52, 0
  %v112 = vsel %vm83, %v53, 0
  %v115 = vsel %vm83, %v54, 0
  %v118 = vsel %vm83, %v55, 0
  %v121 = vsel %vm83, %v56, 0
  %v124 = vsel %vm83, %v57, 0
  %v127 = vsel %vm83, %v58, 0
  %v130 = vsel %vm83, %v59, 0
  %v133 = vsel %vm83, %v60, 0
  %v136 = vsel %vm83, %v61, 0
  %v139 = vsel %vm83, %v62, 0
  %v142 = vsel %vm83, %v63, 0
  %v145 = vsel %vm83, %v64, 0
  %v148 = vsel %vm83, %v65, 0
  %v151 = vsel %vm83, %v66, 0
  %v154 = vsel %vm83, %v67, 0
  %v157 = vsel %vm83, %v68, 0
  %v160 = vsel %vm83, %v69, 0
  %v163 = vsel %vm83, %v70, 0
  %v166 = vsel %vm83, %v71, 0
  %v169 = vsel %vm83, %v72, 0
  %v172 = vsel %vm83, %v73, 0
  %v175 = vsel %vm83, %v74, 0
  %v178 = vsel %vm83, %v75, 0
  %vm180 = vcmask 1042432
  %v182 = vsel %vm180, %v78, 0
  %184 = vmatpush.msra.mxu0 0.0
  %185 = vmatpush.msra.mxu0 0.0
  %186 = vmatpush.msra.mxu0 0.0
  %187 = vmatpush.msra.mxu0 0.0
  %188 = vmatpush.msra.mxu0 0.0
  %189 = vmatpush.msra.mxu0 0.0
  %190 = vmatpush.msra.mxu0 0.0
  %191 = vmatpush.msra.mxu0 0.0
  %192 = vmatpush.msra.mxu0 0.0
  %193 = vmatpush.msra.mxu0 0.0
  %194 = vmatpush.msra.mxu0 0.0
  %195 = vmatpush.msra.mxu0 0.0
  %196 = vmatpush.msra.mxu0 0.0
  %197 = vmatpush.msra.mxu0 %v182
  %198 = vmatpush.msra.mxu0 %v77
  %199 = vmatpush.msra.mxu0 %v76
  %200 = vmatmul.f32.gmra.mxu0 %v85
  %v201 = vpop.f32.mrf.mxu0
  %v202 = vadd.f32 %v81, %v201
  %203 = vmatmul.f32.gmra.mxu0 %v88
  %v204 = vpop.f32.mrf.mxu0
  %v205 = vadd.f32 %v81, %v204
  %206 = vmatmul.f32.gmra.mxu0 %v91
  %v207 = vpop.f32.mrf.mxu0
  %v208 = vadd.f32 %v81, %v207
  %209 = vmatmul.f32.gmra.mxu0 %v94
  %v210 = vpop.f32.mrf.mxu0
  %v211 = vadd.f32 %v81, %v210
  %212 = vmatmul.f32.gmra.mxu0 %v97
  %v213 = vpop.f32.mrf.mxu0
  %v214 = vadd.f32 %v81, %v213
  %215 = vmatmul.f32.gmra.mxu0 %v100
  %v216 = vpop.f32.mrf.mxu0
  %v217 = vadd.f32 %v81, %v216
  %218 = vmatmul.f32.gmra.mxu0 %v103
  %v219 = vpop.f32.mrf.mxu0
  %v220 = vadd.f32 %v81, %v219
  %221 = vmatmul.f32.gmra.mxu0 %v106
  %v222 = vpop.f32.mrf.mxu0
  %v223 = vadd.f32 %v81, %v222
  %224 = vmatmul.f32.gmra.mxu0 %v109
  %v225 = vpop.f32.mrf.mxu0
  %v226 = vadd.f32 %v81, %v225
  %227 = vmatmul.f32.gmra.mxu0 %v112
  %v228 = vpop.f32.mrf.mxu0
  %v229 = vadd.f32 %v81, %v228
  %230 = vmatmul.f32.gmra.mxu0 %v115
  %v231 = vpop.f32.mrf.mxu0
  %v232 = vadd.f32 %v81, %v231
  %233 = vmatmul.f32.gmra.mxu0 %v118
  %v234 = vpop.f32.mrf.mxu0
  %v235 = vadd.f32 %v81, %v234
  %236 = vmatmul.f32.gmra.mxu0 %v121
  %v237 = vpop.f32.mrf.mxu0
  %v238 = vadd.f32 %v81, %v237
  %239 = vmatmul.f32.gmra.mxu0 %v124
  %v240 = vpop.f32.mrf.mxu0
  %v241 = vadd.f32 %v81, %v240
  %242 = vmatmul.f32.gmra.mxu0 %v127
  %v243 = vpop.f32.mrf.mxu0
  %v244 = vadd.f32 %v81, %v243
  %245 = vmatmul.f32.gmra.mxu0 %v130
  %v246 = vpop.f32.mrf.mxu0
  %v247 = vadd.f32 %v81, %v246
  %248 = vmatmul.f32.gmra.mxu0 %v133
  %v249 = vpop.f32.mrf.mxu0
  %v250 = vadd.f32 %v81, %v249
  %251 = vmatmul.f32.gmra.mxu0 %v136
  %v252 = vpop.f32.mrf.mxu0
  %v253 = vadd.f32 %v81, %v252
  %254 = vmatmul.f32.gmra.mxu0 %v139
  %v255 = vpop.f32.mrf.mxu0
  %v256 = vadd.f32 %v81, %v255
  %257 = vmatmul.f32.gmra.mxu0 %v142
  %v258 = vpop.f32.mrf.mxu0
  %v259 = vadd.f32 %v81, %v258
  %260 = vmatmul.f32.gmra.mxu0 %v145
  %v261 = vpop.f32.mrf.mxu0
  %v262 = vadd.f32 %v81, %v261
  %263 = vmatmul.f32.gmra.mxu0 %v148
  %v264 = vpop.f32.mrf.mxu0
  %v265 = vadd.f32 %v81, %v264
  %266 = vmatmul.f32.gmra.mxu0 %v151
  %v267 = vpop.f32.mrf.mxu0
  %v268 = vadd.f32 %v81, %v267
  %269 = vmatmul.f32.gmra.mxu0 %v154
  %v270 = vpop.f32.mrf.mxu0
  %v271 = vadd.f32 %v81, %v270
  %272 = vmatmul.f32.gmra.mxu0 %v157
  %v273 = vpop.f32.mrf.mxu0
  %v274 = vadd.f32 %v81, %v273
  %275 = vmatmul.f32.gmra.mxu0 %v160
  %v276 = vpop.f32.mrf.mxu0
  %v277 = vadd.f32 %v81, %v276
  %278 = vmatmul.f32.gmra.mxu0 %v163
  %v279 = vpop.f32.mrf.mxu0
  %v280 = vadd.f32 %v81, %v279
  %281 = vmatmul.f32.gmra.mxu0 %v166
  %v282 = vpop.f32.mrf.mxu0
  %v283 = vadd.f32 %v81, %v282
  %284 = vmatmul.f32.gmra.mxu0 %v169
  %v285 = vpop.f32.mrf.mxu0
  %v286 = vadd.f32 %v81, %v285
  %287 = vmatmul.f32.gmra.mxu0 %v172
  %v288 = vpop.f32.mrf.mxu0
  %v289 = vadd.f32 %v81, %v288
  %290 = vmatmul.f32.gmra.mxu0 %v175
  %v291 = vpop.f32.mrf.mxu0
  %v292 = vadd.f32 %v81, %v291
  %293 = vmatmul.f32.gmra.mxu0 %v178
  %v294 = vpop.f32.mrf.mxu0
  %v295 = vadd.f32 %v81, %v294
  %296 = vdwg.mxu0
  %v297 = vld [vmem:[%s3] sm:$0x1]
  %v298 = vld [vmem:[%s4] sm:$0x1]
  %vm299 = vcmask 261120
  %v300 = vsel %vm299, %v202, 0.0
  %v301 = vsel %vm299, %v205, 0.0
  %v302 = vadd.f32 %v300, %v301
  %v303 = vsel %vm299, %v208, 0.0
  %v304 = vadd.f32 %v302, %v303
  %v305 = vsel %vm299, %v211, 0.0
  %v306 = vadd.f32 %v304, %v305
  %v307 = vsel %vm299, %v214, 0.0
  %v308 = vadd.f32 %v306, %v307
  %v309 = vsel %vm299, %v217, 0.0
  %v310 = vadd.f32 %v308, %v309
  %v311 = vsel %vm299, %v220, 0.0
  %v312 = vadd.f32 %v310, %v311
  %v313 = vsel %vm299, %v223, 0.0
  %v314 = vadd.f32 %v312, %v313
  %v315 = vsel %vm299, %v226, 0.0
  %v316 = vadd.f32 %v314, %v315
  %v317 = vsel %vm299, %v229, 0.0
  %v318 = vadd.f32 %v316, %v317
  %v319 = vsel %vm299, %v232, 0.0
  %v320 = vadd.f32 %v318, %v319
  %v321 = vsel %vm299, %v235, 0.0
  %v322 = vadd.f32 %v320, %v321
  %v323 = vsel %vm299, %v238, 0.0
  %v324 = vadd.f32 %v322, %v323
  %v325 = vsel %vm299, %v241, 0.0
  %v326 = vadd.f32 %v324, %v325
  %v327 = vsel %vm299, %v244, 0.0
  %v328 = vadd.f32 %v326, %v327
  %v329 = vsel %vm299, %v247, 0.0
  %v330 = vadd.f32 %v328, %v329
  %v331 = vsel %vm299, %v250, 0.0
  %v332 = vadd.f32 %v330, %v331
  %v333 = vsel %vm299, %v253, 0.0
  %v334 = vadd.f32 %v332, %v333
  %v335 = vsel %vm299, %v256, 0.0
  %v336 = vadd.f32 %v334, %v335
  %v337 = vsel %vm299, %v259, 0.0
  %v338 = vadd.f32 %v336, %v337
  %v339 = vsel %vm299, %v262, 0.0
  %v340 = vadd.f32 %v338, %v339
  %v341 = vsel %vm299, %v265, 0.0
  %v342 = vadd.f32 %v340, %v341
  %v343 = vsel %vm299, %v268, 0.0
  %v344 = vadd.f32 %v342, %v343
  %v345 = vsel %vm299, %v271, 0.0
  %v346 = vadd.f32 %v344, %v345
  %v347 = vsel %vm299, %v274, 0.0
  %v348 = vadd.f32 %v346, %v347
  %v349 = vsel %vm299, %v277, 0.0
  %v350 = vadd.f32 %v348, %v349
  %v351 = vsel %vm299, %v280, 0.0
  %v352 = vadd.f32 %v350, %v351
  %v353 = vsel %vm299, %v283, 0.0
  %v354 = vadd.f32 %v352, %v353
  %v355 = vsel %vm299, %v286, 0.0
  %v356 = vadd.f32 %v354, %v355
  %v357 = vsel %vm299, %v289, 0.0
  %v358 = vadd.f32 %v356, %v357
  %v359 = vsel %vm299, %v292, 0.0
  %v360 = vadd.f32 %v358, %v359
  %v361 = vsel %vm299, %v295, 0.0
  %v362 = vadd.f32 %v360, %v361
  %v363 = vrot.slane %v362, 4
  %v364 = vadd.f32 %v362, %v363
  %v365 = vrot.slane %v364, 2
  %v366 = vadd.f32 %v364, %v365
  %v367 = vrot.slane %v366, 1
  %v368 = vadd.f32 %v366, %v367
  %v369 = vrcp.pop 256.0
  %v370 = vmul.f32 256.0, %v369
  %v371 = vsub.f32 1.0, %v370
  %v372 = vmul.f32 %v369, %v371
  %v373 = vadd.f32 %v369, %v372
  %vm374 = vweird.f32 %v369
  %v375 = vsel %vm374, %v369, %v373
  %v376 = vmul.f32 %v368, %v375
  %v377 = vsub.f32 %v202, %v376
  %v378 = vsub.f32 %v205, %v376
  %v379 = vsub.f32 %v208, %v376
  %v380 = vsub.f32 %v211, %v376
  %v381 = vsub.f32 %v214, %v376
  %v382 = vsub.f32 %v217, %v376
  %v383 = vsub.f32 %v220, %v376
  %v384 = vsub.f32 %v223, %v376
  %v385 = vsub.f32 %v226, %v376
  %v386 = vsub.f32 %v229, %v376
  %v387 = vsub.f32 %v232, %v376
  %v388 = vsub.f32 %v235, %v376
  %v389 = vsub.f32 %v238, %v376
  %v390 = vsub.f32 %v241, %v376
  %v391 = vsub.f32 %v244, %v376
  %v392 = vsub.f32 %v247, %v376
  %v393 = vsub.f32 %v250, %v376
  %v394 = vsub.f32 %v253, %v376
  %v395 = vsub.f32 %v256, %v376
  %v396 = vsub.f32 %v259, %v376
  %v397 = vsub.f32 %v262, %v376
  %v398 = vsub.f32 %v265, %v376
  %v399 = vsub.f32 %v268, %v376
  %v400 = vsub.f32 %v271, %v376
  %v401 = vsub.f32 %v274, %v376
  %v402 = vsub.f32 %v277, %v376
  %v403 = vsub.f32 %v280, %v376
  %v404 = vsub.f32 %v283, %v376
  %v405 = vsub.f32 %v286, %v376
  %v406 = vsub.f32 %v289, %v376
  %v407 = vsub.f32 %v292, %v376
  %v408 = vsub.f32 %v295, %v376
  %v409 = vmul.f32 %v377, %v377
  %v410 = vmul.f32 %v378, %v378
  %v411 = vmul.f32 %v379, %v379
  %v412 = vmul.f32 %v380, %v380
  %v413 = vmul.f32 %v381, %v381
  %v414 = vmul.f32 %v382, %v382
  %v415 = vmul.f32 %v383, %v383
  %v416 = vmul.f32 %v384, %v384
  %v417 = vmul.f32 %v385, %v385
  %v418 = vmul.f32 %v386, %v386
  %v419 = vmul.f32 %v387, %v387
  %v420 = vmul.f32 %v388, %v388
  %v421 = vmul.f32 %v389, %v389
  %v422 = vmul.f32 %v390, %v390
  %v423 = vmul.f32 %v391, %v391
  %v424 = vmul.f32 %v392, %v392
  %v425 = vmul.f32 %v393, %v393
  %v426 = vmul.f32 %v394, %v394
  %v427 = vmul.f32 %v395, %v395
  %v428 = vmul.f32 %v396, %v396
  %v429 = vmul.f32 %v397, %v397
  %v430 = vmul.f32 %v398, %v398
  %v431 = vmul.f32 %v399, %v399
  %v432 = vmul.f32 %v400, %v400
  %v433 = vmul.f32 %v401, %v401
  %v434 = vmul.f32 %v402, %v402
  %v435 = vmul.f32 %v403, %v403
  %v436 = vmul.f32 %v404, %v404
  %v437 = vmul.f32 %v405, %v405
  %v438 = vmul.f32 %v406, %v406
  %v439 = vmul.f32 %v407, %v407
  %v440 = vmul.f32 %v408, %v408
  %v441 = vsel %vm299, %v409, 0.0
  %v442 = vsel %vm299, %v410, 0.0
  %v443 = vadd.f32 %v441, %v442
  %v444 = vsel %vm299, %v411, 0.0
  %v445 = vadd.f32 %v443, %v444
  %v446 = vsel %vm299, %v412, 0.0
  %v447 = vadd.f32 %v445, %v446
  %v448 = vsel %vm299, %v413, 0.0
  %v449 = vadd.f32 %v447, %v448
  %v450 = vsel %vm299, %v414, 0.0
  %v451 = vadd.f32 %v449, %v450
  %v452 = vsel %vm299, %v415, 0.0
  %v453 = vadd.f32 %v451, %v452
  %v454 = vsel %vm299, %v416, 0.0
  %v455 = vadd.f32 %v453, %v454
  %v456 = vsel %vm299, %v417, 0.0
  %v457 = vadd.f32 %v455, %v456
  %v458 = vsel %vm299, %v418, 0.0
  %v459 = vadd.f32 %v457, %v458
  %v460 = vsel %vm299, %v419, 0.0
  %v461 = vadd.f32 %v459, %v460
  %v462 = vsel %vm299, %v420, 0.0
  %v463 = vadd.f32 %v461, %v462
  %v464 = vsel %vm299, %v421, 0.0
  %v465 = vadd.f32 %v463, %v464
  %v466 = vsel %vm299, %v422, 0.0
  %v467 = vadd.f32 %v465, %v466
  %v468 = vsel %vm299, %v423, 0.0
  %v469 = vadd.f32 %v467, %v468
  %v470 = vsel %vm299, %v424, 0.0
  %v471 = vadd.f32 %v469, %v470
  %v472 = vsel %vm299, %v425, 0.0
  %v473 = vadd.f32 %v471, %v472
  %v474 = vsel %vm299, %v426, 0.0
  %v475 = vadd.f32 %v473, %v474
  %v476 = vsel %vm299, %v427, 0.0
  %v477 = vadd.f32 %v475, %v476
  %v478 = vsel %vm299, %v428, 0.0
  %v479 = vadd.f32 %v477, %v478
  %v480 = vsel %vm299, %v429, 0.0
  %v481 = vadd.f32 %v479, %v480
  %v482 = vsel %vm299, %v430, 0.0
  %v483 = vadd.f32 %v481, %v482
  %v484 = vsel %vm299, %v431, 0.0
  %v485 = vadd.f32 %v483, %v484
  %v486 = vsel %vm299, %v432, 0.0
  %v487 = vadd.f32 %v485, %v486
  %v488 = vsel %vm299, %v433, 0.0
  %v489 = vadd.f32 %v487, %v488
  %v490 = vsel %vm299, %v434, 0.0
  %v491 = vadd.f32 %v489, %v490
  %v492 = vsel %vm299, %v435, 0.0
  %v493 = vadd.f32 %v491, %v492
  %v494 = vsel %vm299, %v436, 0.0
  %v495 = vadd.f32 %v493, %v494
  %v496 = vsel %vm299, %v437, 0.0
  %v497 = vadd.f32 %v495, %v496
  %v498 = vsel %vm299, %v438, 0.0
  %v499 = vadd.f32 %v497, %v498
  %v500 = vsel %vm299, %v439, 0.0
  %v501 = vadd.f32 %v499, %v500
  %v502 = vsel %vm299, %v440, 0.0
  %v503 = vadd.f32 %v501, %v502
  %v504 = vrot.slane %v503, 4
  %v505 = vadd.f32 %v503, %v504
  %v506 = vrot.slane %v505, 2
  %v507 = vadd.f32 %v505, %v506
  %v508 = vrot.slane %v507, 1
  %v509 = vadd.f32 %v507, %v508
  %v510 = vmul.f32 %v509, %v375
  %v511 = vadd.f32 %v510, 1e-05
  %v512 = vrsqrt.pop %v511
  %v513 = vmul.f32 %v512, %v511
  %v514 = vmul.f32 %v513, %v512
  %v515 = vmul.f32 0.5, %v514
  %v516 = vsub.f32 1.5, %v515
  %v517 = vmul.f32 %v512, %v516
  %v518 = vmul.f32 %v511, %v517
  %vm519 = vcmp.eq.f32.partialorder %v511, inf
  %v520 = vsel %vm519, %v511, %v518
  %vm521 = vcmp.eq.f32.partialorder %v511, 0.0
  %v522 = vand.u32 %v511, 2147483648
  %v523 = vsel %vm521, %v522, %v520
  %v524 = vrcp.pop %v523
  %v525 = vmul.f32 %v523, %v524
  %v526 = vsub.f32 1.0, %v525
  %v527 = vmul.f32 %v524, %v526
  %v528 = vadd.f32 %v524, %v527
  %vm529 = vweird.f32 %v523
  %vm530 = vweird.f32 %v524
  %vm531 = vmor %vm529, %vm530
  %v532 = vsel %vm531, %v524, %v528
  %v533 = vand.u32 2147483647, %v523
  %vm534 = vcmp.eq.f32.partialorder %v533, 8.507059e+37
  %v535 = vand.u32 %v523, 2147483648
  %v536 = vor.u32 1.1754944e-38, %v535
  %v537 = vsel %vm534, %v536, %v532
  %v538 = vmul.f32 %v297, %v537
  %v540 = vperm.slane %v538, 0
  %v542 = vmul.f32 %v377, %v540
  %v543 = vmul.f32 %v378, %v540
  %v544 = vmul.f32 %v379, %v540
  %v545 = vmul.f32 %v380, %v540
  %v546 = vmul.f32 %v381, %v540
  %v547 = vmul.f32 %v382, %v540
  %v548 = vmul.f32 %v383, %v540
  %v549 = vmul.f32 %v384, %v540
  %v550 = vmul.f32 %v385, %v540
  %v551 = vmul.f32 %v386, %v540
  %v552 = vmul.f32 %v387, %v540
  %v553 = vmul.f32 %v388, %v540
  %v554 = vmul.f32 %v389, %v540
  %v555 = vmul.f32 %v390, %v540
  %v556 = vmul.f32 %v391, %v540
  %v557 = vmul.f32 %v392, %v540
  %v558 = vmul.f32 %v393, %v540
  %v559 = vmul.f32 %v394, %v540
  %v560 = vmul.f32 %v395, %v540
  %v561 = vmul.f32 %v396, %v540
  %v562 = vmul.f32 %v397, %v540
  %v563 = vmul.f32 %v398, %v540
  %v564 = vmul.f32 %v399, %v540
  %v565 = vmul.f32 %v400, %v540
  %v566 = vmul.f32 %v401, %v540
  %v567 = vmul.f32 %v402, %v540
  %v568 = vmul.f32 %v403, %v540
  %v569 = vmul.f32 %v404, %v540
  %v570 = vmul.f32 %v405, %v540
  %v571 = vmul.f32 %v406, %v540
  %v572 = vmul.f32 %v407, %v540
  %v573 = vmul.f32 %v408, %v540
  %v575 = vperm.slane %v298, 0
  %v577 = vadd.f32 %v542, %v575
  %v578 = vadd.f32 %v543, %v575
  %v579 = vadd.f32 %v544, %v575
  %v580 = vadd.f32 %v545, %v575
  %v581 = vadd.f32 %v546, %v575
  %v582 = vadd.f32 %v547, %v575
  %v583 = vadd.f32 %v548, %v575
  %v584 = vadd.f32 %v549, %v575
  %v585 = vadd.f32 %v550, %v575
  %v586 = vadd.f32 %v551, %v575
  %v587 = vadd.f32 %v552, %v575
  %v588 = vadd.f32 %v553, %v575
  %v589 = vadd.f32 %v554, %v575
  %v590 = vadd.f32 %v555, %v575
  %v591 = vadd.f32 %v556, %v575
  %v592 = vadd.f32 %v557, %v575
  %v593 = vadd.f32 %v558, %v575
  %v594 = vadd.f32 %v559, %v575
  %v595 = vadd.f32 %v560, %v575
  %v596 = vadd.f32 %v561, %v575
  %v597 = vadd.f32 %v562, %v575
  %v598 = vadd.f32 %v563, %v575
  %v599 = vadd.f32 %v564, %v575
  %v600 = vadd.f32 %v565, %v575
  %v601 = vadd.f32 %v566, %v575
  %v602 = vadd.f32 %v567, %v575
  %v603 = vadd.f32 %v568, %v575
  %v604 = vadd.f32 %v569, %v575
  %v605 = vadd.f32 %v570, %v575
  %v606 = vadd.f32 %v571, %v575
  %v607 = vadd.f32 %v572, %v575
  %v608 = vadd.f32 %v573, %v575
  %v609 = vmax.f32 %v577, 0.0
  %v610 = vmax.f32 %v578, 0.0
  %v611 = vmax.f32 %v579, 0.0
  %v612 = vmax.f32 %v580, 0.0
  %v613 = vmax.f32 %v581, 0.0
  %v614 = vmax.f32 %v582, 0.0
  %v615 = vmax.f32 %v583, 0.0
  %v616 = vmax.f32 %v584, 0.0
  %v617 = vmax.f32 %v585, 0.0
  %v618 = vmax.f32 %v586, 0.0
  %v619 = vmax.f32 %v587, 0.0
  %v620 = vmax.f32 %v588, 0.0
  %v621 = vmax.f32 %v589, 0.0
  %v622 = vmax.f32 %v590, 0.0
  %v623 = vmax.f32 %v591, 0.0
  %v624 = vmax.f32 %v592, 0.0
  %v625 = vmax.f32 %v593, 0.0
  %v626 = vmax.f32 %v594, 0.0
  %v627 = vmax.f32 %v595, 0.0
  %v628 = vmax.f32 %v596, 0.0
  %v629 = vmax.f32 %v597, 0.0
  %v630 = vmax.f32 %v598, 0.0
  %v631 = vmax.f32 %v599, 0.0
  %v632 = vmax.f32 %v600, 0.0
  %v633 = vmax.f32 %v601, 0.0
  %v634 = vmax.f32 %v602, 0.0
  %v635 = vmax.f32 %v603, 0.0
  %v636 = vmax.f32 %v604, 0.0
  %v637 = vmax.f32 %v605, 0.0
  %v638 = vmax.f32 %v606, 0.0
  %v639 = vmax.f32 %v607, 0.0
  %v640 = vmax.f32 %v608, 0.0
  %v641 = vld [vmem:[%s5] sm:$0xff]
  %v642 = vld [vmem:[%s5 + $0x8] sm:$0xff]
  %v643 = vld [vmem:[%s5 + $0x10] sm:$0xff]
  %v644 = vld [vmem:[%s5 + $0x18] sm:$0xff]
  %v645 = vld [vmem:[%s6] sm:$0x1]
  %v647 = vperm.slane %v645, 0
  %v650 = vsel %vm299, %v609, 0
  %v653 = vsel %vm299, %v610, 0
  %v656 = vsel %vm299, %v611, 0
  %v659 = vsel %vm299, %v612, 0
  %v662 = vsel %vm299, %v613, 0
  %v665 = vsel %vm299, %v614, 0
  %v668 = vsel %vm299, %v615, 0
  %v671 = vsel %vm299, %v616, 0
  %v674 = vsel %vm299, %v617, 0
  %v677 = vsel %vm299, %v618, 0
  %v680 = vsel %vm299, %v619, 0
  %v683 = vsel %vm299, %v620, 0
  %v686 = vsel %vm299, %v621, 0
  %v689 = vsel %vm299, %v622, 0
  %v692 = vsel %vm299, %v623, 0
  %v695 = vsel %vm299, %v624, 0
  %v698 = vsel %vm299, %v625, 0
  %v701 = vsel %vm299, %v626, 0
  %v704 = vsel %vm299, %v627, 0
  %v707 = vsel %vm299, %v628, 0
  %v710 = vsel %vm299, %v629, 0
  %v713 = vsel %vm299, %v630, 0
  %v716 = vsel %vm299, %v631, 0
  %v719 = vsel %vm299, %v632, 0
  %v722 = vsel %vm299, %v633, 0
  %v725 = vsel %vm299, %v634, 0
  %v728 = vsel %vm299, %v635, 0
  %v731 = vsel %vm299, %v636, 0
  %v734 = vsel %vm299, %v637, 0
  %v737 = vsel %vm299, %v638, 0
  %v740 = vsel %vm299, %v639, 0
  %v743 = vsel %vm299, %v640, 0
  %745 = vmatpush.msra.mxu0 0.0
  %746 = vmatpush.msra.mxu0 0.0
  %747 = vmatpush.msra.mxu0 0.0
  %748 = vmatpush.msra.mxu0 0.0
  %749 = vmatpush.msra.mxu0 0.0
  %750 = vmatpush.msra.mxu0 0.0
  %751 = vmatpush.msra.mxu0 0.0
  %752 = vmatpush.msra.mxu0 0.0
  %753 = vmatpush.msra.mxu0 0.0
  %754 = vmatpush.msra.mxu0 0.0
  %755 = vmatpush.msra.mxu0 0.0
  %756 = vmatpush.msra.mxu0 0.0
  %757 = vmatpush.msra.mxu0 %v644
  %758 = vmatpush.msra.mxu0 %v643
  %759 = vmatpush.msra.mxu0 %v642
  %760 = vmatpush.msra.mxu0 %v641
  %761 = vmatmul.f32.gmra.mxu0 %v650
  %v762 = vpop.f32.mrf.mxu0
  %v763 = vadd.f32 %v647, %v762
  %764 = vmatmul.f32.gmra.mxu0 %v653
  %v765 = vpop.f32.mrf.mxu0
  %v766 = vadd.f32 %v647, %v765
  %767 = vmatmul.f32.gmra.mxu0 %v656
  %v768 = vpop.f32.mrf.mxu0
  %v769 = vadd.f32 %v647, %v768
  %770 = vmatmul.f32.gmra.mxu0 %v659
  %v771 = vpop.f32.mrf.mxu0
  %v772 = vadd.f32 %v647, %v771
  %773 = vmatmul.f32.gmra.mxu0 %v662
  %v774 = vpop.f32.mrf.mxu0
  %v775 = vadd.f32 %v647, %v774
  %776 = vmatmul.f32.gmra.mxu0 %v665
  %v777 = vpop.f32.mrf.mxu0
  %v778 = vadd.f32 %v647, %v777
  %779 = vmatmul.f32.gmra.mxu0 %v668
  %v780 = vpop.f32.mrf.mxu0
  %v781 = vadd.f32 %v647, %v780
  %782 = vmatmul.f32.gmra.mxu0 %v671
  %v783 = vpop.f32.mrf.mxu0
  %v784 = vadd.f32 %v647, %v783
  %785 = vmatmul.f32.gmra.mxu0 %v674
  %v786 = vpop.f32.mrf.mxu0
  %v787 = vadd.f32 %v647, %v786
  %788 = vmatmul.f32.gmra.mxu0 %v677
  %v789 = vpop.f32.mrf.mxu0
  %v790 = vadd.f32 %v647, %v789
  %791 = vmatmul.f32.gmra.mxu0 %v680
  %v792 = vpop.f32.mrf.mxu0
  %v793 = vadd.f32 %v647, %v792
  %794 = vmatmul.f32.gmra.mxu0 %v683
  %v795 = vpop.f32.mrf.mxu0
  %v796 = vadd.f32 %v647, %v795
  %797 = vmatmul.f32.gmra.mxu0 %v686
  %v798 = vpop.f32.mrf.mxu0
  %v799 = vadd.f32 %v647, %v798
  %800 = vmatmul.f32.gmra.mxu0 %v689
  %v801 = vpop.f32.mrf.mxu0
  %v802 = vadd.f32 %v647, %v801
  %803 = vmatmul.f32.gmra.mxu0 %v692
  %v804 = vpop.f32.mrf.mxu0
  %v805 = vadd.f32 %v647, %v804
  %806 = vmatmul.f32.gmra.mxu0 %v695
  %v807 = vpop.f32.mrf.mxu0
  %v808 = vadd.f32 %v647, %v807
  %809 = vmatmul.f32.gmra.mxu0 %v698
  %v810 = vpop.f32.mrf.mxu0
  %v811 = vadd.f32 %v647, %v810
  %812 = vmatmul.f32.gmra.mxu0 %v701
  %v813 = vpop.f32.mrf.mxu0
  %v814 = vadd.f32 %v647, %v813
  %815 = vmatmul.f32.gmra.mxu0 %v704
  %v816 = vpop.f32.mrf.mxu0
  %v817 = vadd.f32 %v647, %v816
  %818 = vmatmul.f32.gmra.mxu0 %v707
  %v819 = vpop.f32.mrf.mxu0
  %v820 = vadd.f32 %v647, %v819
  %821 = vmatmul.f32.gmra.mxu0 %v710
  %v822 = vpop.f32.mrf.mxu0
  %v823 = vadd.f32 %v647, %v822
  %824 = vmatmul.f32.gmra.mxu0 %v713
  %v825 = vpop.f32.mrf.mxu0
  %v826 = vadd.f32 %v647, %v825
  %827 = vmatmul.f32.gmra.mxu0 %v716
  %v828 = vpop.f32.mrf.mxu0
  %v829 = vadd.f32 %v647, %v828
  %830 = vmatmul.f32.gmra.mxu0 %v719
  %v831 = vpop.f32.mrf.mxu0
  %v832 = vadd.f32 %v647, %v831
  %833 = vmatmul.f32.gmra.mxu0 %v722
  %v834 = vpop.f32.mrf.mxu0
  %v835 = vadd.f32 %v647, %v834
  %836 = vmatmul.f32.gmra.mxu0 %v725
  %v837 = vpop.f32.mrf.mxu0
  %v838 = vadd.f32 %v647, %v837
  %839 = vmatmul.f32.gmra.mxu0 %v728
  %v840 = vpop.f32.mrf.mxu0
  %v841 = vadd.f32 %v647, %v840
  %842 = vmatmul.f32.gmra.mxu0 %v731
  %v843 = vpop.f32.mrf.mxu0
  %v844 = vadd.f32 %v647, %v843
  %845 = vmatmul.f32.gmra.mxu0 %v734
  %v846 = vpop.f32.mrf.mxu0
  %v847 = vadd.f32 %v647, %v846
  %848 = vmatmul.f32.gmra.mxu0 %v737
  %v849 = vpop.f32.mrf.mxu0
  %v850 = vadd.f32 %v647, %v849
  %851 = vmatmul.f32.gmra.mxu0 %v740
  %v852 = vpop.f32.mrf.mxu0
  %v853 = vadd.f32 %v647, %v852
  %854 = vmatmul.f32.gmra.mxu0 %v743
  %v855 = vpop.f32.mrf.mxu0
  %v856 = vadd.f32 %v647, %v855
  %857 = vdwg.mxu0
  %v858 = vld [vmem:[%s7] sm:$0x1]
  %v859 = vld [vmem:[%s8] sm:$0x1]
  %vm860 = vcmask 326656
  %v861 = vsel %vm860, %v763, 0.0
  %v862 = vsel %vm860, %v766, 0.0
  %v863 = vadd.f32 %v861, %v862
  %v864 = vsel %vm860, %v769, 0.0
  %v865 = vadd.f32 %v863, %v864
  %v866 = vsel %vm860, %v772, 0.0
  %v867 = vadd.f32 %v865, %v866
  %v868 = vsel %vm860, %v775, 0.0
  %v869 = vadd.f32 %v867, %v868
  %v870 = vsel %vm860, %v778, 0.0
  %v871 = vadd.f32 %v869, %v870
  %v872 = vsel %vm860, %v781, 0.0
  %v873 = vadd.f32 %v871, %v872
  %v874 = vsel %vm860, %v784, 0.0
  %v875 = vadd.f32 %v873, %v874
  %v876 = vsel %vm860, %v787, 0.0
  %v877 = vadd.f32 %v875, %v876
  %v878 = vsel %vm860, %v790, 0.0
  %v879 = vadd.f32 %v877, %v878
  %v880 = vsel %vm860, %v793, 0.0
  %v881 = vadd.f32 %v879, %v880
  %v882 = vsel %vm860, %v796, 0.0
  %v883 = vadd.f32 %v881, %v882
  %v884 = vsel %vm860, %v799, 0.0
  %v885 = vadd.f32 %v883, %v884
  %v886 = vsel %vm860, %v802, 0.0
  %v887 = vadd.f32 %v885, %v886
  %v888 = vsel %vm860, %v805, 0.0
  %v889 = vadd.f32 %v887, %v888
  %v890 = vsel %vm860, %v808, 0.0
  %v891 = vadd.f32 %v889, %v890
  %v892 = vsel %vm860, %v811, 0.0
  %v893 = vadd.f32 %v891, %v892
  %v894 = vsel %vm860, %v814, 0.0
  %v895 = vadd.f32 %v893, %v894
  %v896 = vsel %vm860, %v817, 0.0
  %v897 = vadd.f32 %v895, %v896
  %v898 = vsel %vm860, %v820, 0.0
  %v899 = vadd.f32 %v897, %v898
  %v900 = vsel %vm860, %v823, 0.0
  %v901 = vadd.f32 %v899, %v900
  %v902 = vsel %vm860, %v826, 0.0
  %v903 = vadd.f32 %v901, %v902
  %v904 = vsel %vm860, %v829, 0.0
  %v905 = vadd.f32 %v903, %v904
  %v906 = vsel %vm860, %v832, 0.0
  %v907 = vadd.f32 %v905, %v906
  %v908 = vsel %vm860, %v835, 0.0
  %v909 = vadd.f32 %v907, %v908
  %v910 = vsel %vm860, %v838, 0.0
  %v911 = vadd.f32 %v909, %v910
  %v912 = vsel %vm860, %v841, 0.0
  %v913 = vadd.f32 %v911, %v912
  %v914 = vsel %vm860, %v844, 0.0
  %v915 = vadd.f32 %v913, %v914
  %v916 = vsel %vm860, %v847, 0.0
  %v917 = vadd.f32 %v915, %v916
  %v918 = vsel %vm860, %v850, 0.0
  %v919 = vadd.f32 %v917, %v918
  %v920 = vsel %vm860, %v853, 0.0
  %v921 = vadd.f32 %v919, %v920
  %v922 = vsel %vm860, %v856, 0.0
  %v923 = vadd.f32 %v921, %v922
  %v924 = vrot.slane %v923, 4
  %v925 = vadd.f32 %v923, %v924
  %v926 = vrot.slane %v925, 2
  %v927 = vadd.f32 %v925, %v926
  %v928 = vrot.slane %v927, 1
  %v929 = vadd.f32 %v927, %v928
  %v930 = vmul.f32 %v929, %v375
  %v931 = vsub.f32 %v763, %v930
  %v932 = vsub.f32 %v766, %v930
  %v933 = vsub.f32 %v769, %v930
  %v934 = vsub.f32 %v772, %v930
  %v935 = vsub.f32 %v775, %v930
  %v936 = vsub.f32 %v778, %v930
  %v937 = vsub.f32 %v781, %v930
  %v938 = vsub.f32 %v784, %v930
  %v939 = vsub.f32 %v787, %v930
  %v940 = vsub.f32 %v790, %v930
  %v941 = vsub.f32 %v793, %v930
  %v942 = vsub.f32 %v796, %v930
  %v943 = vsub.f32 %v799, %v930
  %v944 = vsub.f32 %v802, %v930
  %v945 = vsub.f32 %v805, %v930
  %v946 = vsub.f32 %v808, %v930
  %v947 = vsub.f32 %v811, %v930
  %v948 = vsub.f32 %v814, %v930
  %v949 = vsub.f32 %v817, %v930
  %v950 = vsub.f32 %v820, %v930
  %v951 = vsub.f32 %v823, %v930
  %v952 = vsub.f32 %v826, %v930
  %v953 = vsub.f32 %v829, %v930
  %v954 = vsub.f32 %v832, %v930
  %v955 = vsub.f32 %v835, %v930
  %v956 = vsub.f32 %v838, %v930
  %v957 = vsub.f32 %v841, %v930
  %v958 = vsub.f32 %v844, %v930
  %v959 = vsub.f32 %v847, %v930
  %v960 = vsub.f32 %v850, %v930
  %v961 = vsub.f32 %v853, %v930
  %v962 = vsub.f32 %v856, %v930
  %v963 = vmul.f32 %v931, %v931
  %v964 = vmul.f32 %v932, %v932
  %v965 = vmul.f32 %v933, %v933
  %v966 = vmul.f32 %v934, %v934
  %v967 = vmul.f32 %v935, %v935
  %v968 = vmul.f32 %v936, %v936
  %v969 = vmul.f32 %v937, %v937
  %v970 = vmul.f32 %v938, %v938
  %v971 = vmul.f32 %v939, %v939
  %v972 = vmul.f32 %v940, %v940
  %v973 = vmul.f32 %v941, %v941
  %v974 = vmul.f32 %v942, %v942
  %v975 = vmul.f32 %v943, %v943
  %v976 = vmul.f32 %v944, %v944
  %v977 = vmul.f32 %v945, %v945
  %v978 = vmul.f32 %v946, %v946
  %v979 = vmul.f32 %v947, %v947
  %v980 = vmul.f32 %v948, %v948
  %v981 = vmul.f32 %v949, %v949
  %v982 = vmul.f32 %v950, %v950
  %v983 = vmul.f32 %v951, %v951
  %v984 = vmul.f32 %v952, %v952
  %v985 = vmul.f32 %v953, %v953
  %v986 = vmul.f32 %v954, %v954
  %v987 = vmul.f32 %v955, %v955
  %v988 = vmul.f32 %v956, %v956
  %v989 = vmul.f32 %v957, %v957
  %v990 = vmul.f32 %v958, %v958
  %v991 = vmul.f32 %v959, %v959
  %v992 = vmul.f32 %v960, %v960
  %v993 = vmul.f32 %v961, %v961
  %v994 = vmul.f32 %v962, %v962
  %v995 = vsel %vm860, %v963, 0.0
  %v996 = vsel %vm860, %v964, 0.0
  %v997 = vadd.f32 %v995, %v996
  %v998 = vsel %vm860, %v965, 0.0
  %v999 = vadd.f32 %v997, %v998
  %v1000 = vsel %vm860, %v966, 0.0
  %v1001 = vadd.f32 %v999, %v1000
  %v1002 = vsel %vm860, %v967, 0.0
  %v1003 = vadd.f32 %v1001, %v1002
  %v1004 = vsel %vm860, %v968, 0.0
  %v1005 = vadd.f32 %v1003, %v1004
  %v1006 = vsel %vm860, %v969, 0.0
  %v1007 = vadd.f32 %v1005, %v1006
  %v1008 = vsel %vm860, %v970, 0.0
  %v1009 = vadd.f32 %v1007, %v1008
  %v1010 = vsel %vm860, %v971, 0.0
  %v1011 = vadd.f32 %v1009, %v1010
  %v1012 = vsel %vm860, %v972, 0.0
  %v1013 = vadd.f32 %v1011, %v1012
  %v1014 = vsel %vm860, %v973, 0.0
  %v1015 = vadd.f32 %v1013, %v1014
  %v1016 = vsel %vm860, %v974, 0.0
  %v1017 = vadd.f32 %v1015, %v1016
  %v1018 = vsel %vm860, %v975, 0.0
  %v1019 = vadd.f32 %v1017, %v1018
  %v1020 = vsel %vm860, %v976, 0.0
  %v1021 = vadd.f32 %v1019, %v1020
  %v1022 = vsel %vm860, %v977, 0.0
  %v1023 = vadd.f32 %v1021, %v1022
  %v1024 = vsel %vm860, %v978, 0.0
  %v1025 = vadd.f32 %v1023, %v1024
  %v1026 = vsel %vm860, %v979, 0.0
  %v1027 = vadd.f32 %v1025, %v1026
  %v1028 = vsel %vm860, %v980, 0.0
  %v1029 = vadd.f32 %v1027, %v1028
  %v1030 = vsel %vm860, %v981, 0.0
  %v1031 = vadd.f32 %v1029, %v1030
  %v1032 = vsel %vm860, %v982, 0.0
  %v1033 = vadd.f32 %v1031, %v1032
  %v1034 = vsel %vm860, %v983, 0.0
  %v1035 = vadd.f32 %v1033, %v1034
  %v1036 = vsel %vm860, %v984, 0.0
  %v1037 = vadd.f32 %v1035, %v1036
  %v1038 = vsel %vm860, %v985, 0.0
  %v1039 = vadd.f32 %v1037, %v1038
  %v1040 = vsel %vm860, %v986, 0.0
  %v1041 = vadd.f32 %v1039, %v1040
  %v1042 = vsel %vm860, %v987, 0.0
  %v1043 = vadd.f32 %v1041, %v1042
  %v1044 = vsel %vm860, %v988, 0.0
  %v1045 = vadd.f32 %v1043, %v1044
  %v1046 = vsel %vm860, %v989, 0.0
  %v1047 = vadd.f32 %v1045, %v1046
  %v1048 = vsel %vm860, %v990, 0.0
  %v1049 = vadd.f32 %v1047, %v1048
  %v1050 = vsel %vm860, %v991, 0.0
  %v1051 = vadd.f32 %v1049, %v1050
  %v1052 = vsel %vm860, %v992, 0.0
  %v1053 = vadd.f32 %v1051, %v1052
  %v1054 = vsel %vm860, %v993, 0.0
  %v1055 = vadd.f32 %v1053, %v1054
  %v1056 = vsel %vm860, %v994, 0.0
  %v1057 = vadd.f32 %v1055, %v1056
  %v1058 = vrot.slane %v1057, 4
  %v1059 = vadd.f32 %v1057, %v1058
  %v1060 = vrot.slane %v1059, 2
  %v1061 = vadd.f32 %v1059, %v1060
  %v1062 = vrot.slane %v1061, 1
  %v1063 = vadd.f32 %v1061, %v1062
  %v1064 = vmul.f32 %v1063, %v375
  %v1065 = vadd.f32 %v1064, 1e-05
  %v1066 = vrsqrt.pop %v1065
  %v1067 = vmul.f32 %v1066, %v1065
  %v1068 = vmul.f32 %v1067, %v1066
  %v1069 = vmul.f32 0.5, %v1068
  %v1070 = vsub.f32 1.5, %v1069
  %v1071 = vmul.f32 %v1066, %v1070
  %v1072 = vmul.f32 %v1065, %v1071
  %vm1073 = vcmp.eq.f32.partialorder %v1065, inf
  %v1074 = vsel %vm1073, %v1065, %v1072
  %vm1075 = vcmp.eq.f32.partialorder %v1065, 0.0
  %v1076 = vand.u32 %v1065, 2147483648
  %v1077 = vsel %vm1075, %v1076, %v1074
  %v1078 = vrcp.pop %v1077
  %v1079 = vmul.f32 %v1077, %v1078
  %v1080 = vsub.f32 1.0, %v1079
  %v1081 = vmul.f32 %v1078, %v1080
  %v1082 = vadd.f32 %v1078, %v1081
  %vm1083 = vweird.f32 %v1077
  %vm1084 = vweird.f32 %v1078
  %vm1085 = vmor %vm1083, %vm1084
  %v1086 = vsel %vm1085, %v1078, %v1082
  %v1087 = vand.u32 2147483647, %v1077
  %vm1088 = vcmp.eq.f32.partialorder %v1087, 8.507059e+37
  %v1089 = vand.u32 %v1077, 2147483648
  %v1090 = vor.u32 1.1754944e-38, %v1089
  %v1091 = vsel %vm1088, %v1090, %v1086
  %v1092 = vmul.f32 %v858, %v1091
  %v1094 = vperm.slane %v1092, 0
  %v1096 = vmul.f32 %v931, %v1094
  %v1097 = vmul.f32 %v932, %v1094
  %v1098 = vmul.f32 %v933, %v1094
  %v1099 = vmul.f32 %v934, %v1094
  %v1100 = vmul.f32 %v935, %v1094
  %v1101 = vmul.f32 %v936, %v1094
  %v1102 = vmul.f32 %v937, %v1094
  %v1103 = vmul.f32 %v938, %v1094
  %v1104 = vmul.f32 %v939, %v1094
  %v1105 = vmul.f32 %v940, %v1094
  %v1106 = vmul.f32 %v941, %v1094
  %v1107 = vmul.f32 %v942, %v1094
  %v1108 = vmul.f32 %v943, %v1094
  %v1109 = vmul.f32 %v944, %v1094
  %v1110 = vmul.f32 %v945, %v1094
  %v1111 = vmul.f32 %v946, %v1094
  %v1112 = vmul.f32 %v947, %v1094
  %v1113 = vmul.f32 %v948, %v1094
  %v1114 = vmul.f32 %v949, %v1094
  %v1115 = vmul.f32 %v950, %v1094
  %v1116 = vmul.f32 %v951, %v1094
  %v1117 = vmul.f32 %v952, %v1094
  %v1118 = vmul.f32 %v953, %v1094
  %v1119 = vmul.f32 %v954, %v1094
  %v1120 = vmul.f32 %v955, %v1094
  %v1121 = vmul.f32 %v956, %v1094
  %v1122 = vmul.f32 %v957, %v1094
  %v1123 = vmul.f32 %v958, %v1094
  %v1124 = vmul.f32 %v959, %v1094
  %v1125 = vmul.f32 %v960, %v1094
  %v1126 = vmul.f32 %v961, %v1094
  %v1127 = vmul.f32 %v962, %v1094
  %v1129 = vperm.slane %v859, 0
  %v1131 = vadd.f32 %v1096, %v1129
  %v1132 = vadd.f32 %v1097, %v1129
  %v1133 = vadd.f32 %v1098, %v1129
  %v1134 = vadd.f32 %v1099, %v1129
  %v1135 = vadd.f32 %v1100, %v1129
  %v1136 = vadd.f32 %v1101, %v1129
  %v1137 = vadd.f32 %v1102, %v1129
  %v1138 = vadd.f32 %v1103, %v1129
  %v1139 = vadd.f32 %v1104, %v1129
  %v1140 = vadd.f32 %v1105, %v1129
  %v1141 = vadd.f32 %v1106, %v1129
  %v1142 = vadd.f32 %v1107, %v1129
  %v1143 = vadd.f32 %v1108, %v1129
  %v1144 = vadd.f32 %v1109, %v1129
  %v1145 = vadd.f32 %v1110, %v1129
  %v1146 = vadd.f32 %v1111, %v1129
  %v1147 = vadd.f32 %v1112, %v1129
  %v1148 = vadd.f32 %v1113, %v1129
  %v1149 = vadd.f32 %v1114, %v1129
  %v1150 = vadd.f32 %v1115, %v1129
  %v1151 = vadd.f32 %v1116, %v1129
  %v1152 = vadd.f32 %v1117, %v1129
  %v1153 = vadd.f32 %v1118, %v1129
  %v1154 = vadd.f32 %v1119, %v1129
  %v1155 = vadd.f32 %v1120, %v1129
  %v1156 = vadd.f32 %v1121, %v1129
  %v1157 = vadd.f32 %v1122, %v1129
  %v1158 = vadd.f32 %v1123, %v1129
  %v1159 = vadd.f32 %v1124, %v1129
  %v1160 = vadd.f32 %v1125, %v1129
  %v1161 = vadd.f32 %v1126, %v1129
  %v1162 = vadd.f32 %v1127, %v1129
  %v1163 = vmax.f32 %v1131, 0.0
  %v1164 = vmax.f32 %v1132, 0.0
  %v1165 = vmax.f32 %v1133, 0.0
  %v1166 = vmax.f32 %v1134, 0.0
  %v1167 = vmax.f32 %v1135, 0.0
  %v1168 = vmax.f32 %v1136, 0.0
  %v1169 = vmax.f32 %v1137, 0.0
  %v1170 = vmax.f32 %v1138, 0.0
  %v1171 = vmax.f32 %v1139, 0.0
  %v1172 = vmax.f32 %v1140, 0.0
  %v1173 = vmax.f32 %v1141, 0.0
  %v1174 = vmax.f32 %v1142, 0.0
  %v1175 = vmax.f32 %v1143, 0.0
  %v1176 = vmax.f32 %v1144, 0.0
  %v1177 = vmax.f32 %v1145, 0.0
  %v1178 = vmax.f32 %v1146, 0.0
  %v1179 = vmax.f32 %v1147, 0.0
  %v1180 = vmax.f32 %v1148, 0.0
  %v1181 = vmax.f32 %v1149, 0.0
  %v1182 = vmax.f32 %v1150, 0.0
  %v1183 = vmax.f32 %v1151, 0.0
  %v1184 = vmax.f32 %v1152, 0.0
  %v1185 = vmax.f32 %v1153, 0.0
  %v1186 = vmax.f32 %v1154, 0.0
  %v1187 = vmax.f32 %v1155, 0.0
  %v1188 = vmax.f32 %v1156, 0.0
  %v1189 = vmax.f32 %v1157, 0.0
  %v1190 = vmax.f32 %v1158, 0.0
  %v1191 = vmax.f32 %v1159, 0.0
  %v1192 = vmax.f32 %v1160, 0.0
  %v1193 = vmax.f32 %v1161, 0.0
  %v1194 = vmax.f32 %v1162, 0.0
  %v1195 = vld [vmem:[%s9] sm:$0xff]
  %v1196 = vld [vmem:[%s9 + $0x8] sm:$0xff]
  %v1197 = vld [vmem:[%s9 + $0x10] sm:$0xff]
  %v1198 = vld [vmem:[%s9 + $0x18] sm:$0xff]
  %v1199 = vld [vmem:[%s9 + $0x20] sm:$0xff]
  %v1200 = vld [vmem:[%s10] sm:$0x1]
  %v1202 = vperm.slane %v1200, 0
  %v1205 = vsel %vm860, %v1163, 0
  %v1208 = vsel %vm860, %v1164, 0
  %v1211 = vsel %vm860, %v1165, 0
  %v1214 = vsel %vm860, %v1166, 0
  %v1217 = vsel %vm860, %v1167, 0
  %v1220 = vsel %vm860, %v1168, 0
  %v1223 = vsel %vm860, %v1169, 0
  %v1226 = vsel %vm860, %v1170, 0
  %v1229 = vsel %vm860, %v1171, 0
  %v1232 = vsel %vm860, %v1172, 0
  %v1235 = vsel %vm860, %v1173, 0
  %v1238 = vsel %vm860, %v1174, 0
  %v1241 = vsel %vm860, %v1175, 0
  %v1244 = vsel %vm860, %v1176, 0
  %v1247 = vsel %vm860, %v1177, 0
  %v1250 = vsel %vm860, %v1178, 0
  %v1253 = vsel %vm860, %v1179, 0
  %v1256 = vsel %vm860, %v1180, 0
  %v1259 = vsel %vm860, %v1181, 0
  %v1262 = vsel %vm860, %v1182, 0
  %v1265 = vsel %vm860, %v1183, 0
  %v1268 = vsel %vm860, %v1184, 0
  %v1271 = vsel %vm860, %v1185, 0
  %v1274 = vsel %vm860, %v1186, 0
  %v1277 = vsel %vm860, %v1187, 0
  %v1280 = vsel %vm860, %v1188, 0
  %v1283 = vsel %vm860, %v1189, 0
  %v1286 = vsel %vm860, %v1190, 0
  %v1289 = vsel %vm860, %v1191, 0
  %v1292 = vsel %vm860, %v1192, 0
  %v1295 = vsel %vm860, %v1193, 0
  %v1298 = vsel %vm860, %v1194, 0
  %1300 = vmatpush.msra.mxu0 0.0
  %1301 = vmatpush.msra.mxu0 0.0
  %1302 = vmatpush.msra.mxu0 0.0
  %1303 = vmatpush.msra.mxu0 0.0
  %1304 = vmatpush.msra.mxu0 0.0
  %1305 = vmatpush.msra.mxu0 0.0
  %1306 = vmatpush.msra.mxu0 0.0
  %1307 = vmatpush.msra.mxu0 0.0
  %1308 = vmatpush.msra.mxu0 0.0
  %1309 = vmatpush.msra.mxu0 0.0
  %1310 = vmatpush.msra.mxu0 0.0
  %1311 = vmatpush.msra.mxu0 %v1199
  %1312 = vmatpush.msra.mxu0 %v1198
  %1313 = vmatpush.msra.mxu0 %v1197
  %1314 = vmatpush.msra.mxu0 %v1196
  %1315 = vmatpush.msra.mxu0 %v1195
  %1316 = vmatmul.f32.gmra.mxu0 %v1205
  %v1317 = vpop.f32.mrf.mxu0
  %v1318 = vadd.f32 %v1202, %v1317
  %1319 = vmatmul.f32.gmra.mxu0 %v1208
  %v1320 = vpop.f32.mrf.mxu0
  %v1321 = vadd.f32 %v1202, %v1320
  %1322 = vmatmul.f32.gmra.mxu0 %v1211
  %v1323 = vpop.f32.mrf.mxu0
  %v1324 = vadd.f32 %v1202, %v1323
  %1325 = vmatmul.f32.gmra.mxu0 %v1214
  %v1326 = vpop.f32.mrf.mxu0
  %v1327 = vadd.f32 %v1202, %v1326
  %1328 = vmatmul.f32.gmra.mxu0 %v1217
  %v1329 = vpop.f32.mrf.mxu0
  %v1330 = vadd.f32 %v1202, %v1329
  %1331 = vmatmul.f32.gmra.mxu0 %v1220
  %v1332 = vpop.f32.mrf.mxu0
  %v1333 = vadd.f32 %v1202, %v1332
  %1334 = vmatmul.f32.gmra.mxu0 %v1223
  %v1335 = vpop.f32.mrf.mxu0
  %v1336 = vadd.f32 %v1202, %v1335
  %1337 = vmatmul.f32.gmra.mxu0 %v1226
  %v1338 = vpop.f32.mrf.mxu0
  %v1339 = vadd.f32 %v1202, %v1338
  %1340 = vmatmul.f32.gmra.mxu0 %v1229
  %v1341 = vpop.f32.mrf.mxu0
  %v1342 = vadd.f32 %v1202, %v1341
  %1343 = vmatmul.f32.gmra.mxu0 %v1232
  %v1344 = vpop.f32.mrf.mxu0
  %v1345 = vadd.f32 %v1202, %v1344
  %1346 = vmatmul.f32.gmra.mxu0 %v1235
  %v1347 = vpop.f32.mrf.mxu0
  %v1348 = vadd.f32 %v1202, %v1347
  %1349 = vmatmul.f32.gmra.mxu0 %v1238
  %v1350 = vpop.f32.mrf.mxu0
  %v1351 = vadd.f32 %v1202, %v1350
  %1352 = vmatmul.f32.gmra.mxu0 %v1241
  %v1353 = vpop.f32.mrf.mxu0
  %v1354 = vadd.f32 %v1202, %v1353
  %1355 = vmatmul.f32.gmra.mxu0 %v1244
  %v1356 = vpop.f32.mrf.mxu0
  %v1357 = vadd.f32 %v1202, %v1356
  %1358 = vmatmul.f32.gmra.mxu0 %v1247
  %v1359 = vpop.f32.mrf.mxu0
  %v1360 = vadd.f32 %v1202, %v1359
  %1361 = vmatmul.f32.gmra.mxu0 %v1250
  %v1362 = vpop.f32.mrf.mxu0
  %v1363 = vadd.f32 %v1202, %v1362
  %1364 = vmatmul.f32.gmra.mxu0 %v1253
  %v1365 = vpop.f32.mrf.mxu0
  %v1366 = vadd.f32 %v1202, %v1365
  %1367 = vmatmul.f32.gmra.mxu0 %v1256
  %v1368 = vpop.f32.mrf.mxu0
  %v1369 = vadd.f32 %v1202, %v1368
  %1370 = vmatmul.f32.gmra.mxu0 %v1259
  %v1371 = vpop.f32.mrf.mxu0
  %v1372 = vadd.f32 %v1202, %v1371
  %1373 = vmatmul.f32.gmra.mxu0 %v1262
  %v1374 = vpop.f32.mrf.mxu0
  %v1375 = vadd.f32 %v1202, %v1374
  %1376 = vmatmul.f32.gmra.mxu0 %v1265
  %v1377 = vpop.f32.mrf.mxu0
  %v1378 = vadd.f32 %v1202, %v1377
  %1379 = vmatmul.f32.gmra.mxu0 %v1268
  %v1380 = vpop.f32.mrf.mxu0
  %v1381 = vadd.f32 %v1202, %v1380
  %1382 = vmatmul.f32.gmra.mxu0 %v1271
  %v1383 = vpop.f32.mrf.mxu0
  %v1384 = vadd.f32 %v1202, %v1383
  %1385 = vmatmul.f32.gmra.mxu0 %v1274
  %v1386 = vpop.f32.mrf.mxu0
  %v1387 = vadd.f32 %v1202, %v1386
  %1388 = vmatmul.f32.gmra.mxu0 %v1277
  %v1389 = vpop.f32.mrf.mxu0
  %v1390 = vadd.f32 %v1202, %v1389
  %1391 = vmatmul.f32.gmra.mxu0 %v1280
  %v1392 = vpop.f32.mrf.mxu0
  %v1393 = vadd.f32 %v1202, %v1392
  %1394 = vmatmul.f32.gmra.mxu0 %v1283
  %v1395 = vpop.f32.mrf.mxu0
  %v1396 = vadd.f32 %v1202, %v1395
  %1397 = vmatmul.f32.gmra.mxu0 %v1286
  %v1398 = vpop.f32.mrf.mxu0
  %v1399 = vadd.f32 %v1202, %v1398
  %1400 = vmatmul.f32.gmra.mxu0 %v1289
  %v1401 = vpop.f32.mrf.mxu0
  %v1402 = vadd.f32 %v1202, %v1401
  %1403 = vmatmul.f32.gmra.mxu0 %v1292
  %v1404 = vpop.f32.mrf.mxu0
  %v1405 = vadd.f32 %v1202, %v1404
  %1406 = vmatmul.f32.gmra.mxu0 %v1295
  %v1407 = vpop.f32.mrf.mxu0
  %v1408 = vadd.f32 %v1202, %v1407
  %1409 = vmatmul.f32.gmra.mxu0 %v1298
  %v1410 = vpop.f32.mrf.mxu0
  %v1411 = vadd.f32 %v1202, %v1410
  %1412 = vdwg.mxu0
  %v1413 = vld [vmem:[%s11] sm:$0x1]
  %v1414 = vld [vmem:[%s12] sm:$0x1]
  %vm1415 = vcmask 523264
  %v1416 = vsel %vm1415, %v1318, 0.0
  %v1417 = vsel %vm1415, %v1321, 0.0
  %v1418 = vadd.f32 %v1416, %v1417
  %v1419 = vsel %vm1415, %v1324, 0.0
  %v1420 = vadd.f32 %v1418, %v1419
  %v1421 = vsel %vm1415, %v1327, 0.0
  %v1422 = vadd.f32 %v1420, %v1421
  %v1423 = vsel %vm1415, %v1330, 0.0
  %v1424 = vadd.f32 %v1422, %v1423
  %v1425 = vsel %vm1415, %v1333, 0.0
  %v1426 = vadd.f32 %v1424, %v1425
  %v1427 = vsel %vm1415, %v1336, 0.0
  %v1428 = vadd.f32 %v1426, %v1427
  %v1429 = vsel %vm1415, %v1339, 0.0
  %v1430 = vadd.f32 %v1428, %v1429
  %v1431 = vsel %vm1415, %v1342, 0.0
  %v1432 = vadd.f32 %v1430, %v1431
  %v1433 = vsel %vm1415, %v1345, 0.0
  %v1434 = vadd.f32 %v1432, %v1433
  %v1435 = vsel %vm1415, %v1348, 0.0
  %v1436 = vadd.f32 %v1434, %v1435
  %v1437 = vsel %vm1415, %v1351, 0.0
  %v1438 = vadd.f32 %v1436, %v1437
  %v1439 = vsel %vm1415, %v1354, 0.0
  %v1440 = vadd.f32 %v1438, %v1439
  %v1441 = vsel %vm1415, %v1357, 0.0
  %v1442 = vadd.f32 %v1440, %v1441
  %v1443 = vsel %vm1415, %v1360, 0.0
  %v1444 = vadd.f32 %v1442, %v1443
  %v1445 = vsel %vm1415, %v1363, 0.0
  %v1446 = vadd.f32 %v1444, %v1445
  %v1447 = vsel %vm1415, %v1366, 0.0
  %v1448 = vadd.f32 %v1446, %v1447
  %v1449 = vsel %vm1415, %v1369, 0.0
  %v1450 = vadd.f32 %v1448, %v1449
  %v1451 = vsel %vm1415, %v1372, 0.0
  %v1452 = vadd.f32 %v1450, %v1451
  %v1453 = vsel %vm1415, %v1375, 0.0
  %v1454 = vadd.f32 %v1452, %v1453
  %v1455 = vsel %vm1415, %v1378, 0.0
  %v1456 = vadd.f32 %v1454, %v1455
  %v1457 = vsel %vm1415, %v1381, 0.0
  %v1458 = vadd.f32 %v1456, %v1457
  %v1459 = vsel %vm1415, %v1384, 0.0
  %v1460 = vadd.f32 %v1458, %v1459
  %v1461 = vsel %vm1415, %v1387, 0.0
  %v1462 = vadd.f32 %v1460, %v1461
  %v1463 = vsel %vm1415, %v1390, 0.0
  %v1464 = vadd.f32 %v1462, %v1463
  %v1465 = vsel %vm1415, %v1393, 0.0
  %v1466 = vadd.f32 %v1464, %v1465
  %v1467 = vsel %vm1415, %v1396, 0.0
  %v1468 = vadd.f32 %v1466, %v1467
  %v1469 = vsel %vm1415, %v1399, 0.0
  %v1470 = vadd.f32 %v1468, %v1469
  %v1471 = vsel %vm1415, %v1402, 0.0
  %v1472 = vadd.f32 %v1470, %v1471
  %v1473 = vsel %vm1415, %v1405, 0.0
  %v1474 = vadd.f32 %v1472, %v1473
  %v1475 = vsel %vm1415, %v1408, 0.0
  %v1476 = vadd.f32 %v1474, %v1475
  %v1477 = vsel %vm1415, %v1411, 0.0
  %v1478 = vadd.f32 %v1476, %v1477
  %v1479 = vrot.slane %v1478, 4
  %v1480 = vadd.f32 %v1478, %v1479
  %v1481 = vrot.slane %v1480, 2
  %v1482 = vadd.f32 %v1480, %v1481
  %v1483 = vrot.slane %v1482, 1
  %v1484 = vadd.f32 %v1482, %v1483
  %v1485 = vmul.f32 %v1484, %v375
  %v1486 = vsub.f32 %v1318, %v1485
  %v1487 = vsub.f32 %v1321, %v1485
  %v1488 = vsub.f32 %v1324, %v1485
  %v1489 = vsub.f32 %v1327, %v1485
  %v1490 = vsub.f32 %v1330, %v1485
  %v1491 = vsub.f32 %v1333, %v1485
  %v1492 = vsub.f32 %v1336, %v1485
  %v1493 = vsub.f32 %v1339, %v1485
  %v1494 = vsub.f32 %v1342, %v1485
  %v1495 = vsub.f32 %v1345, %v1485
  %v1496 = vsub.f32 %v1348, %v1485
  %v1497 = vsub.f32 %v1351, %v1485
  %v1498 = vsub.f32 %v1354, %v1485
  %v1499 = vsub.f32 %v1357, %v1485
  %v1500 = vsub.f32 %v1360, %v1485
  %v1501 = vsub.f32 %v1363, %v1485
  %v1502 = vsub.f32 %v1366, %v1485
  %v1503 = vsub.f32 %v1369, %v1485
  %v1504 = vsub.f32 %v1372, %v1485
  %v1505 = vsub.f32 %v1375, %v1485
  %v1506 = vsub.f32 %v1378, %v1485
  %v1507 = vsub.f32 %v1381, %v1485
  %v1508 = vsub.f32 %v1384, %v1485
  %v1509 = vsub.f32 %v1387, %v1485
  %v1510 = vsub.f32 %v1390, %v1485
  %v1511 = vsub.f32 %v1393, %v1485
  %v1512 = vsub.f32 %v1396, %v1485
  %v1513 = vsub.f32 %v1399, %v1485
  %v1514 = vsub.f32 %v1402, %v1485
  %v1515 = vsub.f32 %v1405, %v1485
  %v1516 = vsub.f32 %v1408, %v1485
  %v1517 = vsub.f32 %v1411, %v1485
  %v1518 = vmul.f32 %v1486, %v1486
  %v1519 = vmul.f32 %v1487, %v1487
  %v1520 = vmul.f32 %v1488, %v1488
  %v1521 = vmul.f32 %v1489, %v1489
  %v1522 = vmul.f32 %v1490, %v1490
  %v1523 = vmul.f32 %v1491, %v1491
  %v1524 = vmul.f32 %v1492, %v1492
  %v1525 = vmul.f32 %v1493, %v1493
  %v1526 = vmul.f32 %v1494, %v1494
  %v1527 = vmul.f32 %v1495, %v1495
  %v1528 = vmul.f32 %v1496, %v1496
  %v1529 = vmul.f32 %v1497, %v1497
  %v1530 = vmul.f32 %v1498, %v1498
  %v1531 = vmul.f32 %v1499, %v1499
  %v1532 = vmul.f32 %v1500, %v1500
  %v1533 = vmul.f32 %v1501, %v1501
  %v1534 = vmul.f32 %v1502, %v1502
  %v1535 = vmul.f32 %v1503, %v1503
  %v1536 = vmul.f32 %v1504, %v1504
  %v1537 = vmul.f32 %v1505, %v1505
  %v1538 = vmul.f32 %v1506, %v1506
  %v1539 = vmul.f32 %v1507, %v1507
  %v1540 = vmul.f32 %v1508, %v1508
  %v1541 = vmul.f32 %v1509, %v1509
  %v1542 = vmul.f32 %v1510, %v1510
  %v1543 = vmul.f32 %v1511, %v1511
  %v1544 = vmul.f32 %v1512, %v1512
  %v1545 = vmul.f32 %v1513, %v1513
  %v1546 = vmul.f32 %v1514, %v1514
  %v1547 = vmul.f32 %v1515, %v1515
  %v1548 = vmul.f32 %v1516, %v1516
  %v1549 = vmul.f32 %v1517, %v1517
  %v1550 = vsel %vm1415, %v1518, 0.0
  %v1551 = vsel %vm1415, %v1519, 0.0
  %v1552 = vadd.f32 %v1550, %v1551
  %v1553 = vsel %vm1415, %v1520, 0.0
  %v1554 = vadd.f32 %v1552, %v1553
  %v1555 = vsel %vm1415, %v1521, 0.0
  %v1556 = vadd.f32 %v1554, %v1555
  %v1557 = vsel %vm1415, %v1522, 0.0
  %v1558 = vadd.f32 %v1556, %v1557
  %v1559 = vsel %vm1415, %v1523, 0.0
  %v1560 = vadd.f32 %v1558, %v1559
  %v1561 = vsel %vm1415, %v1524, 0.0
  %v1562 = vadd.f32 %v1560, %v1561
  %v1563 = vsel %vm1415, %v1525, 0.0
  %v1564 = vadd.f32 %v1562, %v1563
  %v1565 = vsel %vm1415, %v1526, 0.0
  %v1566 = vadd.f32 %v1564, %v1565
  %v1567 = vsel %vm1415, %v1527, 0.0
  %v1568 = vadd.f32 %v1566, %v1567
  %v1569 = vsel %vm1415, %v1528, 0.0
  %v1570 = vadd.f32 %v1568, %v1569
  %v1571 = vsel %vm1415, %v1529, 0.0
  %v1572 = vadd.f32 %v1570, %v1571
  %v1573 = vsel %vm1415, %v1530, 0.0
  %v1574 = vadd.f32 %v1572, %v1573
  %v1575 = vsel %vm1415, %v1531, 0.0
  %v1576 = vadd.f32 %v1574, %v1575
  %v1577 = vsel %vm1415, %v1532, 0.0
  %v1578 = vadd.f32 %v1576, %v1577
  %v1579 = vsel %vm1415, %v1533, 0.0
  %v1580 = vadd.f32 %v1578, %v1579
  %v1581 = vsel %vm1415, %v1534, 0.0
  %v1582 = vadd.f32 %v1580, %v1581
  %v1583 = vsel %vm1415, %v1535, 0.0
  %v1584 = vadd.f32 %v1582, %v1583
  %v1585 = vsel %vm1415, %v1536, 0.0
  %v1586 = vadd.f32 %v1584, %v1585
  %v1587 = vsel %vm1415, %v1537, 0.0
  %v1588 = vadd.f32 %v1586, %v1587
  %v1589 = vsel %vm1415, %v1538, 0.0
  %v1590 = vadd.f32 %v1588, %v1589
  %v1591 = vsel %vm1415, %v1539, 0.0
  %v1592 = vadd.f32 %v1590, %v1591
  %v1593 = vsel %vm1415, %v1540, 0.0
  %v1594 = vadd.f32 %v1592, %v1593
  %v1595 = vsel %vm1415, %v1541, 0.0
  %v1596 = vadd.f32 %v1594, %v1595
  %v1597 = vsel %vm1415, %v1542, 0.0
  %v1598 = vadd.f32 %v1596, %v1597
  %v1599 = vsel %vm1415, %v1543, 0.0
  %v1600 = vadd.f32 %v1598, %v1599
  %v1601 = vsel %vm1415, %v1544, 0.0
  %v1602 = vadd.f32 %v1600, %v1601
  %v1603 = vsel %vm1415, %v1545, 0.0
  %v1604 = vadd.f32 %v1602, %v1603
  %v1605 = vsel %vm1415, %v1546, 0.0
  %v1606 = vadd.f32 %v1604, %v1605
  %v1607 = vsel %vm1415, %v1547, 0.0
  %v1608 = vadd.f32 %v1606, %v1607
  %v1609 = vsel %vm1415, %v1548, 0.0
  %v1610 = vadd.f32 %v1608, %v1609
  %v1611 = vsel %vm1415, %v1549, 0.0
  %v1612 = vadd.f32 %v1610, %v1611
  %v1613 = vrot.slane %v1612, 4
  %v1614 = vadd.f32 %v1612, %v1613
  %v1615 = vrot.slane %v1614, 2
  %v1616 = vadd.f32 %v1614, %v1615
  %v1617 = vrot.slane %v1616, 1
  %v1618 = vadd.f32 %v1616, %v1617
  %v1619 = vmul.f32 %v1618, %v375
  %v1620 = vadd.f32 %v1619, 1e-05
  %v1621 = vrsqrt.pop %v1620
  %v1622 = vmul.f32 %v1621, %v1620
  %v1623 = vmul.f32 %v1622, %v1621
  %v1624 = vmul.f32 0.5, %v1623
  %v1625 = vsub.f32 1.5, %v1624
  %v1626 = vmul.f32 %v1621, %v1625
  %v1627 = vmul.f32 %v1620, %v1626
  %vm1628 = vcmp.eq.f32.partialorder %v1620, inf
  %v1629 = vsel %vm1628, %v1620, %v1627
  %vm1630 = vcmp.eq.f32.partialorder %v1620, 0.0
  %v1631 = vand.u32 %v1620, 2147483648
  %v1632 = vsel %vm1630, %v1631, %v1629
  %v1633 = vrcp.pop %v1632
  %v1634 = vmul.f32 %v1632, %v1633
  %v1635 = vsub.f32 1.0, %v1634
  %v1636 = vmul.f32 %v1633, %v1635
  %v1637 = vadd.f32 %v1633, %v1636
  %vm1638 = vweird.f32 %v1632
  %vm1639 = vweird.f32 %v1633
  %vm1640 = vmor %vm1638, %vm1639
  %v1641 = vsel %vm1640, %v1633, %v1637
  %v1642 = vand.u32 2147483647, %v1632
  %vm1643 = vcmp.eq.f32.partialorder %v1642, 8.507059e+37
  %v1644 = vand.u32 %v1632, 2147483648
  %v1645 = vor.u32 1.1754944e-38, %v1644
  %v1646 = vsel %vm1643, %v1645, %v1641
  %v1647 = vmul.f32 %v1413, %v1646
  %v1649 = vperm.slane %v1647, 0
  %v1651 = vmul.f32 %v1486, %v1649
  %v1652 = vmul.f32 %v1487, %v1649
  %v1653 = vmul.f32 %v1488, %v1649
  %v1654 = vmul.f32 %v1489, %v1649
  %v1655 = vmul.f32 %v1490, %v1649
  %v1656 = vmul.f32 %v1491, %v1649
  %v1657 = vmul.f32 %v1492, %v1649
  %v1658 = vmul.f32 %v1493, %v1649
  %v1659 = vmul.f32 %v1494, %v1649
  %v1660 = vmul.f32 %v1495, %v1649
  %v1661 = vmul.f32 %v1496, %v1649
  %v1662 = vmul.f32 %v1497, %v1649
  %v1663 = vmul.f32 %v1498, %v1649
  %v1664 = vmul.f32 %v1499, %v1649
  %v1665 = vmul.f32 %v1500, %v1649
  %v1666 = vmul.f32 %v1501, %v1649
  %v1667 = vmul.f32 %v1502, %v1649
  %v1668 = vmul.f32 %v1503, %v1649
  %v1669 = vmul.f32 %v1504, %v1649
  %v1670 = vmul.f32 %v1505, %v1649
  %v1671 = vmul.f32 %v1506, %v1649
  %v1672 = vmul.f32 %v1507, %v1649
  %v1673 = vmul.f32 %v1508, %v1649
  %v1674 = vmul.f32 %v1509, %v1649
  %v1675 = vmul.f32 %v1510, %v1649
  %v1676 = vmul.f32 %v1511, %v1649
  %v1677 = vmul.f32 %v1512, %v1649
  %v1678 = vmul.f32 %v1513, %v1649
  %v1679 = vmul.f32 %v1514, %v1649
  %v1680 = vmul.f32 %v1515, %v1649
  %v1681 = vmul.f32 %v1516, %v1649
  %v1682 = vmul.f32 %v1517, %v1649
  %v1684 = vperm.slane %v1414, 0
  %v1686 = vadd.f32 %v1651, %v1684
  %v1687 = vadd.f32 %v1652, %v1684
  %v1688 = vadd.f32 %v1653, %v1684
  %v1689 = vadd.f32 %v1654, %v1684
  %v1690 = vadd.f32 %v1655, %v1684
  %v1691 = vadd.f32 %v1656, %v1684
  %v1692 = vadd.f32 %v1657, %v1684
  %v1693 = vadd.f32 %v1658, %v1684
  %v1694 = vadd.f32 %v1659, %v1684
  %v1695 = vadd.f32 %v1660, %v1684
  %v1696 = vadd.f32 %v1661, %v1684
  %v1697 = vadd.f32 %v1662, %v1684
  %v1698 = vadd.f32 %v1663, %v1684
  %v1699 = vadd.f32 %v1664, %v1684
  %v1700 = vadd.f32 %v1665, %v1684
  %v1701 = vadd.f32 %v1666, %v1684
  %v1702 = vadd.f32 %v1667, %v1684
  %v1703 = vadd.f32 %v1668, %v1684
  %v1704 = vadd.f32 %v1669, %v1684
  %v1705 = vadd.f32 %v1670, %v1684
  %v1706 = vadd.f32 %v1671, %v1684
  %v1707 = vadd.f32 %v1672, %v1684
  %v1708 = vadd.f32 %v1673, %v1684
  %v1709 = vadd.f32 %v1674, %v1684
  %v1710 = vadd.f32 %v1675, %v1684
  %v1711 = vadd.f32 %v1676, %v1684
  %v1712 = vadd.f32 %v1677, %v1684
  %v1713 = vadd.f32 %v1678, %v1684
  %v1714 = vadd.f32 %v1679, %v1684
  %v1715 = vadd.f32 %v1680, %v1684
  %v1716 = vadd.f32 %v1681, %v1684
  %v1717 = vadd.f32 %v1682, %v1684
  %v1718 = vmax.f32 %v1686, 0.0
  %v1719 = vmax.f32 %v1687, 0.0
  %v1720 = vmax.f32 %v1688, 0.0
  %v1721 = vmax.f32 %v1689, 0.0
  %v1722 = vmax.f32 %v1690, 0.0
  %v1723 = vmax.f32 %v1691, 0.0
  %v1724 = vmax.f32 %v1692, 0.0
  %v1725 = vmax.f32 %v1693, 0.0
  %v1726 = vmax.f32 %v1694, 0.0
  %v1727 = vmax.f32 %v1695, 0.0
  %v1728 = vmax.f32 %v1696, 0.0
  %v1729 = vmax.f32 %v1697, 0.0
  %v1730 = vmax.f32 %v1698, 0.0
  %v1731 = vmax.f32 %v1699, 0.0
  %v1732 = vmax.f32 %v1700, 0.0
  %v1733 = vmax.f32 %v1701, 0.0
  %v1734 = vmax.f32 %v1702, 0.0
  %v1735 = vmax.f32 %v1703, 0.0
  %v1736 = vmax.f32 %v1704, 0.0
  %v1737 = vmax.f32 %v1705, 0.0
  %v1738 = vmax.f32 %v1706, 0.0
  %v1739 = vmax.f32 %v1707, 0.0
  %v1740 = vmax.f32 %v1708, 0.0
  %v1741 = vmax.f32 %v1709, 0.0
  %v1742 = vmax.f32 %v1710, 0.0
  %v1743 = vmax.f32 %v1711, 0.0
  %v1744 = vmax.f32 %v1712, 0.0
  %v1745 = vmax.f32 %v1713, 0.0
  %v1746 = vmax.f32 %v1714, 0.0
  %v1747 = vmax.f32 %v1715, 0.0
  %v1748 = vmax.f32 %v1716, 0.0
  %v1749 = vmax.f32 %v1717, 0.0
  %1750 = vst.msk [vmem:[%s13] sm:$0xff] %vm1415, %v1718
  %1751 = vst.msk [vmem:[%s13 + $0x8] sm:$0xff] %vm1415, %v1719
  %1752 = vst.msk [vmem:[%s13 + $0x10] sm:$0xff] %vm1415, %v1720
  %1753 = vst.msk [vmem:[%s13 + $0x18] sm:$0xff] %vm1415, %v1721
  %1754 = vst.msk [vmem:[%s13 + $0x20] sm:$0xff] %vm1415, %v1722
  %1755 = vst.msk [vmem:[%s13 + $0x28] sm:$0xff] %vm1415, %v1723
  %1756 = vst.msk [vmem:[%s13 + $0x30] sm:$0xff] %vm1415, %v1724
  %1757 = vst.msk [vmem:[%s13 + $0x38] sm:$0xff] %vm1415, %v1725
  %1758 = vst.msk [vmem:[%s13 + $0x40] sm:$0xff] %vm1415, %v1726
  %1759 = vst.msk [vmem:[%s13 + $0x48] sm:$0xff] %vm1415, %v1727
  %1760 = vst.msk [vmem:[%s13 + $0x50] sm:$0xff] %vm1415, %v1728
  %1761 = vst.msk [vmem:[%s13 + $0x58] sm:$0xff] %vm1415, %v1729
  %1762 = vst.msk [vmem:[%s13 + $0x60] sm:$0xff] %vm1415, %v1730
  %1763 = vst.msk [vmem:[%s13 + $0x68] sm:$0xff] %vm1415, %v1731
  %1764 = vst.msk [vmem:[%s13 + $0x70] sm:$0xff] %vm1415, %v1732
  %1765 = vst.msk [vmem:[%s13 + $0x78] sm:$0xff] %vm1415, %v1733
  %1766 = vst.msk [vmem:[%s13 + $0x80] sm:$0xff] %vm1415, %v1734
  %1767 = vst.msk [vmem:[%s13 + $0x88] sm:$0xff] %vm1415, %v1735
  %1768 = vst.msk [vmem:[%s13 + $0x90] sm:$0xff] %vm1415, %v1736
  %1769 = vst.msk [vmem:[%s13 + $0x98] sm:$0xff] %vm1415, %v1737
  %1770 = vst.msk [vmem:[%s13 + $0xa0] sm:$0xff] %vm1415, %v1738
  %1771 = vst.msk [vmem:[%s13 + $0xa8] sm:$0xff] %vm1415, %v1739
  %1772 = vst.msk [vmem:[%s13 + $0xb0] sm:$0xff] %vm1415, %v1740
  %1773 = vst.msk [vmem:[%s13 + $0xb8] sm:$0xff] %vm1415, %v1741
  %1774 = vst.msk [vmem:[%s13 + $0xc0] sm:$0xff] %vm1415, %v1742
  %1775 = vst.msk [vmem:[%s13 + $0xc8] sm:$0xff] %vm1415, %v1743
  %1776 = vst.msk [vmem:[%s13 + $0xd0] sm:$0xff] %vm1415, %v1744
  %1777 = vst.msk [vmem:[%s13 + $0xd8] sm:$0xff] %vm1415, %v1745
  %1778 = vst.msk [vmem:[%s13 + $0xe0] sm:$0xff] %vm1415, %v1746
  %1779 = vst.msk [vmem:[%s13 + $0xe8] sm:$0xff] %vm1415, %v1747
  %1780 = vst.msk [vmem:[%s13 + $0xf0] sm:$0xff] %vm1415, %v1748
  %1781 = vst.msk [vmem:[%s13 + $0xf8] sm:$0xff] %vm1415, %v1749
  // Predicated region
  $region54: #{pcan_forward.8} parent=0 // pred_check
    _
  $region55: #{pcan_forward.8} parent=0 // pred_check_branch
    %1783 = sbr.rel (0) target = $region57
  $region56: #{pcan_forward.8} parent=0 // pred_region
    _
  $region57: #{pcan_forward.8} parent=0 // pred_fallthru
    _
  // Predicated region
  $region58: #{pcan_forward.8} parent=0 // pred_check
    _
  $region59: #{pcan_forward.8} parent=0 // pred_check_branch
    %1785 = sbr.rel (0) target = $region61
  $region60: #{pcan_forward.8} parent=0 // pred_region
    _
  $region61: #{pcan_forward.8} parent=0 // pred_fallthru
    _

// kernel: pcan_forward.9
$region0: #{pcan_forward.9}
  #allocation0 [shape = 'u32[]', space=smem, size = 0x4, offset = 0x4, fixed_abs, tag = 'smem constant byte address 0x4 - core index']
  #allocation1 [shape = 'u32[72,128]{1,0:T(1,128)}', space=vmem, size = 0x9000, scoped, tag = 'internal scratch']
  %s0 = inlined_call_operand.vmem [shape: f32[32,83], index: 0, kind: input, shape index: {}]
  %s1 = inlined_call_operand.vmem [shape: f32[83,32], index: 1, kind: input, shape index: {}]
  %s2 = inlined_call_operand.vmem [shape: f32[1,32], index: 2, kind: input, shape index: {}]
  %s3 = inlined_call_operand.vmem [shape: f32[1,32], index: 3, kind: input, shape index: {}]
  %s4 = inlined_call_operand.vmem [shape: f32[1,32], index: 4, kind: input, shape index: {}]
  %s5 = inlined_call_operand.vmem [shape: f32[32,64], index: 5, kind: input, shape index: {}]
  %s6 = inlined_call_operand.vmem [shape: f32[1,64], index: 6, kind: input, shape index: {}]
  %s7 = inlined_call_operand.vmem [shape: f32[1,64], index: 7, kind: input, shape index: {}]
  %s8 = inlined_call_operand.vmem [shape: f32[1,64], index: 8, kind: input, shape index: {}]
  %s9 = inlined_call_operand.vmem [shape: f32[64,128], index: 9, kind: input, shape index: {}]
  %s10 = inlined_call_operand.vmem [shape: f32[1,128], index: 10, kind: input, shape index: {}]
  %s11 = inlined_call_operand.vmem [shape: f32[1,128], index: 11, kind: input, shape index: {}]
  %s12 = inlined_call_operand.vmem [shape: f32[1,128], index: 12, kind: input, shape index: {}]
  %s13 = inlined_call_operand.vmem [shape: f32[32,128], index: 13, kind: output, shape index: {}]
  %s14 = sld [smem:[#allocation0]]
  $region62: #{pcan_forward.9} parent=0
    _
  %s16 = ssub.s32 1, %s14
  %s17 = scalar_select 0, %s16, %s14
  // Predicated region
  $region2: #{pcan_forward.9} parent=0 // pred_check
    _
  $region3: #{pcan_forward.9} parent=0 // pred_check_branch
    %19 = sbr.rel (0) target = $region5
  $region4: #{pcan_forward.9} parent=0 // pred_region
    _
  $region5: #{pcan_forward.9} parent=0 // pred_fallthru
    _
  // Predicated region
  $region6: #{pcan_forward.9} parent=0 // pred_check
    _
  $region7: #{pcan_forward.9} parent=0 // pred_check_branch
    %21 = sbr.rel (0) target = $region9
  $region8: #{pcan_forward.9} parent=0 // pred_region
    _
  $region9: #{pcan_forward.9} parent=0 // pred_fallthru
    _
  // Predicated region
  $region10: #{pcan_forward.9} parent=0 // pred_check
    _
  $region11: #{pcan_forward.9} parent=0 // pred_check_branch
    %23 = sbr.rel (0) target = $region13
  $region12: #{pcan_forward.9} parent=0 // pred_region
    _
  $region13: #{pcan_forward.9} parent=0 // pred_fallthru
    _
  // Predicated region
  $region14: #{pcan_forward.9} parent=0 // pred_check
    _
  $region15: #{pcan_forward.9} parent=0 // pred_check_branch
    %25 = sbr.rel (0) target = $region17
  $region16: #{pcan_forward.9} parent=0 // pred_region
    _
  $region17: #{pcan_forward.9} parent=0 // pred_fallthru
    _
  // Predicated region
  $region18: #{pcan_forward.9} parent=0 // pred_check
    _
  $region19: #{pcan_forward.9} parent=0 // pred_check_branch
    %27 = sbr.rel (0) target = $region21
  $region20: #{pcan_forward.9} parent=0 // pred_region
    _
  $region21: #{pcan_forward.9} parent=0 // pred_fallthru
    _
  // Predicated region
  $region22: #{pcan_forward.9} parent=0 // pred_check
    _
  $region23: #{pcan_forward.9} parent=0 // pred_check_branch
    %29 = sbr.rel (0) target = $region25
  $region24: #{pcan_forward.9} parent=0 // pred_region
    _
  $region25: #{pcan_forward.9} parent=0 // pred_fallthru
    _
  // Predicated region
  $region26: #{pcan_forward.9} parent=0 // pred_check
    _
  $region27: #{pcan_forward.9} parent=0 // pred_check_branch
    %31 = sbr.rel (0) target = $region29
  $region28: #{pcan_forward.9} parent=0 // pred_region
    _
  $region29: #{pcan_forward.9} parent=0 // pred_fallthru
    _
  // Predicated region
  $region30: #{pcan_forward.9} parent=0 // pred_check
    _
  $region31: #{pcan_forward.9} parent=0 // pred_check_branch
    %33 = sbr.rel (0) target = $region33
  $region32: #{pcan_forward.9} parent=0 // pred_region
    _
  $region33: #{pcan_forward.9} parent=0 // pred_fallthru
    _
  // Predicated region
  $region34: #{pcan_forward.9} parent=0 // pred_check
    _
  $region35: #{pcan_forward.9} parent=0 // pred_check_branch
    %35 = sbr.rel (0) target = $region37
  $region36: #{pcan_forward.9} parent=0 // pred_region
    _
  $region37: #{pcan_forward.9} parent=0 // pred_fallthru
    _
  // Predicated region
  $region38: #{pcan_forward.9} parent=0 // pred_check
    _
  $region39: #{pcan_forward.9} parent=0 // pred_check_branch
    %37 = sbr.rel (0) target = $region41
  $region40: #{pcan_forward.9} parent=0 // pred_region
    _
  $region41: #{pcan_forward.9} parent=0 // pred_fallthru
    _
  // Predicated region
  $region42: #{pcan_forward.9} parent=0 // pred_check
    _
  $region43: #{pcan_forward.9} parent=0 // pred_check_branch
    %39 = sbr.rel (0) target = $region45
  $region44: #{pcan_forward.9} parent=0 // pred_region
    _
  $region45: #{pcan_forward.9} parent=0 // pred_fallthru
    _
  // Predicated region
  $region46: #{pcan_forward.9} parent=0 // pred_check
    _
  $region47: #{pcan_forward.9} parent=0 // pred_check_branch
    %41 = sbr.rel (0) target = $region49
  $region48: #{pcan_forward.9} parent=0 // pred_region
    _
  $region49: #{pcan_forward.9} parent=0 // pred_fallthru
    _
  // Predicated region
  $region50: #{pcan_forward.9} parent=0 // pred_check
    _
  $region51: #{pcan_forward.9} parent=0 // pred_check_branch
    %43 = sbr.rel (0) target = $region53
  $region52: #{pcan_forward.9} parent=0 // pred_region
    _
  $region53: #{pcan_forward.9} parent=0 // pred_fallthru
    _
  %v44 = vld [vmem:[%s0] sm:$0xff]
  %v45 = vld [vmem:[%s0 + $0x8] sm:$0xff]
  %v46 = vld [vmem:[%s0 + $0x10] sm:$0xff]
  %v47 = vld [vmem:[%s0 + $0x18] sm:$0xff]
  %v48 = vld [vmem:[%s1] sm:$0xff]
  %v49 = vld [vmem:[%s1 + $0x8] sm:$0xff]
  %v50 = vld [vmem:[%s1 + $0x10] sm:$0xff]
  %v51 = vld [vmem:[%s1 + $0x18] sm:$0xff]
  %v52 = vld [vmem:[%s1 + $0x20] sm:$0xff]
  %v53 = vld [vmem:[%s1 + $0x28] sm:$0xff]
  %v54 = vld [vmem:[%s1 + $0x30] sm:$0xff]
  %v55 = vld [vmem:[%s1 + $0x38] sm:$0xff]
  %v56 = vld [vmem:[%s1 + $0x40] sm:$0xff]
  %v57 = vld [vmem:[%s1 + $0x48] sm:$0xff]
  %v58 = vld [vmem:[%s1 + $0x50] sm:$0x7]
  %v59 = vld [vmem:[%s2] sm:$0x1]
  %v61 = vperm.slane %v59, 0
  %vm63 = vcmask 678912
  %v65 = vsel %vm63, %v44, 0
  %v68 = vsel %vm63, %v45, 0
  %v71 = vsel %vm63, %v46, 0
  %v74 = vsel %vm63, %v47, 0
  %vm76 = vcmask 1042432
  %v78 = vsel %vm76, %v58, 0
  %80 = vmatpush.msra.mxu0 0.0
  %81 = vmatpush.msra.mxu0 0.0
  %82 = vmatpush.msra.mxu0 0.0
  %83 = vmatpush.msra.mxu0 0.0
  %84 = vmatpush.msra.mxu0 0.0
  %85 = vmatpush.msra.mxu0 %v78
  %86 = vmatpush.msra.mxu0 %v57
  %87 = vmatpush.msra.mxu0 %v56
  %88 = vmatpush.msra.mxu0 %v55
  %89 = vmatpush.msra.mxu0 %v54
  %90 = vmatpush.msra.mxu0 %v53
  %91 = vmatpush.msra.mxu0 %v52
  %92 = vmatpush.msra.mxu0 %v51
  %93 = vmatpush.msra.mxu0 %v50
  %94 = vmatpush.msra.mxu0 %v49
  %95 = vmatpush.msra.mxu0 %v48
  %96 = vmatmul.f32.gmra.mxu0 %v65
  %v97 = vpop.f32.mrf.mxu0
  %v98 = vadd.f32 %v61, %v97
  %99 = vmatmul.f32.gmra.mxu0 %v68
  %v100 = vpop.f32.mrf.mxu0
  %v101 = vadd.f32 %v61, %v100
  %102 = vmatmul.f32.gmra.mxu0 %v71
  %v103 = vpop.f32.mrf.mxu0
  %v104 = vadd.f32 %v61, %v103
  %105 = vmatmul.f32.gmra.mxu0 %v74
  %v106 = vpop.f32.mrf.mxu0
  %v107 = vadd.f32 %v61, %v106
  %108 = vdwg.mxu0
  %v109 = vld [vmem:[%s3] sm:$0x1]
  %v110 = vld [vmem:[%s4] sm:$0x1]
  %vm111 = vcmask 261120
  %v112 = vsel %vm111, %v98, 0.0
  %v113 = vsel %vm111, %v101, 0.0
  %v114 = vadd.f32 %v112, %v113
  %v115 = vsel %vm111, %v104, 0.0
  %v116 = vadd.f32 %v114, %v115
  %v117 = vsel %vm111, %v107, 0.0
  %v118 = vadd.f32 %v116, %v117
  %v119 = vrot.slane %v118, 4
  %v120 = vadd.f32 %v118, %v119
  %v121 = vrot.slane %v120, 2
  %v122 = vadd.f32 %v120, %v121
  %v123 = vrot.slane %v122, 1
  %v124 = vadd.f32 %v122, %v123
  %v125 = vrcp.pop 32.0
  %v126 = vmul.f32 32.0, %v125
  %v127 = vsub.f32 1.0, %v126
  %v128 = vmul.f32 %v125, %v127
  %v129 = vadd.f32 %v125, %v128
  %vm130 = vweird.f32 %v125
  %v131 = vsel %vm130, %v125, %v129
  %v132 = vmul.f32 %v124, %v131
  %v133 = vsub.f32 %v98, %v132
  %v134 = vsub.f32 %v101, %v132
  %v135 = vsub.f32 %v104, %v132
  %v136 = vsub.f32 %v107, %v132
  %v137 = vmul.f32 %v133, %v133
  %v138 = vmul.f32 %v134, %v134
  %v139 = vmul.f32 %v135, %v135
  %v140 = vmul.f32 %v136, %v136
  %v141 = vsel %vm111, %v137, 0.0
  %v142 = vsel %vm111, %v138, 0.0
  %v143 = vadd.f32 %v141, %v142
  %v144 = vsel %vm111, %v139, 0.0
  %v145 = vadd.f32 %v143, %v144
  %v146 = vsel %vm111, %v140, 0.0
  %v147 = vadd.f32 %v145, %v146
  %v148 = vrot.slane %v147, 4
  %v149 = vadd.f32 %v147, %v148
  %v150 = vrot.slane %v149, 2
  %v151 = vadd.f32 %v149, %v150
  %v152 = vrot.slane %v151, 1
  %v153 = vadd.f32 %v151, %v152
  %v154 = vmul.f32 %v153, %v131
  %v155 = vadd.f32 %v154, 1e-05
  %v156 = vrsqrt.pop %v155
  %v157 = vmul.f32 %v156, %v155
  %v158 = vmul.f32 %v157, %v156
  %v159 = vmul.f32 0.5, %v158
  %v160 = vsub.f32 1.5, %v159
  %v161 = vmul.f32 %v156, %v160
  %v162 = vmul.f32 %v155, %v161
  %vm163 = vcmp.eq.f32.partialorder %v155, inf
  %v164 = vsel %vm163, %v155, %v162
  %vm165 = vcmp.eq.f32.partialorder %v155, 0.0
  %v166 = vand.u32 %v155, 2147483648
  %v167 = vsel %vm165, %v166, %v164
  %v168 = vrcp.pop %v167
  %v169 = vmul.f32 %v167, %v168
  %v170 = vsub.f32 1.0, %v169
  %v171 = vmul.f32 %v168, %v170
  %v172 = vadd.f32 %v168, %v171
  %vm173 = vweird.f32 %v167
  %vm174 = vweird.f32 %v168
  %vm175 = vmor %vm173, %vm174
  %v176 = vsel %vm175, %v168, %v172
  %v177 = vand.u32 2147483647, %v167
  %vm178 = vcmp.eq.f32.partialorder %v177, 8.507059e+37
  %v179 = vand.u32 %v167, 2147483648
  %v180 = vor.u32 1.1754944e-38, %v179
  %v181 = vsel %vm178, %v180, %v176
  %v182 = vmul.f32 %v109, %v181
  %v184 = vperm.slane %v182, 0
  %v186 = vmul.f32 %v133, %v184
  %v187 = vmul.f32 %v134, %v184
  %v188 = vmul.f32 %v135, %v184
  %v189 = vmul.f32 %v136, %v184
  %v191 = vperm.slane %v110, 0
  %v193 = vadd.f32 %v186, %v191
  %v194 = vadd.f32 %v187, %v191
  %v195 = vadd.f32 %v188, %v191
  %v196 = vadd.f32 %v189, %v191
  %v197 = vmax.f32 %v193, 0.0
  %v198 = vmax.f32 %v194, 0.0
  %v199 = vmax.f32 %v195, 0.0
  %v200 = vmax.f32 %v196, 0.0
  %v201 = vld [vmem:[%s5] sm:$0xff]
  %v202 = vld [vmem:[%s5 + $0x8] sm:$0xff]
  %v203 = vld [vmem:[%s5 + $0x10] sm:$0xff]
  %v204 = vld [vmem:[%s5 + $0x18] sm:$0xff]
  %v205 = vld [vmem:[%s6] sm:$0x1]
  %v207 = vperm.slane %v205, 0
  %v210 = vsel %vm111, %v197, 0
  %v213 = vsel %vm111, %v198, 0
  %v216 = vsel %vm111, %v199, 0
  %v219 = vsel %vm111, %v200, 0
  %221 = vmatpush.msra.mxu0 0.0
  %222 = vmatpush.msra.mxu0 0.0
  %223 = vmatpush.msra.mxu0 0.0
  %224 = vmatpush.msra.mxu0 0.0
  %225 = vmatpush.msra.mxu0 0.0
  %226 = vmatpush.msra.mxu0 0.0
  %227 = vmatpush.msra.mxu0 0.0
  %228 = vmatpush.msra.mxu0 0.0
  %229 = vmatpush.msra.mxu0 0.0
  %230 = vmatpush.msra.mxu0 0.0
  %231 = vmatpush.msra.mxu0 0.0
  %232 = vmatpush.msra.mxu0 0.0
  %233 = vmatpush.msra.mxu0 %v204
  %234 = vmatpush.msra.mxu0 %v203
  %235 = vmatpush.msra.mxu0 %v202
  %236 = vmatpush.msra.mxu0 %v201
  %237 = vmatmul.f32.gmra.mxu0 %v210
  %v238 = vpop.f32.mrf.mxu0
  %v239 = vadd.f32 %v207, %v238
  %240 = vmatmul.f32.gmra.mxu0 %v213
  %v241 = vpop.f32.mrf.mxu0
  %v242 = vadd.f32 %v207, %v241
  %243 = vmatmul.f32.gmra.mxu0 %v216
  %v244 = vpop.f32.mrf.mxu0
  %v245 = vadd.f32 %v207, %v244
  %246 = vmatmul.f32.gmra.mxu0 %v219
  %v247 = vpop.f32.mrf.mxu0
  %v248 = vadd.f32 %v207, %v247
  %249 = vdwg.mxu0
  %v250 = vld [vmem:[%s7] sm:$0x1]
  %v251 = vld [vmem:[%s8] sm:$0x1]
  %vm252 = vcmask 523264
  %v253 = vsel %vm252, %v239, 0.0
  %v254 = vsel %vm252, %v242, 0.0
  %v255 = vadd.f32 %v253, %v254
  %v256 = vsel %vm252, %v245, 0.0
  %v257 = vadd.f32 %v255, %v256
  %v258 = vsel %vm252, %v248, 0.0
  %v259 = vadd.f32 %v257, %v258
  %v260 = vrot.slane %v259, 4
  %v261 = vadd.f32 %v259, %v260
  %v262 = vrot.slane %v261, 2
  %v263 = vadd.f32 %v261, %v262
  %v264 = vrot.slane %v263, 1
  %v265 = vadd.f32 %v263, %v264
  %v266 = vmul.f32 %v265, %v131
  %v267 = vsub.f32 %v239, %v266
  %v268 = vsub.f32 %v242, %v266
  %v269 = vsub.f32 %v245, %v266
  %v270 = vsub.f32 %v248, %v266
  %v271 = vmul.f32 %v267, %v267
  %v272 = vmul.f32 %v268, %v268
  %v273 = vmul.f32 %v269, %v269
  %v274 = vmul.f32 %v270, %v270
  %v275 = vsel %vm252, %v271, 0.0
  %v276 = vsel %vm252, %v272, 0.0
  %v277 = vadd.f32 %v275, %v276
  %v278 = vsel %vm252, %v273, 0.0
  %v279 = vadd.f32 %v277, %v278
  %v280 = vsel %vm252, %v274, 0.0
  %v281 = vadd.f32 %v279, %v280
  %v282 = vrot.slane %v281, 4
  %v283 = vadd.f32 %v281, %v282
  %v284 = vrot.slane %v283, 2
  %v285 = vadd.f32 %v283, %v284
  %v286 = vrot.slane %v285, 1
  %v287 = vadd.f32 %v285, %v286
  %v288 = vmul.f32 %v287, %v131
  %v289 = vadd.f32 %v288, 1e-05
  %v290 = vrsqrt.pop %v289
  %v291 = vmul.f32 %v290, %v289
  %v292 = vmul.f32 %v291, %v290
  %v293 = vmul.f32 0.5, %v292
  %v294 = vsub.f32 1.5, %v293
  %v295 = vmul.f32 %v290, %v294
  %v296 = vmul.f32 %v289, %v295
  %vm297 = vcmp.eq.f32.partialorder %v289, inf
  %v298 = vsel %vm297, %v289, %v296
  %vm299 = vcmp.eq.f32.partialorder %v289, 0.0
  %v300 = vand.u32 %v289, 2147483648
  %v301 = vsel %vm299, %v300, %v298
  %v302 = vrcp.pop %v301
  %v303 = vmul.f32 %v301, %v302
  %v304 = vsub.f32 1.0, %v303
  %v305 = vmul.f32 %v302, %v304
  %v306 = vadd.f32 %v302, %v305
  %vm307 = vweird.f32 %v301
  %vm308 = vweird.f32 %v302
  %vm309 = vmor %vm307, %vm308
  %v310 = vsel %vm309, %v302, %v306
  %v311 = vand.u32 2147483647, %v301
  %vm312 = vcmp.eq.f32.partialorder %v311, 8.507059e+37
  %v313 = vand.u32 %v301, 2147483648
  %v314 = vor.u32 1.1754944e-38, %v313
  %v315 = vsel %vm312, %v314, %v310
  %v316 = vmul.f32 %v250, %v315
  %v318 = vperm.slane %v316, 0
  %v320 = vmul.f32 %v267, %v318
  %v321 = vmul.f32 %v268, %v318
  %v322 = vmul.f32 %v269, %v318
  %v323 = vmul.f32 %v270, %v318
  %v325 = vperm.slane %v251, 0
  %v327 = vadd.f32 %v320, %v325
  %v328 = vadd.f32 %v321, %v325
  %v329 = vadd.f32 %v322, %v325
  %v330 = vadd.f32 %v323, %v325
  %v331 = vmax.f32 %v327, 0.0
  %v332 = vmax.f32 %v328, 0.0
  %v333 = vmax.f32 %v329, 0.0
  %v334 = vmax.f32 %v330, 0.0
  %v335 = vld [vmem:[%s9] sm:$0xff]
  %v336 = vld [vmem:[%s9 + $0x8] sm:$0xff]
  %v337 = vld [vmem:[%s9 + $0x10] sm:$0xff]
  %v338 = vld [vmem:[%s9 + $0x18] sm:$0xff]
  %v339 = vld [vmem:[%s9 + $0x20] sm:$0xff]
  %v340 = vld [vmem:[%s9 + $0x28] sm:$0xff]
  %v341 = vld [vmem:[%s9 + $0x30] sm:$0xff]
  %v342 = vld [vmem:[%s9 + $0x38] sm:$0xff]
  %v343 = vld [vmem:[%s10] sm:$0x1]
  %v345 = vperm.slane %v343, 0
  %v348 = vsel %vm252, %v331, 0
  %v351 = vsel %vm252, %v332, 0
  %v354 = vsel %vm252, %v333, 0
  %v357 = vsel %vm252, %v334, 0
  %359 = vmatpush.msra.mxu0 0.0
  %360 = vmatpush.msra.mxu0 0.0
  %361 = vmatpush.msra.mxu0 0.0
  %362 = vmatpush.msra.mxu0 0.0
  %363 = vmatpush.msra.mxu0 0.0
  %364 = vmatpush.msra.mxu0 0.0
  %365 = vmatpush.msra.mxu0 0.0
  %366 = vmatpush.msra.mxu0 0.0
  %367 = vmatpush.msra.mxu0 %v342
  %368 = vmatpush.msra.mxu0 %v341
  %369 = vmatpush.msra.mxu0 %v340
  %370 = vmatpush.msra.mxu0 %v339
  %371 = vmatpush.msra.mxu0 %v338
  %372 = vmatpush.msra.mxu0 %v337
  %373 = vmatpush.msra.mxu0 %v336
  %374 = vmatpush.msra.mxu0 %v335
  %375 = vmatmul.f32.gmra.mxu0 %v348
  %v376 = vpop.f32.mrf.mxu0
  %v377 = vadd.f32 %v345, %v376
  %378 = vmatmul.f32.gmra.mxu0 %v351
  %v379 = vpop.f32.mrf.mxu0
  %v380 = vadd.f32 %v345, %v379
  %381 = vmatmul.f32.gmra.mxu0 %v354
  %v382 = vpop.f32.mrf.mxu0
  %v383 = vadd.f32 %v345, %v382
  %384 = vmatmul.f32.gmra.mxu0 %v357
  %v385 = vpop.f32.mrf.mxu0
  %v386 = vadd.f32 %v345, %v385
  %387 = vdwg.mxu0
  %v388 = vld [vmem:[%s11] sm:$0x1]
  %v389 = vld [vmem:[%s12] sm:$0x1]
  %v390 = vadd.f32 %v377, %v380
  %v391 = vadd.f32 %v390, %v383
  %v392 = vadd.f32 %v391, %v386
  %v393 = vrot.slane %v392, 4
  %v394 = vadd.f32 %v392, %v393
  %v395 = vrot.slane %v394, 2
  %v396 = vadd.f32 %v394, %v395
  %v397 = vrot.slane %v396, 1
  %v398 = vadd.f32 %v396, %v397
  %v399 = vmul.f32 %v398, %v131
  %v400 = vsub.f32 %v377, %v399
  %v401 = vsub.f32 %v380, %v399
  %v402 = vsub.f32 %v383, %v399
  %v403 = vsub.f32 %v386, %v399
  %v404 = vmul.f32 %v400, %v400
  %v405 = vmul.f32 %v401, %v401
  %v406 = vmul.f32 %v402, %v402
  %v407 = vmul.f32 %v403, %v403
  %v408 = vadd.f32 %v404, %v405
  %v409 = vadd.f32 %v408, %v406
  %v410 = vadd.f32 %v409, %v407
  %v411 = vrot.slane %v410, 4
  %v412 = vadd.f32 %v410, %v411
  %v413 = vrot.slane %v412, 2
  %v414 = vadd.f32 %v412, %v413
  %v415 = vrot.slane %v414, 1
  %v416 = vadd.f32 %v414, %v415
  %v417 = vmul.f32 %v416, %v131
  %v418 = vadd.f32 %v417, 1e-05
  %v419 = vrsqrt.pop %v418
  %v420 = vmul.f32 %v419, %v418
  %v421 = vmul.f32 %v420, %v419
  %v422 = vmul.f32 0.5, %v421
  %v423 = vsub.f32 1.5, %v422
  %v424 = vmul.f32 %v419, %v423
  %v425 = vmul.f32 %v418, %v424
  %vm426 = vcmp.eq.f32.partialorder %v418, inf
  %v427 = vsel %vm426, %v418, %v425
  %vm428 = vcmp.eq.f32.partialorder %v418, 0.0
  %v429 = vand.u32 %v418, 2147483648
  %v430 = vsel %vm428, %v429, %v427
  %v431 = vrcp.pop %v430
  %v432 = vmul.f32 %v430, %v431
  %v433 = vsub.f32 1.0, %v432
  %v434 = vmul.f32 %v431, %v433
  %v435 = vadd.f32 %v431, %v434
  %vm436 = vweird.f32 %v430
  %vm437 = vweird.f32 %v431
  %vm438 = vmor %vm436, %vm437
  %v439 = vsel %vm438, %v431, %v435
  %v440 = vand.u32 2147483647, %v430
  %vm441 = vcmp.eq.f32.partialorder %v440, 8.507059e+37
  %v442 = vand.u32 %v430, 2147483648
  %v443 = vor.u32 1.1754944e-38, %v442
  %v444 = vsel %vm441, %v443, %v439
  %v445 = vmul.f32 %v388, %v444
  %v447 = vperm.slane %v445, 0
  %v449 = vmul.f32 %v400, %v447
  %v450 = vmul.f32 %v401, %v447
  %v451 = vmul.f32 %v402, %v447
  %v452 = vmul.f32 %v403, %v447
  %v454 = vperm.slane %v389, 0
  %v456 = vadd.f32 %v449, %v454
  %v457 = vadd.f32 %v450, %v454
  %v458 = vadd.f32 %v451, %v454
  %v459 = vadd.f32 %v452, %v454
  %v460 = vmax.f32 %v456, 0.0
  %v461 = vmax.f32 %v457, 0.0
  %v462 = vmax.f32 %v458, 0.0
  %v463 = vmax.f32 %v459, 0.0
  %464 = vst [vmem:[%s13] sm:$0xff] %v460
  %465 = vst [vmem:[%s13 + $0x8] sm:$0xff] %v461
  %466 = vst [vmem:[%s13 + $0x10] sm:$0xff] %v462
  %467 = vst [vmem:[%s13 + $0x18] sm:$0xff] %v463
  // Predicated region
  $region54: #{pcan_forward.9} parent=0 // pred_check
    _
  $region55: #{pcan_forward.9} parent=0 // pred_check_branch
    %469 = sbr.rel (0) target = $region57
  $region56: #{pcan_forward.9} parent=0 // pred_region
    _
  $region57: #{pcan_forward.9} parent=0 // pred_fallthru
    _
  // Predicated region
  $region58: #{pcan_forward.9} parent=0 // pred_check
    _
  $region59: #{pcan_forward.9} parent=0 // pred_check_branch
    %471 = sbr.rel (0) target = $region61
  $region60: #{pcan_forward.9} parent=0 // pred_region
    _
  $region61: #{pcan_forward.9} parent=0 // pred_fallthru
    _

// kernel: pcan_forward.10
$region0: #{pcan_forward.10}
  #allocation0 [shape = 'u32[]', space=smem, size = 0x4, offset = 0x4, fixed_abs, tag = 'smem constant byte address 0x4 - core index']
  #allocation1 [shape = 'u32[72,128]{1,0:T(1,128)}', space=vmem, size = 0x9000, scoped, tag = 'internal scratch']
  %s0 = inlined_call_operand.vmem [shape: f32[32,208], index: 0, kind: input, shape index: {}]
  %s1 = inlined_call_operand.vmem [shape: f32[208,64], index: 1, kind: input, shape index: {}]
  %s2 = inlined_call_operand.vmem [shape: f32[1,64], index: 2, kind: input, shape index: {}]
  %s3 = inlined_call_operand.vmem [shape: f32[1,64], index: 3, kind: input, shape index: {}]
  %s4 = inlined_call_operand.vmem [shape: f32[1,64], index: 4, kind: input, shape index: {}]
  %s5 = inlined_call_operand.vmem [shape: f32[64,64], index: 5, kind: input, shape index: {}]
  %s6 = inlined_call_operand.vmem [shape: f32[1,64], index: 6, kind: input, shape index: {}]
  %s7 = inlined_call_operand.vmem [shape: f32[1,64], index: 7, kind: input, shape index: {}]
  %s8 = inlined_call_operand.vmem [shape: f32[1,64], index: 8, kind: input, shape index: {}]
  %s9 = inlined_call_operand.vmem [shape: f32[32,64], index: 9, kind: output, shape index: {}]
  %s10 = sld [smem:[#allocation0]]
  $region46: #{pcan_forward.10} parent=0
    _
  %s12 = ssub.s32 1, %s10
  %s13 = scalar_select 0, %s12, %s10
  // Predicated region
  $region2: #{pcan_forward.10} parent=0 // pred_check
    _
  $region3: #{pcan_forward.10} parent=0 // pred_check_branch
    %15 = sbr.rel (0) target = $region5
  $region4: #{pcan_forward.10} parent=0 // pred_region
    _
  $region5: #{pcan_forward.10} parent=0 // pred_fallthru
    _
  // Predicated region
  $region6: #{pcan_forward.10} parent=0 // pred_check
    _
  $region7: #{pcan_forward.10} parent=0 // pred_check_branch
    %17 = sbr.rel (0) target = $region9
  $region8: #{pcan_forward.10} parent=0 // pred_region
    _
  $region9: #{pcan_forward.10} parent=0 // pred_fallthru
    _
  // Predicated region
  $region10: #{pcan_forward.10} parent=0 // pred_check
    _
  $region11: #{pcan_forward.10} parent=0 // pred_check_branch
    %19 = sbr.rel (0) target = $region13
  $region12: #{pcan_forward.10} parent=0 // pred_region
    _
  $region13: #{pcan_forward.10} parent=0 // pred_fallthru
    _
  // Predicated region
  $region14: #{pcan_forward.10} parent=0 // pred_check
    _
  $region15: #{pcan_forward.10} parent=0 // pred_check_branch
    %21 = sbr.rel (0) target = $region17
  $region16: #{pcan_forward.10} parent=0 // pred_region
    _
  $region17: #{pcan_forward.10} parent=0 // pred_fallthru
    _
  // Predicated region
  $region18: #{pcan_forward.10} parent=0 // pred_check
    _
  $region19: #{pcan_forward.10} parent=0 // pred_check_branch
    %23 = sbr.rel (0) target = $region21
  $region20: #{pcan_forward.10} parent=0 // pred_region
    _
  $region21: #{pcan_forward.10} parent=0 // pred_fallthru
    _
  // Predicated region
  $region22: #{pcan_forward.10} parent=0 // pred_check
    _
  $region23: #{pcan_forward.10} parent=0 // pred_check_branch
    %25 = sbr.rel (0) target = $region25
  $region24: #{pcan_forward.10} parent=0 // pred_region
    _
  $region25: #{pcan_forward.10} parent=0 // pred_fallthru
    _
  // Predicated region
  $region26: #{pcan_forward.10} parent=0 // pred_check
    _
  $region27: #{pcan_forward.10} parent=0 // pred_check_branch
    %27 = sbr.rel (0) target = $region29
  $region28: #{pcan_forward.10} parent=0 // pred_region
    _
  $region29: #{pcan_forward.10} parent=0 // pred_fallthru
    _
  // Predicated region
  $region30: #{pcan_forward.10} parent=0 // pred_check
    _
  $region31: #{pcan_forward.10} parent=0 // pred_check_branch
    %29 = sbr.rel (0) target = $region33
  $region32: #{pcan_forward.10} parent=0 // pred_region
    _
  $region33: #{pcan_forward.10} parent=0 // pred_fallthru
    _
  // Predicated region
  $region34: #{pcan_forward.10} parent=0 // pred_check
    _
  $region35: #{pcan_forward.10} parent=0 // pred_check_branch
    %31 = sbr.rel (0) target = $region37
  $region36: #{pcan_forward.10} parent=0 // pred_region
    _
  $region37: #{pcan_forward.10} parent=0 // pred_fallthru
    _
  %v32 = vld [vmem:[%s0] sm:$0xff]
  %v33 = vld [vmem:[%s0 + $0x8] sm:$0xff]
  %v34 = vld [vmem:[%s0 + $0x10] sm:$0xff]
  %v35 = vld [vmem:[%s0 + $0x18] sm:$0xff]
  %v36 = vld [vmem:[%s0 + $0x20] sm:$0xff]
  %v37 = vld [vmem:[%s0 + $0x28] sm:$0xff]
  %v38 = vld [vmem:[%s0 + $0x30] sm:$0xff]
  %v39 = vld [vmem:[%s0 + $0x38] sm:$0xff]
  %v40 = vld [vmem:[%s1] sm:$0xff]
  %v41 = vld [vmem:[%s1 + $0x8] sm:$0xff]
  %v42 = vld [vmem:[%s1 + $0x10] sm:$0xff]
  %v43 = vld [vmem:[%s1 + $0x18] sm:$0xff]
  %v44 = vld [vmem:[%s1 + $0x20] sm:$0xff]
  %v45 = vld [vmem:[%s1 + $0x28] sm:$0xff]
  %v46 = vld [vmem:[%s1 + $0x30] sm:$0xff]
  %v47 = vld [vmem:[%s1 + $0x38] sm:$0xff]
  %v48 = vld [vmem:[%s1 + $0x40] sm:$0xff]
  %v49 = vld [vmem:[%s1 + $0x48] sm:$0xff]
  %v50 = vld [vmem:[%s1 + $0x50] sm:$0xff]
  %v51 = vld [vmem:[%s1 + $0x58] sm:$0xff]
  %v52 = vld [vmem:[%s1 + $0x60] sm:$0xff]
  %v53 = vld [vmem:[%s1 + $0x68] sm:$0xff]
  %v54 = vld [vmem:[%s1 + $0x70] sm:$0xff]
  %v55 = vld [vmem:[%s1 + $0x78] sm:$0xff]
  %v56 = vld [vmem:[%s1 + $0x80] sm:$0xff]
  %v57 = vld [vmem:[%s1 + $0x88] sm:$0xff]
  %v58 = vld [vmem:[%s1 + $0x90] sm:$0xff]
  %v59 = vld [vmem:[%s1 + $0x98] sm:$0xff]
  %v60 = vld [vmem:[%s1 + $0xa0] sm:$0xff]
  %v61 = vld [vmem:[%s1 + $0xa8] sm:$0xff]
  %v62 = vld [vmem:[%s1 + $0xb0] sm:$0xff]
  %v63 = vld [vmem:[%s1 + $0xb8] sm:$0xff]
  %v64 = vld [vmem:[%s1 + $0xc0] sm:$0xff]
  %v65 = vld [vmem:[%s1 + $0xc8] sm:$0xff]
  %v66 = vld [vmem:[%s2] sm:$0x1]
  %v68 = vperm.slane %v66, 0
  %vm70 = vcmask 654336
  %v72 = vsel %vm70, %v33, 0
  %v75 = vsel %vm70, %v35, 0
  %v78 = vsel %vm70, %v37, 0
  %v81 = vsel %vm70, %v39, 0
  %83 = vmatpush.msra.mxu0 %v55
  %84 = vmatpush.msra.mxu0 %v54
  %85 = vmatpush.msra.mxu0 %v53
  %86 = vmatpush.msra.mxu0 %v52
  %87 = vmatpush.msra.mxu0 %v51
  %88 = vmatpush.msra.mxu0 %v50
  %89 = vmatpush.msra.mxu0 %v49
  %90 = vmatpush.msra.mxu0 %v48
  %91 = vmatpush.msra.mxu0 %v47
  %92 = vmatpush.msra.mxu0 %v46
  %93 = vmatpush.msra.mxu0 %v45
  %94 = vmatpush.msra.mxu0 %v44
  %95 = vmatpush.msra.mxu0 %v43
  %96 = vmatpush.msra.mxu0 %v42
  %97 = vmatpush.msra.mxu0 %v41
  %98 = vmatpush.msra.mxu0 %v40
  %99 = vmatmul.f32.gmra.mxu0 %v32
  %v100 = vpop.f32.mrf.mxu0
  %v101 = vadd.f32 %v68, %v100
  %102 = vmatmul.f32.gmra.mxu0 %v34
  %v103 = vpop.f32.mrf.mxu0
  %v104 = vadd.f32 %v68, %v103
  %105 = vmatmul.f32.gmra.mxu0 %v36
  %v106 = vpop.f32.mrf.mxu0
  %v107 = vadd.f32 %v68, %v106
  %108 = vmatmul.f32.gmra.mxu0 %v38
  %v109 = vpop.f32.mrf.mxu0
  %v110 = vadd.f32 %v68, %v109
  %111 = vdwg.mxu0
  %112 = vmatpush.msra.mxu0 0.0
  %113 = vmatpush.msra.mxu0 0.0
  %114 = vmatpush.msra.mxu0 0.0
  %115 = vmatpush.msra.mxu0 0.0
  %116 = vmatpush.msra.mxu0 0.0
  %117 = vmatpush.msra.mxu0 0.0
  %118 = vmatpush.msra.mxu0 %v65
  %119 = vmatpush.msra.mxu0 %v64
  %120 = vmatpush.msra.mxu0 %v63
  %121 = vmatpush.msra.mxu0 %v62
  %122 = vmatpush.msra.mxu0 %v61
  %123 = vmatpush.msra.mxu0 %v60
  %124 = vmatpush.msra.mxu0 %v59
  %125 = vmatpush.msra.mxu0 %v58
  %126 = vmatpush.msra.mxu0 %v57
  %127 = vmatpush.msra.mxu0 %v56
  %128 = vmatmul.f32.gmra.mxu0 %v72
  %v129 = vpop.f32.mrf.mxu0
  %v130 = vadd.f32 %v101, %v129
  %131 = vmatmul.f32.gmra.mxu0 %v75
  %v132 = vpop.f32.mrf.mxu0
  %v133 = vadd.f32 %v104, %v132
  %134 = vmatmul.f32.gmra.mxu0 %v78
  %v135 = vpop.f32.mrf.mxu0
  %v136 = vadd.f32 %v107, %v135
  %137 = vmatmul.f32.gmra.mxu0 %v81
  %v138 = vpop.f32.mrf.mxu0
  %v139 = vadd.f32 %v110, %v138
  %140 = vdwg.mxu0
  %v141 = vld [vmem:[%s3] sm:$0x1]
  %v142 = vld [vmem:[%s4] sm:$0x1]
  %vm143 = vcmask 523264
  %v144 = vsel %vm143, %v130, 0.0
  %v145 = vsel %vm143, %v133, 0.0
  %v146 = vadd.f32 %v144, %v145
  %v147 = vsel %vm143, %v136, 0.0
  %v148 = vadd.f32 %v146, %v147
  %v149 = vsel %vm143, %v139, 0.0
  %v150 = vadd.f32 %v148, %v149
  %v151 = vrot.slane %v150, 4
  %v152 = vadd.f32 %v150, %v151
  %v153 = vrot.slane %v152, 2
  %v154 = vadd.f32 %v152, %v153
  %v155 = vrot.slane %v154, 1
  %v156 = vadd.f32 %v154, %v155
  %v157 = vrcp.pop 32.0
  %v158 = vmul.f32 32.0, %v157
  %v159 = vsub.f32 1.0, %v158
  %v160 = vmul.f32 %v157, %v159
  %v161 = vadd.f32 %v157, %v160
  %vm162 = vweird.f32 %v157
  %v163 = vsel %vm162, %v157, %v161
  %v164 = vmul.f32 %v156, %v163
  %v165 = vsub.f32 %v130, %v164
  %v166 = vsub.f32 %v133, %v164
  %v167 = vsub.f32 %v136, %v164
  %v168 = vsub.f32 %v139, %v164
  %v169 = vmul.f32 %v165, %v165
  %v170 = vmul.f32 %v166, %v166
  %v171 = vmul.f32 %v167, %v167
  %v172 = vmul.f32 %v168, %v168
  %v173 = vsel %vm143, %v169, 0.0
  %v174 = vsel %vm143, %v170, 0.0
  %v175 = vadd.f32 %v173, %v174
  %v176 = vsel %vm143, %v171, 0.0
  %v177 = vadd.f32 %v175, %v176
  %v178 = vsel %vm143, %v172, 0.0
  %v179 = vadd.f32 %v177, %v178
  %v180 = vrot.slane %v179, 4
  %v181 = vadd.f32 %v179, %v180
  %v182 = vrot.slane %v181, 2
  %v183 = vadd.f32 %v181, %v182
  %v184 = vrot.slane %v183, 1
  %v185 = vadd.f32 %v183, %v184
  %v186 = vmul.f32 %v185, %v163
  %v187 = vadd.f32 %v186, 1e-05
  %v188 = vrsqrt.pop %v187
  %v189 = vmul.f32 %v188, %v187
  %v190 = vmul.f32 %v189, %v188
  %v191 = vmul.f32 0.5, %v190
  %v192 = vsub.f32 1.5, %v191
  %v193 = vmul.f32 %v188, %v192
  %v194 = vmul.f32 %v187, %v193
  %vm195 = vcmp.eq.f32.partialorder %v187, inf
  %v196 = vsel %vm195, %v187, %v194
  %vm197 = vcmp.eq.f32.partialorder %v187, 0.0
  %v198 = vand.u32 %v187, 2147483648
  %v199 = vsel %vm197, %v198, %v196
  %v200 = vrcp.pop %v199
  %v201 = vmul.f32 %v199, %v200
  %v202 = vsub.f32 1.0, %v201
  %v203 = vmul.f32 %v200, %v202
  %v204 = vadd.f32 %v200, %v203
  %vm205 = vweird.f32 %v199
  %vm206 = vweird.f32 %v200
  %vm207 = vmor %vm205, %vm206
  %v208 = vsel %vm207, %v200, %v204
  %v209 = vand.u32 2147483647, %v199
  %vm210 = vcmp.eq.f32.partialorder %v209, 8.507059e+37
  %v211 = vand.u32 %v199, 2147483648
  %v212 = vor.u32 1.1754944e-38, %v211
  %v213 = vsel %vm210, %v212, %v208
  %v214 = vmul.f32 %v141, %v213
  %v216 = vperm.slane %v214, 0
  %v218 = vmul.f32 %v165, %v216
  %v219 = vmul.f32 %v166, %v216
  %v220 = vmul.f32 %v167, %v216
  %v221 = vmul.f32 %v168, %v216
  %v223 = vperm.slane %v142, 0
  %v225 = vadd.f32 %v218, %v223
  %v226 = vadd.f32 %v219, %v223
  %v227 = vadd.f32 %v220, %v223
  %v228 = vadd.f32 %v221, %v223
  %v229 = vmax.f32 %v225, 0.0
  %v230 = vmax.f32 %v226, 0.0
  %v231 = vmax.f32 %v227, 0.0
  %v232 = vmax.f32 %v228, 0.0
  %v233 = vld [vmem:[%s5] sm:$0xff]
  %v234 = vld [vmem:[%s5 + $0x8] sm:$0xff]
  %v235 = vld [vmem:[%s5 + $0x10] sm:$0xff]
  %v236 = vld [vmem:[%s5 + $0x18] sm:$0xff]
  %v237 = vld [vmem:[%s5 + $0x20] sm:$0xff]
  %v238 = vld [vmem:[%s5 + $0x28] sm:$0xff]
  %v239 = vld [vmem:[%s5 + $0x30] sm:$0xff]
  %v240 = vld [vmem:[%s5 + $0x38] sm:$0xff]
  %v241 = vld [vmem:[%s6] sm:$0x1]
  %v243 = vperm.slane %v241, 0
  %v246 = vsel %vm143, %v229, 0
  %v249 = vsel %vm143, %v230, 0
  %v252 = vsel %vm143, %v231, 0
  %v255 = vsel %vm143, %v232, 0
  %257 = vmatpush.msra.mxu0 0.0
  %258 = vmatpush.msra.mxu0 0.0
  %259 = vmatpush.msra.mxu0 0.0
  %260 = vmatpush.msra.mxu0 0.0
  %261 = vmatpush.msra.mxu0 0.0
  %262 = vmatpush.msra.mxu0 0.0
  %263 = vmatpush.msra.mxu0 0.0
  %264 = vmatpush.msra.mxu0 0.0
  %265 = vmatpush.msra.mxu0 %v240
  %266 = vmatpush.msra.mxu0 %v239
  %267 = vmatpush.msra.mxu0 %v238
  %268 = vmatpush.msra.mxu0 %v237
  %269 = vmatpush.msra.mxu0 %v236
  %270 = vmatpush.msra.mxu0 %v235
  %271 = vmatpush.msra.mxu0 %v234
  %272 = vmatpush.msra.mxu0 %v233
  %273 = vmatmul.f32.gmra.mxu0 %v246
  %v274 = vpop.f32.mrf.mxu0
  %v275 = vadd.f32 %v243, %v274
  %276 = vmatmul.f32.gmra.mxu0 %v249
  %v277 = vpop.f32.mrf.mxu0
  %v278 = vadd.f32 %v243, %v277
  %279 = vmatmul.f32.gmra.mxu0 %v252
  %v280 = vpop.f32.mrf.mxu0
  %v281 = vadd.f32 %v243, %v280
  %282 = vmatmul.f32.gmra.mxu0 %v255
  %v283 = vpop.f32.mrf.mxu0
  %v284 = vadd.f32 %v243, %v283
  %285 = vdwg.mxu0
  %v286 = vld [vmem:[%s7] sm:$0x1]
  %v287 = vld [vmem:[%s8] sm:$0x1]
  %v288 = vsel %vm143, %v275, 0.0
  %v289 = vsel %vm143, %v278, 0.0
  %v290 = vadd.f32 %v288, %v289
  %v291 = vsel %vm143, %v281, 0.0
  %v292 = vadd.f32 %v290, %v291
  %v293 = vsel %vm143, %v284, 0.0
  %v294 = vadd.f32 %v292, %v293
  %v295 = vrot.slane %v294, 4
  %v296 = vadd.f32 %v294, %v295
  %v297 = vrot.slane %v296, 2
  %v298 = vadd.f32 %v296, %v297
  %v299 = vrot.slane %v298, 1
  %v300 = vadd.f32 %v298, %v299
  %v301 = vmul.f32 %v300, %v163
  %v302 = vsub.f32 %v275, %v301
  %v303 = vsub.f32 %v278, %v301
  %v304 = vsub.f32 %v281, %v301
  %v305 = vsub.f32 %v284, %v301
  %v306 = vmul.f32 %v302, %v302
  %v307 = vmul.f32 %v303, %v303
  %v308 = vmul.f32 %v304, %v304
  %v309 = vmul.f32 %v305, %v305
  %v310 = vsel %vm143, %v306, 0.0
  %v311 = vsel %vm143, %v307, 0.0
  %v312 = vadd.f32 %v310, %v311
  %v313 = vsel %vm143, %v308, 0.0
  %v314 = vadd.f32 %v312, %v313
  %v315 = vsel %vm143, %v309, 0.0
  %v316 = vadd.f32 %v314, %v315
  %v317 = vrot.slane %v316, 4
  %v318 = vadd.f32 %v316, %v317
  %v319 = vrot.slane %v318, 2
  %v320 = vadd.f32 %v318, %v319
  %v321 = vrot.slane %v320, 1
  %v322 = vadd.f32 %v320, %v321
  %v323 = vmul.f32 %v322, %v163
  %v324 = vadd.f32 %v323, 1e-05
  %v325 = vrsqrt.pop %v324
  %v326 = vmul.f32 %v325, %v324
  %v327 = vmul.f32 %v326, %v325
  %v328 = vmul.f32 0.5, %v327
  %v329 = vsub.f32 1.5, %v328
  %v330 = vmul.f32 %v325, %v329
  %v331 = vmul.f32 %v324, %v330
  %vm332 = vcmp.eq.f32.partialorder %v324, inf
  %v333 = vsel %vm332, %v324, %v331
  %vm334 = vcmp.eq.f32.partialorder %v324, 0.0
  %v335 = vand.u32 %v324, 2147483648
  %v336 = vsel %vm334, %v335, %v333
  %v337 = vrcp.pop %v336
  %v338 = vmul.f32 %v336, %v337
  %v339 = vsub.f32 1.0, %v338
  %v340 = vmul.f32 %v337, %v339
  %v341 = vadd.f32 %v337, %v340
  %vm342 = vweird.f32 %v336
  %vm343 = vweird.f32 %v337
  %vm344 = vmor %vm342, %vm343
  %v345 = vsel %vm344, %v337, %v341
  %v346 = vand.u32 2147483647, %v336
  %vm347 = vcmp.eq.f32.partialorder %v346, 8.507059e+37
  %v348 = vand.u32 %v336, 2147483648
  %v349 = vor.u32 1.1754944e-38, %v348
  %v350 = vsel %vm347, %v349, %v345
  %v351 = vmul.f32 %v286, %v350
  %v353 = vperm.slane %v351, 0
  %v355 = vmul.f32 %v302, %v353
  %v356 = vmul.f32 %v303, %v353
  %v357 = vmul.f32 %v304, %v353
  %v358 = vmul.f32 %v305, %v353
  %v360 = vperm.slane %v287, 0
  %v362 = vadd.f32 %v355, %v360
  %v363 = vadd.f32 %v356, %v360
  %v364 = vadd.f32 %v357, %v360
  %v365 = vadd.f32 %v358, %v360
  %v366 = vmax.f32 %v362, 0.0
  %v367 = vmax.f32 %v363, 0.0
  %v368 = vmax.f32 %v364, 0.0
  %v369 = vmax.f32 %v365, 0.0
  %370 = vst.msk [vmem:[%s9] sm:$0xff] %vm143, %v366
  %371 = vst.msk [vmem:[%s9 + $0x8] sm:$0xff] %vm143, %v367
  %372 = vst.msk [vmem:[%s9 + $0x10] sm:$0xff] %vm143, %v368
  %373 = vst.msk [vmem:[%s9 + $0x18] sm:$0xff] %vm143, %v369
  // Predicated region
  $region38: #{pcan_forward.10} parent=0 // pred_check
    _
  $region39: #{pcan_forward.10} parent=0 // pred_check_branch
    %375 = sbr.rel (0) target = $region41
  $region40: #{pcan_forward.10} parent=0 // pred_region
    _
  $region41: #{pcan_forward.10} parent=0 // pred_fallthru
    _
  // Predicated region
  $region42: #{pcan_forward.10} parent=0 // pred_check
    _
  $region43: #{pcan_forward.10} parent=0 // pred_check_branch
    %377 = sbr.rel (0) target = $region45
  $region44: #{pcan_forward.10} parent=0 // pred_region
    _
  $region45: #{pcan_forward.10} parent=0 // pred_fallthru
    _

// kernel: pcan_forward.11
$region0: #{pcan_forward.11}
  #allocation0 [shape = 'u32[]', space=smem, size = 0x4, offset = 0x4, fixed_abs, tag = 'smem constant byte address 0x4 - core index']
  #allocation1 [shape = 'u32[72,128]{1,0:T(1,128)}', space=vmem, size = 0x9000, scoped, tag = 'internal scratch']
  #allocation2 [shape = 'f32[1,1]{1,0:T(1,128)S(1)}', space=vmem, size = 0x200, scoped, tag = 'scoped memory for pcan_forward.11']
  %s0 = inlined_call_operand.vmem [shape: f32[128,64], index: 0, kind: input, shape index: {}]
  %s1 = inlined_call_operand.vmem [shape: f32[64,64], index: 1, kind: input, shape index: {}]
  %s2 = inlined_call_operand.vmem [shape: f32[1,64], index: 2, kind: input, shape index: {}]
  %s3 = inlined_call_operand.vmem [shape: f32[1,64], index: 3, kind: input, shape index: {}]
  %s4 = inlined_call_operand.vmem [shape: f32[1,64], index: 4, kind: input, shape index: {}]
  %s5 = inlined_call_operand.vmem [shape: f32[64,32], index: 5, kind: input, shape index: {}]
  %s6 = inlined_call_operand.vmem [shape: f32[1,32], index: 6, kind: input, shape index: {}]
  %s7 = inlined_call_operand.vmem [shape: f32[1,32], index: 7, kind: input, shape index: {}]
  %s8 = inlined_call_operand.vmem [shape: f32[1,32], index: 8, kind: input, shape index: {}]
  %s9 = inlined_call_operand.vmem [shape: f32[32,32], index: 9, kind: input, shape index: {}]
  %s10 = inlined_call_operand.vmem [shape: f32[1,32], index: 10, kind: input, shape index: {}]
  %s11 = inlined_call_operand.vmem [shape: f32[1,32], index: 11, kind: input, shape index: {}]
  %s12 = inlined_call_operand.vmem [shape: f32[1,32], index: 12, kind: input, shape index: {}]
  %s13 = inlined_call_operand.vmem [shape: f32[32,1], index: 13, kind: input, shape index: {}]
  %s14 = inlined_call_operand.<no memory space> [shape: f32[1,1], index: 14, kind: input, shape index: {}]
  %s15 = inlined_call_operand.vmem [shape: f32[128,1], index: 15, kind: output, shape index: {}]
  %s16 = sld [smem:[#allocation0]]
  $region70: #{pcan_forward.11} parent=0
    _
  %s18 = ssub.s32 1, %s16
  %s19 = scalar_select 0, %s18, %s16
  %v20 = vstv %s14
  %21 = vst [vmem:[#allocation2] sm:$0x1] %v20
  // Predicated region
  $region2: #{pcan_forward.11} parent=0 // pred_check
    _
  $region3: #{pcan_forward.11} parent=0 // pred_check_branch
    %23 = sbr.rel (0) target = $region5
  $region4: #{pcan_forward.11} parent=0 // pred_region
    _
  $region5: #{pcan_forward.11} parent=0 // pred_fallthru
    _
  // Predicated region
  $region6: #{pcan_forward.11} parent=0 // pred_check
    _
  $region7: #{pcan_forward.11} parent=0 // pred_check_branch
    %25 = sbr.rel (0) target = $region9
  $region8: #{pcan_forward.11} parent=0 // pred_region
    _
  $region9: #{pcan_forward.11} parent=0 // pred_fallthru
    _
  // Predicated region
  $region10: #{pcan_forward.11} parent=0 // pred_check
    _
  $region11: #{pcan_forward.11} parent=0 // pred_check_branch
    %27 = sbr.rel (0) target = $region13
  $region12: #{pcan_forward.11} parent=0 // pred_region
    _
  $region13: #{pcan_forward.11} parent=0 // pred_fallthru
    _
  // Predicated region
  $region14: #{pcan_forward.11} parent=0 // pred_check
    _
  $region15: #{pcan_forward.11} parent=0 // pred_check_branch
    %29 = sbr.rel (0) target = $region17
  $region16: #{pcan_forward.11} parent=0 // pred_region
    _
  $region17: #{pcan_forward.11} parent=0 // pred_fallthru
    _
  // Predicated region
  $region18: #{pcan_forward.11} parent=0 // pred_check
    _
  $region19: #{pcan_forward.11} parent=0 // pred_check_branch
    %31 = sbr.rel (0) target = $region21
  $region20: #{pcan_forward.11} parent=0 // pred_region
    _
  $region21: #{pcan_forward.11} parent=0 // pred_fallthru
    _
  // Predicated region
  $region22: #{pcan_forward.11} parent=0 // pred_check
    _
  $region23: #{pcan_forward.11} parent=0 // pred_check_branch
    %33 = sbr.rel (0) target = $region25
  $region24: #{pcan_forward.11} parent=0 // pred_region
    _
  $region25: #{pcan_forward.11} parent=0 // pred_fallthru
    _
  // Predicated region
  $region26: #{pcan_forward.11} parent=0 // pred_check
    _
  $region27: #{pcan_forward.11} parent=0 // pred_check_branch
    %35 = sbr.rel (0) target = $region29
  $region28: #{pcan_forward.11} parent=0 // pred_region
    _
  $region29: #{pcan_forward.11} parent=0 // pred_fallthru
    _
  // Predicated region
  $region30: #{pcan_forward.11} parent=0 // pred_check
    _
  $region31: #{pcan_forward.11} parent=0 // pred_check_branch
    %37 = sbr.rel (0) target = $region33
  $region32: #{pcan_forward.11} parent=0 // pred_region
    _
  $region33: #{pcan_forward.11} parent=0 // pred_fallthru
    _
  // Predicated region
  $region34: #{pcan_forward.11} parent=0 // pred_check
    _
  $region35: #{pcan_forward.11} parent=0 // pred_check_branch
    %39 = sbr.rel (0) target = $region37
  $region36: #{pcan_forward.11} parent=0 // pred_region
    _
  $region37: #{pcan_forward.11} parent=0 // pred_fallthru
    _
  // Predicated region
  $region38: #{pcan_forward.11} parent=0 // pred_check
    _
  $region39: #{pcan_forward.11} parent=0 // pred_check_branch
    %41 = sbr.rel (0) target = $region41
  $region40: #{pcan_forward.11} parent=0 // pred_region
    _
  $region41: #{pcan_forward.11} parent=0 // pred_fallthru
    _
  // Predicated region
  $region42: #{pcan_forward.11} parent=0 // pred_check
    _
  $region43: #{pcan_forward.11} parent=0 // pred_check_branch
    %43 = sbr.rel (0) target = $region45
  $region44: #{pcan_forward.11} parent=0 // pred_region
    _
  $region45: #{pcan_forward.11} parent=0 // pred_fallthru
    _
  // Predicated region
  $region46: #{pcan_forward.11} parent=0 // pred_check
    _
  $region47: #{pcan_forward.11} parent=0 // pred_check_branch
    %45 = sbr.rel (0) target = $region49
  $region48: #{pcan_forward.11} parent=0 // pred_region
    _
  $region49: #{pcan_forward.11} parent=0 // pred_fallthru
    _
  // Predicated region
  $region50: #{pcan_forward.11} parent=0 // pred_check
    _
  $region51: #{pcan_forward.11} parent=0 // pred_check_branch
    %47 = sbr.rel (0) target = $region53
  $region52: #{pcan_forward.11} parent=0 // pred_region
    _
  $region53: #{pcan_forward.11} parent=0 // pred_fallthru
    _
  // Predicated region
  $region54: #{pcan_forward.11} parent=0 // pred_check
    _
  $region55: #{pcan_forward.11} parent=0 // pred_check_branch
    %49 = sbr.rel (0) target = $region57
  $region56: #{pcan_forward.11} parent=0 // pred_region
    _
  $region57: #{pcan_forward.11} parent=0 // pred_fallthru
    _
  // Predicated region
  $region58: #{pcan_forward.11} parent=0 // pred_check
    _
  $region59: #{pcan_forward.11} parent=0 // pred_check_branch
    %51 = sbr.rel (0) target = $region61
  $region60: #{pcan_forward.11} parent=0 // pred_region
    _
  $region61: #{pcan_forward.11} parent=0 // pred_fallthru
    _
  %v52 = vld [vmem:[%s0] sm:$0xff]
  %v53 = vld [vmem:[%s0 + $0x8] sm:$0xff]
  %v54 = vld [vmem:[%s0 + $0x10] sm:$0xff]
  %v55 = vld [vmem:[%s0 + $0x18] sm:$0xff]
  %v56 = vld [vmem:[%s0 + $0x20] sm:$0xff]
  %v57 = vld [vmem:[%s0 + $0x28] sm:$0xff]
  %v58 = vld [vmem:[%s0 + $0x30] sm:$0xff]
  %v59 = vld [vmem:[%s0 + $0x38] sm:$0xff]
  %v60 = vld [vmem:[%s0 + $0x40] sm:$0xff]
  %v61 = vld [vmem:[%s0 + $0x48] sm:$0xff]
  %v62 = vld [vmem:[%s0 + $0x50] sm:$0xff]
  %v63 = vld [vmem:[%s0 + $0x58] sm:$0xff]
  %v64 = vld [vmem:[%s0 + $0x60] sm:$0xff]
  %v65 = vld [vmem:[%s0 + $0x68] sm:$0xff]
  %v66 = vld [vmem:[%s0 + $0x70] sm:$0xff]
  %v67 = vld [vmem:[%s0 + $0x78] sm:$0xff]
  %v68 = vld [vmem:[%s1] sm:$0xff]
  %v69 = vld [vmem:[%s1 + $0x8] sm:$0xff]
  %v70 = vld [vmem:[%s1 + $0x10] sm:$0xff]
  %v71 = vld [vmem:[%s1 + $0x18] sm:$0xff]
  %v72 = vld [vmem:[%s1 + $0x20] sm:$0xff]
  %v73 = vld [vmem:[%s1 + $0x28] sm:$0xff]
  %v74 = vld [vmem:[%s1 + $0x30] sm:$0xff]
  %v75 = vld [vmem:[%s1 + $0x38] sm:$0xff]
  %v76 = vld [vmem:[%s2] sm:$0x1]
  %v78 = vperm.slane %v76, 0
  %vm80 = vcmask 523264
  %v82 = vsel %vm80, %v52, 0
  %v85 = vsel %vm80, %v53, 0
  %v88 = vsel %vm80, %v54, 0
  %v91 = vsel %vm80, %v55, 0
  %v94 = vsel %vm80, %v56, 0
  %v97 = vsel %vm80, %v57, 0
  %v100 = vsel %vm80, %v58, 0
  %v103 = vsel %vm80, %v59, 0
  %v106 = vsel %vm80, %v60, 0
  %v109 = vsel %vm80, %v61, 0
  %v112 = vsel %vm80, %v62, 0
  %v115 = vsel %vm80, %v63, 0
  %v118 = vsel %vm80, %v64, 0
  %v121 = vsel %vm80, %v65, 0
  %v124 = vsel %vm80, %v66, 0
  %v127 = vsel %vm80, %v67, 0
  %129 = vmatpush.msra.mxu0 0.0
  %130 = vmatpush.msra.mxu0 0.0
  %131 = vmatpush.msra.mxu0 0.0
  %132 = vmatpush.msra.mxu0 0.0
  %133 = vmatpush.msra.mxu0 0.0
  %134 = vmatpush.msra.mxu0 0.0
  %135 = vmatpush.msra.mxu0 0.0
  %136 = vmatpush.msra.mxu0 0.0
  %137 = vmatpush.msra.mxu0 %v75
  %138 = vmatpush.msra.mxu0 %v74
  %139 = vmatpush.msra.mxu0 %v73
  %140 = vmatpush.msra.mxu0 %v72
  %141 = vmatpush.msra.mxu0 %v71
  %142 = vmatpush.msra.mxu0 %v70
  %143 = vmatpush.msra.mxu0 %v69
  %144 = vmatpush.msra.mxu0 %v68
  %145 = vmatmul.f32.gmra.mxu0 %v82
  %v146 = vpop.f32.mrf.mxu0
  %v147 = vadd.f32 %v78, %v146
  %148 = vmatmul.f32.gmra.mxu0 %v85
  %v149 = vpop.f32.mrf.mxu0
  %v150 = vadd.f32 %v78, %v149
  %151 = vmatmul.f32.gmra.mxu0 %v88
  %v152 = vpop.f32.mrf.mxu0
  %v153 = vadd.f32 %v78, %v152
  %154 = vmatmul.f32.gmra.mxu0 %v91
  %v155 = vpop.f32.mrf.mxu0
  %v156 = vadd.f32 %v78, %v155
  %157 = vmatmul.f32.gmra.mxu0 %v94
  %v158 = vpop.f32.mrf.mxu0
  %v159 = vadd.f32 %v78, %v158
  %160 = vmatmul.f32.gmra.mxu0 %v97
  %v161 = vpop.f32.mrf.mxu0
  %v162 = vadd.f32 %v78, %v161
  %163 = vmatmul.f32.gmra.mxu0 %v100
  %v164 = vpop.f32.mrf.mxu0
  %v165 = vadd.f32 %v78, %v164
  %166 = vmatmul.f32.gmra.mxu0 %v103
  %v167 = vpop.f32.mrf.mxu0
  %v168 = vadd.f32 %v78, %v167
  %169 = vmatmul.f32.gmra.mxu0 %v106
  %v170 = vpop.f32.mrf.mxu0
  %v171 = vadd.f32 %v78, %v170
  %172 = vmatmul.f32.gmra.mxu0 %v109
  %v173 = vpop.f32.mrf.mxu0
  %v174 = vadd.f32 %v78, %v173
  %175 = vmatmul.f32.gmra.mxu0 %v112
  %v176 = vpop.f32.mrf.mxu0
  %v177 = vadd.f32 %v78, %v176
  %178 = vmatmul.f32.gmra.mxu0 %v115
  %v179 = vpop.f32.mrf.mxu0
  %v180 = vadd.f32 %v78, %v179
  %181 = vmatmul.f32.gmra.mxu0 %v118
  %v182 = vpop.f32.mrf.mxu0
  %v183 = vadd.f32 %v78, %v182
  %184 = vmatmul.f32.gmra.mxu0 %v121
  %v185 = vpop.f32.mrf.mxu0
  %v186 = vadd.f32 %v78, %v185
  %187 = vmatmul.f32.gmra.mxu0 %v124
  %v188 = vpop.f32.mrf.mxu0
  %v189 = vadd.f32 %v78, %v188
  %190 = vmatmul.f32.gmra.mxu0 %v127
  %v191 = vpop.f32.mrf.mxu0
  %v192 = vadd.f32 %v78, %v191
  %193 = vdwg.mxu0
  %v194 = vld [vmem:[%s3] sm:$0x1]
  %v195 = vld [vmem:[%s4] sm:$0x1]
  %v196 = vsel %vm80, %v147, 0.0
  %v197 = vsel %vm80, %v150, 0.0
  %v198 = vadd.f32 %v196, %v197
  %v199 = vsel %vm80, %v153, 0.0
  %v200 = vadd.f32 %v198, %v199
  %v201 = vsel %vm80, %v156, 0.0
  %v202 = vadd.f32 %v200, %v201
  %v203 = vsel %vm80, %v159, 0.0
  %v204 = vadd.f32 %v202, %v203
  %v205 = vsel %vm80, %v162, 0.0
  %v206 = vadd.f32 %v204, %v205
  %v207 = vsel %vm80, %v165, 0.0
  %v208 = vadd.f32 %v206, %v207
  %v209 = vsel %vm80, %v168, 0.0
  %v210 = vadd.f32 %v208, %v209
  %v211 = vsel %vm80, %v171, 0.0
  %v212 = vadd.f32 %v210, %v211
  %v213 = vsel %vm80, %v174, 0.0
  %v214 = vadd.f32 %v212, %v213
  %v215 = vsel %vm80, %v177, 0.0
  %v216 = vadd.f32 %v214, %v215
  %v217 = vsel %vm80, %v180, 0.0
  %v218 = vadd.f32 %v216, %v217
  %v219 = vsel %vm80, %v183, 0.0
  %v220 = vadd.f32 %v218, %v219
  %v221 = vsel %vm80, %v186, 0.0
  %v222 = vadd.f32 %v220, %v221
  %v223 = vsel %vm80, %v189, 0.0
  %v224 = vadd.f32 %v222, %v223
  %v225 = vsel %vm80, %v192, 0.0
  %v226 = vadd.f32 %v224, %v225
  %v227 = vrot.slane %v226, 4
  %v228 = vadd.f32 %v226, %v227
  %v229 = vrot.slane %v228, 2
  %v230 = vadd.f32 %v228, %v229
  %v231 = vrot.slane %v230, 1
  %v232 = vadd.f32 %v230, %v231
  %v233 = vrcp.pop 128.0
  %v234 = vmul.f32 128.0, %v233
  %v235 = vsub.f32 1.0, %v234
  %v236 = vmul.f32 %v233, %v235
  %v237 = vadd.f32 %v233, %v236
  %vm238 = vweird.f32 %v233
  %v239 = vsel %vm238, %v233, %v237
  %v240 = vmul.f32 %v232, %v239
  %v241 = vsub.f32 %v147, %v240
  %v242 = vsub.f32 %v150, %v240
  %v243 = vsub.f32 %v153, %v240
  %v244 = vsub.f32 %v156, %v240
  %v245 = vsub.f32 %v159, %v240
  %v246 = vsub.f32 %v162, %v240
  %v247 = vsub.f32 %v165, %v240
  %v248 = vsub.f32 %v168, %v240
  %v249 = vsub.f32 %v171, %v240
  %v250 = vsub.f32 %v174, %v240
  %v251 = vsub.f32 %v177, %v240
  %v252 = vsub.f32 %v180, %v240
  %v253 = vsub.f32 %v183, %v240
  %v254 = vsub.f32 %v186, %v240
  %v255 = vsub.f32 %v189, %v240
  %v256 = vsub.f32 %v192, %v240
  %v257 = vmul.f32 %v241, %v241
  %v258 = vmul.f32 %v242, %v242
  %v259 = vmul.f32 %v243, %v243
  %v260 = vmul.f32 %v244, %v244
  %v261 = vmul.f32 %v245, %v245
  %v262 = vmul.f32 %v246, %v246
  %v263 = vmul.f32 %v247, %v247
  %v264 = vmul.f32 %v248, %v248
  %v265 = vmul.f32 %v249, %v249
  %v266 = vmul.f32 %v250, %v250
  %v267 = vmul.f32 %v251, %v251
  %v268 = vmul.f32 %v252, %v252
  %v269 = vmul.f32 %v253, %v253
  %v270 = vmul.f32 %v254, %v254
  %v271 = vmul.f32 %v255, %v255
  %v272 = vmul.f32 %v256, %v256
  %v273 = vsel %vm80, %v257, 0.0
  %v274 = vsel %vm80, %v258, 0.0
  %v275 = vadd.f32 %v273, %v274
  %v276 = vsel %vm80, %v259, 0.0
  %v277 = vadd.f32 %v275, %v276
  %v278 = vsel %vm80, %v260, 0.0
  %v279 = vadd.f32 %v277, %v278
  %v280 = vsel %vm80, %v261, 0.0
  %v281 = vadd.f32 %v279, %v280
  %v282 = vsel %vm80, %v262, 0.0
  %v283 = vadd.f32 %v281, %v282
  %v284 = vsel %vm80, %v263, 0.0
  %v285 = vadd.f32 %v283, %v284
  %v286 = vsel %vm80, %v264, 0.0
  %v287 = vadd.f32 %v285, %v286
  %v288 = vsel %vm80, %v265, 0.0
  %v289 = vadd.f32 %v287, %v288
  %v290 = vsel %vm80, %v266, 0.0
  %v291 = vadd.f32 %v289, %v290
  %v292 = vsel %vm80, %v267, 0.0
  %v293 = vadd.f32 %v291, %v292
  %v294 = vsel %vm80, %v268, 0.0
  %v295 = vadd.f32 %v293, %v294
  %v296 = vsel %vm80, %v269, 0.0
  %v297 = vadd.f32 %v295, %v296
  %v298 = vsel %vm80, %v270, 0.0
  %v299 = vadd.f32 %v297, %v298
  %v300 = vsel %vm80, %v271, 0.0
  %v301 = vadd.f32 %v299, %v300
  %v302 = vsel %vm80, %v272, 0.0
  %v303 = vadd.f32 %v301, %v302
  %v304 = vrot.slane %v303, 4
  %v305 = vadd.f32 %v303, %v304
  %v306 = vrot.slane %v305, 2
  %v307 = vadd.f32 %v305, %v306
  %v308 = vrot.slane %v307, 1
  %v309 = vadd.f32 %v307, %v308
  %v310 = vmul.f32 %v309, %v239
  %v311 = vadd.f32 %v310, 1e-05
  %v312 = vrsqrt.pop %v311
  %v313 = vmul.f32 %v312, %v311
  %v314 = vmul.f32 %v313, %v312
  %v315 = vmul.f32 0.5, %v314
  %v316 = vsub.f32 1.5, %v315
  %v317 = vmul.f32 %v312, %v316
  %v318 = vmul.f32 %v311, %v317
  %vm319 = vcmp.eq.f32.partialorder %v311, inf
  %v320 = vsel %vm319, %v311, %v318
  %vm321 = vcmp.eq.f32.partialorder %v311, 0.0
  %v322 = vand.u32 %v311, 2147483648
  %v323 = vsel %vm321, %v322, %v320
  %v324 = vrcp.pop %v323
  %v325 = vmul.f32 %v323, %v324
  %v326 = vsub.f32 1.0, %v325
  %v327 = vmul.f32 %v324, %v326
  %v328 = vadd.f32 %v324, %v327
  %vm329 = vweird.f32 %v323
  %vm330 = vweird.f32 %v324
  %vm331 = vmor %vm329, %vm330
  %v332 = vsel %vm331, %v324, %v328
  %v333 = vand.u32 2147483647, %v323
  %vm334 = vcmp.eq.f32.partialorder %v333, 8.507059e+37
  %v335 = vand.u32 %v323, 2147483648
  %v336 = vor.u32 1.1754944e-38, %v335
  %v337 = vsel %vm334, %v336, %v332
  %v338 = vmul.f32 %v194, %v337
  %v340 = vperm.slane %v338, 0
  %v342 = vmul.f32 %v241, %v340
  %v343 = vmul.f32 %v242, %v340
  %v344 = vmul.f32 %v243, %v340
  %v345 = vmul.f32 %v244, %v340
  %v346 = vmul.f32 %v245, %v340
  %v347 = vmul.f32 %v246, %v340
  %v348 = vmul.f32 %v247, %v340
  %v349 = vmul.f32 %v248, %v340
  %v350 = vmul.f32 %v249, %v340
  %v351 = vmul.f32 %v250, %v340
  %v352 = vmul.f32 %v251, %v340
  %v353 = vmul.f32 %v252, %v340
  %v354 = vmul.f32 %v253, %v340
  %v355 = vmul.f32 %v254, %v340
  %v356 = vmul.f32 %v255, %v340
  %v357 = vmul.f32 %v256, %v340
  %v359 = vperm.slane %v195, 0
  %v361 = vadd.f32 %v342, %v359
  %v362 = vadd.f32 %v343, %v359
  %v363 = vadd.f32 %v344, %v359
  %v364 = vadd.f32 %v345, %v359
  %v365 = vadd.f32 %v346, %v359
  %v366 = vadd.f32 %v347, %v359
  %v367 = vadd.f32 %v348, %v359
  %v368 = vadd.f32 %v349, %v359
  %v369 = vadd.f32 %v350, %v359
  %v370 = vadd.f32 %v351, %v359
  %v371 = vadd.f32 %v352, %v359
  %v372 = vadd.f32 %v353, %v359
  %v373 = vadd.f32 %v354, %v359
  %v374 = vadd.f32 %v355, %v359
  %v375 = vadd.f32 %v356, %v359
  %v376 = vadd.f32 %v357, %v359
  %v377 = vmax.f32 %v361, 0.0
  %v378 = vmax.f32 %v362, 0.0
  %v379 = vmax.f32 %v363, 0.0
  %v380 = vmax.f32 %v364, 0.0
  %v381 = vmax.f32 %v365, 0.0
  %v382 = vmax.f32 %v366, 0.0
  %v383 = vmax.f32 %v367, 0.0
  %v384 = vmax.f32 %v368, 0.0
  %v385 = vmax.f32 %v369, 0.0
  %v386 = vmax.f32 %v370, 0.0
  %v387 = vmax.f32 %v371, 0.0
  %v388 = vmax.f32 %v372, 0.0
  %v389 = vmax.f32 %v373, 0.0
  %v390 = vmax.f32 %v374, 0.0
  %v391 = vmax.f32 %v375, 0.0
  %v392 = vmax.f32 %v376, 0.0
  %v393 = vld [vmem:[%s5] sm:$0xff]
  %v394 = vld [vmem:[%s5 + $0x8] sm:$0xff]
  %v395 = vld [vmem:[%s5 + $0x10] sm:$0xff]
  %v396 = vld [vmem:[%s5 + $0x18] sm:$0xff]
  %v397 = vld [vmem:[%s5 + $0x20] sm:$0xff]
  %v398 = vld [vmem:[%s5 + $0x28] sm:$0xff]
  %v399 = vld [vmem:[%s5 + $0x30] sm:$0xff]
  %v400 = vld [vmem:[%s5 + $0x38] sm:$0xff]
  %v401 = vld [vmem:[%s6] sm:$0x1]
  %v403 = vperm.slane %v401, 0
  %v406 = vsel %vm80, %v377, 0
  %v409 = vsel %vm80, %v378, 0
  %v412 = vsel %vm80, %v379, 0
  %v415 = vsel %vm80, %v380, 0
  %v418 = vsel %vm80, %v381, 0
  %v421 = vsel %vm80, %v382, 0
  %v424 = vsel %vm80, %v383, 0
  %v427 = vsel %vm80, %v384, 0
  %v430 = vsel %vm80, %v385, 0
  %v433 = vsel %vm80, %v386, 0
  %v436 = vsel %vm80, %v387, 0
  %v439 = vsel %vm80, %v388, 0
  %v442 = vsel %vm80, %v389, 0
  %v445 = vsel %vm80, %v390, 0
  %v448 = vsel %vm80, %v391, 0
  %v451 = vsel %vm80, %v392, 0
  %453 = vmatpush.msra.mxu0 0.0
  %454 = vmatpush.msra.mxu0 0.0
  %455 = vmatpush.msra.mxu0 0.0
  %456 = vmatpush.msra.mxu0 0.0
  %457 = vmatpush.msra.mxu0 0.0
  %458 = vmatpush.msra.mxu0 0.0
  %459 = vmatpush.msra.mxu0 0.0
  %460 = vmatpush.msra.mxu0 0.0
  %461 = vmatpush.msra.mxu0 %v400
  %462 = vmatpush.msra.mxu0 %v399
  %463 = vmatpush.msra.mxu0 %v398
  %464 = vmatpush.msra.mxu0 %v397
  %465 = vmatpush.msra.mxu0 %v396
  %466 = vmatpush.msra.mxu0 %v395
  %467 = vmatpush.msra.mxu0 %v394
  %468 = vmatpush.msra.mxu0 %v393
  %469 = vmatmul.f32.gmra.mxu0 %v406
  %v470 = vpop.f32.mrf.mxu0
  %v471 = vadd.f32 %v403, %v470
  %472 = vmatmul.f32.gmra.mxu0 %v409
  %v473 = vpop.f32.mrf.mxu0
  %v474 = vadd.f32 %v403, %v473
  %475 = vmatmul.f32.gmra.mxu0 %v412
  %v476 = vpop.f32.mrf.mxu0
  %v477 = vadd.f32 %v403, %v476
  %478 = vmatmul.f32.gmra.mxu0 %v415
  %v479 = vpop.f32.mrf.mxu0
  %v480 = vadd.f32 %v403, %v479
  %481 = vmatmul.f32.gmra.mxu0 %v418
  %v482 = vpop.f32.mrf.mxu0
  %v483 = vadd.f32 %v403, %v482
  %484 = vmatmul.f32.gmra.mxu0 %v421
  %v485 = vpop.f32.mrf.mxu0
  %v486 = vadd.f32 %v403, %v485
  %487 = vmatmul.f32.gmra.mxu0 %v424
  %v488 = vpop.f32.mrf.mxu0
  %v489 = vadd.f32 %v403, %v488
  %490 = vmatmul.f32.gmra.mxu0 %v427
  %v491 = vpop.f32.mrf.mxu0
  %v492 = vadd.f32 %v403, %v491
  %493 = vmatmul.f32.gmra.mxu0 %v430
  %v494 = vpop.f32.mrf.mxu0
  %v495 = vadd.f32 %v403, %v494
  %496 = vmatmul.f32.gmra.mxu0 %v433
  %v497 = vpop.f32.mrf.mxu0
  %v498 = vadd.f32 %v403, %v497
  %499 = vmatmul.f32.gmra.mxu0 %v436
  %v500 = vpop.f32.mrf.mxu0
  %v501 = vadd.f32 %v403, %v500
  %502 = vmatmul.f32.gmra.mxu0 %v439
  %v503 = vpop.f32.mrf.mxu0
  %v504 = vadd.f32 %v403, %v503
  %505 = vmatmul.f32.gmra.mxu0 %v442
  %v506 = vpop.f32.mrf.mxu0
  %v507 = vadd.f32 %v403, %v506
  %508 = vmatmul.f32.gmra.mxu0 %v445
  %v509 = vpop.f32.mrf.mxu0
  %v510 = vadd.f32 %v403, %v509
  %511 = vmatmul.f32.gmra.mxu0 %v448
  %v512 = vpop.f32.mrf.mxu0
  %v513 = vadd.f32 %v403, %v512
  %514 = vmatmul.f32.gmra.mxu0 %v451
  %v515 = vpop.f32.mrf.mxu0
  %v516 = vadd.f32 %v403, %v515
  %517 = vdwg.mxu0
  %v518 = vld [vmem:[%s7] sm:$0x1]
  %v519 = vld [vmem:[%s8] sm:$0x1]
  %vm520 = vcmask 261120
  %v521 = vsel %vm520, %v471, 0.0
  %v522 = vsel %vm520, %v474, 0.0
  %v523 = vadd.f32 %v521, %v522
  %v524 = vsel %vm520, %v477, 0.0
  %v525 = vadd.f32 %v523, %v524
  %v526 = vsel %vm520, %v480, 0.0
  %v527 = vadd.f32 %v525, %v526
  %v528 = vsel %vm520, %v483, 0.0
  %v529 = vadd.f32 %v527, %v528
  %v530 = vsel %vm520, %v486, 0.0
  %v531 = vadd.f32 %v529, %v530
  %v532 = vsel %vm520, %v489, 0.0
  %v533 = vadd.f32 %v531, %v532
  %v534 = vsel %vm520, %v492, 0.0
  %v535 = vadd.f32 %v533, %v534
  %v536 = vsel %vm520, %v495, 0.0
  %v537 = vadd.f32 %v535, %v536
  %v538 = vsel %vm520, %v498, 0.0
  %v539 = vadd.f32 %v537, %v538
  %v540 = vsel %vm520, %v501, 0.0
  %v541 = vadd.f32 %v539, %v540
  %v542 = vsel %vm520, %v504, 0.0
  %v543 = vadd.f32 %v541, %v542
  %v544 = vsel %vm520, %v507, 0.0
  %v545 = vadd.f32 %v543, %v544
  %v546 = vsel %vm520, %v510, 0.0
  %v547 = vadd.f32 %v545, %v546
  %v548 = vsel %vm520, %v513, 0.0
  %v549 = vadd.f32 %v547, %v548
  %v550 = vsel %vm520, %v516, 0.0
  %v551 = vadd.f32 %v549, %v550
  %v552 = vrot.slane %v551, 4
  %v553 = vadd.f32 %v551, %v552
  %v554 = vrot.slane %v553, 2
  %v555 = vadd.f32 %v553, %v554
  %v556 = vrot.slane %v555, 1
  %v557 = vadd.f32 %v555, %v556
  %v558 = vmul.f32 %v557, %v239
  %v559 = vsub.f32 %v471, %v558
  %v560 = vsub.f32 %v474, %v558
  %v561 = vsub.f32 %v477, %v558
  %v562 = vsub.f32 %v480, %v558
  %v563 = vsub.f32 %v483, %v558
  %v564 = vsub.f32 %v486, %v558
  %v565 = vsub.f32 %v489, %v558
  %v566 = vsub.f32 %v492, %v558
  %v567 = vsub.f32 %v495, %v558
  %v568 = vsub.f32 %v498, %v558
  %v569 = vsub.f32 %v501, %v558
  %v570 = vsub.f32 %v504, %v558
  %v571 = vsub.f32 %v507, %v558
  %v572 = vsub.f32 %v510, %v558
  %v573 = vsub.f32 %v513, %v558
  %v574 = vsub.f32 %v516, %v558
  %v575 = vmul.f32 %v559, %v559
  %v576 = vmul.f32 %v560, %v560
  %v577 = vmul.f32 %v561, %v561
  %v578 = vmul.f32 %v562, %v562
  %v579 = vmul.f32 %v563, %v563
  %v580 = vmul.f32 %v564, %v564
  %v581 = vmul.f32 %v565, %v565
  %v582 = vmul.f32 %v566, %v566
  %v583 = vmul.f32 %v567, %v567
  %v584 = vmul.f32 %v568, %v568
  %v585 = vmul.f32 %v569, %v569
  %v586 = vmul.f32 %v570, %v570
  %v587 = vmul.f32 %v571, %v571
  %v588 = vmul.f32 %v572, %v572
  %v589 = vmul.f32 %v573, %v573
  %v590 = vmul.f32 %v574, %v574
  %v591 = vsel %vm520, %v575, 0.0
  %v592 = vsel %vm520, %v576, 0.0
  %v593 = vadd.f32 %v591, %v592
  %v594 = vsel %vm520, %v577, 0.0
  %v595 = vadd.f32 %v593, %v594
  %v596 = vsel %vm520, %v578, 0.0
  %v597 = vadd.f32 %v595, %v596
  %v598 = vsel %vm520, %v579, 0.0
  %v599 = vadd.f32 %v597, %v598
  %v600 = vsel %vm520, %v580, 0.0
  %v601 = vadd.f32 %v599, %v600
  %v602 = vsel %vm520, %v581, 0.0
  %v603 = vadd.f32 %v601, %v602
  %v604 = vsel %vm520, %v582, 0.0
  %v605 = vadd.f32 %v603, %v604
  %v606 = vsel %vm520, %v583, 0.0
  %v607 = vadd.f32 %v605, %v606
  %v608 = vsel %vm520, %v584, 0.0
  %v609 = vadd.f32 %v607, %v608
  %v610 = vsel %vm520, %v585, 0.0
  %v611 = vadd.f32 %v609, %v610
  %v612 = vsel %vm520, %v586, 0.0
  %v613 = vadd.f32 %v611, %v612
  %v614 = vsel %vm520, %v587, 0.0
  %v615 = vadd.f32 %v613, %v614
  %v616 = vsel %vm520, %v588, 0.0
  %v617 = vadd.f32 %v615, %v616
  %v618 = vsel %vm520, %v589, 0.0
  %v619 = vadd.f32 %v617, %v618
  %v620 = vsel %vm520, %v590, 0.0
  %v621 = vadd.f32 %v619, %v620
  %v622 = vrot.slane %v621, 4
  %v623 = vadd.f32 %v621, %v622
  %v624 = vrot.slane %v623, 2
  %v625 = vadd.f32 %v623, %v624
  %v626 = vrot.slane %v625, 1
  %v627 = vadd.f32 %v625, %v626
  %v628 = vmul.f32 %v627, %v239
  %v629 = vadd.f32 %v628, 1e-05
  %v630 = vrsqrt.pop %v629
  %v631 = vmul.f32 %v630, %v629
  %v632 = vmul.f32 %v631, %v630
  %v633 = vmul.f32 0.5, %v632
  %v634 = vsub.f32 1.5, %v633
  %v635 = vmul.f32 %v630, %v634
  %v636 = vmul.f32 %v629, %v635
  %vm637 = vcmp.eq.f32.partialorder %v629, inf
  %v638 = vsel %vm637, %v629, %v636
  %vm639 = vcmp.eq.f32.partialorder %v629, 0.0
  %v640 = vand.u32 %v629, 2147483648
  %v641 = vsel %vm639, %v640, %v638
  %v642 = vrcp.pop %v641
  %v643 = vmul.f32 %v641, %v642
  %v644 = vsub.f32 1.0, %v643
  %v645 = vmul.f32 %v642, %v644
  %v646 = vadd.f32 %v642, %v645
  %vm647 = vweird.f32 %v641
  %vm648 = vweird.f32 %v642
  %vm649 = vmor %vm647, %vm648
  %v650 = vsel %vm649, %v642, %v646
  %v651 = vand.u32 2147483647, %v641
  %vm652 = vcmp.eq.f32.partialorder %v651, 8.507059e+37
  %v653 = vand.u32 %v641, 2147483648
  %v654 = vor.u32 1.1754944e-38, %v653
  %v655 = vsel %vm652, %v654, %v650
  %v656 = vmul.f32 %v518, %v655
  %v658 = vperm.slane %v656, 0
  %v660 = vmul.f32 %v559, %v658
  %v661 = vmul.f32 %v560, %v658
  %v662 = vmul.f32 %v561, %v658
  %v663 = vmul.f32 %v562, %v658
  %v664 = vmul.f32 %v563, %v658
  %v665 = vmul.f32 %v564, %v658
  %v666 = vmul.f32 %v565, %v658
  %v667 = vmul.f32 %v566, %v658
  %v668 = vmul.f32 %v567, %v658
  %v669 = vmul.f32 %v568, %v658
  %v670 = vmul.f32 %v569, %v658
  %v671 = vmul.f32 %v570, %v658
  %v672 = vmul.f32 %v571, %v658
  %v673 = vmul.f32 %v572, %v658
  %v674 = vmul.f32 %v573, %v658
  %v675 = vmul.f32 %v574, %v658
  %v677 = vperm.slane %v519, 0
  %v679 = vadd.f32 %v660, %v677
  %v680 = vadd.f32 %v661, %v677
  %v681 = vadd.f32 %v662, %v677
  %v682 = vadd.f32 %v663, %v677
  %v683 = vadd.f32 %v664, %v677
  %v684 = vadd.f32 %v665, %v677
  %v685 = vadd.f32 %v666, %v677
  %v686 = vadd.f32 %v667, %v677
  %v687 = vadd.f32 %v668, %v677
  %v688 = vadd.f32 %v669, %v677
  %v689 = vadd.f32 %v670, %v677
  %v690 = vadd.f32 %v671, %v677
  %v691 = vadd.f32 %v672, %v677
  %v692 = vadd.f32 %v673, %v677
  %v693 = vadd.f32 %v674, %v677
  %v694 = vadd.f32 %v675, %v677
  %v695 = vmax.f32 %v679, 0.0
  %v696 = vmax.f32 %v680, 0.0
  %v697 = vmax.f32 %v681, 0.0
  %v698 = vmax.f32 %v682, 0.0
  %v699 = vmax.f32 %v683, 0.0
  %v700 = vmax.f32 %v684, 0.0
  %v701 = vmax.f32 %v685, 0.0
  %v702 = vmax.f32 %v686, 0.0
  %v703 = vmax.f32 %v687, 0.0
  %v704 = vmax.f32 %v688, 0.0
  %v705 = vmax.f32 %v689, 0.0
  %v706 = vmax.f32 %v690, 0.0
  %v707 = vmax.f32 %v691, 0.0
  %v708 = vmax.f32 %v692, 0.0
  %v709 = vmax.f32 %v693, 0.0
  %v710 = vmax.f32 %v694, 0.0
  %v711 = vld [vmem:[%s9] sm:$0xff]
  %v712 = vld [vmem:[%s9 + $0x8] sm:$0xff]
  %v713 = vld [vmem:[%s9 + $0x10] sm:$0xff]
  %v714 = vld [vmem:[%s9 + $0x18] sm:$0xff]
  %v715 = vld [vmem:[%s10] sm:$0x1]
  %v717 = vperm.slane %v715, 0
  %v720 = vsel %vm520, %v695, 0
  %v723 = vsel %vm520, %v696, 0
  %v726 = vsel %vm520, %v697, 0
  %v729 = vsel %vm520, %v698, 0
  %v732 = vsel %vm520, %v699, 0
  %v735 = vsel %vm520, %v700, 0
  %v738 = vsel %vm520, %v701, 0
  %v741 = vsel %vm520, %v702, 0
  %v744 = vsel %vm520, %v703, 0
  %v747 = vsel %vm520, %v704, 0
  %v750 = vsel %vm520, %v705, 0
  %v753 = vsel %vm520, %v706, 0
  %v756 = vsel %vm520, %v707, 0
  %v759 = vsel %vm520, %v708, 0
  %v762 = vsel %vm520, %v709, 0
  %v765 = vsel %vm520, %v710, 0
  %767 = vmatpush.msra.mxu0 0.0
  %768 = vmatpush.msra.mxu0 0.0
  %769 = vmatpush.msra.mxu0 0.0
  %770 = vmatpush.msra.mxu0 0.0
  %771 = vmatpush.msra.mxu0 0.0
  %772 = vmatpush.msra.mxu0 0.0
  %773 = vmatpush.msra.mxu0 0.0
  %774 = vmatpush.msra.mxu0 0.0
  %775 = vmatpush.msra.mxu0 0.0
  %776 = vmatpush.msra.mxu0 0.0
  %777 = vmatpush.msra.mxu0 0.0
  %778 = vmatpush.msra.mxu0 0.0
  %779 = vmatpush.msra.mxu0 %v714
  %780 = vmatpush.msra.mxu0 %v713
  %781 = vmatpush.msra.mxu0 %v712
  %782 = vmatpush.msra.mxu0 %v711
  %783 = vmatmul.f32.gmra.mxu0 %v720
  %v784 = vpop.f32.mrf.mxu0
  %v785 = vadd.f32 %v717, %v784
  %786 = vmatmul.f32.gmra.mxu0 %v723
  %v787 = vpop.f32.mrf.mxu0
  %v788 = vadd.f32 %v717, %v787
  %789 = vmatmul.f32.gmra.mxu0 %v726
  %v790 = vpop.f32.mrf.mxu0
  %v791 = vadd.f32 %v717, %v790
  %792 = vmatmul.f32.gmra.mxu0 %v729
  %v793 = vpop.f32.mrf.mxu0
  %v794 = vadd.f32 %v717, %v793
  %795 = vmatmul.f32.gmra.mxu0 %v732
  %v796 = vpop.f32.mrf.mxu0
  %v797 = vadd.f32 %v717, %v796
  %798 = vmatmul.f32.gmra.mxu0 %v735
  %v799 = vpop.f32.mrf.mxu0
  %v800 = vadd.f32 %v717, %v799
  %801 = vmatmul.f32.gmra.mxu0 %v738
  %v802 = vpop.f32.mrf.mxu0
  %v803 = vadd.f32 %v717, %v802
  %804 = vmatmul.f32.gmra.mxu0 %v741
  %v805 = vpop.f32.mrf.mxu0
  %v806 = vadd.f32 %v717, %v805
  %807 = vmatmul.f32.gmra.mxu0 %v744
  %v808 = vpop.f32.mrf.mxu0
  %v809 = vadd.f32 %v717, %v808
  %810 = vmatmul.f32.gmra.mxu0 %v747
  %v811 = vpop.f32.mrf.mxu0
  %v812 = vadd.f32 %v717, %v811
  %813 = vmatmul.f32.gmra.mxu0 %v750
  %v814 = vpop.f32.mrf.mxu0
  %v815 = vadd.f32 %v717, %v814
  %816 = vmatmul.f32.gmra.mxu0 %v753
  %v817 = vpop.f32.mrf.mxu0
  %v818 = vadd.f32 %v717, %v817
  %819 = vmatmul.f32.gmra.mxu0 %v756
  %v820 = vpop.f32.mrf.mxu0
  %v821 = vadd.f32 %v717, %v820
  %822 = vmatmul.f32.gmra.mxu0 %v759
  %v823 = vpop.f32.mrf.mxu0
  %v824 = vadd.f32 %v717, %v823
  %825 = vmatmul.f32.gmra.mxu0 %v762
  %v826 = vpop.f32.mrf.mxu0
  %v827 = vadd.f32 %v717, %v826
  %828 = vmatmul.f32.gmra.mxu0 %v765
  %v829 = vpop.f32.mrf.mxu0
  %v830 = vadd.f32 %v717, %v829
  %831 = vdwg.mxu0
  %v832 = vld [vmem:[%s11] sm:$0x1]
  %v833 = vld [vmem:[%s12] sm:$0x1]
  %v834 = vsel %vm520, %v785, 0.0
  %v835 = vsel %vm520, %v788, 0.0
  %v836 = vadd.f32 %v834, %v835
  %v837 = vsel %vm520, %v791, 0.0
  %v838 = vadd.f32 %v836, %v837
  %v839 = vsel %vm520, %v794, 0.0
  %v840 = vadd.f32 %v838, %v839
  %v841 = vsel %vm520, %v797, 0.0
  %v842 = vadd.f32 %v840, %v841
  %v843 = vsel %vm520, %v800, 0.0
  %v844 = vadd.f32 %v842, %v843
  %v845 = vsel %vm520, %v803, 0.0
  %v846 = vadd.f32 %v844, %v845
  %v847 = vsel %vm520, %v806, 0.0
  %v848 = vadd.f32 %v846, %v847
  %v849 = vsel %vm520, %v809, 0.0
  %v850 = vadd.f32 %v848, %v849
  %v851 = vsel %vm520, %v812, 0.0
  %v852 = vadd.f32 %v850, %v851
  %v853 = vsel %vm520, %v815, 0.0
  %v854 = vadd.f32 %v852, %v853
  %v855 = vsel %vm520, %v818, 0.0
  %v856 = vadd.f32 %v854, %v855
  %v857 = vsel %vm520, %v821, 0.0
  %v858 = vadd.f32 %v856, %v857
  %v859 = vsel %vm520, %v824, 0.0
  %v860 = vadd.f32 %v858, %v859
  %v861 = vsel %vm520, %v827, 0.0
  %v862 = vadd.f32 %v860, %v861
  %v863 = vsel %vm520, %v830, 0.0
  %v864 = vadd.f32 %v862, %v863
  %v865 = vrot.slane %v864, 4
  %v866 = vadd.f32 %v864, %v865
  %v867 = vrot.slane %v866, 2
  %v868 = vadd.f32 %v866, %v867
  %v869 = vrot.slane %v868, 1
  %v870 = vadd.f32 %v868, %v869
  %v871 = vmul.f32 %v870, %v239
  %v872 = vsub.f32 %v785, %v871
  %v873 = vsub.f32 %v788, %v871
  %v874 = vsub.f32 %v791, %v871
  %v875 = vsub.f32 %v794, %v871
  %v876 = vsub.f32 %v797, %v871
  %v877 = vsub.f32 %v800, %v871
  %v878 = vsub.f32 %v803, %v871
  %v879 = vsub.f32 %v806, %v871
  %v880 = vsub.f32 %v809, %v871
  %v881 = vsub.f32 %v812, %v871
  %v882 = vsub.f32 %v815, %v871
  %v883 = vsub.f32 %v818, %v871
  %v884 = vsub.f32 %v821, %v871
  %v885 = vsub.f32 %v824, %v871
  %v886 = vsub.f32 %v827, %v871
  %v887 = vsub.f32 %v830, %v871
  %v888 = vmul.f32 %v872, %v872
  %v889 = vmul.f32 %v873, %v873
  %v890 = vmul.f32 %v874, %v874
  %v891 = vmul.f32 %v875, %v875
  %v892 = vmul.f32 %v876, %v876
  %v893 = vmul.f32 %v877, %v877
  %v894 = vmul.f32 %v878, %v878
  %v895 = vmul.f32 %v879, %v879
  %v896 = vmul.f32 %v880, %v880
  %v897 = vmul.f32 %v881, %v881
  %v898 = vmul.f32 %v882, %v882
  %v899 = vmul.f32 %v883, %v883
  %v900 = vmul.f32 %v884, %v884
  %v901 = vmul.f32 %v885, %v885
  %v902 = vmul.f32 %v886, %v886
  %v903 = vmul.f32 %v887, %v887
  %v904 = vsel %vm520, %v888, 0.0
  %v905 = vsel %vm520, %v889, 0.0
  %v906 = vadd.f32 %v904, %v905
  %v907 = vsel %vm520, %v890, 0.0
  %v908 = vadd.f32 %v906, %v907
  %v909 = vsel %vm520, %v891, 0.0
  %v910 = vadd.f32 %v908, %v909
  %v911 = vsel %vm520, %v892, 0.0
  %v912 = vadd.f32 %v910, %v911
  %v913 = vsel %vm520, %v893, 0.0
  %v914 = vadd.f32 %v912, %v913
  %v915 = vsel %vm520, %v894, 0.0
  %v916 = vadd.f32 %v914, %v915
  %v917 = vsel %vm520, %v895, 0.0
  %v918 = vadd.f32 %v916, %v917
  %v919 = vsel %vm520, %v896, 0.0
  %v920 = vadd.f32 %v918, %v919
  %v921 = vsel %vm520, %v897, 0.0
  %v922 = vadd.f32 %v920, %v921
  %v923 = vsel %vm520, %v898, 0.0
  %v924 = vadd.f32 %v922, %v923
  %v925 = vsel %vm520, %v899, 0.0
  %v926 = vadd.f32 %v924, %v925
  %v927 = vsel %vm520, %v900, 0.0
  %v928 = vadd.f32 %v926, %v927
  %v929 = vsel %vm520, %v901, 0.0
  %v930 = vadd.f32 %v928, %v929
  %v931 = vsel %vm520, %v902, 0.0
  %v932 = vadd.f32 %v930, %v931
  %v933 = vsel %vm520, %v903, 0.0
  %v934 = vadd.f32 %v932, %v933
  %v935 = vrot.slane %v934, 4
  %v936 = vadd.f32 %v934, %v935
  %v937 = vrot.slane %v936, 2
  %v938 = vadd.f32 %v936, %v937
  %v939 = vrot.slane %v938, 1
  %v940 = vadd.f32 %v938, %v939
  %v941 = vmul.f32 %v940, %v239
  %v942 = vadd.f32 %v941, 1e-05
  %v943 = vrsqrt.pop %v942
  %v944 = vmul.f32 %v943, %v942
  %v945 = vmul.f32 %v944, %v943
  %v946 = vmul.f32 0.5, %v945
  %v947 = vsub.f32 1.5, %v946
  %v948 = vmul.f32 %v943, %v947
  %v949 = vmul.f32 %v942, %v948
  %vm950 = vcmp.eq.f32.partialorder %v942, inf
  %v951 = vsel %vm950, %v942, %v949
  %vm952 = vcmp.eq.f32.partialorder %v942, 0.0
  %v953 = vand.u32 %v942, 2147483648
  %v954 = vsel %vm952, %v953, %v951
  %v955 = vrcp.pop %v954
  %v956 = vmul.f32 %v954, %v955
  %v957 = vsub.f32 1.0, %v956
  %v958 = vmul.f32 %v955, %v957
  %v959 = vadd.f32 %v955, %v958
  %vm960 = vweird.f32 %v954
  %vm961 = vweird.f32 %v955
  %vm962 = vmor %vm960, %vm961
  %v963 = vsel %vm962, %v955, %v959
  %v964 = vand.u32 2147483647, %v954
  %vm965 = vcmp.eq.f32.partialorder %v964, 8.507059e+37
  %v966 = vand.u32 %v954, 2147483648
  %v967 = vor.u32 1.1754944e-38, %v966
  %v968 = vsel %vm965, %v967, %v963
  %v969 = vmul.f32 %v832, %v968
  %v971 = vperm.slane %v969, 0
  %v973 = vmul.f32 %v872, %v971
  %v974 = vmul.f32 %v873, %v971
  %v975 = vmul.f32 %v874, %v971
  %v976 = vmul.f32 %v875, %v971
  %v977 = vmul.f32 %v876, %v971
  %v978 = vmul.f32 %v877, %v971
  %v979 = vmul.f32 %v878, %v971
  %v980 = vmul.f32 %v879, %v971
  %v981 = vmul.f32 %v880, %v971
  %v982 = vmul.f32 %v881, %v971
  %v983 = vmul.f32 %v882, %v971
  %v984 = vmul.f32 %v883, %v971
  %v985 = vmul.f32 %v884, %v971
  %v986 = vmul.f32 %v885, %v971
  %v987 = vmul.f32 %v886, %v971
  %v988 = vmul.f32 %v887, %v971
  %v990 = vperm.slane %v833, 0
  %v992 = vadd.f32 %v973, %v990
  %v993 = vadd.f32 %v974, %v990
  %v994 = vadd.f32 %v975, %v990
  %v995 = vadd.f32 %v976, %v990
  %v996 = vadd.f32 %v977, %v990
  %v997 = vadd.f32 %v978, %v990
  %v998 = vadd.f32 %v979, %v990
  %v999 = vadd.f32 %v980, %v990
  %v1000 = vadd.f32 %v981, %v990
  %v1001 = vadd.f32 %v982, %v990
  %v1002 = vadd.f32 %v983, %v990
  %v1003 = vadd.f32 %v984, %v990
  %v1004 = vadd.f32 %v985, %v990
  %v1005 = vadd.f32 %v986, %v990
  %v1006 = vadd.f32 %v987, %v990
  %v1007 = vadd.f32 %v988, %v990
  %v1008 = vmax.f32 %v992, 0.0
  %v1009 = vmax.f32 %v993, 0.0
  %v1010 = vmax.f32 %v994, 0.0
  %v1011 = vmax.f32 %v995, 0.0
  %v1012 = vmax.f32 %v996, 0.0
  %v1013 = vmax.f32 %v997, 0.0
  %v1014 = vmax.f32 %v998, 0.0
  %v1015 = vmax.f32 %v999, 0.0
  %v1016 = vmax.f32 %v1000, 0.0
  %v1017 = vmax.f32 %v1001, 0.0
  %v1018 = vmax.f32 %v1002, 0.0
  %v1019 = vmax.f32 %v1003, 0.0
  %v1020 = vmax.f32 %v1004, 0.0
  %v1021 = vmax.f32 %v1005, 0.0
  %v1022 = vmax.f32 %v1006, 0.0
  %v1023 = vmax.f32 %v1007, 0.0
  %v1024 = vld [vmem:[%s13] sm:$0xff]
  %v1025 = vld [vmem:[%s13 + $0x8] sm:$0xff]
  %v1026 = vld [vmem:[%s13 + $0x10] sm:$0xff]
  %v1027 = vld [vmem:[%s13 + $0x18] sm:$0xff]
  %v1028 = vld [vmem:[#allocation2] sm:$0x1]
  %v1030 = vperm.slane %v1028, 0
  %v1033 = vsel %vm520, %v1008, 0
  %v1036 = vsel %vm520, %v1009, 0
  %v1039 = vsel %vm520, %v1010, 0
  %v1042 = vsel %vm520, %v1011, 0
  %v1045 = vsel %vm520, %v1012, 0
  %v1048 = vsel %vm520, %v1013, 0
  %v1051 = vsel %vm520, %v1014, 0
  %v1054 = vsel %vm520, %v1015, 0
  %v1057 = vsel %vm520, %v1016, 0
  %v1060 = vsel %vm520, %v1017, 0
  %v1063 = vsel %vm520, %v1018, 0
  %v1066 = vsel %vm520, %v1019, 0
  %v1069 = vsel %vm520, %v1020, 0
  %v1072 = vsel %vm520, %v1021, 0
  %v1075 = vsel %vm520, %v1022, 0
  %v1078 = vsel %vm520, %v1023, 0
  %1080 = vmatpush.msra.mxu0 0.0
  %1081 = vmatpush.msra.mxu0 0.0
  %1082 = vmatpush.msra.mxu0 0.0
  %1083 = vmatpush.msra.mxu0 0.0
  %1084 = vmatpush.msra.mxu0 0.0
  %1085 = vmatpush.msra.mxu0 0.0
  %1086 = vmatpush.msra.mxu0 0.0
  %1087 = vmatpush.msra.mxu0 0.0
  %1088 = vmatpush.msra.mxu0 0.0
  %1089 = vmatpush.msra.mxu0 0.0
  %1090 = vmatpush.msra.mxu0 0.0
  %1091 = vmatpush.msra.mxu0 0.0
  %1092 = vmatpush.msra.mxu0 %v1027
  %1093 = vmatpush.msra.mxu0 %v1026
  %1094 = vmatpush.msra.mxu0 %v1025
  %1095 = vmatpush.msra.mxu0 %v1024
  %1096 = vmatmul.f32.gmra.mxu0 %v1033
  %v1097 = vpop.f32.mrf.mxu0
  %v1098 = vadd.f32 %v1030, %v1097
  %1099 = vmatmul.f32.gmra.mxu0 %v1036
  %v1100 = vpop.f32.mrf.mxu0
  %v1101 = vadd.f32 %v1030, %v1100
  %1102 = vmatmul.f32.gmra.mxu0 %v1039
  %v1103 = vpop.f32.mrf.mxu0
  %v1104 = vadd.f32 %v1030, %v1103
  %1105 = vmatmul.f32.gmra.mxu0 %v1042
  %v1106 = vpop.f32.mrf.mxu0
  %v1107 = vadd.f32 %v1030, %v1106
  %1108 = vmatmul.f32.gmra.mxu0 %v1045
  %v1109 = vpop.f32.mrf.mxu0
  %v1110 = vadd.f32 %v1030, %v1109
  %1111 = vmatmul.f32.gmra.mxu0 %v1048
  %v1112 = vpop.f32.mrf.mxu0
  %v1113 = vadd.f32 %v1030, %v1112
  %1114 = vmatmul.f32.gmra.mxu0 %v1051
  %v1115 = vpop.f32.mrf.mxu0
  %v1116 = vadd.f32 %v1030, %v1115
  %1117 = vmatmul.f32.gmra.mxu0 %v1054
  %v1118 = vpop.f32.mrf.mxu0
  %v1119 = vadd.f32 %v1030, %v1118
  %1120 = vmatmul.f32.gmra.mxu0 %v1057
  %v1121 = vpop.f32.mrf.mxu0
  %v1122 = vadd.f32 %v1030, %v1121
  %1123 = vmatmul.f32.gmra.mxu0 %v1060
  %v1124 = vpop.f32.mrf.mxu0
  %v1125 = vadd.f32 %v1030, %v1124
  %1126 = vmatmul.f32.gmra.mxu0 %v1063
  %v1127 = vpop.f32.mrf.mxu0
  %v1128 = vadd.f32 %v1030, %v1127
  %1129 = vmatmul.f32.gmra.mxu0 %v1066
  %v1130 = vpop.f32.mrf.mxu0
  %v1131 = vadd.f32 %v1030, %v1130
  %1132 = vmatmul.f32.gmra.mxu0 %v1069
  %v1133 = vpop.f32.mrf.mxu0
  %v1134 = vadd.f32 %v1030, %v1133
  %1135 = vmatmul.f32.gmra.mxu0 %v1072
  %v1136 = vpop.f32.mrf.mxu0
  %v1137 = vadd.f32 %v1030, %v1136
  %1138 = vmatmul.f32.gmra.mxu0 %v1075
  %v1139 = vpop.f32.mrf.mxu0
  %v1140 = vadd.f32 %v1030, %v1139
  %1141 = vmatmul.f32.gmra.mxu0 %v1078
  %v1142 = vpop.f32.mrf.mxu0
  %v1143 = vadd.f32 %v1030, %v1142
  %1144 = vdwg.mxu0
  %v1145 = vxor.u32 %v1098, 2147483648
  %v1146 = vxor.u32 %v1101, 2147483648
  %v1147 = vxor.u32 %v1104, 2147483648
  %v1148 = vxor.u32 %v1107, 2147483648
  %v1149 = vxor.u32 %v1110, 2147483648
  %v1150 = vxor.u32 %v1113, 2147483648
  %v1151 = vxor.u32 %v1116, 2147483648
  %v1152 = vxor.u32 %v1119, 2147483648
  %v1153 = vxor.u32 %v1122, 2147483648
  %v1154 = vxor.u32 %v1125, 2147483648
  %v1155 = vxor.u32 %v1128, 2147483648
  %v1156 = vxor.u32 %v1131, 2147483648
  %v1157 = vxor.u32 %v1134, 2147483648
  %v1158 = vxor.u32 %v1137, 2147483648
  %v1159 = vxor.u32 %v1140, 2147483648
  %v1160 = vxor.u32 %v1143, 2147483648
  %v1161 = vmul.f32 %v1145, 1.442695
  %v1162 = vpow.pop %v1161
  %v1163 = vmul.f32 %v1146, 1.442695
  %v1164 = vpow.pop %v1163
  %v1165 = vmul.f32 %v1147, 1.442695
  %v1166 = vpow.pop %v1165
  %v1167 = vmul.f32 %v1148, 1.442695
  %v1168 = vpow.pop %v1167
  %v1169 = vmul.f32 %v1149, 1.442695
  %v1170 = vpow.pop %v1169
  %v1171 = vmul.f32 %v1150, 1.442695
  %v1172 = vpow.pop %v1171
  %v1173 = vmul.f32 %v1151, 1.442695
  %v1174 = vpow.pop %v1173
  %v1175 = vmul.f32 %v1152, 1.442695
  %v1176 = vpow.pop %v1175
  %v1177 = vmul.f32 %v1153, 1.442695
  %v1178 = vpow.pop %v1177
  %v1179 = vmul.f32 %v1154, 1.442695
  %v1180 = vpow.pop %v1179
  %v1181 = vmul.f32 %v1155, 1.442695
  %v1182 = vpow.pop %v1181
  %v1183 = vmul.f32 %v1156, 1.442695
  %v1184 = vpow.pop %v1183
  %v1185 = vmul.f32 %v1157, 1.442695
  %v1186 = vpow.pop %v1185
  %v1187 = vmul.f32 %v1158, 1.442695
  %v1188 = vpow.pop %v1187
  %v1189 = vmul.f32 %v1159, 1.442695
  %v1190 = vpow.pop %v1189
  %v1191 = vmul.f32 %v1160, 1.442695
  %v1192 = vpow.pop %v1191
  %v1193 = vadd.f32 %v1162, 1.0
  %v1194 = vadd.f32 %v1164, 1.0
  %v1195 = vadd.f32 %v1166, 1.0
  %v1196 = vadd.f32 %v1168, 1.0
  %v1197 = vadd.f32 %v1170, 1.0
  %v1198 = vadd.f32 %v1172, 1.0
  %v1199 = vadd.f32 %v1174, 1.0
  %v1200 = vadd.f32 %v1176, 1.0
  %v1201 = vadd.f32 %v1178, 1.0
  %v1202 = vadd.f32 %v1180, 1.0
  %v1203 = vadd.f32 %v1182, 1.0
  %v1204 = vadd.f32 %v1184, 1.0
  %v1205 = vadd.f32 %v1186, 1.0
  %v1206 = vadd.f32 %v1188, 1.0
  %v1207 = vadd.f32 %v1190, 1.0
  %v1208 = vadd.f32 %v1192, 1.0
  %v1209 = vrcp.pop %v1193
  %v1210 = vmul.f32 %v1193, %v1209
  %v1211 = vsub.f32 1.0, %v1210
  %v1212 = vmul.f32 %v1209, %v1211
  %v1213 = vadd.f32 %v1209, %v1212
  %vm1214 = vweird.f32 %v1193
  %vm1215 = vweird.f32 %v1209
  %vm1216 = vmor %vm1214, %vm1215
  %v1217 = vsel %vm1216, %v1209, %v1213
  %v1218 = vand.u32 2147483647, %v1193
  %vm1219 = vcmp.eq.f32.partialorder %v1218, 8.507059e+37
  %v1220 = vand.u32 %v1193, 2147483648
  %v1221 = vor.u32 1.1754944e-38, %v1220
  %v1222 = vsel %vm1219, %v1221, %v1217
  %v1223 = vmul.f32 1.0, %v1222
  %v1224 = vrcp.pop %v1194
  %v1225 = vmul.f32 %v1194, %v1224
  %v1226 = vsub.f32 1.0, %v1225
  %v1227 = vmul.f32 %v1224, %v1226
  %v1228 = vadd.f32 %v1224, %v1227
  %vm1229 = vweird.f32 %v1194
  %vm1230 = vweird.f32 %v1224
  %vm1231 = vmor %vm1229, %vm1230
  %v1232 = vsel %vm1231, %v1224, %v1228
  %v1233 = vand.u32 2147483647, %v1194
  %vm1234 = vcmp.eq.f32.partialorder %v1233, 8.507059e+37
  %v1235 = vand.u32 %v1194, 2147483648
  %v1236 = vor.u32 1.1754944e-38, %v1235
  %v1237 = vsel %vm1234, %v1236, %v1232
  %v1238 = vmul.f32 1.0, %v1237
  %v1239 = vrcp.pop %v1195
  %v1240 = vmul.f32 %v1195, %v1239
  %v1241 = vsub.f32 1.0, %v1240
  %v1242 = vmul.f32 %v1239, %v1241
  %v1243 = vadd.f32 %v1239, %v1242
  %vm1244 = vweird.f32 %v1195
  %vm1245 = vweird.f32 %v1239
  %vm1246 = vmor %vm1244, %vm1245
  %v1247 = vsel %vm1246, %v1239, %v1243
  %v1248 = vand.u32 2147483647, %v1195
  %vm1249 = vcmp.eq.f32.partialorder %v1248, 8.507059e+37
  %v1250 = vand.u32 %v1195, 2147483648
  %v1251 = vor.u32 1.1754944e-38, %v1250
  %v1252 = vsel %vm1249, %v1251, %v1247
  %v1253 = vmul.f32 1.0, %v1252
  %v1254 = vrcp.pop %v1196
  %v1255 = vmul.f32 %v1196, %v1254
  %v1256 = vsub.f32 1.0, %v1255
  %v1257 = vmul.f32 %v1254, %v1256
  %v1258 = vadd.f32 %v1254, %v1257
  %vm1259 = vweird.f32 %v1196
  %vm1260 = vweird.f32 %v1254
  %vm1261 = vmor %vm1259, %vm1260
  %v1262 = vsel %vm1261, %v1254, %v1258
  %v1263 = vand.u32 2147483647, %v1196
  %vm1264 = vcmp.eq.f32.partialorder %v1263, 8.507059e+37
  %v1265 = vand.u32 %v1196, 2147483648
  %v1266 = vor.u32 1.1754944e-38, %v1265
  %v1267 = vsel %vm1264, %v1266, %v1262
  %v1268 = vmul.f32 1.0, %v1267
  %v1269 = vrcp.pop %v1197
  %v1270 = vmul.f32 %v1197, %v1269
  %v1271 = vsub.f32 1.0, %v1270
  %v1272 = vmul.f32 %v1269, %v1271
  %v1273 = vadd.f32 %v1269, %v1272
  %vm1274 = vweird.f32 %v1197
  %vm1275 = vweird.f32 %v1269
  %vm1276 = vmor %vm1274, %vm1275
  %v1277 = vsel %vm1276, %v1269, %v1273
  %v1278 = vand.u32 2147483647, %v1197
  %vm1279 = vcmp.eq.f32.partialorder %v1278, 8.507059e+37
  %v1280 = vand.u32 %v1197, 2147483648
  %v1281 = vor.u32 1.1754944e-38, %v1280
  %v1282 = vsel %vm1279, %v1281, %v1277
  %v1283 = vmul.f32 1.0, %v1282
  %v1284 = vrcp.pop %v1198
  %v1285 = vmul.f32 %v1198, %v1284
  %v1286 = vsub.f32 1.0, %v1285
  %v1287 = vmul.f32 %v1284, %v1286
  %v1288 = vadd.f32 %v1284, %v1287
  %vm1289 = vweird.f32 %v1198
  %vm1290 = vweird.f32 %v1284
  %vm1291 = vmor %vm1289, %vm1290
  %v1292 = vsel %vm1291, %v1284, %v1288
  %v1293 = vand.u32 2147483647, %v1198
  %vm1294 = vcmp.eq.f32.partialorder %v1293, 8.507059e+37
  %v1295 = vand.u32 %v1198, 2147483648
  %v1296 = vor.u32 1.1754944e-38, %v1295
  %v1297 = vsel %vm1294, %v1296, %v1292
  %v1298 = vmul.f32 1.0, %v1297
  %v1299 = vrcp.pop %v1199
  %v1300 = vmul.f32 %v1199, %v1299
  %v1301 = vsub.f32 1.0, %v1300
  %v1302 = vmul.f32 %v1299, %v1301
  %v1303 = vadd.f32 %v1299, %v1302
  %vm1304 = vweird.f32 %v1199
  %vm1305 = vweird.f32 %v1299
  %vm1306 = vmor %vm1304, %vm1305
  %v1307 = vsel %vm1306, %v1299, %v1303
  %v1308 = vand.u32 2147483647, %v1199
  %vm1309 = vcmp.eq.f32.partialorder %v1308, 8.507059e+37
  %v1310 = vand.u32 %v1199, 2147483648
  %v1311 = vor.u32 1.1754944e-38, %v1310
  %v1312 = vsel %vm1309, %v1311, %v1307
  %v1313 = vmul.f32 1.0, %v1312
  %v1314 = vrcp.pop %v1200
  %v1315 = vmul.f32 %v1200, %v1314
  %v1316 = vsub.f32 1.0, %v1315
  %v1317 = vmul.f32 %v1314, %v1316
  %v1318 = vadd.f32 %v1314, %v1317
  %vm1319 = vweird.f32 %v1200
  %vm1320 = vweird.f32 %v1314
  %vm1321 = vmor %vm1319, %vm1320
  %v1322 = vsel %vm1321, %v1314, %v1318
  %v1323 = vand.u32 2147483647, %v1200
  %vm1324 = vcmp.eq.f32.partialorder %v1323, 8.507059e+37
  %v1325 = vand.u32 %v1200, 2147483648
  %v1326 = vor.u32 1.1754944e-38, %v1325
  %v1327 = vsel %vm1324, %v1326, %v1322
  %v1328 = vmul.f32 1.0, %v1327
  %v1329 = vrcp.pop %v1201
  %v1330 = vmul.f32 %v1201, %v1329
  %v1331 = vsub.f32 1.0, %v1330
  %v1332 = vmul.f32 %v1329, %v1331
  %v1333 = vadd.f32 %v1329, %v1332
  %vm1334 = vweird.f32 %v1201
  %vm1335 = vweird.f32 %v1329
  %vm1336 = vmor %vm1334, %vm1335
  %v1337 = vsel %vm1336, %v1329, %v1333
  %v1338 = vand.u32 2147483647, %v1201
  %vm1339 = vcmp.eq.f32.partialorder %v1338, 8.507059e+37
  %v1340 = vand.u32 %v1201, 2147483648
  %v1341 = vor.u32 1.1754944e-38, %v1340
  %v1342 = vsel %vm1339, %v1341, %v1337
  %v1343 = vmul.f32 1.0, %v1342
  %v1344 = vrcp.pop %v1202
  %v1345 = vmul.f32 %v1202, %v1344
  %v1346 = vsub.f32 1.0, %v1345
  %v1347 = vmul.f32 %v1344, %v1346
  %v1348 = vadd.f32 %v1344, %v1347
  %vm1349 = vweird.f32 %v1202
  %vm1350 = vweird.f32 %v1344
  %vm1351 = vmor %vm1349, %vm1350
  %v1352 = vsel %vm1351, %v1344, %v1348
  %v1353 = vand.u32 2147483647, %v1202
  %vm1354 = vcmp.eq.f32.partialorder %v1353, 8.507059e+37
  %v1355 = vand.u32 %v1202, 2147483648
  %v1356 = vor.u32 1.1754944e-38, %v1355
  %v1357 = vsel %vm1354, %v1356, %v1352
  %v1358 = vmul.f32 1.0, %v1357
  %v1359 = vrcp.pop %v1203
  %v1360 = vmul.f32 %v1203, %v1359
  %v1361 = vsub.f32 1.0, %v1360
  %v1362 = vmul.f32 %v1359, %v1361
  %v1363 = vadd.f32 %v1359, %v1362
  %vm1364 = vweird.f32 %v1203
  %vm1365 = vweird.f32 %v1359
  %vm1366 = vmor %vm1364, %vm1365
  %v1367 = vsel %vm1366, %v1359, %v1363
  %v1368 = vand.u32 2147483647, %v1203
  %vm1369 = vcmp.eq.f32.partialorder %v1368, 8.507059e+37
  %v1370 = vand.u32 %v1203, 2147483648
  %v1371 = vor.u32 1.1754944e-38, %v1370
  %v1372 = vsel %vm1369, %v1371, %v1367
  %v1373 = vmul.f32 1.0, %v1372
  %v1374 = vrcp.pop %v1204
  %v1375 = vmul.f32 %v1204, %v1374
  %v1376 = vsub.f32 1.0, %v1375
  %v1377 = vmul.f32 %v1374, %v1376
  %v1378 = vadd.f32 %v1374, %v1377
  %vm1379 = vweird.f32 %v1204
  %vm1380 = vweird.f32 %v1374
  %vm1381 = vmor %vm1379, %vm1380
  %v1382 = vsel %vm1381, %v1374, %v1378
  %v1383 = vand.u32 2147483647, %v1204
  %vm1384 = vcmp.eq.f32.partialorder %v1383, 8.507059e+37
  %v1385 = vand.u32 %v1204, 2147483648
  %v1386 = vor.u32 1.1754944e-38, %v1385
  %v1387 = vsel %vm1384, %v1386, %v1382
  %v1388 = vmul.f32 1.0, %v1387
  %v1389 = vrcp.pop %v1205
  %v1390 = vmul.f32 %v1205, %v1389
  %v1391 = vsub.f32 1.0, %v1390
  %v1392 = vmul.f32 %v1389, %v1391
  %v1393 = vadd.f32 %v1389, %v1392
  %vm1394 = vweird.f32 %v1205
  %vm1395 = vweird.f32 %v1389
  %vm1396 = vmor %vm1394, %vm1395
  %v1397 = vsel %vm1396, %v1389, %v1393
  %v1398 = vand.u32 2147483647, %v1205
  %vm1399 = vcmp.eq.f32.partialorder %v1398, 8.507059e+37
  %v1400 = vand.u32 %v1205, 2147483648
  %v1401 = vor.u32 1.1754944e-38, %v1400
  %v1402 = vsel %vm1399, %v1401, %v1397
  %v1403 = vmul.f32 1.0, %v1402
  %v1404 = vrcp.pop %v1206
  %v1405 = vmul.f32 %v1206, %v1404
  %v1406 = vsub.f32 1.0, %v1405
  %v1407 = vmul.f32 %v1404, %v1406
  %v1408 = vadd.f32 %v1404, %v1407
  %vm1409 = vweird.f32 %v1206
  %vm1410 = vweird.f32 %v1404
  %vm1411 = vmor %vm1409, %vm1410
  %v1412 = vsel %vm1411, %v1404, %v1408
  %v1413 = vand.u32 2147483647, %v1206
  %vm1414 = vcmp.eq.f32.partialorder %v1413, 8.507059e+37
  %v1415 = vand.u32 %v1206, 2147483648
  %v1416 = vor.u32 1.1754944e-38, %v1415
  %v1417 = vsel %vm1414, %v1416, %v1412
  %v1418 = vmul.f32 1.0, %v1417
  %v1419 = vrcp.pop %v1207
  %v1420 = vmul.f32 %v1207, %v1419
  %v1421 = vsub.f32 1.0, %v1420
  %v1422 = vmul.f32 %v1419, %v1421
  %v1423 = vadd.f32 %v1419, %v1422
  %vm1424 = vweird.f32 %v1207
  %vm1425 = vweird.f32 %v1419
  %vm1426 = vmor %vm1424, %vm1425
  %v1427 = vsel %vm1426, %v1419, %v1423
  %v1428 = vand.u32 2147483647, %v1207
  %vm1429 = vcmp.eq.f32.partialorder %v1428, 8.507059e+37
  %v1430 = vand.u32 %v1207, 2147483648
  %v1431 = vor.u32 1.1754944e-38, %v1430
  %v1432 = vsel %vm1429, %v1431, %v1427
  %v1433 = vmul.f32 1.0, %v1432
  %v1434 = vrcp.pop %v1208
  %v1435 = vmul.f32 %v1208, %v1434
  %v1436 = vsub.f32 1.0, %v1435
  %v1437 = vmul.f32 %v1434, %v1436
  %v1438 = vadd.f32 %v1434, %v1437
  %vm1439 = vweird.f32 %v1208
  %vm1440 = vweird.f32 %v1434
  %vm1441 = vmor %vm1439, %vm1440
  %v1442 = vsel %vm1441, %v1434, %v1438
  %v1443 = vand.u32 2147483647, %v1208
  %vm1444 = vcmp.eq.f32.partialorder %v1443, 8.507059e+37
  %v1445 = vand.u32 %v1208, 2147483648
  %v1446 = vor.u32 1.1754944e-38, %v1445
  %v1447 = vsel %vm1444, %v1446, %v1442
  %v1448 = vmul.f32 1.0, %v1447
  %vm1449 = vcmask 7168
  %1450 = vst.msk [vmem:[%s15] sm:$0xff] %vm1449, %v1223
  %1451 = vst.msk [vmem:[%s15 + $0x8] sm:$0xff] %vm1449, %v1238
  %1452 = vst.msk [vmem:[%s15 + $0x10] sm:$0xff] %vm1449, %v1253
  %1453 = vst.msk [vmem:[%s15 + $0x18] sm:$0xff] %vm1449, %v1268
  %1454 = vst.msk [vmem:[%s15 + $0x20] sm:$0xff] %vm1449, %v1283
  %1455 = vst.msk [vmem:[%s15 + $0x28] sm:$0xff] %vm1449, %v1298
  %1456 = vst.msk [vmem:[%s15 + $0x30] sm:$0xff] %vm1449, %v1313
  %1457 = vst.msk [vmem:[%s15 + $0x38] sm:$0xff] %vm1449, %v1328
  %1458 = vst.msk [vmem:[%s15 + $0x40] sm:$0xff] %vm1449, %v1343
  %1459 = vst.msk [vmem:[%s15 + $0x48] sm:$0xff] %vm1449, %v1358
  %1460 = vst.msk [vmem:[%s15 + $0x50] sm:$0xff] %vm1449, %v1373
  %1461 = vst.msk [vmem:[%s15 + $0x58] sm:$0xff] %vm1449, %v1388
  %1462 = vst.msk [vmem:[%s15 + $0x60] sm:$0xff] %vm1449, %v1403
  %1463 = vst.msk [vmem:[%s15 + $0x68] sm:$0xff] %vm1449, %v1418
  %1464 = vst.msk [vmem:[%s15 + $0x70] sm:$0xff] %vm1449, %v1433
  %1465 = vst.msk [vmem:[%s15 + $0x78] sm:$0xff] %vm1449, %v1448
  // Predicated region
  $region62: #{pcan_forward.11} parent=0 // pred_check
    _
  $region63: #{pcan_forward.11} parent=0 // pred_check_branch
    %1467 = sbr.rel (0) target = $region65
  $region64: #{pcan_forward.11} parent=0 // pred_region
    _
  $region65: #{pcan_forward.11} parent=0 // pred_fallthru
    _
  // Predicated region
  $region66: #{pcan_forward.11} parent=0 // pred_check
    _
  $region67: #{pcan_forward.11} parent=0 // pred_check_branch
    %1469 = sbr.rel (0) target = $region69
  $region68: #{pcan_forward.11} parent=0 // pred_region
    _
  $region69: #{pcan_forward.11} parent=0 // pred_fallthru
    _

// kernel: pcan_forward.12
$region0: #{pcan_forward.12}
  #allocation0 [shape = 'u32[]', space=smem, size = 0x4, offset = 0x4, fixed_abs, tag = 'smem constant byte address 0x4 - core index']
  #allocation1 [shape = 'u32[72,128]{1,0:T(1,128)}', space=vmem, size = 0x9000, scoped, tag = 'internal scratch']
  %s0 = inlined_call_operand.vmem [shape: f32[128,16], index: 0, kind: input, shape index: {}]
  %s1 = inlined_call_operand.vmem [shape: f32[2,16,64], index: 1, kind: input, shape index: {}]
  %s2 = inlined_call_operand.vmem [shape: f32[2,64], index: 2, kind: input, shape index: {}]
  %s3 = inlined_call_operand.vmem [shape: f32[16,64], index: 3, kind: input, shape index: {}]
  %s4 = inlined_call_operand.vmem [shape: f32[1,64], index: 4, kind: input, shape index: {}]
  %s5 = inlined_call_operand.vmem [shape: f32[1,64], index: 5, kind: input, shape index: {}]
  %s6 = inlined_call_operand.vmem [shape: f32[16,64], index: 6, kind: input, shape index: {}]
  %s7 = inlined_call_operand.vmem [shape: f32[2,16,64], index: 7, kind: output, shape index: {}]
  %s8 = sld [smem:[#allocation0]]
  $region38: #{pcan_forward.12} parent=0
    _
  %s10 = ssub.s32 1, %s8
  %s11 = scalar_select 0, %s10, %s8
  // Predicated region
  $region2: #{pcan_forward.12} parent=0 // pred_check
    _
  $region3: #{pcan_forward.12} parent=0 // pred_check_branch
    %13 = sbr.rel (0) target = $region5
  $region4: #{pcan_forward.12} parent=0 // pred_region
    _
  $region5: #{pcan_forward.12} parent=0 // pred_fallthru
    _
  // Predicated region
  $region6: #{pcan_forward.12} parent=0 // pred_check
    _
  $region7: #{pcan_forward.12} parent=0 // pred_check_branch
    %15 = sbr.rel (0) target = $region9
  $region8: #{pcan_forward.12} parent=0 // pred_region
    _
  $region9: #{pcan_forward.12} parent=0 // pred_fallthru
    _
  // Predicated region
  $region10: #{pcan_forward.12} parent=0 // pred_check
    _
  $region11: #{pcan_forward.12} parent=0 // pred_check_branch
    %17 = sbr.rel (0) target = $region13
  $region12: #{pcan_forward.12} parent=0 // pred_region
    _
  $region13: #{pcan_forward.12} parent=0 // pred_fallthru
    _
  // Predicated region
  $region14: #{pcan_forward.12} parent=0 // pred_check
    _
  $region15: #{pcan_forward.12} parent=0 // pred_check_branch
    %19 = sbr.rel (0) target = $region17
  $region16: #{pcan_forward.12} parent=0 // pred_region
    _
  $region17: #{pcan_forward.12} parent=0 // pred_fallthru
    _
  // Predicated region
  $region18: #{pcan_forward.12} parent=0 // pred_check
    _
  $region19: #{pcan_forward.12} parent=0 // pred_check_branch
    %21 = sbr.rel (0) target = $region21
  $region20: #{pcan_forward.12} parent=0 // pred_region
    _
  $region21: #{pcan_forward.12} parent=0 // pred_fallthru
    _
  // Predicated region
  $region22: #{pcan_forward.12} parent=0 // pred_check
    _
  $region23: #{pcan_forward.12} parent=0 // pred_check_branch
    %23 = sbr.rel (0) target = $region25
  $region24: #{pcan_forward.12} parent=0 // pred_region
    _
  $region25: #{pcan_forward.12} parent=0 // pred_fallthru
    _
  // Predicated region
  $region26: #{pcan_forward.12} parent=0 // pred_check
    _
  $region27: #{pcan_forward.12} parent=0 // pred_check_branch
    %25 = sbr.rel (0) target = $region29
  $region28: #{pcan_forward.12} parent=0 // pred_region
    _
  $region29: #{pcan_forward.12} parent=0 // pred_fallthru
    _
  %v26 = vld [vmem:[%s0] sm:$0xff]
  %v27 = vld [vmem:[%s0 + $0x8] sm:$0xff]
  %v28 = vld [vmem:[%s0 + $0x10] sm:$0xff]
  %v29 = vld [vmem:[%s0 + $0x18] sm:$0xff]
  %v30 = vld [vmem:[%s0 + $0x20] sm:$0xff]
  %v31 = vld [vmem:[%s0 + $0x28] sm:$0xff]
  %v32 = vld [vmem:[%s0 + $0x30] sm:$0xff]
  %v33 = vld [vmem:[%s0 + $0x38] sm:$0xff]
  %v34 = vld [vmem:[%s0 + $0x40] sm:$0xff]
  %v35 = vld [vmem:[%s0 + $0x48] sm:$0xff]
  %v36 = vld [vmem:[%s0 + $0x50] sm:$0xff]
  %v37 = vld [vmem:[%s0 + $0x58] sm:$0xff]
  %v38 = vld [vmem:[%s0 + $0x60] sm:$0xff]
  %v39 = vld [vmem:[%s0 + $0x68] sm:$0xff]
  %v40 = vld [vmem:[%s0 + $0x70] sm:$0xff]
  %v41 = vld [vmem:[%s0 + $0x78] sm:$0xff]
  %v42 = vld [vmem:[%s3] sm:$0xff]
  %v43 = vld [vmem:[%s3 + $0x8] sm:$0xff]
  %vm44 = vcmask 130048
  %v46 = vsel %vm44, %v26, 0
  %v49 = vsel %vm44, %v27, 0
  %v52 = vsel %vm44, %v28, 0
  %v55 = vsel %vm44, %v29, 0
  %v58 = vsel %vm44, %v30, 0
  %v61 = vsel %vm44, %v31, 0
  %v64 = vsel %vm44, %v32, 0
  %v67 = vsel %vm44, %v33, 0
  %v70 = vsel %vm44, %v34, 0
  %v73 = vsel %vm44, %v35, 0
  %v76 = vsel %vm44, %v36, 0
  %v79 = vsel %vm44, %v37, 0
  %v82 = vsel %vm44, %v38, 0
  %v85 = vsel %vm44, %v39, 0
  %v88 = vsel %vm44, %v40, 0
  %v91 = vsel %vm44, %v41, 0
  %93 = vmatpush.msra.mxu0 0.0
  %94 = vmatpush.msra.mxu0 0.0
  %95 = vmatpush.msra.mxu0 0.0
  %96 = vmatpush.msra.mxu0 0.0
  %97 = vmatpush.msra.mxu0 0.0
  %98 = vmatpush.msra.mxu0 0.0
  %99 = vmatpush.msra.mxu0 0.0
  %100 = vmatpush.msra.mxu0 0.0
  %101 = vmatpush.msra.mxu0 0.0
  %102 = vmatpush.msra.mxu0 0.0
  %103 = vmatpush.msra.mxu0 0.0
  %104 = vmatpush.msra.mxu0 0.0
  %105 = vmatpush.msra.mxu0 0.0
  %106 = vmatpush.msra.mxu0 0.0
  %107 = vmatpush.msra.mxu0 %v43
  %108 = vmatpush.msra.mxu0 %v42
  %109 = vmatmul.f32.gmra.mxu0 %v46
  %v110 = vpop.f32.mrf.mxu0
  %v111 = vadd.f32 0.0, %v110
  %112 = vmatmul.f32.gmra.mxu0 %v49
  %v113 = vpop.f32.mrf.mxu0
  %v114 = vadd.f32 0.0, %v113
  %115 = vmatmul.f32.gmra.mxu0 %v52
  %v116 = vpop.f32.mrf.mxu0
  %v117 = vadd.f32 0.0, %v116
  %118 = vmatmul.f32.gmra.mxu0 %v55
  %v119 = vpop.f32.mrf.mxu0
  %v120 = vadd.f32 0.0, %v119
  %121 = vmatmul.f32.gmra.mxu0 %v58
  %v122 = vpop.f32.mrf.mxu0
  %v123 = vadd.f32 0.0, %v122
  %124 = vmatmul.f32.gmra.mxu0 %v61
  %v125 = vpop.f32.mrf.mxu0
  %v126 = vadd.f32 0.0, %v125
  %127 = vmatmul.f32.gmra.mxu0 %v64
  %v128 = vpop.f32.mrf.mxu0
  %v129 = vadd.f32 0.0, %v128
  %130 = vmatmul.f32.gmra.mxu0 %v67
  %v131 = vpop.f32.mrf.mxu0
  %v132 = vadd.f32 0.0, %v131
  %133 = vmatmul.f32.gmra.mxu0 %v70
  %v134 = vpop.f32.mrf.mxu0
  %v135 = vadd.f32 0.0, %v134
  %136 = vmatmul.f32.gmra.mxu0 %v73
  %v137 = vpop.f32.mrf.mxu0
  %v138 = vadd.f32 0.0, %v137
  %139 = vmatmul.f32.gmra.mxu0 %v76
  %v140 = vpop.f32.mrf.mxu0
  %v141 = vadd.f32 0.0, %v140
  %142 = vmatmul.f32.gmra.mxu0 %v79
  %v143 = vpop.f32.mrf.mxu0
  %v144 = vadd.f32 0.0, %v143
  %145 = vmatmul.f32.gmra.mxu0 %v82
  %v146 = vpop.f32.mrf.mxu0
  %v147 = vadd.f32 0.0, %v146
  %148 = vmatmul.f32.gmra.mxu0 %v85
  %v149 = vpop.f32.mrf.mxu0
  %v150 = vadd.f32 0.0, %v149
  %151 = vmatmul.f32.gmra.mxu0 %v88
  %v152 = vpop.f32.mrf.mxu0
  %v153 = vadd.f32 0.0, %v152
  %154 = vmatmul.f32.gmra.mxu0 %v91
  %v155 = vpop.f32.mrf.mxu0
  %v156 = vadd.f32 0.0, %v155
  %157 = vdwg.mxu0
  %v158 = vld [vmem:[%s4] sm:$0x1]
  %v159 = vld [vmem:[%s5] sm:$0x1]
  %vm160 = vcmask 523264
  %v161 = vsel %vm160, %v111, 0.0
  %v162 = vsel %vm160, %v114, 0.0
  %v163 = vadd.f32 %v161, %v162
  %v164 = vsel %vm160, %v117, 0.0
  %v165 = vadd.f32 %v163, %v164
  %v166 = vsel %vm160, %v120, 0.0
  %v167 = vadd.f32 %v165, %v166
  %v168 = vsel %vm160, %v123, 0.0
  %v169 = vadd.f32 %v167, %v168
  %v170 = vsel %vm160, %v126, 0.0
  %v171 = vadd.f32 %v169, %v170
  %v172 = vsel %vm160, %v129, 0.0
  %v173 = vadd.f32 %v171, %v172
  %v174 = vsel %vm160, %v132, 0.0
  %v175 = vadd.f32 %v173, %v174
  %v176 = vsel %vm160, %v135, 0.0
  %v177 = vadd.f32 %v175, %v176
  %v178 = vsel %vm160, %v138, 0.0
  %v179 = vadd.f32 %v177, %v178
  %v180 = vsel %vm160, %v141, 0.0
  %v181 = vadd.f32 %v179, %v180
  %v182 = vsel %vm160, %v144, 0.0
  %v183 = vadd.f32 %v181, %v182
  %v184 = vsel %vm160, %v147, 0.0
  %v185 = vadd.f32 %v183, %v184
  %v186 = vsel %vm160, %v150, 0.0
  %v187 = vadd.f32 %v185, %v186
  %v188 = vsel %vm160, %v153, 0.0
  %v189 = vadd.f32 %v187, %v188
  %v190 = vsel %vm160, %v156, 0.0
  %v191 = vadd.f32 %v189, %v190
  %v192 = vrot.slane %v191, 4
  %v193 = vadd.f32 %v191, %v192
  %v194 = vrot.slane %v193, 2
  %v195 = vadd.f32 %v193, %v194
  %v196 = vrot.slane %v195, 1
  %v197 = vadd.f32 %v195, %v196
  %v198 = vrcp.pop 128.0
  %v199 = vmul.f32 128.0, %v198
  %v200 = vsub.f32 1.0, %v199
  %v201 = vmul.f32 %v198, %v200
  %v202 = vadd.f32 %v198, %v201
  %vm203 = vweird.f32 %v198
  %v204 = vsel %vm203, %v198, %v202
  %v205 = vmul.f32 %v197, %v204
  %v206 = vsub.f32 %v111, %v205
  %v207 = vsub.f32 %v114, %v205
  %v208 = vsub.f32 %v117, %v205
  %v209 = vsub.f32 %v120, %v205
  %v210 = vsub.f32 %v123, %v205
  %v211 = vsub.f32 %v126, %v205
  %v212 = vsub.f32 %v129, %v205
  %v213 = vsub.f32 %v132, %v205
  %v214 = vsub.f32 %v135, %v205
  %v215 = vsub.f32 %v138, %v205
  %v216 = vsub.f32 %v141, %v205
  %v217 = vsub.f32 %v144, %v205
  %v218 = vsub.f32 %v147, %v205
  %v219 = vsub.f32 %v150, %v205
  %v220 = vsub.f32 %v153, %v205
  %v221 = vsub.f32 %v156, %v205
  %v222 = vmul.f32 %v206, %v206
  %v223 = vmul.f32 %v207, %v207
  %v224 = vmul.f32 %v208, %v208
  %v225 = vmul.f32 %v209, %v209
  %v226 = vmul.f32 %v210, %v210
  %v227 = vmul.f32 %v211, %v211
  %v228 = vmul.f32 %v212, %v212
  %v229 = vmul.f32 %v213, %v213
  %v230 = vmul.f32 %v214, %v214
  %v231 = vmul.f32 %v215, %v215
  %v232 = vmul.f32 %v216, %v216
  %v233 = vmul.f32 %v217, %v217
  %v234 = vmul.f32 %v218, %v218
  %v235 = vmul.f32 %v219, %v219
  %v236 = vmul.f32 %v220, %v220
  %v237 = vmul.f32 %v221, %v221
  %v238 = vsel %vm160, %v222, 0.0
  %v239 = vsel %vm160, %v223, 0.0
  %v240 = vadd.f32 %v238, %v239
  %v241 = vsel %vm160, %v224, 0.0
  %v242 = vadd.f32 %v240, %v241
  %v243 = vsel %vm160, %v225, 0.0
  %v244 = vadd.f32 %v242, %v243
  %v245 = vsel %vm160, %v226, 0.0
  %v246 = vadd.f32 %v244, %v245
  %v247 = vsel %vm160, %v227, 0.0
  %v248 = vadd.f32 %v246, %v247
  %v249 = vsel %vm160, %v228, 0.0
  %v250 = vadd.f32 %v248, %v249
  %v251 = vsel %vm160, %v229, 0.0
  %v252 = vadd.f32 %v250, %v251
  %v253 = vsel %vm160, %v230, 0.0
  %v254 = vadd.f32 %v252, %v253
  %v255 = vsel %vm160, %v231, 0.0
  %v256 = vadd.f32 %v254, %v255
  %v257 = vsel %vm160, %v232, 0.0
  %v258 = vadd.f32 %v256, %v257
  %v259 = vsel %vm160, %v233, 0.0
  %v260 = vadd.f32 %v258, %v259
  %v261 = vsel %vm160, %v234, 0.0
  %v262 = vadd.f32 %v260, %v261
  %v263 = vsel %vm160, %v235, 0.0
  %v264 = vadd.f32 %v262, %v263
  %v265 = vsel %vm160, %v236, 0.0
  %v266 = vadd.f32 %v264, %v265
  %v267 = vsel %vm160, %v237, 0.0
  %v268 = vadd.f32 %v266, %v267
  %v269 = vrot.slane %v268, 4
  %v270 = vadd.f32 %v268, %v269
  %v271 = vrot.slane %v270, 2
  %v272 = vadd.f32 %v270, %v271
  %v273 = vrot.slane %v272, 1
  %v274 = vadd.f32 %v272, %v273
  %v275 = vmul.f32 %v274, %v204
  %v276 = vadd.f32 %v275, 1e-05
  %v277 = vrsqrt.pop %v276
  %v278 = vmul.f32 %v277, %v276
  %v279 = vmul.f32 %v278, %v277
  %v280 = vmul.f32 0.5, %v279
  %v281 = vsub.f32 1.5, %v280
  %v282 = vmul.f32 %v277, %v281
  %v283 = vmul.f32 %v276, %v282
  %vm284 = vcmp.eq.f32.partialorder %v276, inf
  %v285 = vsel %vm284, %v276, %v283
  %vm286 = vcmp.eq.f32.partialorder %v276, 0.0
  %v287 = vand.u32 %v276, 2147483648
  %v288 = vsel %vm286, %v287, %v285
  %v289 = vrcp.pop %v288
  %v290 = vmul.f32 %v288, %v289
  %v291 = vsub.f32 1.0, %v290
  %v292 = vmul.f32 %v289, %v291
  %v293 = vadd.f32 %v289, %v292
  %vm294 = vweird.f32 %v288
  %vm295 = vweird.f32 %v289
  %vm296 = vmor %vm294, %vm295
  %v297 = vsel %vm296, %v289, %v293
  %v298 = vand.u32 2147483647, %v288
  %vm299 = vcmp.eq.f32.partialorder %v298, 8.507059e+37
  %v300 = vand.u32 %v288, 2147483648
  %v301 = vor.u32 1.1754944e-38, %v300
  %v302 = vsel %vm299, %v301, %v297
  %v303 = vmul.f32 %v158, %v302
  %v305 = vperm.slane %v303, 0
  %v307 = vmul.f32 %v206, %v305
  %v308 = vmul.f32 %v207, %v305
  %v309 = vmul.f32 %v208, %v305
  %v310 = vmul.f32 %v209, %v305
  %v311 = vmul.f32 %v210, %v305
  %v312 = vmul.f32 %v211, %v305
  %v313 = vmul.f32 %v212, %v305
  %v314 = vmul.f32 %v213, %v305
  %v315 = vmul.f32 %v214, %v305
  %v316 = vmul.f32 %v215, %v305
  %v317 = vmul.f32 %v216, %v305
  %v318 = vmul.f32 %v217, %v305
  %v319 = vmul.f32 %v218, %v305
  %v320 = vmul.f32 %v219, %v305
  %v321 = vmul.f32 %v220, %v305
  %v322 = vmul.f32 %v221, %v305
  %v324 = vperm.slane %v159, 0
  %v326 = vadd.f32 %v307, %v324
  %v327 = vadd.f32 %v308, %v324
  %v328 = vadd.f32 %v309, %v324
  %v329 = vadd.f32 %v310, %v324
  %v330 = vadd.f32 %v311, %v324
  %v331 = vadd.f32 %v312, %v324
  %v332 = vadd.f32 %v313, %v324
  %v333 = vadd.f32 %v314, %v324
  %v334 = vadd.f32 %v315, %v324
  %v335 = vadd.f32 %v316, %v324
  %v336 = vadd.f32 %v317, %v324
  %v337 = vadd.f32 %v318, %v324
  %v338 = vadd.f32 %v319, %v324
  %v339 = vadd.f32 %v320, %v324
  %v340 = vadd.f32 %v321, %v324
  %v341 = vadd.f32 %v322, %v324
  %v342 = vsel %vm160, %v326, -inf
  %343 = vmax.xlane.f32.xlu0 %v342
  %v344 = vpop.xlane.xlu0 %343
  %v345 = vsel %vm160, %v327, -inf
  %346 = vmax.xlane.f32.xlu0 %v345
  %v347 = vpop.xlane.xlu0 %346
  %v348 = vsel %vm160, %v328, -inf
  %349 = vmax.xlane.f32.xlu0 %v348
  %v350 = vpop.xlane.xlu0 %349
  %v351 = vsel %vm160, %v329, -inf
  %352 = vmax.xlane.f32.xlu0 %v351
  %v353 = vpop.xlane.xlu0 %352
  %v354 = vsel %vm160, %v330, -inf
  %355 = vmax.xlane.f32.xlu0 %v354
  %v356 = vpop.xlane.xlu0 %355
  %v357 = vsel %vm160, %v331, -inf
  %358 = vmax.xlane.f32.xlu0 %v357
  %v359 = vpop.xlane.xlu0 %358
  %v360 = vsel %vm160, %v332, -inf
  %361 = vmax.xlane.f32.xlu0 %v360
  %v362 = vpop.xlane.xlu0 %361
  %v363 = vsel %vm160, %v333, -inf
  %364 = vmax.xlane.f32.xlu0 %v363
  %v365 = vpop.xlane.xlu0 %364
  %v366 = vsel %vm160, %v334, -inf
  %367 = vmax.xlane.f32.xlu0 %v366
  %v368 = vpop.xlane.xlu0 %367
  %v369 = vsel %vm160, %v335, -inf
  %370 = vmax.xlane.f32.xlu0 %v369
  %v371 = vpop.xlane.xlu0 %370
  %v372 = vsel %vm160, %v336, -inf
  %373 = vmax.xlane.f32.xlu0 %v372
  %v374 = vpop.xlane.xlu0 %373
  %v375 = vsel %vm160, %v337, -inf
  %376 = vmax.xlane.f32.xlu0 %v375
  %v377 = vpop.xlane.xlu0 %376
  %v378 = vsel %vm160, %v338, -inf
  %379 = vmax.xlane.f32.xlu0 %v378
  %v380 = vpop.xlane.xlu0 %379
  %v381 = vsel %vm160, %v339, -inf
  %382 = vmax.xlane.f32.xlu0 %v381
  %v383 = vpop.xlane.xlu0 %382
  %v384 = vsel %vm160, %v340, -inf
  %385 = vmax.xlane.f32.xlu0 %v384
  %v386 = vpop.xlane.xlu0 %385
  %v387 = vsel %vm160, %v341, -inf
  %388 = vmax.xlane.f32.xlu0 %v387
  %v389 = vpop.xlane.xlu0 %388
  %v390 = vsub.f32 %v326, %v344
  %v391 = vsub.f32 %v327, %v347
  %v392 = vsub.f32 %v328, %v350
  %v393 = vsub.f32 %v329, %v353
  %v394 = vsub.f32 %v330, %v356
  %v395 = vsub.f32 %v331, %v359
  %v396 = vsub.f32 %v332, %v362
  %v397 = vsub.f32 %v333, %v365
  %v398 = vsub.f32 %v334, %v368
  %v399 = vsub.f32 %v335, %v371
  %v400 = vsub.f32 %v336, %v374
  %v401 = vsub.f32 %v337, %v377
  %v402 = vsub.f32 %v338, %v380
  %v403 = vsub.f32 %v339, %v383
  %v404 = vsub.f32 %v340, %v386
  %v405 = vsub.f32 %v341, %v389
  %v406 = vmul.f32 %v390, 1.442695
  %v407 = vpow.pop %v406
  %v408 = vmul.f32 %v391, 1.442695
  %v409 = vpow.pop %v408
  %v410 = vmul.f32 %v392, 1.442695
  %v411 = vpow.pop %v410
  %v412 = vmul.f32 %v393, 1.442695
  %v413 = vpow.pop %v412
  %v414 = vmul.f32 %v394, 1.442695
  %v415 = vpow.pop %v414
  %v416 = vmul.f32 %v395, 1.442695
  %v417 = vpow.pop %v416
  %v418 = vmul.f32 %v396, 1.442695
  %v419 = vpow.pop %v418
  %v420 = vmul.f32 %v397, 1.442695
  %v421 = vpow.pop %v420
  %v422 = vmul.f32 %v398, 1.442695
  %v423 = vpow.pop %v422
  %v424 = vmul.f32 %v399, 1.442695
  %v425 = vpow.pop %v424
  %v426 = vmul.f32 %v400, 1.442695
  %v427 = vpow.pop %v426
  %v428 = vmul.f32 %v401, 1.442695
  %v429 = vpow.pop %v428
  %v430 = vmul.f32 %v402, 1.442695
  %v431 = vpow.pop %v430
  %v432 = vmul.f32 %v403, 1.442695
  %v433 = vpow.pop %v432
  %v434 = vmul.f32 %v404, 1.442695
  %v435 = vpow.pop %v434
  %v436 = vmul.f32 %v405, 1.442695
  %v437 = vpow.pop %v436
  %v438 = vsel %vm160, %v407, 0.0
  %439 = vadd.xlane.f32.xlu0 %v438
  %v440 = vpop.xlane.xlu0 %439
  %v441 = vsel %vm160, %v409, 0.0
  %442 = vadd.xlane.f32.xlu0 %v441
  %v443 = vpop.xlane.xlu0 %442
  %v444 = vsel %vm160, %v411, 0.0
  %445 = vadd.xlane.f32.xlu0 %v444
  %v446 = vpop.xlane.xlu0 %445
  %v447 = vsel %vm160, %v413, 0.0
  %448 = vadd.xlane.f32.xlu0 %v447
  %v449 = vpop.xlane.xlu0 %448
  %v450 = vsel %vm160, %v415, 0.0
  %451 = vadd.xlane.f32.xlu0 %v450
  %v452 = vpop.xlane.xlu0 %451
  %v453 = vsel %vm160, %v417, 0.0
  %454 = vadd.xlane.f32.xlu0 %v453
  %v455 = vpop.xlane.xlu0 %454
  %v456 = vsel %vm160, %v419, 0.0
  %457 = vadd.xlane.f32.xlu0 %v456
  %v458 = vpop.xlane.xlu0 %457
  %v459 = vsel %vm160, %v421, 0.0
  %460 = vadd.xlane.f32.xlu0 %v459
  %v461 = vpop.xlane.xlu0 %460
  %v462 = vsel %vm160, %v423, 0.0
  %463 = vadd.xlane.f32.xlu0 %v462
  %v464 = vpop.xlane.xlu0 %463
  %v465 = vsel %vm160, %v425, 0.0
  %466 = vadd.xlane.f32.xlu0 %v465
  %v467 = vpop.xlane.xlu0 %466
  %v468 = vsel %vm160, %v427, 0.0
  %469 = vadd.xlane.f32.xlu0 %v468
  %v470 = vpop.xlane.xlu0 %469
  %v471 = vsel %vm160, %v429, 0.0
  %472 = vadd.xlane.f32.xlu0 %v471
  %v473 = vpop.xlane.xlu0 %472
  %v474 = vsel %vm160, %v431, 0.0
  %475 = vadd.xlane.f32.xlu0 %v474
  %v476 = vpop.xlane.xlu0 %475
  %v477 = vsel %vm160, %v433, 0.0
  %478 = vadd.xlane.f32.xlu0 %v477
  %v479 = vpop.xlane.xlu0 %478
  %v480 = vsel %vm160, %v435, 0.0
  %481 = vadd.xlane.f32.xlu0 %v480
  %v482 = vpop.xlane.xlu0 %481
  %v483 = vsel %vm160, %v437, 0.0
  %484 = vadd.xlane.f32.xlu0 %v483
  %v485 = vpop.xlane.xlu0 %484
  %v486 = vrcp.pop %v440
  %v487 = vmul.f32 %v440, %v486
  %v488 = vsub.f32 1.0, %v487
  %v489 = vmul.f32 %v486, %v488
  %v490 = vadd.f32 %v486, %v489
  %vm491 = vweird.f32 %v440
  %vm492 = vweird.f32 %v486
  %vm493 = vmor %vm491, %vm492
  %v494 = vsel %vm493, %v486, %v490
  %v495 = vand.u32 2147483647, %v440
  %vm496 = vcmp.eq.f32.partialorder %v495, 8.507059e+37
  %v497 = vand.u32 %v440, 2147483648
  %v498 = vor.u32 1.1754944e-38, %v497
  %v499 = vsel %vm496, %v498, %v494
  %v500 = vmul.f32 %v407, %v499
  %v501 = vrcp.pop %v443
  %v502 = vmul.f32 %v443, %v501
  %v503 = vsub.f32 1.0, %v502
  %v504 = vmul.f32 %v501, %v503
  %v505 = vadd.f32 %v501, %v504
  %vm506 = vweird.f32 %v443
  %vm507 = vweird.f32 %v501
  %vm508 = vmor %vm506, %vm507
  %v509 = vsel %vm508, %v501, %v505
  %v510 = vand.u32 2147483647, %v443
  %vm511 = vcmp.eq.f32.partialorder %v510, 8.507059e+37
  %v512 = vand.u32 %v443, 2147483648
  %v513 = vor.u32 1.1754944e-38, %v512
  %v514 = vsel %vm511, %v513, %v509
  %v515 = vmul.f32 %v409, %v514
  %v516 = vrcp.pop %v446
  %v517 = vmul.f32 %v446, %v516
  %v518 = vsub.f32 1.0, %v517
  %v519 = vmul.f32 %v516, %v518
  %v520 = vadd.f32 %v516, %v519
  %vm521 = vweird.f32 %v446
  %vm522 = vweird.f32 %v516
  %vm523 = vmor %vm521, %vm522
  %v524 = vsel %vm523, %v516, %v520
  %v525 = vand.u32 2147483647, %v446
  %vm526 = vcmp.eq.f32.partialorder %v525, 8.507059e+37
  %v527 = vand.u32 %v446, 2147483648
  %v528 = vor.u32 1.1754944e-38, %v527
  %v529 = vsel %vm526, %v528, %v524
  %v530 = vmul.f32 %v411, %v529
  %v531 = vrcp.pop %v449
  %v532 = vmul.f32 %v449, %v531
  %v533 = vsub.f32 1.0, %v532
  %v534 = vmul.f32 %v531, %v533
  %v535 = vadd.f32 %v531, %v534
  %vm536 = vweird.f32 %v449
  %vm537 = vweird.f32 %v531
  %vm538 = vmor %vm536, %vm537
  %v539 = vsel %vm538, %v531, %v535
  %v540 = vand.u32 2147483647, %v449
  %vm541 = vcmp.eq.f32.partialorder %v540, 8.507059e+37
  %v542 = vand.u32 %v449, 2147483648
  %v543 = vor.u32 1.1754944e-38, %v542
  %v544 = vsel %vm541, %v543, %v539
  %v545 = vmul.f32 %v413, %v544
  %v546 = vrcp.pop %v452
  %v547 = vmul.f32 %v452, %v546
  %v548 = vsub.f32 1.0, %v547
  %v549 = vmul.f32 %v546, %v548
  %v550 = vadd.f32 %v546, %v549
  %vm551 = vweird.f32 %v452
  %vm552 = vweird.f32 %v546
  %vm553 = vmor %vm551, %vm552
  %v554 = vsel %vm553, %v546, %v550
  %v555 = vand.u32 2147483647, %v452
  %vm556 = vcmp.eq.f32.partialorder %v555, 8.507059e+37
  %v557 = vand.u32 %v452, 2147483648
  %v558 = vor.u32 1.1754944e-38, %v557
  %v559 = vsel %vm556, %v558, %v554
  %v560 = vmul.f32 %v415, %v559
  %v561 = vrcp.pop %v455
  %v562 = vmul.f32 %v455, %v561
  %v563 = vsub.f32 1.0, %v562
  %v564 = vmul.f32 %v561, %v563
  %v565 = vadd.f32 %v561, %v564
  %vm566 = vweird.f32 %v455
  %vm567 = vweird.f32 %v561
  %vm568 = vmor %vm566, %vm567
  %v569 = vsel %vm568, %v561, %v565
  %v570 = vand.u32 2147483647, %v455
  %vm571 = vcmp.eq.f32.partialorder %v570, 8.507059e+37
  %v572 = vand.u32 %v455, 2147483648
  %v573 = vor.u32 1.1754944e-38, %v572
  %v574 = vsel %vm571, %v573, %v569
  %v575 = vmul.f32 %v417, %v574
  %v576 = vrcp.pop %v458
  %v577 = vmul.f32 %v458, %v576
  %v578 = vsub.f32 1.0, %v577
  %v579 = vmul.f32 %v576, %v578
  %v580 = vadd.f32 %v576, %v579
  %vm581 = vweird.f32 %v458
  %vm582 = vweird.f32 %v576
  %vm583 = vmor %vm581, %vm582
  %v584 = vsel %vm583, %v576, %v580
  %v585 = vand.u32 2147483647, %v458
  %vm586 = vcmp.eq.f32.partialorder %v585, 8.507059e+37
  %v587 = vand.u32 %v458, 2147483648
  %v588 = vor.u32 1.1754944e-38, %v587
  %v589 = vsel %vm586, %v588, %v584
  %v590 = vmul.f32 %v419, %v589
  %v591 = vrcp.pop %v461
  %v592 = vmul.f32 %v461, %v591
  %v593 = vsub.f32 1.0, %v592
  %v594 = vmul.f32 %v591, %v593
  %v595 = vadd.f32 %v591, %v594
  %vm596 = vweird.f32 %v461
  %vm597 = vweird.f32 %v591
  %vm598 = vmor %vm596, %vm597
  %v599 = vsel %vm598, %v591, %v595
  %v600 = vand.u32 2147483647, %v461
  %vm601 = vcmp.eq.f32.partialorder %v600, 8.507059e+37
  %v602 = vand.u32 %v461, 2147483648
  %v603 = vor.u32 1.1754944e-38, %v602
  %v604 = vsel %vm601, %v603, %v599
  %v605 = vmul.f32 %v421, %v604
  %v606 = vrcp.pop %v464
  %v607 = vmul.f32 %v464, %v606
  %v608 = vsub.f32 1.0, %v607
  %v609 = vmul.f32 %v606, %v608
  %v610 = vadd.f32 %v606, %v609
  %vm611 = vweird.f32 %v464
  %vm612 = vweird.f32 %v606
  %vm613 = vmor %vm611, %vm612
  %v614 = vsel %vm613, %v606, %v610
  %v615 = vand.u32 2147483647, %v464
  %vm616 = vcmp.eq.f32.partialorder %v615, 8.507059e+37
  %v617 = vand.u32 %v464, 2147483648
  %v618 = vor.u32 1.1754944e-38, %v617
  %v619 = vsel %vm616, %v618, %v614
  %v620 = vmul.f32 %v423, %v619
  %v621 = vrcp.pop %v467
  %v622 = vmul.f32 %v467, %v621
  %v623 = vsub.f32 1.0, %v622
  %v624 = vmul.f32 %v621, %v623
  %v625 = vadd.f32 %v621, %v624
  %vm626 = vweird.f32 %v467
  %vm627 = vweird.f32 %v621
  %vm628 = vmor %vm626, %vm627
  %v629 = vsel %vm628, %v621, %v625
  %v630 = vand.u32 2147483647, %v467
  %vm631 = vcmp.eq.f32.partialorder %v630, 8.507059e+37
  %v632 = vand.u32 %v467, 2147483648
  %v633 = vor.u32 1.1754944e-38, %v632
  %v634 = vsel %vm631, %v633, %v629
  %v635 = vmul.f32 %v425, %v634
  %v636 = vrcp.pop %v470
  %v637 = vmul.f32 %v470, %v636
  %v638 = vsub.f32 1.0, %v637
  %v639 = vmul.f32 %v636, %v638
  %v640 = vadd.f32 %v636, %v639
  %vm641 = vweird.f32 %v470
  %vm642 = vweird.f32 %v636
  %vm643 = vmor %vm641, %vm642
  %v644 = vsel %vm643, %v636, %v640
  %v645 = vand.u32 2147483647, %v470
  %vm646 = vcmp.eq.f32.partialorder %v645, 8.507059e+37
  %v647 = vand.u32 %v470, 2147483648
  %v648 = vor.u32 1.1754944e-38, %v647
  %v649 = vsel %vm646, %v648, %v644
  %v650 = vmul.f32 %v427, %v649
  %v651 = vrcp.pop %v473
  %v652 = vmul.f32 %v473, %v651
  %v653 = vsub.f32 1.0, %v652
  %v654 = vmul.f32 %v651, %v653
  %v655 = vadd.f32 %v651, %v654
  %vm656 = vweird.f32 %v473
  %vm657 = vweird.f32 %v651
  %vm658 = vmor %vm656, %vm657
  %v659 = vsel %vm658, %v651, %v655
  %v660 = vand.u32 2147483647, %v473
  %vm661 = vcmp.eq.f32.partialorder %v660, 8.507059e+37
  %v662 = vand.u32 %v473, 2147483648
  %v663 = vor.u32 1.1754944e-38, %v662
  %v664 = vsel %vm661, %v663, %v659
  %v665 = vmul.f32 %v429, %v664
  %v666 = vrcp.pop %v476
  %v667 = vmul.f32 %v476, %v666
  %v668 = vsub.f32 1.0, %v667
  %v669 = vmul.f32 %v666, %v668
  %v670 = vadd.f32 %v666, %v669
  %vm671 = vweird.f32 %v476
  %vm672 = vweird.f32 %v666
  %vm673 = vmor %vm671, %vm672
  %v674 = vsel %vm673, %v666, %v670
  %v675 = vand.u32 2147483647, %v476
  %vm676 = vcmp.eq.f32.partialorder %v675, 8.507059e+37
  %v677 = vand.u32 %v476, 2147483648
  %v678 = vor.u32 1.1754944e-38, %v677
  %v679 = vsel %vm676, %v678, %v674
  %v680 = vmul.f32 %v431, %v679
  %v681 = vrcp.pop %v479
  %v682 = vmul.f32 %v479, %v681
  %v683 = vsub.f32 1.0, %v682
  %v684 = vmul.f32 %v681, %v683
  %v685 = vadd.f32 %v681, %v684
  %vm686 = vweird.f32 %v479
  %vm687 = vweird.f32 %v681
  %vm688 = vmor %vm686, %vm687
  %v689 = vsel %vm688, %v681, %v685
  %v690 = vand.u32 2147483647, %v479
  %vm691 = vcmp.eq.f32.partialorder %v690, 8.507059e+37
  %v692 = vand.u32 %v479, 2147483648
  %v693 = vor.u32 1.1754944e-38, %v692
  %v694 = vsel %vm691, %v693, %v689
  %v695 = vmul.f32 %v433, %v694
  %v696 = vrcp.pop %v482
  %v697 = vmul.f32 %v482, %v696
  %v698 = vsub.f32 1.0, %v697
  %v699 = vmul.f32 %v696, %v698
  %v700 = vadd.f32 %v696, %v699
  %vm701 = vweird.f32 %v482
  %vm702 = vweird.f32 %v696
  %vm703 = vmor %vm701, %vm702
  %v704 = vsel %vm703, %v696, %v700
  %v705 = vand.u32 2147483647, %v482
  %vm706 = vcmp.eq.f32.partialorder %v705, 8.507059e+37
  %v707 = vand.u32 %v482, 2147483648
  %v708 = vor.u32 1.1754944e-38, %v707
  %v709 = vsel %vm706, %v708, %v704
  %v710 = vmul.f32 %v435, %v709
  %v711 = vrcp.pop %v485
  %v712 = vmul.f32 %v485, %v711
  %v713 = vsub.f32 1.0, %v712
  %v714 = vmul.f32 %v711, %v713
  %v715 = vadd.f32 %v711, %v714
  %vm716 = vweird.f32 %v485
  %vm717 = vweird.f32 %v711
  %vm718 = vmor %vm716, %vm717
  %v719 = vsel %vm718, %v711, %v715
  %v720 = vand.u32 2147483647, %v485
  %vm721 = vcmp.eq.f32.partialorder %v720, 8.507059e+37
  %v722 = vand.u32 %v485, 2147483648
  %v723 = vor.u32 1.1754944e-38, %v722
  %v724 = vsel %vm721, %v723, %v719
  %v725 = vmul.f32 %v437, %v724
  %v726 = vld [vmem:[%s2] sm:$0x3]
  %v727 = vld [vmem:[%s6] sm:$0xff]
  %v728 = vld [vmem:[%s6 + $0x8] sm:$0xff]
  %v729 = vperm.slane %v726, 0
  %v730 = vmul.f32 %v500, %v729
  %v731 = vmul.f32 %v515, %v729
  %v732 = vmul.f32 %v530, %v729
  %v733 = vmul.f32 %v545, %v729
  %v734 = vmul.f32 %v560, %v729
  %v735 = vmul.f32 %v575, %v729
  %v736 = vmul.f32 %v590, %v729
  %v737 = vmul.f32 %v605, %v729
  %v738 = vsel %vm160, %v730, 0.0
  %v739 = vsel %vm160, %v731, 0.0
  %v740 = vadd.f32 %v738, %v739
  %v741 = vsel %vm160, %v732, 0.0
  %v742 = vadd.f32 %v740, %v741
  %v743 = vsel %vm160, %v733, 0.0
  %v744 = vadd.f32 %v742, %v743
  %v745 = vsel %vm160, %v734, 0.0
  %v746 = vadd.f32 %v744, %v745
  %v747 = vsel %vm160, %v735, 0.0
  %v748 = vadd.f32 %v746, %v747
  %v749 = vsel %vm160, %v736, 0.0
  %v750 = vadd.f32 %v748, %v749
  %v751 = vsel %vm160, %v737, 0.0
  %v752 = vadd.f32 %v750, %v751
  %v753 = vrot.slane %v752, 4
  %v754 = vadd.f32 %v752, %v753
  %v755 = vrot.slane %v754, 2
  %v756 = vadd.f32 %v754, %v755
  %v757 = vrot.slane %v756, 1
  %v758 = vadd.f32 %v756, %v757
  %v759 = vld [vmem:[%s1] sm:$0xff]
  %v760 = vld [vmem:[%s1 + $0x8] sm:$0xff]
  %v762 = vsel %vm160, %v759, 0
  %v765 = vsel %vm160, %v760, 0
  %767 = vmatpush.msra.mxu0 0.0
  %768 = vmatpush.msra.mxu0 0.0
  %769 = vmatpush.msra.mxu0 0.0
  %770 = vmatpush.msra.mxu0 0.0
  %771 = vmatpush.msra.mxu0 0.0
  %772 = vmatpush.msra.mxu0 0.0
  %773 = vmatpush.msra.mxu0 0.0
  %774 = vmatpush.msra.mxu0 0.0
  %775 = vmatpush.msra.mxu0 %v737
  %776 = vmatpush.msra.mxu0 %v736
  %777 = vmatpush.msra.mxu0 %v735
  %778 = vmatpush.msra.mxu0 %v734
  %779 = vmatpush.msra.mxu0 %v733
  %780 = vmatpush.msra.mxu0 %v732
  %781 = vmatpush.msra.mxu0 %v731
  %782 = vmatpush.msra.mxu0 %v730
  %783 = vmatmul.f32.gmra.mxu0 %v762
  %v784 = vpop.f32.mrf.mxu0
  %v785 = vadd.f32 0.0, %v784
  %786 = vmatmul.f32.gmra.mxu0 %v765
  %v787 = vpop.f32.mrf.mxu0
  %v788 = vadd.f32 0.0, %v787
  %789 = vdwg.mxu0
  %v790 = vmul.f32 %v758, %v727
  %v791 = vmul.f32 %v758, %v728
  %v792 = vsub.f32 %v785, %v790
  %v793 = vsub.f32 %v788, %v791
  %v794 = vmul.f32 %v792, %v792
  %v795 = vmul.f32 %v793, %v793
  %v796 = vsel %vm160, %v794, 0.0
  %v797 = vsel %vm160, %v795, 0.0
  %v798 = vadd.f32 %v796, %v797
  %v799 = vrot.slane %v798, 4
  %v800 = vadd.f32 %v798, %v799
  %v801 = vrot.slane %v800, 2
  %v802 = vadd.f32 %v800, %v801
  %v803 = vrot.slane %v802, 1
  %v804 = vadd.f32 %v802, %v803
  %v805 = vrsqrt.pop %v804
  %v806 = vmul.f32 %v805, %v804
  %v807 = vmul.f32 %v806, %v805
  %v808 = vmul.f32 0.5, %v807
  %v809 = vsub.f32 1.5, %v808
  %v810 = vmul.f32 %v805, %v809
  %v811 = vmul.f32 %v804, %v810
  %vm812 = vcmp.eq.f32.partialorder %v804, inf
  %v813 = vsel %vm812, %v804, %v811
  %vm814 = vcmp.eq.f32.partialorder %v804, 0.0
  %v815 = vand.u32 %v804, 2147483648
  %v816 = vsel %vm814, %v815, %v813
  %v817 = vmax.f32 %v816, 1e-12
  %v818 = vrcp.pop %v817
  %v819 = vmul.f32 %v817, %v818
  %v820 = vsub.f32 1.0, %v819
  %v821 = vmul.f32 %v818, %v820
  %v822 = vadd.f32 %v818, %v821
  %vm823 = vweird.f32 %v817
  %vm824 = vweird.f32 %v818
  %vm825 = vmor %vm823, %vm824
  %v826 = vsel %vm825, %v818, %v822
  %v827 = vand.u32 2147483647, %v817
  %vm828 = vcmp.eq.f32.partialorder %v827, 8.507059e+37
  %v829 = vand.u32 %v817, 2147483648
  %v830 = vor.u32 1.1754944e-38, %v829
  %v831 = vsel %vm828, %v830, %v826
  %v832 = vmul.f32 %v792, %v831
  %v833 = vmul.f32 %v793, %v831
  %834 = vst.msk [vmem:[%s7] sm:$0xff] %vm160, %v832
  %835 = vst.msk [vmem:[%s7 + $0x8] sm:$0xff] %vm160, %v833
  %v836 = vperm.slane %v726, 1
  %v837 = vmul.f32 %v620, %v836
  %v838 = vmul.f32 %v635, %v836
  %v839 = vmul.f32 %v650, %v836
  %v840 = vmul.f32 %v665, %v836
  %v841 = vmul.f32 %v680, %v836
  %v842 = vmul.f32 %v695, %v836
  %v843 = vmul.f32 %v710, %v836
  %v844 = vmul.f32 %v725, %v836
  %v845 = vsel %vm160, %v837, 0.0
  %v846 = vsel %vm160, %v838, 0.0
  %v847 = vadd.f32 %v845, %v846
  %v848 = vsel %vm160, %v839, 0.0
  %v849 = vadd.f32 %v847, %v848
  %v850 = vsel %vm160, %v840, 0.0
  %v851 = vadd.f32 %v849, %v850
  %v852 = vsel %vm160, %v841, 0.0
  %v853 = vadd.f32 %v851, %v852
  %v854 = vsel %vm160, %v842, 0.0
  %v855 = vadd.f32 %v853, %v854
  %v856 = vsel %vm160, %v843, 0.0
  %v857 = vadd.f32 %v855, %v856
  %v858 = vsel %vm160, %v844, 0.0
  %v859 = vadd.f32 %v857, %v858
  %v860 = vrot.slane %v859, 4
  %v861 = vadd.f32 %v859, %v860
  %v862 = vrot.slane %v861, 2
  %v863 = vadd.f32 %v861, %v862
  %v864 = vrot.slane %v863, 1
  %v865 = vadd.f32 %v863, %v864
  %s866 = scalar_lea.vmem %s1, 16
  %v867 = vld [vmem:[%s866] sm:$0xff]
  %v868 = vld [vmem:[%s866 + $0x8] sm:$0xff]
  %v870 = vsel %vm160, %v867, 0
  %v873 = vsel %vm160, %v868, 0
  %875 = vmatpush.msra.mxu0 0.0
  %876 = vmatpush.msra.mxu0 0.0
  %877 = vmatpush.msra.mxu0 0.0
  %878 = vmatpush.msra.mxu0 0.0
  %879 = vmatpush.msra.mxu0 0.0
  %880 = vmatpush.msra.mxu0 0.0
  %881 = vmatpush.msra.mxu0 0.0
  %882 = vmatpush.msra.mxu0 0.0
  %883 = vmatpush.msra.mxu0 %v844
  %884 = vmatpush.msra.mxu0 %v843
  %885 = vmatpush.msra.mxu0 %v842
  %886 = vmatpush.msra.mxu0 %v841
  %887 = vmatpush.msra.mxu0 %v840
  %888 = vmatpush.msra.mxu0 %v839
  %889 = vmatpush.msra.mxu0 %v838
  %890 = vmatpush.msra.mxu0 %v837
  %891 = vmatmul.f32.gmra.mxu0 %v870
  %v892 = vpop.f32.mrf.mxu0
  %v893 = vadd.f32 0.0, %v892
  %894 = vmatmul.f32.gmra.mxu0 %v873
  %v895 = vpop.f32.mrf.mxu0
  %v896 = vadd.f32 0.0, %v895
  %897 = vdwg.mxu0
  %v898 = vmul.f32 %v865, %v727
  %v899 = vmul.f32 %v865, %v728
  %v900 = vsub.f32 %v893, %v898
  %v901 = vsub.f32 %v896, %v899
  %v902 = vmul.f32 %v900, %v900
  %v903 = vmul.f32 %v901, %v901
  %v904 = vsel %vm160, %v902, 0.0
  %v905 = vsel %vm160, %v903, 0.0
  %v906 = vadd.f32 %v904, %v905
  %v907 = vrot.slane %v906, 4
  %v908 = vadd.f32 %v906, %v907
  %v909 = vrot.slane %v908, 2
  %v910 = vadd.f32 %v908, %v909
  %v911 = vrot.slane %v910, 1
  %v912 = vadd.f32 %v910, %v911
  %v913 = vrsqrt.pop %v912
  %v914 = vmul.f32 %v913, %v912
  %v915 = vmul.f32 %v914, %v913
  %v916 = vmul.f32 0.5, %v915
  %v917 = vsub.f32 1.5, %v916
  %v918 = vmul.f32 %v913, %v917
  %v919 = vmul.f32 %v912, %v918
  %vm920 = vcmp.eq.f32.partialorder %v912, inf
  %v921 = vsel %vm920, %v912, %v919
  %vm922 = vcmp.eq.f32.partialorder %v912, 0.0
  %v923 = vand.u32 %v912, 2147483648
  %v924 = vsel %vm922, %v923, %v921
  %v925 = vmax.f32 %v924, 1e-12
  %v926 = vrcp.pop %v925
  %v927 = vmul.f32 %v925, %v926
  %v928 = vsub.f32 1.0, %v927
  %v929 = vmul.f32 %v926, %v928
  %v930 = vadd.f32 %v926, %v929
  %vm931 = vweird.f32 %v925
  %vm932 = vweird.f32 %v926
  %vm933 = vmor %vm931, %vm932
  %v934 = vsel %vm933, %v926, %v930
  %v935 = vand.u32 2147483647, %v925
  %vm936 = vcmp.eq.f32.partialorder %v935, 8.507059e+37
  %v937 = vand.u32 %v925, 2147483648
  %v938 = vor.u32 1.1754944e-38, %v937
  %v939 = vsel %vm936, %v938, %v934
  %v940 = vmul.f32 %v900, %v939
  %v941 = vmul.f32 %v901, %v939
  %s942 = scalar_lea.vmem %s7, 16
  %943 = vst.msk [vmem:[%s942] sm:$0xff] %vm160, %v940
  %944 = vst.msk [vmem:[%s942 + $0x8] sm:$0xff] %vm160, %v941
  // Predicated region
  $region30: #{pcan_forward.12} parent=0 // pred_check
    _
  $region31: #{pcan_forward.12} parent=0 // pred_check_branch
    %946 = sbr.rel (0) target = $region33
  $region32: #{pcan_forward.12} parent=0 // pred_region
    _
  $region33: #{pcan_forward.12} parent=0 // pred_fallthru
    _
  // Predicated region
  $region34: #{pcan_forward.12} parent=0 // pred_check
    _
  $region35: #{pcan_forward.12} parent=0 // pred_check_branch
    %948 = sbr.rel (0) target = $region37
  $region36: #{pcan_forward.12} parent=0 // pred_region
    _
  $region37: #{pcan_forward.12} parent=0 // pred_fallthru
    _

// kernel: pcan_forward.13
$region0: #{pcan_forward.13}
  #allocation0 [shape = 'u32[]', space=smem, size = 0x4, offset = 0x4, fixed_abs, tag = 'smem constant byte address 0x4 - core index']
  #allocation1 [shape = 'u32[72,128]{1,0:T(1,128)}', space=vmem, size = 0x9000, scoped, tag = 'internal scratch']
  %s0 = inlined_call_operand.vmem [shape: f32[8,1024], index: 0, kind: input, shape index: {}]
  %s1 = inlined_call_operand.vmem [shape: f32[1024,32], index: 1, kind: input, shape index: {}]
  %s2 = inlined_call_operand.vmem [shape: f32[1,32], index: 2, kind: input, shape index: {}]
  %s3 = inlined_call_operand.vmem [shape: f32[1,32], index: 3, kind: input, shape index: {}]
  %s4 = inlined_call_operand.vmem [shape: f32[32,32], index: 4, kind: input, shape index: {}]
  %s5 = inlined_call_operand.vmem [shape: f32[1,32], index: 5, kind: input, shape index: {}]
  %s6 = inlined_call_operand.vmem [shape: f32[1,32], index: 6, kind: input, shape index: {}]
  %s7 = inlined_call_operand.vmem [shape: f32[8,32], index: 7, kind: output, shape index: {}]
  %s8 = sld [smem:[#allocation0]]
  $region38: #{pcan_forward.13} parent=0
    _
  %s10 = ssub.s32 1, %s8
  %s11 = scalar_select 0, %s10, %s8
  // Predicated region
  $region2: #{pcan_forward.13} parent=0 // pred_check
    _
  $region3: #{pcan_forward.13} parent=0 // pred_check_branch
    %13 = sbr.rel (0) target = $region5
  $region4: #{pcan_forward.13} parent=0 // pred_region
    _
  $region5: #{pcan_forward.13} parent=0 // pred_fallthru
    _
  // Predicated region
  $region6: #{pcan_forward.13} parent=0 // pred_check
    _
  $region7: #{pcan_forward.13} parent=0 // pred_check_branch
    %15 = sbr.rel (0) target = $region9
  $region8: #{pcan_forward.13} parent=0 // pred_region
    _
  $region9: #{pcan_forward.13} parent=0 // pred_fallthru
    _
  // Predicated region
  $region10: #{pcan_forward.13} parent=0 // pred_check
    _
  $region11: #{pcan_forward.13} parent=0 // pred_check_branch
    %17 = sbr.rel (0) target = $region13
  $region12: #{pcan_forward.13} parent=0 // pred_region
    _
  $region13: #{pcan_forward.13} parent=0 // pred_fallthru
    _
  // Predicated region
  $region14: #{pcan_forward.13} parent=0 // pred_check
    _
  $region15: #{pcan_forward.13} parent=0 // pred_check_branch
    %19 = sbr.rel (0) target = $region17
  $region16: #{pcan_forward.13} parent=0 // pred_region
    _
  $region17: #{pcan_forward.13} parent=0 // pred_fallthru
    _
  // Predicated region
  $region18: #{pcan_forward.13} parent=0 // pred_check
    _
  $region19: #{pcan_forward.13} parent=0 // pred_check_branch
    %21 = sbr.rel (0) target = $region21
  $region20: #{pcan_forward.13} parent=0 // pred_region
    _
  $region21: #{pcan_forward.13} parent=0 // pred_fallthru
    _
  // Predicated region
  $region22: #{pcan_forward.13} parent=0 // pred_check
    _
  $region23: #{pcan_forward.13} parent=0 // pred_check_branch
    %23 = sbr.rel (0) target = $region25
  $region24: #{pcan_forward.13} parent=0 // pred_region
    _
  $region25: #{pcan_forward.13} parent=0 // pred_fallthru
    _
  // Predicated region
  $region26: #{pcan_forward.13} parent=0 // pred_check
    _
  $region27: #{pcan_forward.13} parent=0 // pred_check_branch
    %25 = sbr.rel (0) target = $region29
  $region28: #{pcan_forward.13} parent=0 // pred_region
    _
  $region29: #{pcan_forward.13} parent=0 // pred_fallthru
    _
  %v26 = vld [vmem:[%s0] sm:$0xff]
  %v27 = vld [vmem:[%s0 + $0x8] sm:$0xff]
  %v28 = vld [vmem:[%s0 + $0x10] sm:$0xff]
  %v29 = vld [vmem:[%s0 + $0x18] sm:$0xff]
  %v30 = vld [vmem:[%s0 + $0x20] sm:$0xff]
  %v31 = vld [vmem:[%s0 + $0x28] sm:$0xff]
  %v32 = vld [vmem:[%s0 + $0x30] sm:$0xff]
  %v33 = vld [vmem:[%s0 + $0x38] sm:$0xff]
  %v34 = vmul.f32 %v26, %v26
  %v35 = vmul.f32 %v27, %v27
  %v36 = vmul.f32 %v28, %v28
  %v37 = vmul.f32 %v29, %v29
  %v38 = vmul.f32 %v30, %v30
  %v39 = vmul.f32 %v31, %v31
  %v40 = vmul.f32 %v32, %v32
  %v41 = vmul.f32 %v33, %v33
  %v42 = vadd.f32 %v34, %v35
  %v43 = vadd.f32 %v42, %v36
  %v44 = vadd.f32 %v43, %v37
  %v45 = vadd.f32 %v44, %v38
  %v46 = vadd.f32 %v45, %v39
  %v47 = vadd.f32 %v46, %v40
  %v48 = vadd.f32 %v47, %v41
  %49 = vadd.xlane.f32.xlu0 %v48
  %v50 = vpop.xlane.xlu0 %49
  %v51 = vrsqrt.pop %v50
  %v52 = vmul.f32 %v51, %v50
  %v53 = vmul.f32 %v52, %v51
  %v54 = vmul.f32 0.5, %v53
  %v55 = vsub.f32 1.5, %v54
  %v56 = vmul.f32 %v51, %v55
  %v57 = vmul.f32 %v50, %v56
  %vm58 = vcmp.eq.f32.partialorder %v50, inf
  %v59 = vsel %vm58, %v50, %v57
  %vm60 = vcmp.eq.f32.partialorder %v50, 0.0
  %v61 = vand.u32 %v50, 2147483648
  %v62 = vsel %vm60, %v61, %v59
  %v63 = vmax.f32 %v62, 1e-12
  %v64 = vrcp.pop %v63
  %v65 = vmul.f32 %v63, %v64
  %v66 = vsub.f32 1.0, %v65
  %v67 = vmul.f32 %v64, %v66
  %v68 = vadd.f32 %v64, %v67
  %vm69 = vweird.f32 %v63
  %vm70 = vweird.f32 %v64
  %vm71 = vmor %vm69, %vm70
  %v72 = vsel %vm71, %v64, %v68
  %v73 = vand.u32 2147483647, %v63
  %vm74 = vcmp.eq.f32.partialorder %v73, 8.507059e+37
  %v75 = vand.u32 %v63, 2147483648
  %v76 = vor.u32 1.1754944e-38, %v75
  %v77 = vsel %vm74, %v76, %v72
  %v78 = vmul.f32 %v26, %v77
  %v79 = vmul.f32 %v27, %v77
  %v80 = vmul.f32 %v28, %v77
  %v81 = vmul.f32 %v29, %v77
  %v82 = vmul.f32 %v30, %v77
  %v83 = vmul.f32 %v31, %v77
  %v84 = vmul.f32 %v32, %v77
  %v85 = vmul.f32 %v33, %v77
  %v86 = vld [vmem:[%s1] sm:$0xff]
  %v87 = vld [vmem:[%s1 + $0x8] sm:$0xff]
  %v88 = vld [vmem:[%s1 + $0x10] sm:$0xff]
  %v89 = vld [vmem:[%s1 + $0x18] sm:$0xff]
  %v90 = vld [vmem:[%s1 + $0x20] sm:$0xff]
  %v91 = vld [vmem:[%s1 + $0x28] sm:$0xff]
  %v92 = vld [vmem:[%s1 + $0x30] sm:$0xff]
  %v93 = vld [vmem:[%s1 + $0x38] sm:$0xff]
  %v94 = vld [vmem:[%s1 + $0x40] sm:$0xff]
  %v95 = vld [vmem:[%s1 + $0x48] sm:$0xff]
  %v96 = vld [vmem:[%s1 + $0x50] sm:$0xff]
  %v97 = vld [vmem:[%s1 + $0x58] sm:$0xff]
  %v98 = vld [vmem:[%s1 + $0x60] sm:$0xff]
  %v99 = vld [vmem:[%s1 + $0x68] sm:$0xff]
  %v100 = vld [vmem:[%s1 + $0x70] sm:$0xff]
  %v101 = vld [vmem:[%s1 + $0x78] sm:$0xff]
  %v102 = vld [vmem:[%s1 + $0x80] sm:$0xff]
  %v103 = vld [vmem:[%s1 + $0x88] sm:$0xff]
  %v104 = vld [vmem:[%s1 + $0x90] sm:$0xff]
  %v105 = vld [vmem:[%s1 + $0x98] sm:$0xff]
  %v106 = vld [vmem:[%s1 + $0xa0] sm:$0xff]
  %v107 = vld [vmem:[%s1 + $0xa8] sm:$0xff]
  %v108 = vld [vmem:[%s1 + $0xb0] sm:$0xff]
  %v109 = vld [vmem:[%s1 + $0xb8] sm:$0xff]
  %v110 = vld [vmem:[%s1 + $0xc0] sm:$0xff]
  %v111 = vld [vmem:[%s1 + $0xc8] sm:$0xff]
  %v112 = vld [vmem:[%s1 + $0xd0] sm:$0xff]
  %v113 = vld [vmem:[%s1 + $0xd8] sm:$0xff]
  %v114 = vld [vmem:[%s1 + $0xe0] sm:$0xff]
  %v115 = vld [vmem:[%s1 + $0xe8] sm:$0xff]
  %v116 = vld [vmem:[%s1 + $0xf0] sm:$0xff]
  %v117 = vld [vmem:[%s1 + $0xf8] sm:$0xff]
  %v118 = vld [vmem:[%s1 + $0x100] sm:$0xff]
  %v119 = vld [vmem:[%s1 + $0x108] sm:$0xff]
  %v120 = vld [vmem:[%s1 + $0x110] sm:$0xff]
  %v121 = vld [vmem:[%s1 + $0x118] sm:$0xff]
  %v122 = vld [vmem:[%s1 + $0x120] sm:$0xff]
  %v123 = vld [vmem:[%s1 + $0x128] sm:$0xff]
  %v124 = vld [vmem:[%s1 + $0x130] sm:$0xff]
  %v125 = vld [vmem:[%s1 + $0x138] sm:$0xff]
  %v126 = vld [vmem:[%s1 + $0x140] sm:$0xff]
  %v127 = vld [vmem:[%s1 + $0x148] sm:$0xff]
  %v128 = vld [vmem:[%s1 + $0x150] sm:$0xff]
  %v129 = vld [vmem:[%s1 + $0x158] sm:$0xff]
  %v130 = vld [vmem:[%s1 + $0x160] sm:$0xff]
  %v131 = vld [vmem:[%s1 + $0x168] sm:$0xff]
  %v132 = vld [vmem:[%s1 + $0x170] sm:$0xff]
  %v133 = vld [vmem:[%s1 + $0x178] sm:$0xff]
  %v134 = vld [vmem:[%s1 + $0x180] sm:$0xff]
  %v135 = vld [vmem:[%s1 + $0x188] sm:$0xff]
  %v136 = vld [vmem:[%s1 + $0x190] sm:$0xff]
  %v137 = vld [vmem:[%s1 + $0x198] sm:$0xff]
  %v138 = vld [vmem:[%s1 + $0x1a0] sm:$0xff]
  %v139 = vld [vmem:[%s1 + $0x1a8] sm:$0xff]
  %v140 = vld [vmem:[%s1 + $0x1b0] sm:$0xff]
  %v141 = vld [vmem:[%s1 + $0x1b8] sm:$0xff]
  %v142 = vld [vmem:[%s1 + $0x1c0] sm:$0xff]
  %v143 = vld [vmem:[%s1 + $0x1c8] sm:$0xff]
  %v144 = vld [vmem:[%s1 + $0x1d0] sm:$0xff]
  %v145 = vld [vmem:[%s1 + $0x1d8] sm:$0xff]
  %v146 = vld [vmem:[%s1 + $0x1e0] sm:$0xff]
  %v147 = vld [vmem:[%s1 + $0x1e8] sm:$0xff]
  %v148 = vld [vmem:[%s1 + $0x1f0] sm:$0xff]
  %v149 = vld [vmem:[%s1 + $0x1f8] sm:$0xff]
  %v150 = vld [vmem:[%s1 + $0x200] sm:$0xff]
  %v151 = vld [vmem:[%s1 + $0x208] sm:$0xff]
  %v152 = vld [vmem:[%s1 + $0x210] sm:$0xff]
  %v153 = vld [vmem:[%s1 + $0x218] sm:$0xff]
  %v154 = vld [vmem:[%s1 + $0x220] sm:$0xff]
  %v155 = vld [vmem:[%s1 + $0x228] sm:$0xff]
  %v156 = vld [vmem:[%s1 + $0x230] sm:$0xff]
  %v157 = vld [vmem:[%s1 + $0x238] sm:$0xff]
  %v158 = vld [vmem:[%s1 + $0x240] sm:$0xff]
  %v159 = vld [vmem:[%s1 + $0x248] sm:$0xff]
  %v160 = vld [vmem:[%s1 + $0x250] sm:$0xff]
  %v161 = vld [vmem:[%s1 + $0x258] sm:$0xff]
  %v162 = vld [vmem:[%s1 + $0x260] sm:$0xff]
  %v163 = vld [vmem:[%s1 + $0x268] sm:$0xff]
  %v164 = vld [vmem:[%s1 + $0x270] sm:$0xff]
  %v165 = vld [vmem:[%s1 + $0x278] sm:$0xff]
  %v166 = vld [vmem:[%s1 + $0x280] sm:$0xff]
  %v167 = vld [vmem:[%s1 + $0x288] sm:$0xff]
  %v168 = vld [vmem:[%s1 + $0x290] sm:$0xff]
  %v169 = vld [vmem:[%s1 + $0x298] sm:$0xff]
  %v170 = vld [vmem:[%s1 + $0x2a0] sm:$0xff]
  %v171 = vld [vmem:[%s1 + $0x2a8] sm:$0xff]
  %v172 = vld [vmem:[%s1 + $0x2b0] sm:$0xff]
  %v173 = vld [vmem:[%s1 + $0x2b8] sm:$0xff]
  %v174 = vld [vmem:[%s1 + $0x2c0] sm:$0xff]
  %v175 = vld [vmem:[%s1 + $0x2c8] sm:$0xff]
  %v176 = vld [vmem:[%s1 + $0x2d0] sm:$0xff]
  %v177 = vld [vmem:[%s1 + $0x2d8] sm:$0xff]
  %v178 = vld [vmem:[%s1 + $0x2e0] sm:$0xff]
  %v179 = vld [vmem:[%s1 + $0x2e8] sm:$0xff]
  %v180 = vld [vmem:[%s1 + $0x2f0] sm:$0xff]
  %v181 = vld [vmem:[%s1 + $0x2f8] sm:$0xff]
  %v182 = vld [vmem:[%s1 + $0x300] sm:$0xff]
  %v183 = vld [vmem:[%s1 + $0x308] sm:$0xff]
  %v184 = vld [vmem:[%s1 + $0x310] sm:$0xff]
  %v185 = vld [vmem:[%s1 + $0x318] sm:$0xff]
  %v186 = vld [vmem:[%s1 + $0x320] sm:$0xff]
  %v187 = vld [vmem:[%s1 + $0x328] sm:$0xff]
  %v188 = vld [vmem:[%s1 + $0x330] sm:$0xff]
  %v189 = vld [vmem:[%s1 + $0x338] sm:$0xff]
  %v190 = vld [vmem:[%s1 + $0x340] sm:$0xff]
  %v191 = vld [vmem:[%s1 + $0x348] sm:$0xff]
  %v192 = vld [vmem:[%s1 + $0x350] sm:$0xff]
  %v193 = vld [vmem:[%s1 + $0x358] sm:$0xff]
  %v194 = vld [vmem:[%s1 + $0x360] sm:$0xff]
  %v195 = vld [vmem:[%s1 + $0x368] sm:$0xff]
  %v196 = vld [vmem:[%s1 + $0x370] sm:$0xff]
  %v197 = vld [vmem:[%s1 + $0x378] sm:$0xff]
  %v198 = vld [vmem:[%s1 + $0x380] sm:$0xff]
  %v199 = vld [vmem:[%s1 + $0x388] sm:$0xff]
  %v200 = vld [vmem:[%s1 + $0x390] sm:$0xff]
  %v201 = vld [vmem:[%s1 + $0x398] sm:$0xff]
  %v202 = vld [vmem:[%s1 + $0x3a0] sm:$0xff]
  %v203 = vld [vmem:[%s1 + $0x3a8] sm:$0xff]
  %v204 = vld [vmem:[%s1 + $0x3b0] sm:$0xff]
  %v205 = vld [vmem:[%s1 + $0x3b8] sm:$0xff]
  %v206 = vld [vmem:[%s1 + $0x3c0] sm:$0xff]
  %v207 = vld [vmem:[%s1 + $0x3c8] sm:$0xff]
  %v208 = vld [vmem:[%s1 + $0x3d0] sm:$0xff]
  %v209 = vld [vmem:[%s1 + $0x3d8] sm:$0xff]
  %v210 = vld [vmem:[%s1 + $0x3e0] sm:$0xff]
  %v211 = vld [vmem:[%s1 + $0x3e8] sm:$0xff]
  %v212 = vld [vmem:[%s1 + $0x3f0] sm:$0xff]
  %v213 = vld [vmem:[%s1 + $0x3f8] sm:$0xff]
  %214 = vmatpush.msra.mxu0 %v101
  %215 = vmatpush.msra.mxu0 %v100
  %216 = vmatpush.msra.mxu0 %v99
  %217 = vmatpush.msra.mxu0 %v98
  %218 = vmatpush.msra.mxu0 %v97
  %219 = vmatpush.msra.mxu0 %v96
  %220 = vmatpush.msra.mxu0 %v95
  %221 = vmatpush.msra.mxu0 %v94
  %222 = vmatpush.msra.mxu0 %v93
  %223 = vmatpush.msra.mxu0 %v92
  %224 = vmatpush.msra.mxu0 %v91
  %225 = vmatpush.msra.mxu0 %v90
  %226 = vmatpush.msra.mxu0 %v89
  %227 = vmatpush.msra.mxu0 %v88
  %228 = vmatpush.msra.mxu0 %v87
  %229 = vmatpush.msra.mxu0 %v86
  %230 = vmatmul.f32.gmra.mxu0 %v78
  %v231 = vpop.f32.mrf.mxu0
  %v232 = vadd.f32 0.0, %v231
  %233 = vdwg.mxu0
  %234 = vmatpush.msra.mxu0 %v117
  %235 = vmatpush.msra.mxu0 %v116
  %236 = vmatpush.msra.mxu0 %v115
  %237 = vmatpush.msra.mxu0 %v114
  %238 = vmatpush.msra.mxu0 %v113
  %239 = vmatpush.msra.mxu0 %v112
  %240 = vmatpush.msra.mxu0 %v111
  %241 = vmatpush.msra.mxu0 %v110
  %242 = vmatpush.msra.mxu0 %v109
  %243 = vmatpush.msra.mxu0 %v108
  %244 = vmatpush.msra.mxu0 %v107
  %245 = vmatpush.msra.mxu0 %v106
  %246 = vmatpush.msra.mxu0 %v105
  %247 = vmatpush.msra.mxu0 %v104
  %248 = vmatpush.msra.mxu0 %v103
  %249 = vmatpush.msra.mxu0 %v102
  %250 = vmatmul.f32.gmra.mxu0 %v79
  %v251 = vpop.f32.mrf.mxu0
  %v252 = vadd.f32 %v232, %v251
  %253 = vdwg.mxu0
  %254 = vmatpush.msra.mxu0 %v133
  %255 = vmatpush.msra.mxu0 %v132
  %256 = vmatpush.msra.mxu0 %v131
  %257 = vmatpush.msra.mxu0 %v130
  %258 = vmatpush.msra.mxu0 %v129
  %259 = vmatpush.msra.mxu0 %v128
  %260 = vmatpush.msra.mxu0 %v127
  %261 = vmatpush.msra.mxu0 %v126
  %262 = vmatpush.msra.mxu0 %v125
  %263 = vmatpush.msra.mxu0 %v124
  %264 = vmatpush.msra.mxu0 %v123
  %265 = vmatpush.msra.mxu0 %v122
  %266 = vmatpush.msra.mxu0 %v121
  %267 = vmatpush.msra.mxu0 %v120
  %268 = vmatpush.msra.mxu0 %v119
  %269 = vmatpush.msra.mxu0 %v118
  %270 = vmatmul.f32.gmra.mxu0 %v80
  %v271 = vpop.f32.mrf.mxu0
  %v272 = vadd.f32 %v252, %v271
  %273 = vdwg.mxu0
  %274 = vmatpush.msra.mxu0 %v149
  %275 = vmatpush.msra.mxu0 %v148
  %276 = vmatpush.msra.mxu0 %v147
  %277 = vmatpush.msra.mxu0 %v146
  %278 = vmatpush.msra.mxu0 %v145
  %279 = vmatpush.msra.mxu0 %v144
  %280 = vmatpush.msra.mxu0 %v143
  %281 = vmatpush.msra.mxu0 %v142
  %282 = vmatpush.msra.mxu0 %v141
  %283 = vmatpush.msra.mxu0 %v140
  %284 = vmatpush.msra.mxu0 %v139
  %285 = vmatpush.msra.mxu0 %v138
  %286 = vmatpush.msra.mxu0 %v137
  %287 = vmatpush.msra.mxu0 %v136
  %288 = vmatpush.msra.mxu0 %v135
  %289 = vmatpush.msra.mxu0 %v134
  %290 = vmatmul.f32.gmra.mxu0 %v81
  %v291 = vpop.f32.mrf.mxu0
  %v292 = vadd.f32 %v272, %v291
  %293 = vdwg.mxu0
  %294 = vmatpush.msra.mxu0 %v165
  %295 = vmatpush.msra.mxu0 %v164
  %296 = vmatpush.msra.mxu0 %v163
  %297 = vmatpush.msra.mxu0 %v162
  %298 = vmatpush.msra.mxu0 %v161
  %299 = vmatpush.msra.mxu0 %v160
  %300 = vmatpush.msra.mxu0 %v159
  %301 = vmatpush.msra.mxu0 %v158
  %302 = vmatpush.msra.mxu0 %v157
  %303 = vmatpush.msra.mxu0 %v156
  %304 = vmatpush.msra.mxu0 %v155
  %305 = vmatpush.msra.mxu0 %v154
  %306 = vmatpush.msra.mxu0 %v153
  %307 = vmatpush.msra.mxu0 %v152
  %308 = vmatpush.msra.mxu0 %v151
  %309 = vmatpush.msra.mxu0 %v150
  %310 = vmatmul.f32.gmra.mxu0 %v82
  %v311 = vpop.f32.mrf.mxu0
  %v312 = vadd.f32 %v292, %v311
  %313 = vdwg.mxu0
  %314 = vmatpush.msra.mxu0 %v181
  %315 = vmatpush.msra.mxu0 %v180
  %316 = vmatpush.msra.mxu0 %v179
  %317 = vmatpush.msra.mxu0 %v178
  %318 = vmatpush.msra.mxu0 %v177
  %319 = vmatpush.msra.mxu0 %v176
  %320 = vmatpush.msra.mxu0 %v175
  %321 = vmatpush.msra.mxu0 %v174
  %322 = vmatpush.msra.mxu0 %v173
  %323 = vmatpush.msra.mxu0 %v172
  %324 = vmatpush.msra.mxu0 %v171
  %325 = vmatpush.msra.mxu0 %v170
  %326 = vmatpush.msra.mxu0 %v169
  %327 = vmatpush.msra.mxu0 %v168
  %328 = vmatpush.msra.mxu0 %v167
  %329 = vmatpush.msra.mxu0 %v166
  %330 = vmatmul.f32.gmra.mxu0 %v83
  %v331 = vpop.f32.mrf.mxu0
  %v332 = vadd.f32 %v312, %v331
  %333 = vdwg.mxu0
  %334 = vmatpush.msra.mxu0 %v197
  %335 = vmatpush.msra.mxu0 %v196
  %336 = vmatpush.msra.mxu0 %v195
  %337 = vmatpush.msra.mxu0 %v194
  %338 = vmatpush.msra.mxu0 %v193
  %339 = vmatpush.msra.mxu0 %v192
  %340 = vmatpush.msra.mxu0 %v191
  %341 = vmatpush.msra.mxu0 %v190
  %342 = vmatpush.msra.mxu0 %v189
  %343 = vmatpush.msra.mxu0 %v188
  %344 = vmatpush.msra.mxu0 %v187
  %345 = vmatpush.msra.mxu0 %v186
  %346 = vmatpush.msra.mxu0 %v185
  %347 = vmatpush.msra.mxu0 %v184
  %348 = vmatpush.msra.mxu0 %v183
  %349 = vmatpush.msra.mxu0 %v182
  %350 = vmatmul.f32.gmra.mxu0 %v84
  %v351 = vpop.f32.mrf.mxu0
  %v352 = vadd.f32 %v332, %v351
  %353 = vdwg.mxu0
  %354 = vmatpush.msra.mxu0 %v213
  %355 = vmatpush.msra.mxu0 %v212
  %356 = vmatpush.msra.mxu0 %v211
  %357 = vmatpush.msra.mxu0 %v210
  %358 = vmatpush.msra.mxu0 %v209
  %359 = vmatpush.msra.mxu0 %v208
  %360 = vmatpush.msra.mxu0 %v207
  %361 = vmatpush.msra.mxu0 %v206
  %362 = vmatpush.msra.mxu0 %v205
  %363 = vmatpush.msra.mxu0 %v204
  %364 = vmatpush.msra.mxu0 %v203
  %365 = vmatpush.msra.mxu0 %v202
  %366 = vmatpush.msra.mxu0 %v201
  %367 = vmatpush.msra.mxu0 %v200
  %368 = vmatpush.msra.mxu0 %v199
  %369 = vmatpush.msra.mxu0 %v198
  %370 = vmatmul.f32.gmra.mxu0 %v85
  %v371 = vpop.f32.mrf.mxu0
  %v372 = vadd.f32 %v352, %v371
  %373 = vdwg.mxu0
  %v374 = vld [vmem:[%s2] sm:$0x1]
  %v375 = vld [vmem:[%s3] sm:$0x1]
  %v376 = vlaneseq
  %v377 = vshrl.u32 %v376, 7
  %vm378 = vcmp.lt.s32.totalorder %v377, 2
  %v379 = vsel %vm378, 1, 0
  %v380 = vcvt.s32.f32 %v379
  %v381 = vmul.f32 %v372, %v380
  %vm382 = vcmask 261120
  %v383 = vsel %vm382, %v381, 0.0
  %v384 = vrot.slane %v383, 4
  %v385 = vadd.f32 %v383, %v384
  %v386 = vrot.slane %v385, 2
  %v387 = vadd.f32 %v385, %v386
  %v388 = vrot.slane %v387, 1
  %v389 = vadd.f32 %v387, %v388
  %v390 = vmul.f32 %v389, 0.5
  %v391 = vsub.f32 %v372, %v390
  %v392 = vmul.f32 %v391, %v391
  %v393 = vmul.f32 %v392, %v380
  %v394 = vsel %vm382, %v393, 0.0
  %v395 = vrot.slane %v394, 4
  %v396 = vadd.f32 %v394, %v395
  %v397 = vrot.slane %v396, 2
  %v398 = vadd.f32 %v396, %v397
  %v399 = vrot.slane %v398, 1
  %v400 = vadd.f32 %v398, %v399
  %v401 = vmul.f32 %v400, 0.5
  %v402 = vadd.f32 %v401, 1e-05
  %v403 = vrsqrt.pop %v402
  %v404 = vmul.f32 %v403, %v402
  %v405 = vmul.f32 %v404, %v403
  %v406 = vmul.f32 0.5, %v405
  %v407 = vsub.f32 1.5, %v406
  %v408 = vmul.f32 %v403, %v407
  %v409 = vmul.f32 %v402, %v408
  %vm410 = vcmp.eq.f32.partialorder %v402, inf
  %v411 = vsel %vm410, %v402, %v409
  %vm412 = vcmp.eq.f32.partialorder %v402, 0.0
  %v413 = vand.u32 %v402, 2147483648
  %v414 = vsel %vm412, %v413, %v411
  %v415 = vrcp.pop %v414
  %v416 = vmul.f32 %v414, %v415
  %v417 = vsub.f32 1.0, %v416
  %v418 = vmul.f32 %v415, %v417
  %v419 = vadd.f32 %v415, %v418
  %vm420 = vweird.f32 %v414
  %vm421 = vweird.f32 %v415
  %vm422 = vmor %vm420, %vm421
  %v423 = vsel %vm422, %v415, %v419
  %v424 = vand.u32 2147483647, %v414
  %vm425 = vcmp.eq.f32.partialorder %v424, 8.507059e+37
  %v426 = vand.u32 %v414, 2147483648
  %v427 = vor.u32 1.1754944e-38, %v426
  %v428 = vsel %vm425, %v427, %v423
  %v429 = vmul.f32 %v374, %v428
  %v431 = vperm.slane %v429, 0
  %v433 = vmul.f32 %v391, %v431
  %v435 = vperm.slane %v375, 0
  %v437 = vadd.f32 %v433, %v435
  %v438 = vld [vmem:[%s4] sm:$0xff]
  %v439 = vld [vmem:[%s4 + $0x8] sm:$0xff]
  %v440 = vld [vmem:[%s4 + $0x10] sm:$0xff]
  %v441 = vld [vmem:[%s4 + $0x18] sm:$0xff]
  %v443 = vsel %vm382, %v437, 0
  %445 = vmatpush.msra.mxu0 0.0
  %446 = vmatpush.msra.mxu0 0.0
  %447 = vmatpush.msra.mxu0 0.0
  %448 = vmatpush.msra.mxu0 0.0
  %449 = vmatpush.msra.mxu0 0.0
  %450 = vmatpush.msra.mxu0 0.0
  %451 = vmatpush.msra.mxu0 0.0
  %452 = vmatpush.msra.mxu0 0.0
  %453 = vmatpush.msra.mxu0 0.0
  %454 = vmatpush.msra.mxu0 0.0
  %455 = vmatpush.msra.mxu0 0.0
  %456 = vmatpush.msra.mxu0 0.0
  %457 = vmatpush.msra.mxu0 %v441
  %458 = vmatpush.msra.mxu0 %v440
  %459 = vmatpush.msra.mxu0 %v439
  %460 = vmatpush.msra.mxu0 %v438
  %461 = vmatmul.f32.gmra.mxu0 %v443
  %v462 = vpop.f32.mrf.mxu0
  %v463 = vadd.f32 0.0, %v462
  %464 = vdwg.mxu0
  %v465 = vld [vmem:[%s5] sm:$0x1]
  %v466 = vld [vmem:[%s6] sm:$0x1]
  %v467 = vmul.f32 %v463, %v380
  %v468 = vsel %vm382, %v467, 0.0
  %v469 = vrot.slane %v468, 4
  %v470 = vadd.f32 %v468, %v469
  %v471 = vrot.slane %v470, 2
  %v472 = vadd.f32 %v470, %v471
  %v473 = vrot.slane %v472, 1
  %v474 = vadd.f32 %v472, %v473
  %v475 = vmul.f32 %v474, 0.5
  %v476 = vsub.f32 %v463, %v475
  %v477 = vmul.f32 %v476, %v476
  %v478 = vmul.f32 %v477, %v380
  %v479 = vsel %vm382, %v478, 0.0
  %v480 = vrot.slane %v479, 4
  %v481 = vadd.f32 %v479, %v480
  %v482 = vrot.slane %v481, 2
  %v483 = vadd.f32 %v481, %v482
  %v484 = vrot.slane %v483, 1
  %v485 = vadd.f32 %v483, %v484
  %v486 = vmul.f32 %v485, 0.5
  %v487 = vadd.f32 %v486, 1e-05
  %v488 = vrsqrt.pop %v487
  %v489 = vmul.f32 %v488, %v487
  %v490 = vmul.f32 %v489, %v488
  %v491 = vmul.f32 0.5, %v490
  %v492 = vsub.f32 1.5, %v491
  %v493 = vmul.f32 %v488, %v492
  %v494 = vmul.f32 %v487, %v493
  %vm495 = vcmp.eq.f32.partialorder %v487, inf
  %v496 = vsel %vm495, %v487, %v494
  %vm497 = vcmp.eq.f32.partialorder %v487, 0.0
  %v498 = vand.u32 %v487, 2147483648
  %v499 = vsel %vm497, %v498, %v496
  %v500 = vrcp.pop %v499
  %v501 = vmul.f32 %v499, %v500
  %v502 = vsub.f32 1.0, %v501
  %v503 = vmul.f32 %v500, %v502
  %v504 = vadd.f32 %v500, %v503
  %vm505 = vweird.f32 %v499
  %vm506 = vweird.f32 %v500
  %vm507 = vmor %vm505, %vm506
  %v508 = vsel %vm507, %v500, %v504
  %v509 = vand.u32 2147483647, %v499
  %vm510 = vcmp.eq.f32.partialorder %v509, 8.507059e+37
  %v511 = vand.u32 %v499, 2147483648
  %v512 = vor.u32 1.1754944e-38, %v511
  %v513 = vsel %vm510, %v512, %v508
  %v514 = vmul.f32 %v465, %v513
  %v516 = vperm.slane %v514, 0
  %v518 = vmul.f32 %v476, %v516
  %v520 = vperm.slane %v466, 0
  %v522 = vadd.f32 %v518, %v520
  %v523 = vxor.u32 %v522, 2147483648
  %v524 = vmul.f32 %v523, 1.442695
  %v525 = vpow.pop %v524
  %v526 = vadd.f32 %v525, 1.0
  %v527 = vrcp.pop %v526
  %v528 = vmul.f32 %v526, %v527
  %v529 = vsub.f32 1.0, %v528
  %v530 = vmul.f32 %v527, %v529
  %v531 = vadd.f32 %v527, %v530
  %vm532 = vweird.f32 %v526
  %vm533 = vweird.f32 %v527
  %vm534 = vmor %vm532, %vm533
  %v535 = vsel %vm534, %v527, %v531
  %v536 = vand.u32 2147483647, %v526
  %vm537 = vcmp.eq.f32.partialorder %v536, 8.507059e+37
  %v538 = vand.u32 %v526, 2147483648
  %v539 = vor.u32 1.1754944e-38, %v538
  %v540 = vsel %vm537, %v539, %v535
  %v541 = vmul.f32 1.0, %v540
  %v542 = vmul.f32 %v437, %v541
  %543 = vst.msk [vmem:[%s7] sm:$0xff] %vm382, %v542
  // Predicated region
  $region30: #{pcan_forward.13} parent=0 // pred_check
    _
  $region31: #{pcan_forward.13} parent=0 // pred_check_branch
    %545 = sbr.rel (0) target = $region33
  $region32: #{pcan_forward.13} parent=0 // pred_region
    _
  $region33: #{pcan_forward.13} parent=0 // pred_fallthru
    _
  // Predicated region
  $region34: #{pcan_forward.13} parent=0 // pred_check
    _
  $region35: #{pcan_forward.13} parent=0 // pred_check_branch
    %547 = sbr.rel (0) target = $region37
  $region36: #{pcan_forward.13} parent=0 // pred_region
    _
  $region37: #{pcan_forward.13} parent=0 // pred_fallthru
    _

</llo_original>
